<compile_context>
chip_gen: v7x
topology: tpu7x:2x2x1
jax: 0.10.0
libtpu: 0.0.40
codegen_flags: <defaults>
</compile_context>

<pallas_src>
import functools

import jax
import jax.numpy as jnp
from jax.experimental import pallas as pl
from jax.experimental.pallas import tpu as pltpu


# ----------------------------------------------------------------------------
# Pallas kernels
# ----------------------------------------------------------------------------
def _mm_bias_act_kernel(a_ref, b_ref, bias_ref, o_ref, *, act):
    """o = act(a @ b + bias). a:(tm,K) bf16, b:(K,N) bf16, bias:(1,N) f32."""
    acc = jnp.dot(a_ref[...], b_ref[...], preferred_element_type=jnp.float32)
    acc = acc + bias_ref[...]
    if act == "leaky_relu":
        # nn.LeakyReLU(0.2) in the reference module (not the 0.01 default).
        acc = jnp.where(acc > 0, acc, 0.2 * acc)
    elif act == "relu":
        acc = jnp.maximum(acc, 0.0)
    elif act == "sigmoid":
        acc = jax.nn.sigmoid(acc)
    o_ref[...] = acc.astype(o_ref.dtype)


def _mid_kernel(flat_ref, few_ref, feb_ref, emb_ref, fdw_ref, fdb_ref,
                d_ref, loss_ref, *, commitment):
    """Fused bottleneck: fe-Linear+ReLU -> VQ (nearest codebook row, one-hot
    lookup, VQ loss) -> fd-Linear+ReLU.  Everything fits in one VMEM block.

    VQ loss = q_latent_loss + commitment * e_latent_loss; both terms equal
    mse(quantized, latent) in the forward pass (detach/stop_gradient only
    affects gradients), so loss = (1 + commitment) * mse.  Straight-through
    estimator makes the forward value of `quantized` equal the codebook row.
    """
    # encoder linear + relu  (bf16 x bf16 -> f32 accumulate)
    latent = jnp.dot(flat_ref[...], few_ref[...],
                     preferred_element_type=jnp.float32)
    latent = jnp.maximum(latent + feb_ref[...], 0.0)           # (B, Hd) f32

    e = emb_ref[...]                                           # (Ne, Hd) f32
    n_emb = e.shape[0]
    col_iota = jax.lax.broadcasted_iota(jnp.int32, (n_emb, 1), 0)
    row_iota = jax.lax.broadcasted_iota(jnp.int32, (1, n_emb), 1)

    # Explicit (x - e)^2 distances (matches the PyTorch broadcast-subtract
    # path exactly, incl. first-index argmin tie-break).  B is tiny & static,
    # so the batch loop is unrolled and every op stays 2-D.
    onehot_rows = []
    for bi in range(latent.shape[0]):
        diff = latent[bi:bi + 1, :] - e                        # (Ne, Hd)
        dist = jnp.sum(diff * diff, axis=1, keepdims=True)     # (Ne, 1)
        min_d = jnp.min(dist, axis=0, keepdims=True)           # (1, 1)
        idx = jnp.min(jnp.where(dist <= min_d, col_iota, n_emb),
                      axis=0, keepdims=True)                   # (1, 1) first min
        onehot_rows.append((row_iota == idx).astype(jnp.float32))
    onehot = jnp.concatenate(onehot_rows, axis=0)              # (B, Ne)

    q = jnp.dot(onehot, e, preferred_element_type=jnp.float32)  # (B, Hd)

    d = q - latent
    sse = jnp.sum(jnp.sum(d * d, axis=1, keepdims=True), axis=0, keepdims=True)
    loss_ref[...] = (1.0 + commitment) * sse / float(d.shape[0] * d.shape[1])

    # decoder linear + relu (forward value of quantized == q)
    dec = jnp.dot(q, fdw_ref[...], preferred_element_type=jnp.float32)
    dec = jnp.maximum(dec + fdb_ref[...], 0.0)
    d_ref[...] = dec.astype(d_ref.dtype)


# ----------------------------------------------------------------------------
# Pallas wrappers
# ----------------------------------------------------------------------------
def _choose_tm(m):
    """Adaptive M-tile: never pad tiny GEMMs up to 128 rows, but keep >=2
    blocks on the larger GEMMs so a 'parallel' grid axis feeds both v7x TCs."""
    if m <= 16:
        return m
    candidates = [t for t in (256, 128, 64, 32, 16, 8) if t < m and m % t == 0]
    return candidates[0] if candidates else m


def matmul_bias_act(a, b, bias, act="none", out_dtype=jnp.float32):
    """act(a @ b + bias).  a:(M,K) bf16, b:(K,N) bf16, bias:(1,N) f32.
    Single-K, single-N block (all shapes here are small); M tiled adaptively.
    No zero-padding anywhere: block dims either divide (8,128) or equal the
    full array dims."""
    M, K = a.shape
    K2, N = b.shape
    assert K == K2 and bias.shape == (1, N)
    tm = _choose_tm(M)
    return pl.pallas_call(
        functools.partial(_mm_bias_act_kernel, act=act),
        out_shape=jax.ShapeDtypeStruct((M, N), out_dtype),
        grid=(M // tm,),
        in_specs=[
            pl.BlockSpec((tm, K), lambda i: (i, 0)),
            pl.BlockSpec((K, N), lambda i: (0, 0)),
            pl.BlockSpec((1, N), lambda i: (0, 0)),
        ],
        out_specs=pl.BlockSpec((tm, N), lambda i: (i, 0)),
        compiler_params=pltpu.CompilerParams(
            dimension_semantics=("parallel",)),
    )(a, b, bias)


def fused_mid(flat, fe_wt, fe_b, emb, fd_wt, fd_b, commitment, out_dtype):
    """flat:(B, 1024) bf16 -> (decoded (B, 1024), vq_loss scalar)."""
    B = flat.shape[0]
    d_out = fd_wt.shape[1]
    dec, loss = pl.pallas_call(
        functools.partial(_mid_kernel, commitment=commitment),
        out_shape=(jax.ShapeDtypeStruct((B, d_out), out_dtype),
                   jax.ShapeDtypeStruct((1, 1), jnp.float32)),
    )(flat, fe_wt, fe_b, emb, fd_wt, fd_b)
    return dec, loss[0, 0]


# ----------------------------------------------------------------------------
# Conv / ConvTranspose via NHWC im2col + Pallas GEMM
# ----------------------------------------------------------------------------
def _im2col_nhwc(x, k, stride, padding):
    """x:(B,H,W,C) -> patches (B*Ho*Wo, k*k*C) ordered (kh, kw, C)."""
    B, H, W, C = x.shape
    xp = jnp.pad(x, ((0, 0), (padding, padding), (padding, padding), (0, 0)))
    Ho = (H + 2 * padding - k) // stride + 1
    Wo = (W + 2 * padding - k) // stride + 1
    cols = []
    for i in range(k):
        for j in range(k):
            cols.append(xp[:, i:i + stride * Ho:stride,
                           j:j + stride * Wo:stride, :])
    patches = jnp.stack(cols, axis=3)                  # (B, Ho, Wo, k*k, C)
    return patches.reshape(B * Ho * Wo, k * k * C), Ho, Wo


def conv2d_nhwc(x, w_mat, bias, k, stride, padding, act, out_dtype):
    """x:(B,H,W,Cin) bf16, w_mat:(k*k*Cin, Cout) bf16, bias:(1,Cout)."""
    B = x.shape[0]
    patches, Ho, Wo = _im2col_nhwc(x, k, stride, padding)
    out = matmul_bias_act(patches.astype(jnp.bfloat16), w_mat, bias,
                          act=act, out_dtype=out_dtype)
    return out.reshape(B, Ho, Wo, -1)                  # already NHWC — no transpose


def conv_transpose2d_nhwc(x, wc_mat, bias4, act, out_dtype):
    """ConvTranspose2d(k=4, stride=2, padding=1) as one fused GEMM.

    Each output phase (oy%2, ox%2) is a 2x2 conv over the 1-padded input with
    a phase-specific tap subset of the 4x4 deconv kernel; the union of taps
    for all four phases is a 3x3 window, so a single 3x3 im2col GEMM against
    the phase-combined weight (9*Cin, 4*Cout) computes all phases at once
    (no zero-dilated input, ~2x fewer MXU FLOPs and 7x smaller patches than
    the dilated-conv lowering, bias+act fused)."""
    B, H, W, Cin = x.shape
    Cout = wc_mat.shape[1] // 4
    patches, _, _ = _im2col_nhwc(x, 3, 1, 1)           # (B*H*W, 9*Cin)
    out = matmul_bias_act(patches.astype(jnp.bfloat16), wc_mat, bias4,
                          act=act, out_dtype=out_dtype)
    out = out.reshape(B, H, W, 2, 2, Cout)             # (..., oy%2, ox%2, Cout)
    out = out.transpose(0, 1, 3, 2, 4, 5).reshape(B, 2 * H, 2 * W, Cout)
    return out


# ----------------------------------------------------------------------------
# Parameters: raw PyTorch-layout init + one-time kernel-layout preparation
# ----------------------------------------------------------------------------
def init_raw_params(key, image_channels=3, hidden_dim=64, num_embeddings=64):
    params = {}
    keys = iter(jax.random.split(key, 64))

    def unif(shape, bound):
        return jax.random.uniform(next(keys), shape, jnp.float32, -bound, bound)

    def conv_wb(cout, cin, k):
        bound = 1.0 / (cin * k * k) ** 0.5
        return unif((cout, cin, k, k), bound), unif((cout,), bound)

    def deconv_wb(cin, cout, k):
        bound = 1.0 / (cin * k * k) ** 0.5
        return unif((cin, cout, k, k), bound), unif((cout,), bound)

    def linear_wb(cout, cin):
        bound = 1.0 / cin ** 0.5
        return unif((cout, cin), bound), unif((cout,), bound)

    params["c1w"], params["c1b"] = conv_wb(32, image_channels, 4)
    params["c2w"], params["c2b"] = conv_wb(64, 32, 4)
    params["c3w"], params["c3b"] = conv_wb(128, 64, 4)
    params["c4w"], params["c4b"] = conv_wb(256, 128, 4)
    params["fe_w"], params["fe_b"] = linear_wb(hidden_dim, 256 * 4)
    params["emb"] = jax.random.uniform(
        next(keys), (num_embeddings, hidden_dim), jnp.float32,
        -1.0 / num_embeddings, 1.0 / num_embeddings)
    params["fd_w"], params["fd_b"] = linear_wb(256 * 4, hidden_dim)
    params["d1w"], params["d1b"] = deconv_wb(256, 128, 4)
    params["d2w"], params["d2b"] = deconv_wb(128, 64, 4)
    params["d3w"], params["d3b"] = deconv_wb(64, 32, 4)
    params["d4w"], params["d4b"] = deconv_wb(32, image_channels, 4)
    return params


def _prep_deconv_weight(w):
    """PyTorch ConvTranspose2d weight (Cin, Cout, 4, 4), stride 2, padding 1
    -> phase-combined GEMM weight (9*Cin, 4*Cout) bf16.
    Phase py reads padded rows {m+r}: py=0 uses (r=0 -> ky=3, r=1 -> ky=1),
    py=1 uses (r=1 -> ky=2, r=2 -> ky=0); same mapping for columns."""
    cin, cout = w.shape[0], w.shape[1]
    kmap = {(0, 0): 3, (0, 1): 1, (1, 1): 2, (1, 2): 0}   # (phase, offset) -> tap
    wc = jnp.zeros((3, 3, cin, 2, 2, cout), w.dtype)
    for (py, r), ky in kmap.items():
        for (px, c), kx in kmap.items():
            wc = wc.at[r, c, :, py, px, :].set(w[:, :, ky, kx])
    return wc.reshape(9 * cin, 4 * cout).astype(jnp.bfloat16)


def prepare_params(raw):
    """One-time conversion into kernel-ready layouts (done outside the jitted
    forward): NHWC-ordered bf16 GEMM weights, (1,N) f32 biases, NHWC-permuted
    fe/fd linears, phase-combined deconv weights."""
    p = {}
    for name in ("c1", "c2", "c3", "c4"):
        w, b = raw[name + "w"], raw[name + "b"]
        cout = w.shape[0]
        p[name + "w"] = w.transpose(2, 3, 1, 0).reshape(-1, cout).astype(jnp.bfloat16)
        p[name + "b"] = b.reshape(1, -1).astype(jnp.float32)

    hid = raw["fe_w"].shape[0]
    # encoder linear consumes NHWC-flat (h, w, c) features instead of (c, h, w)
    p["fe_wt"] = (raw["fe_w"].reshape(hid, 256, 2, 2).transpose(0, 2, 3, 1)
                  .reshape(hid, 256 * 4).T.astype(jnp.bfloat16))
    p["fe_b"] = raw["fe_b"].reshape(1, -1).astype(jnp.float32)
    p["emb"] = raw["emb"].astype(jnp.float32)
    # decoder linear produces NHWC-flat (h, w, c) features
    p["fd_wt"] = (raw["fd_w"].T.reshape(hid, 256, 2, 2).transpose(0, 2, 3, 1)
                  .reshape(hid, 256 * 4).astype(jnp.float32))
    p["fd_b"] = (raw["fd_b"].reshape(256, 2, 2).transpose(1, 2, 0)
                 .reshape(1, 256 * 4).astype(jnp.float32))

    for name in ("d1", "d2", "d3", "d4"):
        w, b = raw[name + "w"], raw[name + "b"]
        p[name + "w"] = _prep_deconv_weight(w)                 # (9*Cin, 4*Cout)
        p[name + "b"] = jnp.tile(b, 4).reshape(1, -1).astype(jnp.float32)
    return p


# ----------------------------------------------------------------------------
# Forward pass (semantics of ConvDeconvVQVAE.forward)
# ----------------------------------------------------------------------------
def conv_deconv_vqvae_forward(p, x, commitment_cost=0.25):
    B = x.shape[0]
    act_dt = jnp.bfloat16
    h = x.transpose(0, 2, 3, 1).astype(act_dt)                         # NCHW -> NHWC
    # encoder
    h = conv2d_nhwc(h, p["c1w"], p["c1b"], 4, 2, 1, "leaky_relu", act_dt)  # (B,16,16,32)
    h = conv2d_nhwc(h, p["c2w"], p["c2b"], 4, 2, 1, "leaky_relu", act_dt)  # (B,8,8,64)
    h = conv2d_nhwc(h, p["c3w"], p["c3b"], 4, 2, 1, "leaky_relu", act_dt)  # (B,4,4,128)
    h = conv2d_nhwc(h, p["c4w"], p["c4b"], 4, 2, 1, "leaky_relu", act_dt)  # (B,2,2,256)
    flat = h.reshape(B, -1)                                            # NHWC-flat (B,1024)

    # fused: fe-Linear+ReLU -> VectorQuantizer -> fd-Linear+ReLU
    dec, vq_loss = fused_mid(flat, p["fe_wt"], p["fe_b"], p["emb"],
                             p["fd_wt"], p["fd_b"], commitment_cost, act_dt)

    # decoder
    d = dec.reshape(B, 2, 2, 256)
    d = conv_transpose2d_nhwc(d, p["d1w"], p["d1b"], "relu", act_dt)       # (B,4,4,128)
    d = conv_transpose2d_nhwc(d, p["d2w"], p["d2b"], "relu", act_dt)       # (B,8,8,64)
    d = conv_transpose2d_nhwc(d, p["d3w"], p["d3b"], "relu", act_dt)       # (B,16,16,32)
    d = conv_transpose2d_nhwc(d, p["d4w"], p["d4b"], "sigmoid", jnp.float32)  # (B,32,32,3)
    return d.transpose(0, 3, 1, 2), vq_loss                            # NHWC -> NCHW


# ----------------------------------------------------------------------------
if __name__ == "__main__":
    key = jax.random.PRNGKey(0)
    pkey, xkey = jax.random.split(key)

    image_channels = 3
    hidden_dim = 64        # small but architecture-consistent hidden size
    num_embeddings = 64    # small codebook
    batch = 2

    raw = init_raw_params(pkey, image_channels, hidden_dim, num_embeddings)
    params = prepare_params(raw)
    # image_size must be 32: the encoder's Flatten->Linear(256*4) hardcodes it.
    x = jax.random.uniform(xkey, (batch, image_channels, 32, 32), jnp.float32)

    fwd = jax.jit(functools.partial(conv_deconv_vqvae_forward, commitment_cost=0.25))
    x_hat, vq_loss = fwd(params, x)
    jax.block_until_ready((x_hat, vq_loss))

    assert x_hat.shape == (batch, image_channels, 32, 32)
    assert x_hat.dtype == jnp.float32
    assert vq_loss.shape == ()
    assert bool(jnp.all((x_hat >= 0.0) & (x_hat <= 1.0)))  # sigmoid output
    print("KERNEL_OK")
</pallas_src>

<mosaic_0001>
module attributes {stable_mosaic.version = 11 : i64} {
  func.func @_mm_bias_act_kernel(%arg0: i32, %arg1: memref<256x48xbf16, #tpu.memory_space<vmem>>, %arg2: memref<48x32xbf16, #tpu.memory_space<vmem>>, %arg3: memref<1x32xf32, #tpu.memory_space<vmem>>, %arg4: memref<256x32xbf16, #tpu.memory_space<vmem>>) attributes {dimension_semantics = [#tpu.dimension_semantics<parallel>], iteration_bounds = array<i64: 2>, scalar_prefetch = 0 : i64, scratch_operands = 0 : i64, tpu.core_type = #tpu.core_type<tc>, window_params = [{transform_indices = @transform_0, window_bounds = array<i64: 256, 48>}, {pipeline_mode = #tpu.pipeline_mode<synchronous>, transform_indices = @transform_1, window_bounds = array<i64: 48, 32>}, {pipeline_mode = #tpu.pipeline_mode<synchronous>, transform_indices = @transform_2, window_bounds = array<i64: 1, 32>}, {transform_indices = @transform_3, window_bounds = array<i64: 256, 32>}]} {
    %c0 = arith.constant 0 : index
    %c0_0 = arith.constant 0 : index
    %0 = vector.load %arg1[%c0, %c0_0] : memref<256x48xbf16, #tpu.memory_space<vmem>>, vector<256x48xbf16>
    %c0_1 = arith.constant 0 : index
    %c0_2 = arith.constant 0 : index
    %1 = vector.load %arg2[%c0_1, %c0_2] : memref<48x32xbf16, #tpu.memory_space<vmem>>, vector<48x32xbf16>
    %cst = arith.constant dense<0.000000e+00> : vector<256x32xf32>
    %2 = tpu.matmul %0, %1, %cst {dimension_numbers = #tpu.dot_dimension_numbers<[1], [0], [0], [1], [0, 0, 1, 1], [], []>} : vector<256x48xbf16>, vector<48x32xbf16>, vector<256x32xf32> -> vector<256x32xf32>
    %c0_3 = arith.constant 0 : index
    %c0_4 = arith.constant 0 : index
    %3 = vector.load %arg3[%c0_3, %c0_4] : memref<1x32xf32, #tpu.memory_space<vmem>>, vector<1x32xf32>
    %4 = vector.broadcast %3 : vector<1x32xf32> to vector<256x32xf32>
    %5 = arith.addf %2, %4 : vector<256x32xf32>
    %cst_5 = arith.constant 0.000000e+00 : f32
    %6 = vector.broadcast %cst_5 : f32 to vector<256x32xf32>
    %7 = arith.cmpf ogt, %5, %6 : vector<256x32xf32>
    %cst_6 = arith.constant 2.000000e-01 : f32
    %8 = vector.broadcast %cst_6 : f32 to vector<256x32xf32>
    %9 = arith.mulf %8, %5 : vector<256x32xf32>
    %10 = arith.select %7, %5, %9 : vector<256x32xi1>, vector<256x32xf32>
    %11 = arith.truncf %10 : vector<256x32xf32> to vector<256x32xbf16>
    %c0_7 = arith.constant 0 : index
    %c0_8 = arith.constant 0 : index
    %12 = vector.load %arg4[%c0_7, %c0_8] : memref<256x32xbf16, #tpu.memory_space<vmem>>, vector<256x32xbf16>
    tpu.vector_store %arg4[%c0_7, %c0_8], %11 {strides = array<i32>} : memref<256x32xbf16, #tpu.memory_space<vmem>>, vector<256x32xbf16>,
    return
  }
  func.func @transform_0(%arg0: i32) -> (i32, i32) {
    %c0_i32 = arith.constant 0 : i32
    %c0_i32_0 = arith.constant 0 : i32
    return %arg0, %c0_i32 : i32, i32
  }
  func.func @transform_1(%arg0: i32) -> (i32, i32) {
    %c0_i32 = arith.constant 0 : i32
    %c0_i32_0 = arith.constant 0 : i32
    %c0_i32_1 = arith.constant 0 : i32
    return %c0_i32, %c0_i32_0 : i32, i32
  }
  func.func @transform_2(%arg0: i32) -> (i32, i32) {
    %c0_i32 = arith.constant 0 : i32
    %c0_i32_0 = arith.constant 0 : i32
    %c0_i32_1 = arith.constant 0 : i32
    return %c0_i32, %c0_i32_0 : i32, i32
  }
  func.func @transform_3(%arg0: i32) -> (i32, i32) {
    %c0_i32 = arith.constant 0 : i32
    %c0_i32_0 = arith.constant 0 : i32
    return %arg0, %c0_i32 : i32, i32
  }
}

module attributes {stable_mosaic.version = 11 : i64} {
  func.func @_mm_bias_act_kernel(%arg0: i32, %arg1: memref<64x512xbf16, #tpu.memory_space<vmem>>, %arg2: memref<512x64xbf16, #tpu.memory_space<vmem>>, %arg3: memref<1x64xf32, #tpu.memory_space<vmem>>, %arg4: memref<64x64xbf16, #tpu.memory_space<vmem>>) attributes {dimension_semantics = [#tpu.dimension_semantics<parallel>], iteration_bounds = array<i64: 2>, scalar_prefetch = 0 : i64, scratch_operands = 0 : i64, tpu.core_type = #tpu.core_type<tc>, window_params = [{transform_indices = @transform_0, window_bounds = array<i64: 64, 512>}, {pipeline_mode = #tpu.pipeline_mode<synchronous>, transform_indices = @transform_1, window_bounds = array<i64: 512, 64>}, {pipeline_mode = #tpu.pipeline_mode<synchronous>, transform_indices = @transform_2, window_bounds = array<i64: 1, 64>}, {transform_indices = @transform_3, window_bounds = array<i64: 64, 64>}]} {
    %c0 = arith.constant 0 : index
    %c0_0 = arith.constant 0 : index
    %0 = vector.load %arg1[%c0, %c0_0] : memref<64x512xbf16, #tpu.memory_space<vmem>>, vector<64x512xbf16>
    %c0_1 = arith.constant 0 : index
    %c0_2 = arith.constant 0 : index
    %1 = vector.load %arg2[%c0_1, %c0_2] : memref<512x64xbf16, #tpu.memory_space<vmem>>, vector<512x64xbf16>
    %cst = arith.constant dense<0.000000e+00> : vector<64x64xf32>
    %2 = tpu.matmul %0, %1, %cst {dimension_numbers = #tpu.dot_dimension_numbers<[1], [0], [0], [1], [0, 0, 1, 1], [], []>} : vector<64x512xbf16>, vector<512x64xbf16>, vector<64x64xf32> -> vector<64x64xf32>
    %c0_3 = arith.constant 0 : index
    %c0_4 = arith.constant 0 : index
    %3 = vector.load %arg3[%c0_3, %c0_4] : memref<1x64xf32, #tpu.memory_space<vmem>>, vector<1x64xf32>
    %4 = vector.broadcast %3 : vector<1x64xf32> to vector<64x64xf32>
    %5 = arith.addf %2, %4 : vector<64x64xf32>
    %cst_5 = arith.constant 0.000000e+00 : f32
    %6 = vector.broadcast %cst_5 : f32 to vector<64x64xf32>
    %7 = arith.cmpf ogt, %5, %6 : vector<64x64xf32>
    %cst_6 = arith.constant 2.000000e-01 : f32
    %8 = vector.broadcast %cst_6 : f32 to vector<64x64xf32>
    %9 = arith.mulf %8, %5 : vector<64x64xf32>
    %10 = arith.select %7, %5, %9 : vector<64x64xi1>, vector<64x64xf32>
    %11 = arith.truncf %10 : vector<64x64xf32> to vector<64x64xbf16>
    %c0_7 = arith.constant 0 : index
    %c0_8 = arith.constant 0 : index
    %12 = vector.load %arg4[%c0_7, %c0_8] : memref<64x64xbf16, #tpu.memory_space<vmem>>, vector<64x64xbf16>
    tpu.vector_store %arg4[%c0_7, %c0_8], %11 {strides = array<i32>} : memref<64x64xbf16, #tpu.memory_space<vmem>>, vector<64x64xbf16>,
    return
  }
  func.func @transform_0(%arg0: i32) -> (i32, i32) {
    %c0_i32 = arith.constant 0 : i32
    %c0_i32_0 = arith.constant 0 : i32
    return %arg0, %c0_i32 : i32, i32
  }
  func.func @transform_1(%arg0: i32) -> (i32, i32) {
    %c0_i32 = arith.constant 0 : i32
    %c0_i32_0 = arith.constant 0 : i32
    %c0_i32_1 = arith.constant 0 : i32
    return %c0_i32, %c0_i32_0 : i32, i32
  }
  func.func @transform_2(%arg0: i32) -> (i32, i32) {
    %c0_i32 = arith.constant 0 : i32
    %c0_i32_0 = arith.constant 0 : i32
    %c0_i32_1 = arith.constant 0 : i32
    return %c0_i32, %c0_i32_0 : i32, i32
  }
  func.func @transform_3(%arg0: i32) -> (i32, i32) {
    %c0_i32 = arith.constant 0 : i32
    %c0_i32_0 = arith.constant 0 : i32
    return %arg0, %c0_i32 : i32, i32
  }
}

module attributes {stable_mosaic.version = 11 : i64} {
  func.func @_mm_bias_act_kernel(%arg0: i32, %arg1: memref<16x1024xbf16, #tpu.memory_space<vmem>>, %arg2: memref<1024x128xbf16, #tpu.memory_space<vmem>>, %arg3: memref<1x128xf32, #tpu.memory_space<vmem>>, %arg4: memref<16x128xbf16, #tpu.memory_space<vmem>>) attributes {dimension_semantics = [#tpu.dimension_semantics<parallel>], iteration_bounds = array<i64: 2>, scalar_prefetch = 0 : i64, scratch_operands = 0 : i64, tpu.core_type = #tpu.core_type<tc>, window_params = [{transform_indices = @transform_0, window_bounds = array<i64: 16, 1024>}, {pipeline_mode = #tpu.pipeline_mode<synchronous>, transform_indices = @transform_1, window_bounds = array<i64: 1024, 128>}, {pipeline_mode = #tpu.pipeline_mode<synchronous>, transform_indices = @transform_2, window_bounds = array<i64: 1, 128>}, {transform_indices = @transform_3, window_bounds = array<i64: 16, 128>}]} {
    %c0 = arith.constant 0 : index
    %c0_0 = arith.constant 0 : index
    %0 = vector.load %arg1[%c0, %c0_0] : memref<16x1024xbf16, #tpu.memory_space<vmem>>, vector<16x1024xbf16>
    %c0_1 = arith.constant 0 : index
    %c0_2 = arith.constant 0 : index
    %1 = vector.load %arg2[%c0_1, %c0_2] : memref<1024x128xbf16, #tpu.memory_space<vmem>>, vector<1024x128xbf16>
    %cst = arith.constant dense<0.000000e+00> : vector<16x128xf32>
    %2 = tpu.matmul %0, %1, %cst {dimension_numbers = #tpu.dot_dimension_numbers<[1], [0], [0], [1], [0, 0, 1, 1], [], []>} : vector<16x1024xbf16>, vector<1024x128xbf16>, vector<16x128xf32> -> vector<16x128xf32>
    %c0_3 = arith.constant 0 : index
    %c0_4 = arith.constant 0 : index
    %3 = vector.load %arg3[%c0_3, %c0_4] : memref<1x128xf32, #tpu.memory_space<vmem>>, vector<1x128xf32>
    %4 = vector.broadcast %3 : vector<1x128xf32> to vector<16x128xf32>
    %5 = arith.addf %2, %4 : vector<16x128xf32>
    %cst_5 = arith.constant 0.000000e+00 : f32
    %6 = vector.broadcast %cst_5 : f32 to vector<16x128xf32>
    %7 = arith.cmpf ogt, %5, %6 : vector<16x128xf32>
    %cst_6 = arith.constant 2.000000e-01 : f32
    %8 = vector.broadcast %cst_6 : f32 to vector<16x128xf32>
    %9 = arith.mulf %8, %5 : vector<16x128xf32>
    %10 = arith.select %7, %5, %9 : vector<16x128xi1>, vector<16x128xf32>
    %11 = arith.truncf %10 : vector<16x128xf32> to vector<16x128xbf16>
    %c0_7 = arith.constant 0 : index
    %c0_8 = arith.constant 0 : index
    %12 = vector.load %arg4[%c0_7, %c0_8] : memref<16x128xbf16, #tpu.memory_space<vmem>>, vector<16x128xbf16>
    tpu.vector_store %arg4[%c0_7, %c0_8], %11 {strides = array<i32>} : memref<16x128xbf16, #tpu.memory_space<vmem>>, vector<16x128xbf16>,
    return
  }
  func.func @transform_0(%arg0: i32) -> (i32, i32) {
    %c0_i32 = arith.constant 0 : i32
    %c0_i32_0 = arith.constant 0 : i32
    return %arg0, %c0_i32 : i32, i32
  }
  func.func @transform_1(%arg0: i32) -> (i32, i32) {
    %c0_i32 = arith.constant 0 : i32
    %c0_i32_0 = arith.constant 0 : i32
    %c0_i32_1 = arith.constant 0 : i32
    return %c0_i32, %c0_i32_0 : i32, i32
  }
  func.func @transform_2(%arg0: i32) -> (i32, i32) {
    %c0_i32 = arith.constant 0 : i32
    %c0_i32_0 = arith.constant 0 : i32
    %c0_i32_1 = arith.constant 0 : i32
    return %c0_i32, %c0_i32_0 : i32, i32
  }
  func.func @transform_3(%arg0: i32) -> (i32, i32) {
    %c0_i32 = arith.constant 0 : i32
    %c0_i32_0 = arith.constant 0 : i32
    return %arg0, %c0_i32 : i32, i32
  }
}

module attributes {stable_mosaic.version = 11 : i64} {
  func.func @_mm_bias_act_kernel(%arg0: i32, %arg1: memref<8x2048xbf16, #tpu.memory_space<vmem>>, %arg2: memref<2048x256xbf16, #tpu.memory_space<vmem>>, %arg3: memref<1x256xf32, #tpu.memory_space<vmem>>, %arg4: memref<8x256xbf16, #tpu.memory_space<vmem>>) attributes {dimension_semantics = [#tpu.dimension_semantics<parallel>], iteration_bounds = array<i64: 1>, scalar_prefetch = 0 : i64, scratch_operands = 0 : i64, tpu.core_type = #tpu.core_type<tc>, window_params = [{transform_indices = @transform_0, window_bounds = array<i64: 8, 2048>}, {pipeline_mode = #tpu.pipeline_mode<synchronous>, transform_indices = @transform_1, window_bounds = array<i64: 2048, 256>}, {pipeline_mode = #tpu.pipeline_mode<synchronous>, transform_indices = @transform_2, window_bounds = array<i64: 1, 256>}, {transform_indices = @transform_3, window_bounds = array<i64: 8, 256>}]} {
    %c0 = arith.constant 0 : index
    %c0_0 = arith.constant 0 : index
    %0 = vector.load %arg1[%c0, %c0_0] : memref<8x2048xbf16, #tpu.memory_space<vmem>>, vector<8x2048xbf16>
    %c0_1 = arith.constant 0 : index
    %c0_2 = arith.constant 0 : index
    %1 = vector.load %arg2[%c0_1, %c0_2] : memref<2048x256xbf16, #tpu.memory_space<vmem>>, vector<2048x256xbf16>
    %cst = arith.constant dense<0.000000e+00> : vector<8x256xf32>
    %2 = tpu.matmul %0, %1, %cst {dimension_numbers = #tpu.dot_dimension_numbers<[1], [0], [0], [1], [0, 0, 1, 1], [], []>} : vector<8x2048xbf16>, vector<2048x256xbf16>, vector<8x256xf32> -> vector<8x256xf32>
    %c0_3 = arith.constant 0 : index
    %c0_4 = arith.constant 0 : index
    %3 = vector.load %arg3[%c0_3, %c0_4] : memref<1x256xf32, #tpu.memory_space<vmem>>, vector<1x256xf32>
    %4 = vector.broadcast %3 : vector<1x256xf32> to vector<8x256xf32>
    %5 = arith.addf %2, %4 : vector<8x256xf32>
    %cst_5 = arith.constant 0.000000e+00 : f32
    %6 = vector.broadcast %cst_5 : f32 to vector<8x256xf32>
    %7 = arith.cmpf ogt, %5, %6 : vector<8x256xf32>
    %cst_6 = arith.constant 2.000000e-01 : f32
    %8 = vector.broadcast %cst_6 : f32 to vector<8x256xf32>
    %9 = arith.mulf %8, %5 : vector<8x256xf32>
    %10 = arith.select %7, %5, %9 : vector<8x256xi1>, vector<8x256xf32>
    %11 = arith.truncf %10 : vector<8x256xf32> to vector<8x256xbf16>
    %c0_7 = arith.constant 0 : index
    %c0_8 = arith.constant 0 : index
    %12 = vector.load %arg4[%c0_7, %c0_8] : memref<8x256xbf16, #tpu.memory_space<vmem>>, vector<8x256xbf16>
    tpu.vector_store %arg4[%c0_7, %c0_8], %11 {strides = array<i32>} : memref<8x256xbf16, #tpu.memory_space<vmem>>, vector<8x256xbf16>,
    return
  }
  func.func @transform_0(%arg0: i32) -> (i32, i32) {
    %c0_i32 = arith.constant 0 : i32
    %c0_i32_0 = arith.constant 0 : i32
    return %arg0, %c0_i32 : i32, i32
  }
  func.func @transform_1(%arg0: i32) -> (i32, i32) {
    %c0_i32 = arith.constant 0 : i32
    %c0_i32_0 = arith.constant 0 : i32
    %c0_i32_1 = arith.constant 0 : i32
    return %c0_i32, %c0_i32_0 : i32, i32
  }
  func.func @transform_2(%arg0: i32) -> (i32, i32) {
    %c0_i32 = arith.constant 0 : i32
    %c0_i32_0 = arith.constant 0 : i32
    %c0_i32_1 = arith.constant 0 : i32
    return %c0_i32, %c0_i32_0 : i32, i32
  }
  func.func @transform_3(%arg0: i32) -> (i32, i32) {
    %c0_i32 = arith.constant 0 : i32
    %c0_i32_0 = arith.constant 0 : i32
    return %arg0, %c0_i32 : i32, i32
  }
}

module attributes {stable_mosaic.version = 11 : i64} {
  func.func @_mid_kernel(%arg0: memref<2x1024xbf16, #tpu.memory_space<vmem>>, %arg1: memref<1024x64xbf16, #tpu.memory_space<vmem>>, %arg2: memref<1x64xf32, #tpu.memory_space<vmem>>, %arg3: memref<64x64xf32, #tpu.memory_space<vmem>>, %arg4: memref<64x1024xf32, #tpu.memory_space<vmem>>, %arg5: memref<1x1024xf32, #tpu.memory_space<vmem>>, %arg6: memref<2x1024xbf16, #tpu.memory_space<vmem>>, %arg7: memref<1x1xf32, #tpu.memory_space<vmem>>) attributes {dimension_semantics = [], scalar_prefetch = 0 : i64, scratch_operands = 0 : i64, tpu.core_type = #tpu.core_type<tc>} {
    %c0 = arith.constant 0 : index
    %c0_0 = arith.constant 0 : index
    %0 = vector.load %arg0[%c0, %c0_0] : memref<2x1024xbf16, #tpu.memory_space<vmem>>, vector<2x1024xbf16>
    %c0_1 = arith.constant 0 : index
    %c0_2 = arith.constant 0 : index
    %1 = vector.load %arg1[%c0_1, %c0_2] : memref<1024x64xbf16, #tpu.memory_space<vmem>>, vector<1024x64xbf16>
    %cst = arith.constant dense<0.000000e+00> : vector<2x64xf32>
    %2 = tpu.matmul %0, %1, %cst {dimension_numbers = #tpu.dot_dimension_numbers<[1], [0], [0], [1], [0, 0, 1, 1], [], []>} : vector<2x1024xbf16>, vector<1024x64xbf16>, vector<2x64xf32> -> vector<2x64xf32>
    %c0_3 = arith.constant 0 : index
    %c0_4 = arith.constant 0 : index
    %3 = vector.load %arg2[%c0_3, %c0_4] : memref<1x64xf32, #tpu.memory_space<vmem>>, vector<1x64xf32>
    %4 = vector.broadcast %3 : vector<1x64xf32> to vector<2x64xf32>
    %5 = arith.addf %2, %4 : vector<2x64xf32>
    %cst_5 = arith.constant 0.000000e+00 : f32
    %6 = vector.broadcast %cst_5 : f32 to vector<2x64xf32>
    %7 = arith.maximumf %5, %6 : vector<2x64xf32>
    %c0_6 = arith.constant 0 : index
    %c0_7 = arith.constant 0 : index
    %8 = vector.load %arg3[%c0_6, %c0_7] : memref<64x64xf32, #tpu.memory_space<vmem>>, vector<64x64xf32>
    %9 = tpu.iota {dimensions = array<i32: 0>} : vector<64x1xi32>
    %10 = tpu.iota {dimensions = array<i32: 1>} : vector<1x64xi32>
    %11 = vector.extract_strided_slice %7 {offsets = [0, 0], sizes = [1, 64], strides = [1, 1]} : vector<2x64xf32> to vector<1x64xf32>
    %12 = vector.broadcast %11 : vector<1x64xf32> to vector<64x64xf32>
    %13 = arith.subf %12, %8 : vector<64x64xf32>
    %14 = arith.mulf %13, %13 : vector<64x64xf32>
    %cst_8 = arith.constant dense<0.000000e+00> : vector<64xf32>
    %15 = vector.multi_reduction <add>, %14, %cst_8 [1] : vector<64x64xf32> to vector<64xf32>
    %16 = vector.shape_cast %15 : vector<64xf32> to vector<64x1xf32>
    %cst_9 = arith.constant dense<0x7F800000> : vector<1xf32>
    %17 = vector.multi_reduction <minimumf>, %16, %cst_9 [0] : vector<64x1xf32> to vector<1xf32>
    %18 = vector.shape_cast %17 : vector<1xf32> to vector<1x1xf32>
    %19 = vector.broadcast %18 : vector<1x1xf32> to vector<64x1xf32>
    %20 = arith.cmpf ole, %16, %19 : vector<64x1xf32>
    %c64_i32 = arith.constant 64 : i32
    %21 = vector.broadcast %c64_i32 : i32 to vector<64x1xi32>
    %22 = arith.select %20, %9, %21 : vector<64x1xi1>, vector<64x1xi32>
    %cst_10 = arith.constant dense<2147483647> : vector<1xi32>
    %23 = vector.multi_reduction <minsi>, %22, %cst_10 [0] : vector<64x1xi32> to vector<1xi32>
    %24 = vector.shape_cast %23 : vector<1xi32> to vector<1x1xi32>
    %25 = vector.broadcast %24 : vector<1x1xi32> to vector<1x64xi32>
    %26 = arith.cmpi eq, %10, %25 : vector<1x64xi32>
    %27 = arith.extui %26 : vector<1x64xi1> to vector<1x64xi32>
    %28 = arith.sitofp %27 : vector<1x64xi32> to vector<1x64xf32>
    %29 = vector.extract_strided_slice %7 {offsets = [1, 0], sizes = [1, 64], strides = [1, 1]} : vector<2x64xf32> to vector<1x64xf32>
    %30 = vector.broadcast %29 : vector<1x64xf32> to vector<64x64xf32>
    %31 = arith.subf %30, %8 : vector<64x64xf32>
    %32 = arith.mulf %31, %31 : vector<64x64xf32>
    %cst_11 = arith.constant dense<0.000000e+00> : vector<64xf32>
    %33 = vector.multi_reduction <add>, %32, %cst_11 [1] : vector<64x64xf32> to vector<64xf32>
    %34 = vector.shape_cast %33 : vector<64xf32> to vector<64x1xf32>
    %cst_12 = arith.constant dense<0x7F800000> : vector<1xf32>
    %35 = vector.multi_reduction <minimumf>, %34, %cst_12 [0] : vector<64x1xf32> to vector<1xf32>
    %36 = vector.shape_cast %35 : vector<1xf32> to vector<1x1xf32>
    %37 = vector.broadcast %36 : vector<1x1xf32> to vector<64x1xf32>
    %38 = arith.cmpf ole, %34, %37 : vector<64x1xf32>
    %c64_i32_13 = arith.constant 64 : i32
    %39 = vector.broadcast %c64_i32_13 : i32 to vector<64x1xi32>
    %40 = arith.select %38, %9, %39 : vector<64x1xi1>, vector<64x1xi32>
    %cst_14 = arith.constant dense<2147483647> : vector<1xi32>
    %41 = vector.multi_reduction <minsi>, %40, %cst_14 [0] : vector<64x1xi32> to vector<1xi32>
    %42 = vector.shape_cast %41 : vector<1xi32> to vector<1x1xi32>
    %43 = vector.broadcast %42 : vector<1x1xi32> to vector<1x64xi32>
    %44 = arith.cmpi eq, %10, %43 : vector<1x64xi32>
    %45 = arith.extui %44 : vector<1x64xi1> to vector<1x64xi32>
    %46 = arith.sitofp %45 : vector<1x64xi32> to vector<1x64xf32>
    %47 = tpu.concatenate %28, %46 in 0 : vector<1x64xf32>, vector<1x64xf32> -> vector<2x64xf32>
    %cst_15 = arith.constant dense<0.000000e+00> : vector<2x64xf32>
    %48 = tpu.matmul %47, %8, %cst_15 {dimension_numbers = #tpu.dot_dimension_numbers<[1], [0], [0], [1], [0, 0, 1, 1], [], []>} : vector<2x64xf32>, vector<64x64xf32>, vector<2x64xf32> -> vector<2x64xf32>
    %49 = arith.subf %48, %7 : vector<2x64xf32>
    %50 = arith.mulf %49, %49 : vector<2x64xf32>
    %cst_16 = arith.constant dense<0.000000e+00> : vector<2xf32>
    %51 = vector.multi_reduction <add>, %50, %cst_16 [1] : vector<2x64xf32> to vector<2xf32>
    %52 = vector.shape_cast %51 : vector<2xf32> to vector<2x1xf32>
    %cst_17 = arith.constant dense<0.000000e+00> : vector<1xf32>
    %53 = vector.multi_reduction <add>, %52, %cst_17 [0] : vector<2x1xf32> to vector<1xf32>
    %54 = vector.shape_cast %53 : vector<1xf32> to vector<1x1xf32>
    %cst_18 = arith.constant 1.250000e+00 : f32
    %55 = vector.broadcast %cst_18 : f32 to vector<1x1xf32>
    %56 = arith.mulf %55, %54 : vector<1x1xf32>
    %cst_19 = arith.constant 1.280000e+02 : f32
    %57 = vector.broadcast %cst_19 : f32 to vector<1x1xf32>
    %58 = arith.divf %56, %57 : vector<1x1xf32>
    %c0_20 = arith.constant 0 : index
    %c0_21 = arith.constant 0 : index
    %59 = vector.load %arg7[%c0_20, %c0_21] : memref<1x1xf32, #tpu.memory_space<vmem>>, vector<1x1xf32>
    tpu.vector_store %arg7[%c0_20, %c0_21], %58 {strides = array<i32>} : memref<1x1xf32, #tpu.memory_space<vmem>>, vector<1x1xf32>,
    %c0_22 = arith.constant 0 : index
    %c0_23 = arith.constant 0 : index
    %60 = vector.load %arg4[%c0_22, %c0_23] : memref<64x1024xf32, #tpu.memory_space<vmem>>, vector<64x1024xf32>
    %cst_24 = arith.constant dense<0.000000e+00> : vector<2x1024xf32>
    %61 = tpu.matmul %48, %60, %cst_24 {dimension_numbers = #tpu.dot_dimension_numbers<[1], [0], [0], [1], [0, 0, 1, 1], [], []>} : vector<2x64xf32>, vector<64x1024xf32>, vector<2x1024xf32> -> vector<2x1024xf32>
    %c0_25 = arith.constant 0 : index
    %c0_26 = arith.constant 0 : index
    %62 = vector.load %arg5[%c0_25, %c0_26] : memref<1x1024xf32, #tpu.memory_space<vmem>>, vector<1x1024xf32>
    %63 = vector.broadcast %62 : vector<1x1024xf32> to vector<2x1024xf32>
    %64 = arith.addf %61, %63 : vector<2x1024xf32>
    %cst_27 = arith.constant 0.000000e+00 : f32
    %65 = vector.broadcast %cst_27 : f32 to vector<2x1024xf32>
    %66 = arith.maximumf %64, %65 : vector<2x1024xf32>
    %67 = arith.truncf %66 : vector<2x1024xf32> to vector<2x1024xbf16>
    %c0_28 = arith.constant 0 : index
    %c0_29 = arith.constant 0 : index
    %68 = vector.load %arg6[%c0_28, %c0_29] : memref<2x1024xbf16, #tpu.memory_space<vmem>>, vector<2x1024xbf16>
    tpu.vector_store %arg6[%c0_28, %c0_29], %67 {strides = array<i32>} : memref<2x1024xbf16, #tpu.memory_space<vmem>>, vector<2x1024xbf16>,
    return
  }
}

module attributes {stable_mosaic.version = 11 : i64} {
  func.func @_mm_bias_act_kernel(%arg0: i32, %arg1: memref<8x2304xbf16, #tpu.memory_space<vmem>>, %arg2: memref<2304x512xbf16, #tpu.memory_space<vmem>>, %arg3: memref<1x512xf32, #tpu.memory_space<vmem>>, %arg4: memref<8x512xbf16, #tpu.memory_space<vmem>>) attributes {dimension_semantics = [#tpu.dimension_semantics<parallel>], iteration_bounds = array<i64: 1>, scalar_prefetch = 0 : i64, scratch_operands = 0 : i64, tpu.core_type = #tpu.core_type<tc>, window_params = [{transform_indices = @transform_0, window_bounds = array<i64: 8, 2304>}, {pipeline_mode = #tpu.pipeline_mode<synchronous>, transform_indices = @transform_1, window_bounds = array<i64: 2304, 512>}, {pipeline_mode = #tpu.pipeline_mode<synchronous>, transform_indices = @transform_2, window_bounds = array<i64: 1, 512>}, {transform_indices = @transform_3, window_bounds = array<i64: 8, 512>}]} {
    %c0 = arith.constant 0 : index
    %c0_0 = arith.constant 0 : index
    %0 = vector.load %arg1[%c0, %c0_0] : memref<8x2304xbf16, #tpu.memory_space<vmem>>, vector<8x2304xbf16>
    %c0_1 = arith.constant 0 : index
    %c0_2 = arith.constant 0 : index
    %1 = vector.load %arg2[%c0_1, %c0_2] : memref<2304x512xbf16, #tpu.memory_space<vmem>>, vector<2304x512xbf16>
    %cst = arith.constant dense<0.000000e+00> : vector<8x512xf32>
    %2 = tpu.matmul %0, %1, %cst {dimension_numbers = #tpu.dot_dimension_numbers<[1], [0], [0], [1], [0, 0, 1, 1], [], []>} : vector<8x2304xbf16>, vector<2304x512xbf16>, vector<8x512xf32> -> vector<8x512xf32>
    %c0_3 = arith.constant 0 : index
    %c0_4 = arith.constant 0 : index
    %3 = vector.load %arg3[%c0_3, %c0_4] : memref<1x512xf32, #tpu.memory_space<vmem>>, vector<1x512xf32>
    %4 = vector.broadcast %3 : vector<1x512xf32> to vector<8x512xf32>
    %5 = arith.addf %2, %4 : vector<8x512xf32>
    %cst_5 = arith.constant 0.000000e+00 : f32
    %6 = vector.broadcast %cst_5 : f32 to vector<8x512xf32>
    %7 = arith.maximumf %5, %6 : vector<8x512xf32>
    %8 = arith.truncf %7 : vector<8x512xf32> to vector<8x512xbf16>
    %c0_6 = arith.constant 0 : index
    %c0_7 = arith.constant 0 : index
    %9 = vector.load %arg4[%c0_6, %c0_7] : memref<8x512xbf16, #tpu.memory_space<vmem>>, vector<8x512xbf16>
    tpu.vector_store %arg4[%c0_6, %c0_7], %8 {strides = array<i32>} : memref<8x512xbf16, #tpu.memory_space<vmem>>, vector<8x512xbf16>,
    return
  }
  func.func @transform_0(%arg0: i32) -> (i32, i32) {
    %c0_i32 = arith.constant 0 : i32
    %c0_i32_0 = arith.constant 0 : i32
    return %arg0, %c0_i32 : i32, i32
  }
  func.func @transform_1(%arg0: i32) -> (i32, i32) {
    %c0_i32 = arith.constant 0 : i32
    %c0_i32_0 = arith.constant 0 : i32
    %c0_i32_1 = arith.constant 0 : i32
    return %c0_i32, %c0_i32_0 : i32, i32
  }
  func.func @transform_2(%arg0: i32) -> (i32, i32) {
    %c0_i32 = arith.constant 0 : i32
    %c0_i32_0 = arith.constant 0 : i32
    %c0_i32_1 = arith.constant 0 : i32
    return %c0_i32, %c0_i32_0 : i32, i32
  }
  func.func @transform_3(%arg0: i32) -> (i32, i32) {
    %c0_i32 = arith.constant 0 : i32
    %c0_i32_0 = arith.constant 0 : i32
    return %arg0, %c0_i32 : i32, i32
  }
}

module attributes {stable_mosaic.version = 11 : i64} {
  func.func @_mm_bias_act_kernel(%arg0: i32, %arg1: memref<16x1152xbf16, #tpu.memory_space<vmem>>, %arg2: memref<1152x256xbf16, #tpu.memory_space<vmem>>, %arg3: memref<1x256xf32, #tpu.memory_space<vmem>>, %arg4: memref<16x256xbf16, #tpu.memory_space<vmem>>) attributes {dimension_semantics = [#tpu.dimension_semantics<parallel>], iteration_bounds = array<i64: 2>, scalar_prefetch = 0 : i64, scratch_operands = 0 : i64, tpu.core_type = #tpu.core_type<tc>, window_params = [{transform_indices = @transform_0, window_bounds = array<i64: 16, 1152>}, {pipeline_mode = #tpu.pipeline_mode<synchronous>, transform_indices = @transform_1, window_bounds = array<i64: 1152, 256>}, {pipeline_mode = #tpu.pipeline_mode<synchronous>, transform_indices = @transform_2, window_bounds = array<i64: 1, 256>}, {transform_indices = @transform_3, window_bounds = array<i64: 16, 256>}]} {
    %c0 = arith.constant 0 : index
    %c0_0 = arith.constant 0 : index
    %0 = vector.load %arg1[%c0, %c0_0] : memref<16x1152xbf16, #tpu.memory_space<vmem>>, vector<16x1152xbf16>
    %c0_1 = arith.constant 0 : index
    %c0_2 = arith.constant 0 : index
    %1 = vector.load %arg2[%c0_1, %c0_2] : memref<1152x256xbf16, #tpu.memory_space<vmem>>, vector<1152x256xbf16>
    %cst = arith.constant dense<0.000000e+00> : vector<16x256xf32>
    %2 = tpu.matmul %0, %1, %cst {dimension_numbers = #tpu.dot_dimension_numbers<[1], [0], [0], [1], [0, 0, 1, 1], [], []>} : vector<16x1152xbf16>, vector<1152x256xbf16>, vector<16x256xf32> -> vector<16x256xf32>
    %c0_3 = arith.constant 0 : index
    %c0_4 = arith.constant 0 : index
    %3 = vector.load %arg3[%c0_3, %c0_4] : memref<1x256xf32, #tpu.memory_space<vmem>>, vector<1x256xf32>
    %4 = vector.broadcast %3 : vector<1x256xf32> to vector<16x256xf32>
    %5 = arith.addf %2, %4 : vector<16x256xf32>
    %cst_5 = arith.constant 0.000000e+00 : f32
    %6 = vector.broadcast %cst_5 : f32 to vector<16x256xf32>
    %7 = arith.maximumf %5, %6 : vector<16x256xf32>
    %8 = arith.truncf %7 : vector<16x256xf32> to vector<16x256xbf16>
    %c0_6 = arith.constant 0 : index
    %c0_7 = arith.constant 0 : index
    %9 = vector.load %arg4[%c0_6, %c0_7] : memref<16x256xbf16, #tpu.memory_space<vmem>>, vector<16x256xbf16>
    tpu.vector_store %arg4[%c0_6, %c0_7], %8 {strides = array<i32>} : memref<16x256xbf16, #tpu.memory_space<vmem>>, vector<16x256xbf16>,
    return
  }
  func.func @transform_0(%arg0: i32) -> (i32, i32) {
    %c0_i32 = arith.constant 0 : i32
    %c0_i32_0 = arith.constant 0 : i32
    return %arg0, %c0_i32 : i32, i32
  }
  func.func @transform_1(%arg0: i32) -> (i32, i32) {
    %c0_i32 = arith.constant 0 : i32
    %c0_i32_0 = arith.constant 0 : i32
    %c0_i32_1 = arith.constant 0 : i32
    return %c0_i32, %c0_i32_0 : i32, i32
  }
  func.func @transform_2(%arg0: i32) -> (i32, i32) {
    %c0_i32 = arith.constant 0 : i32
    %c0_i32_0 = arith.constant 0 : i32
    %c0_i32_1 = arith.constant 0 : i32
    return %c0_i32, %c0_i32_0 : i32, i32
  }
  func.func @transform_3(%arg0: i32) -> (i32, i32) {
    %c0_i32 = arith.constant 0 : i32
    %c0_i32_0 = arith.constant 0 : i32
    return %arg0, %c0_i32 : i32, i32
  }
}

module attributes {stable_mosaic.version = 11 : i64} {
  func.func @_mm_bias_act_kernel(%arg0: i32, %arg1: memref<64x576xbf16, #tpu.memory_space<vmem>>, %arg2: memref<576x128xbf16, #tpu.memory_space<vmem>>, %arg3: memref<1x128xf32, #tpu.memory_space<vmem>>, %arg4: memref<64x128xbf16, #tpu.memory_space<vmem>>) attributes {dimension_semantics = [#tpu.dimension_semantics<parallel>], iteration_bounds = array<i64: 2>, scalar_prefetch = 0 : i64, scratch_operands = 0 : i64, tpu.core_type = #tpu.core_type<tc>, window_params = [{transform_indices = @transform_0, window_bounds = array<i64: 64, 576>}, {pipeline_mode = #tpu.pipeline_mode<synchronous>, transform_indices = @transform_1, window_bounds = array<i64: 576, 128>}, {pipeline_mode = #tpu.pipeline_mode<synchronous>, transform_indices = @transform_2, window_bounds = array<i64: 1, 128>}, {transform_indices = @transform_3, window_bounds = array<i64: 64, 128>}]} {
    %c0 = arith.constant 0 : index
    %c0_0 = arith.constant 0 : index
    %0 = vector.load %arg1[%c0, %c0_0] : memref<64x576xbf16, #tpu.memory_space<vmem>>, vector<64x576xbf16>
    %c0_1 = arith.constant 0 : index
    %c0_2 = arith.constant 0 : index
    %1 = vector.load %arg2[%c0_1, %c0_2] : memref<576x128xbf16, #tpu.memory_space<vmem>>, vector<576x128xbf16>
    %cst = arith.constant dense<0.000000e+00> : vector<64x128xf32>
    %2 = tpu.matmul %0, %1, %cst {dimension_numbers = #tpu.dot_dimension_numbers<[1], [0], [0], [1], [0, 0, 1, 1], [], []>} : vector<64x576xbf16>, vector<576x128xbf16>, vector<64x128xf32> -> vector<64x128xf32>
    %c0_3 = arith.constant 0 : index
    %c0_4 = arith.constant 0 : index
    %3 = vector.load %arg3[%c0_3, %c0_4] : memref<1x128xf32, #tpu.memory_space<vmem>>, vector<1x128xf32>
    %4 = vector.broadcast %3 : vector<1x128xf32> to vector<64x128xf32>
    %5 = arith.addf %2, %4 : vector<64x128xf32>
    %cst_5 = arith.constant 0.000000e+00 : f32
    %6 = vector.broadcast %cst_5 : f32 to vector<64x128xf32>
    %7 = arith.maximumf %5, %6 : vector<64x128xf32>
    %8 = arith.truncf %7 : vector<64x128xf32> to vector<64x128xbf16>
    %c0_6 = arith.constant 0 : index
    %c0_7 = arith.constant 0 : index
    %9 = vector.load %arg4[%c0_6, %c0_7] : memref<64x128xbf16, #tpu.memory_space<vmem>>, vector<64x128xbf16>
    tpu.vector_store %arg4[%c0_6, %c0_7], %8 {strides = array<i32>} : memref<64x128xbf16, #tpu.memory_space<vmem>>, vector<64x128xbf16>,
    return
  }
  func.func @transform_0(%arg0: i32) -> (i32, i32) {
    %c0_i32 = arith.constant 0 : i32
    %c0_i32_0 = arith.constant 0 : i32
    return %arg0, %c0_i32 : i32, i32
  }
  func.func @transform_1(%arg0: i32) -> (i32, i32) {
    %c0_i32 = arith.constant 0 : i32
    %c0_i32_0 = arith.constant 0 : i32
    %c0_i32_1 = arith.constant 0 : i32
    return %c0_i32, %c0_i32_0 : i32, i32
  }
  func.func @transform_2(%arg0: i32) -> (i32, i32) {
    %c0_i32 = arith.constant 0 : i32
    %c0_i32_0 = arith.constant 0 : i32
    %c0_i32_1 = arith.constant 0 : i32
    return %c0_i32, %c0_i32_0 : i32, i32
  }
  func.func @transform_3(%arg0: i32) -> (i32, i32) {
    %c0_i32 = arith.constant 0 : i32
    %c0_i32_0 = arith.constant 0 : i32
    return %arg0, %c0_i32 : i32, i32
  }
}

module attributes {stable_mosaic.version = 11 : i64} {
  func.func @_mm_bias_act_kernel(%arg0: i32, %arg1: memref<256x288xbf16, #tpu.memory_space<vmem>>, %arg2: memref<288x12xbf16, #tpu.memory_space<vmem>>, %arg3: memref<1x12xf32, #tpu.memory_space<vmem>>, %arg4: memref<256x12xf32, #tpu.memory_space<vmem>>) attributes {dimension_semantics = [#tpu.dimension_semantics<parallel>], iteration_bounds = array<i64: 2>, scalar_prefetch = 0 : i64, scratch_operands = 0 : i64, tpu.core_type = #tpu.core_type<tc>, window_params = [{transform_indices = @transform_0, window_bounds = array<i64: 256, 288>}, {pipeline_mode = #tpu.pipeline_mode<synchronous>, transform_indices = @transform_1, window_bounds = array<i64: 288, 12>}, {pipeline_mode = #tpu.pipeline_mode<synchronous>, transform_indices = @transform_2, window_bounds = array<i64: 1, 12>}, {transform_indices = @transform_3, window_bounds = array<i64: 256, 12>}]} {
    %c0 = arith.constant 0 : index
    %c0_0 = arith.constant 0 : index
    %0 = vector.load %arg1[%c0, %c0_0] : memref<256x288xbf16, #tpu.memory_space<vmem>>, vector<256x288xbf16>
    %c0_1 = arith.constant 0 : index
    %c0_2 = arith.constant 0 : index
    %1 = vector.load %arg2[%c0_1, %c0_2] : memref<288x12xbf16, #tpu.memory_space<vmem>>, vector<288x12xbf16>
    %cst = arith.constant dense<0.000000e+00> : vector<256x12xf32>
    %2 = tpu.matmul %0, %1, %cst {dimension_numbers = #tpu.dot_dimension_numbers<[1], [0], [0], [1], [0, 0, 1, 1], [], []>} : vector<256x288xbf16>, vector<288x12xbf16>, vector<256x12xf32> -> vector<256x12xf32>
    %c0_3 = arith.constant 0 : index
    %c0_4 = arith.constant 0 : index
    %3 = vector.load %arg3[%c0_3, %c0_4] : memref<1x12xf32, #tpu.memory_space<vmem>>, vector<1x12xf32>
    %4 = vector.broadcast %3 : vector<1x12xf32> to vector<256x12xf32>
    %5 = arith.addf %2, %4 : vector<256x12xf32>
    %6 = arith.negf %5 : vector<256x12xf32>
    %7 = math.exp %6 : vector<256x12xf32>
    %cst_5 = arith.constant 1.000000e+00 : f32
    %8 = vector.broadcast %cst_5 : f32 to vector<256x12xf32>
    %9 = arith.addf %8, %7 : vector<256x12xf32>
    %10 = arith.divf %8, %9 : vector<256x12xf32>
    %c0_6 = arith.constant 0 : index
    %c0_7 = arith.constant 0 : index
    %11 = vector.load %arg4[%c0_6, %c0_7] : memref<256x12xf32, #tpu.memory_space<vmem>>, vector<256x12xf32>
    tpu.vector_store %arg4[%c0_6, %c0_7], %10 {strides = array<i32>} : memref<256x12xf32, #tpu.memory_space<vmem>>, vector<256x12xf32>,
    return
  }
  func.func @transform_0(%arg0: i32) -> (i32, i32) {
    %c0_i32 = arith.constant 0 : i32
    %c0_i32_0 = arith.constant 0 : i32
    return %arg0, %c0_i32 : i32, i32
  }
  func.func @transform_1(%arg0: i32) -> (i32, i32) {
    %c0_i32 = arith.constant 0 : i32
    %c0_i32_0 = arith.constant 0 : i32
    %c0_i32_1 = arith.constant 0 : i32
    return %c0_i32, %c0_i32_0 : i32, i32
  }
  func.func @transform_2(%arg0: i32) -> (i32, i32) {
    %c0_i32 = arith.constant 0 : i32
    %c0_i32_0 = arith.constant 0 : i32
    %c0_i32_1 = arith.constant 0 : i32
    return %c0_i32, %c0_i32_0 : i32, i32
  }
  func.func @transform_3(%arg0: i32) -> (i32, i32) {
    %c0_i32 = arith.constant 0 : i32
    %c0_i32_0 = arith.constant 0 : i32
    return %arg0, %c0_i32 : i32, i32
  }
}

</mosaic_0001>

<llo_original>
// kernel: conv_deconv_vqvae_forward.9
$region0: #{conv_deconv_vqvae_forward.9}
  #allocation0 [shape = 'u32[]', space=smem, size = 0x4, offset = 0x4, fixed_abs, tag = 'smem constant byte address 0x4 - core index']
  #allocation1 [shape = 'u32[144,128]{1,0:T(1,128)}', space=vmem, size = 0x12000, scoped, tag = 'internal scratch']
  %s0 = inlined_call_operand.vmem [shape: bf16[512,48], index: 0, kind: input, shape index: {}]
  %s1 = inlined_call_operand.vmem [shape: bf16[48,32], index: 1, kind: input, shape index: {}]
  %s2 = inlined_call_operand.vmem [shape: f32[1,32], index: 2, kind: input, shape index: {}]
  %s3 = inlined_call_operand.vmem [shape: bf16[512,32], index: 3, kind: output, shape index: {}]
  %s4 = sld [smem:[#allocation0]]
  $region45: #{conv_deconv_vqvae_forward.9} parent=0
    _
  %s6 = ssub.s32 1, %s4
  %s7 = scalar_select 0, %s6, %s4
  loop: start=0, step=1, limit=4
  $region2: #{conv_deconv_vqvae_forward.9} parent=0 // loop_pre_header
    _
  $region3: #{conv_deconv_vqvae_forward.9} parent=0 // loop_header
    %s9 = sphi 0, %s13
    %p10 = scmp.ge.s32.totalorder %s9, 4
    %s19 = sphi 0, %s21
    %s22 = sphi 0, %s19
    %s23 = sphi 0, %s22
    %s39 = sphi 0, %s23
    %s43 = sphi 0, %s43
    %s45 = sphi 0, %s43
    %s46 = sphi 0, %s45
    %s60 = sphi 0, %s46
    %s64 = sphi 0, %s64
    %s66 = sphi 0, %s64
    %s67 = sphi 0, %s66
    %s81 = sphi 0, %s67
    %s87 = sphi 0, %s89
    %s90 = sphi 0, %s87
    %s91 = sphi 0, %s90
    %s107 = sphi 0, %s91
  $region4: #{conv_deconv_vqvae_forward.9} parent=0 // loop_header_branch
    %12 = sbr.rel (%p10) target = $region8
  $region5: #{conv_deconv_vqvae_forward.9} parent=0 // loop_body
    %s14 = ssub.s32 %s9, 1
    %s15 = ssub.s32 %s9, 2
    %s16 = sadd.s32 %s9, 1
    %s17 = ssub.s32 %s9, %s16
    %p18 = scmp.eq.s32.totalorder %s17, 0
    %s20 = sadd.s32 %s19, 1
    %s21 = scalar_select %p18, %s19, %s20
    %p24 = pneg %p18
    %p25 = scmp.eq.s32.totalorder %s9, 1
    %p26 = por %p24, %p25
    %p27 = scmp.ne.s32.totalorder %s19, %s22
    %p28 = scmp.eq.s32.totalorder %s9, 0
    %p29 = por %p27, %p28
    %p30 = scmp.ne.s32.totalorder %s19, %s22
    %p31 = scmp.eq.s32.totalorder %s14, 1
    %p32 = por %p30, %p31
    %p33 = scmp.ne.s32.totalorder %s22, %s23
    %p34 = scmp.eq.s32.totalorder %s14, 0
    %p35 = por %p33, %p34
    %p36 = scmp.ne.s32.totalorder %s22, %s23
    %p37 = scmp.eq.s32.totalorder %s15, 1
    %p38 = por %p36, %p37
    %p40 = scmp.ne.s32.totalorder %s23, %s39
    %p41 = scmp.eq.s32.totalorder %s15, 0
    %p42 = por %p40, %p41
    %s44 = sadd.s32 %s43, 1
    %p47 = scmp.eq.s32.totalorder %s9, 1
    %p48 = scmp.ne.s32.totalorder %s43, %s45
    %p49 = scmp.eq.s32.totalorder %s9, 0
    %p50 = por %p48, %p49
    %p51 = scmp.ne.s32.totalorder %s43, %s45
    %p52 = scmp.eq.s32.totalorder %s14, 1
    %p53 = por %p51, %p52
    %p54 = scmp.ne.s32.totalorder %s45, %s46
    %p55 = scmp.eq.s32.totalorder %s14, 0
    %p56 = por %p54, %p55
    %p57 = scmp.ne.s32.totalorder %s45, %s46
    %p58 = scmp.eq.s32.totalorder %s15, 1
    %p59 = por %p57, %p58
    %p61 = scmp.ne.s32.totalorder %s46, %s60
    %p62 = scmp.eq.s32.totalorder %s15, 0
    %p63 = por %p61, %p62
    %s65 = sadd.s32 %s64, 1
    %p68 = scmp.eq.s32.totalorder %s9, 1
    %p69 = scmp.ne.s32.totalorder %s64, %s66
    %p70 = scmp.eq.s32.totalorder %s9, 0
    %p71 = por %p69, %p70
    %p72 = scmp.ne.s32.totalorder %s64, %s66
    %p73 = scmp.eq.s32.totalorder %s14, 1
    %p74 = por %p72, %p73
    %p75 = scmp.ne.s32.totalorder %s66, %s67
    %p76 = scmp.eq.s32.totalorder %s14, 0
    %p77 = por %p75, %p76
    %p78 = scmp.ne.s32.totalorder %s66, %s67
    %p79 = scmp.eq.s32.totalorder %s15, 1
    %p80 = por %p78, %p79
    %p82 = scmp.ne.s32.totalorder %s67, %s81
    %p83 = scmp.eq.s32.totalorder %s15, 0
    %p84 = por %p82, %p83
    %s85 = ssub.s32 %s9, %s16
    %p86 = scmp.eq.s32.totalorder %s85, 0
    %s88 = sadd.s32 %s87, 1
    %s89 = scalar_select %p86, %s87, %s88
    %p92 = pneg %p86
    %p93 = scmp.eq.s32.totalorder %s9, 1
    %p94 = por %p92, %p93
    %p95 = scmp.ne.s32.totalorder %s87, %s90
    %p96 = scmp.eq.s32.totalorder %s9, 0
    %p97 = por %p95, %p96
    %p98 = scmp.ne.s32.totalorder %s87, %s90
    %p99 = scmp.eq.s32.totalorder %s14, 1
    %p100 = por %p98, %p99
    %p101 = scmp.ne.s32.totalorder %s90, %s91
    %p102 = scmp.eq.s32.totalorder %s14, 0
    %p103 = por %p101, %p102
    %p104 = scmp.ne.s32.totalorder %s90, %s91
    %p105 = scmp.eq.s32.totalorder %s15, 1
    %p106 = por %p104, %p105
    %p108 = scmp.ne.s32.totalorder %s91, %s107
    %p109 = scmp.eq.s32.totalorder %s15, 0
    %p110 = por %p108, %p109
    %p111 = scmp.le.s32.totalorder 1, %s9
    %p112 = scmp.lt.s32.totalorder %s9, 3
    %p113 = pnand %p111, %p112
    %p114 = pneg %p113
    // Predicated region
    $region9: #{conv_deconv_vqvae_forward.9} parent=5 // pred_check
      _
    $region10: #{conv_deconv_vqvae_forward.9} parent=5 // pred_check_branch
      %116 = sbr.rel (%p113) target = $region12
    $region11: #{conv_deconv_vqvae_forward.9} parent=5 // pred_region
      %s117 = ssub.s32 %s9, 1
      // Predicated region
      $region13: #{conv_deconv_vqvae_forward.9} parent=11 // pred_check
        %p118 = pneg %p56
      $region14: #{conv_deconv_vqvae_forward.9} parent=11 // pred_check_branch
        %120 = sbr.rel (%p118) target = $region16
      $region15: #{conv_deconv_vqvae_forward.9} parent=11 // pred_region
        _
      $region16: #{conv_deconv_vqvae_forward.9} parent=11 // pred_fallthru
        _
      // Predicated region
      $region17: #{conv_deconv_vqvae_forward.9} parent=11 // pred_check
        %p121 = pneg %p77
      $region18: #{conv_deconv_vqvae_forward.9} parent=11 // pred_check_branch
        %123 = sbr.rel (%p121) target = $region20
      $region19: #{conv_deconv_vqvae_forward.9} parent=11 // pred_region
        _
      $region20: #{conv_deconv_vqvae_forward.9} parent=11 // pred_fallthru
        _
    $region12: #{conv_deconv_vqvae_forward.9} parent=5 // pred_fallthru
      _
    %p124 = scmp.lt.s32.totalorder %s9, 2
    // Predicated region
    $region21: #{conv_deconv_vqvae_forward.9} parent=5 // pred_check
      %p125 = pneg %p124
    $region22: #{conv_deconv_vqvae_forward.9} parent=5 // pred_check_branch
      %127 = sbr.rel (%p125) target = $region24
    $region23: #{conv_deconv_vqvae_forward.9} parent=5 // pred_region
      // Predicated region
      $region25: #{conv_deconv_vqvae_forward.9} parent=23 // pred_check
        %p128 = pneg %p29
      $region26: #{conv_deconv_vqvae_forward.9} parent=23 // pred_check_branch
        %130 = sbr.rel (%p128) target = $region28
      $region27: #{conv_deconv_vqvae_forward.9} parent=23 // pred_region
        %s131 = smul.u32 32, %s9
        %p132 = scmp.lt.s32.totalorder %s131, 63
        %s133 = scalar_select %p132, %s131, 63
        %s134 = smul.addr %s133, 4
        %s135 = scalar_lea.vmem %s0, %s134
        %s136 = smul.u32 32, %s9
      $region28: #{conv_deconv_vqvae_forward.9} parent=23 // pred_fallthru
        _
    $region24: #{conv_deconv_vqvae_forward.9} parent=5 // pred_fallthru
      _
    %p137 = scmp.le.s32.totalorder 1, %s9
    %p138 = scmp.lt.s32.totalorder %s9, 3
    %p139 = pnand %p137, %p138
    %p140 = pneg %p139
    // Predicated region
    $region29: #{conv_deconv_vqvae_forward.9} parent=5 // pred_check
      _
    $region30: #{conv_deconv_vqvae_forward.9} parent=5 // pred_check_branch
      %142 = sbr.rel (%p139) target = $region32
    $region31: #{conv_deconv_vqvae_forward.9} parent=5 // pred_region
      %s143 = ssub.s32 %s9, 1
      %s144 = smul.u32 32, %s14
      %p145 = scmp.lt.s32.totalorder %s144, 63
      %s146 = scalar_select %p145, %s144, 63
      %s147 = smul.addr %s146, 4
      %s148 = scalar_lea.vmem %s0, %s147
      %p149 = pneg %p35
      %p150 = pneg %p32
      %p151 = pneg %p56
      %p152 = pneg %p53
      %p153 = pneg %p77
      %p154 = pneg %p74
      %p155 = pneg %p103
      %p156 = pneg %p100
      %s157 = smul.u32 32, %s14
      %p158 = scmp.lt.s32.totalorder %s157, 63
      %s159 = scalar_select %p158, %s157, 63
      %s160 = smul.addr %s159, 4
      %s161 = scalar_lea.vmem %s3, %s160
      %s162 = smul.u32 32, %s14
      %p163 = scmp.lt.s32.totalorder %s162, 63
      %s164 = scalar_select %p163, %s162, 63
      %s165 = smul.addr %s164, 4
      %s166 = scalar_lea.vmem %s0, %s165
      %s167 = smul.u32 32, %s14
      %s168 = smul.u32 32, %s14
      %p169 = scmp.lt.s32.totalorder %s168, 63
      %s170 = scalar_select %p169, %s168, 63
      %s171 = smul.addr %s170, 4
      %s172 = scalar_lea.vmem %s3, %s171
      %s173 = smul.u32 32, %s14
      %v175 = vld [vmem:[%s166] sm:$0xf]
      %v176 = vld [vmem:[%s166 + $0x4] sm:$0xf]
      %v177 = vld [vmem:[%s166 + $0x8] sm:$0xf]
      %v178 = vld [vmem:[%s166 + $0xc] sm:$0xf]
      %v179 = vld [vmem:[%s166 + $0x10] sm:$0xf]
      %v180 = vld [vmem:[%s166 + $0x14] sm:$0xf]
      %v181 = vld [vmem:[%s166 + $0x18] sm:$0xf]
      %v182 = vld [vmem:[%s166 + $0x1c] sm:$0xf]
      %v183 = vld [vmem:[%s166 + $0x20] sm:$0xf]
      %v184 = vld [vmem:[%s166 + $0x24] sm:$0xf]
      %v185 = vld [vmem:[%s166 + $0x28] sm:$0xf]
      %v186 = vld [vmem:[%s166 + $0x2c] sm:$0xf]
      %v187 = vld [vmem:[%s166 + $0x30] sm:$0xf]
      %v188 = vld [vmem:[%s166 + $0x34] sm:$0xf]
      %v189 = vld [vmem:[%s166 + $0x38] sm:$0xf]
      %v190 = vld [vmem:[%s166 + $0x3c] sm:$0xf]
      %v191 = vld [vmem:[%s166 + $0x40] sm:$0xf]
      %v192 = vld [vmem:[%s166 + $0x44] sm:$0xf]
      %v193 = vld [vmem:[%s166 + $0x48] sm:$0xf]
      %v194 = vld [vmem:[%s166 + $0x4c] sm:$0xf]
      %v195 = vld [vmem:[%s166 + $0x50] sm:$0xf]
      %v196 = vld [vmem:[%s166 + $0x54] sm:$0xf]
      %v197 = vld [vmem:[%s166 + $0x58] sm:$0xf]
      %v198 = vld [vmem:[%s166 + $0x5c] sm:$0xf]
      %v199 = vld [vmem:[%s166 + $0x60] sm:$0xf]
      %v200 = vld [vmem:[%s166 + $0x64] sm:$0xf]
      %v201 = vld [vmem:[%s166 + $0x68] sm:$0xf]
      %v202 = vld [vmem:[%s166 + $0x6c] sm:$0xf]
      %v203 = vld [vmem:[%s166 + $0x70] sm:$0xf]
      %v204 = vld [vmem:[%s166 + $0x74] sm:$0xf]
      %v205 = vld [vmem:[%s166 + $0x78] sm:$0xf]
      %v206 = vld [vmem:[%s166 + $0x7c] sm:$0xf]
      %v207 = vld [vmem:[%s1] sm:$0xf]
      %v208 = vld [vmem:[%s1 + $0x4] sm:$0xf]
      %v209 = vld [vmem:[%s1 + $0x8] sm:$0xf]
      %v210 = vld [vmem:[%s1 + $0xc] sm:$0xf]
      %v211 = vld [vmem:[%s1 + $0x10] sm:$0xf]
      %v212 = vld [vmem:[%s1 + $0x14] sm:$0xf]
      %v213 = vld [vmem:[%s2] sm:$0x1]
      %v215 = vlaneseq
      %v216 = vshrl.u32 %v215, 7
      %v217 = vsub.s32 0, %v216
      %v218 = vrot.slane %v213, %v217
      %v252 = vunpack.c.l.b16 %v175
      %v253 = vunpack.c.l.b16 %v176
      %v254 = vunpack.c.l.b16 %v177
      %v255 = vunpack.c.l.b16 %v178
      %v256 = vunpack.c.l.b16 %v179
      %v257 = vunpack.c.l.b16 %v180
      %v258 = vunpack.c.l.b16 %v181
      %v259 = vunpack.c.l.b16 %v182
      %v260 = vunpack.c.l.b16 %v183
      %v261 = vunpack.c.l.b16 %v184
      %v262 = vunpack.c.l.b16 %v185
      %v263 = vunpack.c.l.b16 %v186
      %v264 = vunpack.c.l.b16 %v187
      %v265 = vunpack.c.l.b16 %v188
      %v266 = vunpack.c.l.b16 %v189
      %v267 = vunpack.c.l.b16 %v190
      %v268 = vunpack.c.l.b16 %v191
      %v269 = vunpack.c.l.b16 %v192
      %v270 = vunpack.c.l.b16 %v193
      %v271 = vunpack.c.l.b16 %v194
      %v272 = vunpack.c.l.b16 %v195
      %v273 = vunpack.c.l.b16 %v196
      %v274 = vunpack.c.l.b16 %v197
      %v275 = vunpack.c.l.b16 %v198
      %v276 = vunpack.c.l.b16 %v199
      %v277 = vunpack.c.l.b16 %v200
      %v278 = vunpack.c.l.b16 %v201
      %v279 = vunpack.c.l.b16 %v202
      %v280 = vunpack.c.l.b16 %v203
      %v281 = vunpack.c.l.b16 %v204
      %v282 = vunpack.c.l.b16 %v205
      %v283 = vunpack.c.l.b16 %v206
      %v284 = vpack.c.b16 %v253, %v252
      %v285 = vpack.c.b16 %v255, %v254
      %v286 = vpack.c.b16 %v257, %v256
      %v287 = vpack.c.b16 %v259, %v258
      %v288 = vpack.c.b16 %v261, %v260
      %v289 = vpack.c.b16 %v263, %v262
      %v290 = vpack.c.b16 %v265, %v264
      %v291 = vpack.c.b16 %v267, %v266
      %v292 = vpack.c.b16 %v269, %v268
      %v293 = vpack.c.b16 %v271, %v270
      %v294 = vpack.c.b16 %v273, %v272
      %v295 = vpack.c.b16 %v275, %v274
      %v296 = vpack.c.b16 %v277, %v276
      %v297 = vpack.c.b16 %v279, %v278
      %v298 = vpack.c.b16 %v281, %v280
      %v299 = vpack.c.b16 %v283, %v282
      %v306 = vunpack.c.l.b16 %v207
      %v307 = vunpack.c.l.b16 %v208
      %v308 = vunpack.c.l.b16 %v209
      %v309 = vunpack.c.l.b16 %v210
      %v310 = vunpack.c.l.b16 %v211
      %v311 = vunpack.c.l.b16 %v212
      %v312 = vpack.c.b16 %v307, %v306
      %v313 = vpack.c.b16 %v309, %v308
      %v314 = vpack.c.b16 %v311, %v310
      %vm318 = vcmask 392192
      %v320 = vsel %vm318, %v284, 0
      %v323 = vsel %vm318, %v285, 0
      %v326 = vsel %vm318, %v286, 0
      %v329 = vsel %vm318, %v287, 0
      %v332 = vsel %vm318, %v288, 0
      %v335 = vsel %vm318, %v289, 0
      %v338 = vsel %vm318, %v290, 0
      %v341 = vsel %vm318, %v291, 0
      %v344 = vsel %vm318, %v292, 0
      %v347 = vsel %vm318, %v293, 0
      %v350 = vsel %vm318, %v294, 0
      %v353 = vsel %vm318, %v295, 0
      %v356 = vsel %vm318, %v296, 0
      %v359 = vsel %vm318, %v297, 0
      %v362 = vsel %vm318, %v298, 0
      %v365 = vsel %vm318, %v299, 0
      %367 = vmatprep.subr.bf16.mxu0 0
      %368 = vmatpush1.bf16.msra.mxu0 %v312
      %369 = vmatprep.subr.bf16.mxu0 0
      %370 = vmatpush1.bf16.msra.mxu0 %v313
      %371 = vmatprep.subr.bf16.mxu0 0
      %372 = vmatpush1.bf16.msra.mxu0 %v314
      %373 = vmatprep.subr.bf16.mxu0 0
      %374 = vmatpush1.bf16.msra.mxu0 0
      %375 = vmatprep.subr.bf16.mxu0 0
      %376 = vmatpush1.bf16.msra.mxu0 0
      %377 = vmatprep.subr.bf16.mxu0 0
      %378 = vmatpush1.bf16.msra.mxu0 0
      %379 = vmatprep.subr.bf16.mxu0 0
      %380 = vmatpush1.bf16.msra.mxu0 0
      %381 = vmatprep.subr.bf16.mxu0 0
      %382 = vmatpush1.bf16.msra.mxu0 0
      %383 = vmatprep.subr.bf16.mxu0 0
      %384 = vmatpush1.bf16.msra.mxu0 0
      %385 = vmatprep.subr.bf16.mxu0 0
      %386 = vmatpush1.bf16.msra.mxu0 0
      %387 = vmatprep.subr.bf16.mxu0 0
      %388 = vmatpush1.bf16.msra.mxu0 0
      %389 = vmatprep.subr.bf16.mxu0 0
      %390 = vmatpush1.bf16.msra.mxu0 0
      %391 = vmatprep.subr.bf16.mxu0 0
      %392 = vmatpush1.bf16.msra.mxu0 0
      %393 = vmatprep.subr.bf16.mxu0 0
      %394 = vmatpush1.bf16.msra.mxu0 0
      %395 = vmatprep.subr.bf16.mxu0 0
      %396 = vmatpush1.bf16.msra.mxu0 0
      %397 = vmatprep.subr.bf16.mxu0 0
      %398 = vmatpush1.bf16.msra.mxu0 0
      %399 = vmatprep.mubr.bf16.mxu0 0
      %400 = vmatmul.mubr.bf16.gmra.mrb[0].mxu0 %v320
      %v401 = vpop.f32.mrb[0].mxu0
      %v402 = vadd.f32 %v218, %v401
      %v403 = vpop.f32.mrb[0].mxu0
      %v404 = vpop.f32.mrb[0].mxu0
      %v405 = vadd.f32 %v218, %v404
      %v406 = vpop.f32.mrb[0].mxu0
      %407 = vmatprep.mubr.bf16.mxu0 0
      %408 = vmatmul.mubr.bf16.gmra.mrb[0].mxu0 %v323
      %v409 = vpop.f32.mrb[0].mxu0
      %v410 = vadd.f32 %v218, %v409
      %v411 = vpop.f32.mrb[0].mxu0
      %v412 = vpop.f32.mrb[0].mxu0
      %v413 = vadd.f32 %v218, %v412
      %v414 = vpop.f32.mrb[0].mxu0
      %415 = vmatprep.mubr.bf16.mxu0 0
      %416 = vmatmul.mubr.bf16.gmra.mrb[0].mxu0 %v326
      %v417 = vpop.f32.mrb[0].mxu0
      %v418 = vadd.f32 %v218, %v417
      %v419 = vpop.f32.mrb[0].mxu0
      %v420 = vpop.f32.mrb[0].mxu0
      %v421 = vadd.f32 %v218, %v420
      %v422 = vpop.f32.mrb[0].mxu0
      %423 = vmatprep.mubr.bf16.mxu0 0
      %424 = vmatmul.mubr.bf16.gmra.mrb[0].mxu0 %v329
      %v425 = vpop.f32.mrb[0].mxu0
      %v426 = vadd.f32 %v218, %v425
      %v427 = vpop.f32.mrb[0].mxu0
      %v428 = vpop.f32.mrb[0].mxu0
      %v429 = vadd.f32 %v218, %v428
      %v430 = vpop.f32.mrb[0].mxu0
      %431 = vmatprep.mubr.bf16.mxu0 0
      %432 = vmatmul.mubr.bf16.gmra.mrb[0].mxu0 %v332
      %v433 = vpop.f32.mrb[0].mxu0
      %v434 = vadd.f32 %v218, %v433
      %v435 = vpop.f32.mrb[0].mxu0
      %v436 = vpop.f32.mrb[0].mxu0
      %v437 = vadd.f32 %v218, %v436
      %v438 = vpop.f32.mrb[0].mxu0
      %439 = vmatprep.mubr.bf16.mxu0 0
      %440 = vmatmul.mubr.bf16.gmra.mrb[0].mxu0 %v335
      %v441 = vpop.f32.mrb[0].mxu0
      %v442 = vadd.f32 %v218, %v441
      %v443 = vpop.f32.mrb[0].mxu0
      %v444 = vpop.f32.mrb[0].mxu0
      %v445 = vadd.f32 %v218, %v444
      %v446 = vpop.f32.mrb[0].mxu0
      %447 = vmatprep.mubr.bf16.mxu0 0
      %448 = vmatmul.mubr.bf16.gmra.mrb[0].mxu0 %v338
      %v449 = vpop.f32.mrb[0].mxu0
      %v450 = vadd.f32 %v218, %v449
      %v451 = vpop.f32.mrb[0].mxu0
      %v452 = vpop.f32.mrb[0].mxu0
      %v453 = vadd.f32 %v218, %v452
      %v454 = vpop.f32.mrb[0].mxu0
      %455 = vmatprep.mubr.bf16.mxu0 0
      %456 = vmatmul.mubr.bf16.gmra.mrb[0].mxu0 %v341
      %v457 = vpop.f32.mrb[0].mxu0
      %v458 = vadd.f32 %v218, %v457
      %v459 = vpop.f32.mrb[0].mxu0
      %v460 = vpop.f32.mrb[0].mxu0
      %v461 = vadd.f32 %v218, %v460
      %v462 = vpop.f32.mrb[0].mxu0
      %463 = vmatprep.mubr.bf16.mxu0 0
      %464 = vmatmul.mubr.bf16.gmra.mrb[0].mxu0 %v344
      %v465 = vpop.f32.mrb[0].mxu0
      %v466 = vadd.f32 %v218, %v465
      %v467 = vpop.f32.mrb[0].mxu0
      %v468 = vpop.f32.mrb[0].mxu0
      %v469 = vadd.f32 %v218, %v468
      %v470 = vpop.f32.mrb[0].mxu0
      %471 = vmatprep.mubr.bf16.mxu0 0
      %472 = vmatmul.mubr.bf16.gmra.mrb[0].mxu0 %v347
      %v473 = vpop.f32.mrb[0].mxu0
      %v474 = vadd.f32 %v218, %v473
      %v475 = vpop.f32.mrb[0].mxu0
      %v476 = vpop.f32.mrb[0].mxu0
      %v477 = vadd.f32 %v218, %v476
      %v478 = vpop.f32.mrb[0].mxu0
      %479 = vmatprep.mubr.bf16.mxu0 0
      %480 = vmatmul.mubr.bf16.gmra.mrb[0].mxu0 %v350
      %v481 = vpop.f32.mrb[0].mxu0
      %v482 = vadd.f32 %v218, %v481
      %v483 = vpop.f32.mrb[0].mxu0
      %v484 = vpop.f32.mrb[0].mxu0
      %v485 = vadd.f32 %v218, %v484
      %v486 = vpop.f32.mrb[0].mxu0
      %487 = vmatprep.mubr.bf16.mxu0 0
      %488 = vmatmul.mubr.bf16.gmra.mrb[0].mxu0 %v353
      %v489 = vpop.f32.mrb[0].mxu0
      %v490 = vadd.f32 %v218, %v489
      %v491 = vpop.f32.mrb[0].mxu0
      %v492 = vpop.f32.mrb[0].mxu0
      %v493 = vadd.f32 %v218, %v492
      %v494 = vpop.f32.mrb[0].mxu0
      %495 = vmatprep.mubr.bf16.mxu0 0
      %496 = vmatmul.mubr.bf16.gmra.mrb[0].mxu0 %v356
      %v497 = vpop.f32.mrb[0].mxu0
      %v498 = vadd.f32 %v218, %v497
      %v499 = vpop.f32.mrb[0].mxu0
      %v500 = vpop.f32.mrb[0].mxu0
      %v501 = vadd.f32 %v218, %v500
      %v502 = vpop.f32.mrb[0].mxu0
      %503 = vmatprep.mubr.bf16.mxu0 0
      %504 = vmatmul.mubr.bf16.gmra.mrb[0].mxu0 %v359
      %v505 = vpop.f32.mrb[0].mxu0
      %v506 = vadd.f32 %v218, %v505
      %v507 = vpop.f32.mrb[0].mxu0
      %v508 = vpop.f32.mrb[0].mxu0
      %v509 = vadd.f32 %v218, %v508
      %v510 = vpop.f32.mrb[0].mxu0
      %511 = vmatprep.mubr.bf16.mxu0 0
      %512 = vmatmul.mubr.bf16.gmra.mrb[0].mxu0 %v362
      %v513 = vpop.f32.mrb[0].mxu0
      %v514 = vadd.f32 %v218, %v513
      %v515 = vpop.f32.mrb[0].mxu0
      %v516 = vpop.f32.mrb[0].mxu0
      %v517 = vadd.f32 %v218, %v516
      %v518 = vpop.f32.mrb[0].mxu0
      %519 = vmatprep.mubr.bf16.mxu0 0
      %520 = vmatmul.mubr.bf16.gmra.mrb[0].mxu0 %v365
      %v521 = vpop.f32.mrb[0].mxu0
      %v522 = vadd.f32 %v218, %v521
      %v523 = vpop.f32.mrb[0].mxu0
      %v524 = vpop.f32.mrb[0].mxu0
      %v525 = vadd.f32 %v218, %v524
      %v526 = vpop.f32.mrb[0].mxu0
      %527 = vdwg.mxu0
      %vm528 = vcmp.gt.f32.partialorder %v402, 0.0
      %vm529 = vcmp.gt.f32.partialorder %v405, 0.0
      %vm530 = vcmp.gt.f32.partialorder %v410, 0.0
      %vm531 = vcmp.gt.f32.partialorder %v413, 0.0
      %vm532 = vcmp.gt.f32.partialorder %v418, 0.0
      %vm533 = vcmp.gt.f32.partialorder %v421, 0.0
      %vm534 = vcmp.gt.f32.partialorder %v426, 0.0
      %vm535 = vcmp.gt.f32.partialorder %v429, 0.0
      %vm536 = vcmp.gt.f32.partialorder %v434, 0.0
      %vm537 = vcmp.gt.f32.partialorder %v437, 0.0
      %vm538 = vcmp.gt.f32.partialorder %v442, 0.0
      %vm539 = vcmp.gt.f32.partialorder %v445, 0.0
      %vm540 = vcmp.gt.f32.partialorder %v450, 0.0
      %vm541 = vcmp.gt.f32.partialorder %v453, 0.0
      %vm542 = vcmp.gt.f32.partialorder %v458, 0.0
      %vm543 = vcmp.gt.f32.partialorder %v461, 0.0
      %vm544 = vcmp.gt.f32.partialorder %v466, 0.0
      %vm545 = vcmp.gt.f32.partialorder %v469, 0.0
      %vm546 = vcmp.gt.f32.partialorder %v474, 0.0
      %vm547 = vcmp.gt.f32.partialorder %v477, 0.0
      %vm548 = vcmp.gt.f32.partialorder %v482, 0.0
      %vm549 = vcmp.gt.f32.partialorder %v485, 0.0
      %vm550 = vcmp.gt.f32.partialorder %v490, 0.0
      %vm551 = vcmp.gt.f32.partialorder %v493, 0.0
      %vm552 = vcmp.gt.f32.partialorder %v498, 0.0
      %vm553 = vcmp.gt.f32.partialorder %v501, 0.0
      %vm554 = vcmp.gt.f32.partialorder %v506, 0.0
      %vm555 = vcmp.gt.f32.partialorder %v509, 0.0
      %vm556 = vcmp.gt.f32.partialorder %v514, 0.0
      %vm557 = vcmp.gt.f32.partialorder %v517, 0.0
      %vm558 = vcmp.gt.f32.partialorder %v522, 0.0
      %vm559 = vcmp.gt.f32.partialorder %v525, 0.0
      %v560 = vmul.f32 %v402, 0.2
      %v561 = vmul.f32 %v405, 0.2
      %v562 = vmul.f32 %v410, 0.2
      %v563 = vmul.f32 %v413, 0.2
      %v564 = vmul.f32 %v418, 0.2
      %v565 = vmul.f32 %v421, 0.2
      %v566 = vmul.f32 %v426, 0.2
      %v567 = vmul.f32 %v429, 0.2
      %v568 = vmul.f32 %v434, 0.2
      %v569 = vmul.f32 %v437, 0.2
      %v570 = vmul.f32 %v442, 0.2
      %v571 = vmul.f32 %v445, 0.2
      %v572 = vmul.f32 %v450, 0.2
      %v573 = vmul.f32 %v453, 0.2
      %v574 = vmul.f32 %v458, 0.2
      %v575 = vmul.f32 %v461, 0.2
      %v576 = vmul.f32 %v466, 0.2
      %v577 = vmul.f32 %v469, 0.2
      %v578 = vmul.f32 %v474, 0.2
      %v579 = vmul.f32 %v477, 0.2
      %v580 = vmul.f32 %v482, 0.2
      %v581 = vmul.f32 %v485, 0.2
      %v582 = vmul.f32 %v490, 0.2
      %v583 = vmul.f32 %v493, 0.2
      %v584 = vmul.f32 %v498, 0.2
      %v585 = vmul.f32 %v501, 0.2
      %v586 = vmul.f32 %v506, 0.2
      %v587 = vmul.f32 %v509, 0.2
      %v588 = vmul.f32 %v514, 0.2
      %v589 = vmul.f32 %v517, 0.2
      %v590 = vmul.f32 %v522, 0.2
      %v591 = vmul.f32 %v525, 0.2
      %v592 = vsel %vm528, %v402, %v560
      %v593 = vsel %vm529, %v405, %v561
      %v594 = vsel %vm530, %v410, %v562
      %v595 = vsel %vm531, %v413, %v563
      %v596 = vsel %vm532, %v418, %v564
      %v597 = vsel %vm533, %v421, %v565
      %v598 = vsel %vm534, %v426, %v566
      %v599 = vsel %vm535, %v429, %v567
      %v600 = vsel %vm536, %v434, %v568
      %v601 = vsel %vm537, %v437, %v569
      %v602 = vsel %vm538, %v442, %v570
      %v603 = vsel %vm539, %v445, %v571
      %v604 = vsel %vm540, %v450, %v572
      %v605 = vsel %vm541, %v453, %v573
      %v606 = vsel %vm542, %v458, %v574
      %v607 = vsel %vm543, %v461, %v575
      %v608 = vsel %vm544, %v466, %v576
      %v609 = vsel %vm545, %v469, %v577
      %v610 = vsel %vm546, %v474, %v578
      %v611 = vsel %vm547, %v477, %v579
      %v612 = vsel %vm548, %v482, %v580
      %v613 = vsel %vm549, %v485, %v581
      %v614 = vsel %vm550, %v490, %v582
      %v615 = vsel %vm551, %v493, %v583
      %v616 = vsel %vm552, %v498, %v584
      %v617 = vsel %vm553, %v501, %v585
      %v618 = vsel %vm554, %v506, %v586
      %v619 = vsel %vm555, %v509, %v587
      %v620 = vsel %vm556, %v514, %v588
      %v621 = vsel %vm557, %v517, %v589
      %v622 = vsel %vm558, %v522, %v590
      %v623 = vsel %vm559, %v525, %v591
      %v624 = vpack.c.bf16 %v593, %v592
      %v625 = vpack.c.bf16 %v595, %v594
      %v626 = vpack.c.bf16 %v597, %v596
      %v627 = vpack.c.bf16 %v599, %v598
      %v628 = vpack.c.bf16 %v601, %v600
      %v629 = vpack.c.bf16 %v603, %v602
      %v630 = vpack.c.bf16 %v605, %v604
      %v631 = vpack.c.bf16 %v607, %v606
      %v632 = vpack.c.bf16 %v609, %v608
      %v633 = vpack.c.bf16 %v611, %v610
      %v634 = vpack.c.bf16 %v613, %v612
      %v635 = vpack.c.bf16 %v615, %v614
      %v636 = vpack.c.bf16 %v617, %v616
      %v637 = vpack.c.bf16 %v619, %v618
      %v638 = vpack.c.bf16 %v621, %v620
      %v639 = vpack.c.bf16 %v623, %v622
      %v656 = vunpack.c.l.b16 %v624
      %v657 = vunpack.c.h.b16 %v624
      %v658 = vunpack.c.l.b16 %v625
      %v659 = vunpack.c.h.b16 %v625
      %v660 = vunpack.c.l.b16 %v626
      %v661 = vunpack.c.h.b16 %v626
      %v662 = vunpack.c.l.b16 %v627
      %v663 = vunpack.c.h.b16 %v627
      %v664 = vunpack.c.l.b16 %v628
      %v665 = vunpack.c.h.b16 %v628
      %v666 = vunpack.c.l.b16 %v629
      %v667 = vunpack.c.h.b16 %v629
      %v668 = vunpack.c.l.b16 %v630
      %v669 = vunpack.c.h.b16 %v630
      %v670 = vunpack.c.l.b16 %v631
      %v671 = vunpack.c.h.b16 %v631
      %v672 = vunpack.c.l.b16 %v632
      %v673 = vunpack.c.h.b16 %v632
      %v674 = vunpack.c.l.b16 %v633
      %v675 = vunpack.c.h.b16 %v633
      %v676 = vunpack.c.l.b16 %v634
      %v677 = vunpack.c.h.b16 %v634
      %v678 = vunpack.c.l.b16 %v635
      %v679 = vunpack.c.h.b16 %v635
      %v680 = vunpack.c.l.b16 %v636
      %v681 = vunpack.c.h.b16 %v636
      %v682 = vunpack.c.l.b16 %v637
      %v683 = vunpack.c.h.b16 %v637
      %v684 = vunpack.c.l.b16 %v638
      %v685 = vunpack.c.h.b16 %v638
      %v686 = vunpack.c.l.b16 %v639
      %v687 = vunpack.c.h.b16 %v639
      %v688 = vpack.c.b16 %v656, %v656
      %v689 = vpack.c.b16 %v657, %v657
      %v690 = vpack.c.b16 %v658, %v658
      %v691 = vpack.c.b16 %v659, %v659
      %v692 = vpack.c.b16 %v660, %v660
      %v693 = vpack.c.b16 %v661, %v661
      %v694 = vpack.c.b16 %v662, %v662
      %v695 = vpack.c.b16 %v663, %v663
      %v696 = vpack.c.b16 %v664, %v664
      %v697 = vpack.c.b16 %v665, %v665
      %v698 = vpack.c.b16 %v666, %v666
      %v699 = vpack.c.b16 %v667, %v667
      %v700 = vpack.c.b16 %v668, %v668
      %v701 = vpack.c.b16 %v669, %v669
      %v702 = vpack.c.b16 %v670, %v670
      %v703 = vpack.c.b16 %v671, %v671
      %v704 = vpack.c.b16 %v672, %v672
      %v705 = vpack.c.b16 %v673, %v673
      %v706 = vpack.c.b16 %v674, %v674
      %v707 = vpack.c.b16 %v675, %v675
      %v708 = vpack.c.b16 %v676, %v676
      %v709 = vpack.c.b16 %v677, %v677
      %v710 = vpack.c.b16 %v678, %v678
      %v711 = vpack.c.b16 %v679, %v679
      %v712 = vpack.c.b16 %v680, %v680
      %v713 = vpack.c.b16 %v681, %v681
      %v714 = vpack.c.b16 %v682, %v682
      %v715 = vpack.c.b16 %v683, %v683
      %v716 = vpack.c.b16 %v684, %v684
      %v717 = vpack.c.b16 %v685, %v685
      %v718 = vpack.c.b16 %v686, %v686
      %v719 = vpack.c.b16 %v687, %v687
      %vm752 = vcmask 257024
      %753 = vst.msk [vmem:[%s172] sm:$0xf] %vm752, %v688
      %754 = vst.msk [vmem:[%s172 + $0x4] sm:$0xf] %vm752, %v689
      %755 = vst.msk [vmem:[%s172 + $0x8] sm:$0xf] %vm752, %v690
      %756 = vst.msk [vmem:[%s172 + $0xc] sm:$0xf] %vm752, %v691
      %757 = vst.msk [vmem:[%s172 + $0x10] sm:$0xf] %vm752, %v692
      %758 = vst.msk [vmem:[%s172 + $0x14] sm:$0xf] %vm752, %v693
      %759 = vst.msk [vmem:[%s172 + $0x18] sm:$0xf] %vm752, %v694
      %760 = vst.msk [vmem:[%s172 + $0x1c] sm:$0xf] %vm752, %v695
      %761 = vst.msk [vmem:[%s172 + $0x20] sm:$0xf] %vm752, %v696
      %762 = vst.msk [vmem:[%s172 + $0x24] sm:$0xf] %vm752, %v697
      %763 = vst.msk [vmem:[%s172 + $0x28] sm:$0xf] %vm752, %v698
      %764 = vst.msk [vmem:[%s172 + $0x2c] sm:$0xf] %vm752, %v699
      %765 = vst.msk [vmem:[%s172 + $0x30] sm:$0xf] %vm752, %v700
      %766 = vst.msk [vmem:[%s172 + $0x34] sm:$0xf] %vm752, %v701
      %767 = vst.msk [vmem:[%s172 + $0x38] sm:$0xf] %vm752, %v702
      %768 = vst.msk [vmem:[%s172 + $0x3c] sm:$0xf] %vm752, %v703
      %769 = vst.msk [vmem:[%s172 + $0x40] sm:$0xf] %vm752, %v704
      %770 = vst.msk [vmem:[%s172 + $0x44] sm:$0xf] %vm752, %v705
      %771 = vst.msk [vmem:[%s172 + $0x48] sm:$0xf] %vm752, %v706
      %772 = vst.msk [vmem:[%s172 + $0x4c] sm:$0xf] %vm752, %v707
      %773 = vst.msk [vmem:[%s172 + $0x50] sm:$0xf] %vm752, %v708
      %774 = vst.msk [vmem:[%s172 + $0x54] sm:$0xf] %vm752, %v709
      %775 = vst.msk [vmem:[%s172 + $0x58] sm:$0xf] %vm752, %v710
      %776 = vst.msk [vmem:[%s172 + $0x5c] sm:$0xf] %vm752, %v711
      %777 = vst.msk [vmem:[%s172 + $0x60] sm:$0xf] %vm752, %v712
      %778 = vst.msk [vmem:[%s172 + $0x64] sm:$0xf] %vm752, %v713
      %779 = vst.msk [vmem:[%s172 + $0x68] sm:$0xf] %vm752, %v714
      %780 = vst.msk [vmem:[%s172 + $0x6c] sm:$0xf] %vm752, %v715
      %781 = vst.msk [vmem:[%s172 + $0x70] sm:$0xf] %vm752, %v716
      %782 = vst.msk [vmem:[%s172 + $0x74] sm:$0xf] %vm752, %v717
      %783 = vst.msk [vmem:[%s172 + $0x78] sm:$0xf] %vm752, %v718
      %784 = vst.msk [vmem:[%s172 + $0x7c] sm:$0xf] %vm752, %v719
      %s785 = smul.u32 32, %s14
      %p786 = scmp.lt.s32.totalorder %s785, 63
      %s787 = scalar_select %p786, %s785, 63
      %s788 = smul.addr %s787, 4
      %s789 = scalar_lea.vmem %s3, %s788
      // Predicated region
      $region33: #{conv_deconv_vqvae_forward.9} parent=31 // pred_check
        %p790 = pneg %p100
      $region34: #{conv_deconv_vqvae_forward.9} parent=31 // pred_check_branch
        %792 = sbr.rel (%p790) target = $region36
      $region35: #{conv_deconv_vqvae_forward.9} parent=31 // pred_region
        %s793 = smul.u32 32, %s14
      $region36: #{conv_deconv_vqvae_forward.9} parent=31 // pred_fallthru
        _
    $region32: #{conv_deconv_vqvae_forward.9} parent=5 // pred_fallthru
      _
    %p794 = scmp.le.s32.totalorder 2, %s9
    // Predicated region
    $region37: #{conv_deconv_vqvae_forward.9} parent=5 // pred_check
      %p795 = pneg %p794
    $region38: #{conv_deconv_vqvae_forward.9} parent=5 // pred_check_branch
      %797 = sbr.rel (%p795) target = $region40
    $region39: #{conv_deconv_vqvae_forward.9} parent=5 // pred_region
      %s798 = ssub.s32 %s9, 2
      // Predicated region
      $region41: #{conv_deconv_vqvae_forward.9} parent=39 // pred_check
        %p799 = pneg %p106
      $region42: #{conv_deconv_vqvae_forward.9} parent=39 // pred_check_branch
        %801 = sbr.rel (%p799) target = $region44
      $region43: #{conv_deconv_vqvae_forward.9} parent=39 // pred_region
        %s802 = smul.u32 32, %s15
        %p803 = scmp.lt.s32.totalorder %s802, 63
        %s804 = scalar_select %p803, %s802, 63
        %s805 = smul.addr %s804, 4
        %s806 = scalar_lea.vmem %s3, %s805
      $region44: #{conv_deconv_vqvae_forward.9} parent=39 // pred_fallthru
        _
    $region40: #{conv_deconv_vqvae_forward.9} parent=5 // pred_fallthru
      _
  $region6: #{conv_deconv_vqvae_forward.9} parent=0 // loop_footer
    %s13 = sadd.s32 1, %s9
  $region7: #{conv_deconv_vqvae_forward.9} parent=0 // loop_footer_branch
    %8 = sbr.rel target = $region3
  $region8: #{conv_deconv_vqvae_forward.9} parent=0 // loop_exit
    _

// kernel: conv_deconv_vqvae_forward.10
$region0: #{conv_deconv_vqvae_forward.10}
  #allocation0 [shape = 'u32[]', space=smem, size = 0x4, offset = 0x4, fixed_abs, tag = 'smem constant byte address 0x4 - core index']
  #allocation1 [shape = 'u32[144,128]{1,0:T(1,128)}', space=vmem, size = 0x12000, scoped, tag = 'internal scratch']
  %s0 = inlined_call_operand.vmem [shape: bf16[128,512], index: 0, kind: input, shape index: {}]
  %s1 = inlined_call_operand.vmem [shape: bf16[512,64], index: 1, kind: input, shape index: {}]
  %s2 = inlined_call_operand.vmem [shape: f32[1,64], index: 2, kind: input, shape index: {}]
  %s3 = inlined_call_operand.vmem [shape: bf16[128,64], index: 3, kind: output, shape index: {}]
  %s4 = sld [smem:[#allocation0]]
  $region45: #{conv_deconv_vqvae_forward.10} parent=0
    _
  %s6 = ssub.s32 1, %s4
  %s7 = scalar_select 0, %s6, %s4
  loop: start=0, step=1, limit=4
  $region2: #{conv_deconv_vqvae_forward.10} parent=0 // loop_pre_header
    _
  $region3: #{conv_deconv_vqvae_forward.10} parent=0 // loop_header
    %s9 = sphi 0, %s13
    %p10 = scmp.ge.s32.totalorder %s9, 4
    %s19 = sphi 0, %s21
    %s22 = sphi 0, %s19
    %s23 = sphi 0, %s22
    %s39 = sphi 0, %s23
    %s43 = sphi 0, %s43
    %s45 = sphi 0, %s43
    %s46 = sphi 0, %s45
    %s60 = sphi 0, %s46
    %s64 = sphi 0, %s64
    %s66 = sphi 0, %s64
    %s67 = sphi 0, %s66
    %s81 = sphi 0, %s67
    %s87 = sphi 0, %s89
    %s90 = sphi 0, %s87
    %s91 = sphi 0, %s90
    %s107 = sphi 0, %s91
  $region4: #{conv_deconv_vqvae_forward.10} parent=0 // loop_header_branch
    %12 = sbr.rel (%p10) target = $region8
  $region5: #{conv_deconv_vqvae_forward.10} parent=0 // loop_body
    %s14 = ssub.s32 %s9, 1
    %s15 = ssub.s32 %s9, 2
    %s16 = sadd.s32 %s9, 1
    %s17 = ssub.s32 %s9, %s16
    %p18 = scmp.eq.s32.totalorder %s17, 0
    %s20 = sadd.s32 %s19, 1
    %s21 = scalar_select %p18, %s19, %s20
    %p24 = pneg %p18
    %p25 = scmp.eq.s32.totalorder %s9, 1
    %p26 = por %p24, %p25
    %p27 = scmp.ne.s32.totalorder %s19, %s22
    %p28 = scmp.eq.s32.totalorder %s9, 0
    %p29 = por %p27, %p28
    %p30 = scmp.ne.s32.totalorder %s19, %s22
    %p31 = scmp.eq.s32.totalorder %s14, 1
    %p32 = por %p30, %p31
    %p33 = scmp.ne.s32.totalorder %s22, %s23
    %p34 = scmp.eq.s32.totalorder %s14, 0
    %p35 = por %p33, %p34
    %p36 = scmp.ne.s32.totalorder %s22, %s23
    %p37 = scmp.eq.s32.totalorder %s15, 1
    %p38 = por %p36, %p37
    %p40 = scmp.ne.s32.totalorder %s23, %s39
    %p41 = scmp.eq.s32.totalorder %s15, 0
    %p42 = por %p40, %p41
    %s44 = sadd.s32 %s43, 1
    %p47 = scmp.eq.s32.totalorder %s9, 1
    %p48 = scmp.ne.s32.totalorder %s43, %s45
    %p49 = scmp.eq.s32.totalorder %s9, 0
    %p50 = por %p48, %p49
    %p51 = scmp.ne.s32.totalorder %s43, %s45
    %p52 = scmp.eq.s32.totalorder %s14, 1
    %p53 = por %p51, %p52
    %p54 = scmp.ne.s32.totalorder %s45, %s46
    %p55 = scmp.eq.s32.totalorder %s14, 0
    %p56 = por %p54, %p55
    %p57 = scmp.ne.s32.totalorder %s45, %s46
    %p58 = scmp.eq.s32.totalorder %s15, 1
    %p59 = por %p57, %p58
    %p61 = scmp.ne.s32.totalorder %s46, %s60
    %p62 = scmp.eq.s32.totalorder %s15, 0
    %p63 = por %p61, %p62
    %s65 = sadd.s32 %s64, 1
    %p68 = scmp.eq.s32.totalorder %s9, 1
    %p69 = scmp.ne.s32.totalorder %s64, %s66
    %p70 = scmp.eq.s32.totalorder %s9, 0
    %p71 = por %p69, %p70
    %p72 = scmp.ne.s32.totalorder %s64, %s66
    %p73 = scmp.eq.s32.totalorder %s14, 1
    %p74 = por %p72, %p73
    %p75 = scmp.ne.s32.totalorder %s66, %s67
    %p76 = scmp.eq.s32.totalorder %s14, 0
    %p77 = por %p75, %p76
    %p78 = scmp.ne.s32.totalorder %s66, %s67
    %p79 = scmp.eq.s32.totalorder %s15, 1
    %p80 = por %p78, %p79
    %p82 = scmp.ne.s32.totalorder %s67, %s81
    %p83 = scmp.eq.s32.totalorder %s15, 0
    %p84 = por %p82, %p83
    %s85 = ssub.s32 %s9, %s16
    %p86 = scmp.eq.s32.totalorder %s85, 0
    %s88 = sadd.s32 %s87, 1
    %s89 = scalar_select %p86, %s87, %s88
    %p92 = pneg %p86
    %p93 = scmp.eq.s32.totalorder %s9, 1
    %p94 = por %p92, %p93
    %p95 = scmp.ne.s32.totalorder %s87, %s90
    %p96 = scmp.eq.s32.totalorder %s9, 0
    %p97 = por %p95, %p96
    %p98 = scmp.ne.s32.totalorder %s87, %s90
    %p99 = scmp.eq.s32.totalorder %s14, 1
    %p100 = por %p98, %p99
    %p101 = scmp.ne.s32.totalorder %s90, %s91
    %p102 = scmp.eq.s32.totalorder %s14, 0
    %p103 = por %p101, %p102
    %p104 = scmp.ne.s32.totalorder %s90, %s91
    %p105 = scmp.eq.s32.totalorder %s15, 1
    %p106 = por %p104, %p105
    %p108 = scmp.ne.s32.totalorder %s91, %s107
    %p109 = scmp.eq.s32.totalorder %s15, 0
    %p110 = por %p108, %p109
    %p111 = scmp.le.s32.totalorder 1, %s9
    %p112 = scmp.lt.s32.totalorder %s9, 3
    %p113 = pnand %p111, %p112
    %p114 = pneg %p113
    // Predicated region
    $region9: #{conv_deconv_vqvae_forward.10} parent=5 // pred_check
      _
    $region10: #{conv_deconv_vqvae_forward.10} parent=5 // pred_check_branch
      %116 = sbr.rel (%p113) target = $region12
    $region11: #{conv_deconv_vqvae_forward.10} parent=5 // pred_region
      %s117 = ssub.s32 %s9, 1
      // Predicated region
      $region13: #{conv_deconv_vqvae_forward.10} parent=11 // pred_check
        %p118 = pneg %p56
      $region14: #{conv_deconv_vqvae_forward.10} parent=11 // pred_check_branch
        %120 = sbr.rel (%p118) target = $region16
      $region15: #{conv_deconv_vqvae_forward.10} parent=11 // pred_region
        _
      $region16: #{conv_deconv_vqvae_forward.10} parent=11 // pred_fallthru
        _
      // Predicated region
      $region17: #{conv_deconv_vqvae_forward.10} parent=11 // pred_check
        %p121 = pneg %p77
      $region18: #{conv_deconv_vqvae_forward.10} parent=11 // pred_check_branch
        %123 = sbr.rel (%p121) target = $region20
      $region19: #{conv_deconv_vqvae_forward.10} parent=11 // pred_region
        _
      $region20: #{conv_deconv_vqvae_forward.10} parent=11 // pred_fallthru
        _
    $region12: #{conv_deconv_vqvae_forward.10} parent=5 // pred_fallthru
      _
    %p124 = scmp.lt.s32.totalorder %s9, 2
    // Predicated region
    $region21: #{conv_deconv_vqvae_forward.10} parent=5 // pred_check
      %p125 = pneg %p124
    $region22: #{conv_deconv_vqvae_forward.10} parent=5 // pred_check_branch
      %127 = sbr.rel (%p125) target = $region24
    $region23: #{conv_deconv_vqvae_forward.10} parent=5 // pred_region
      // Predicated region
      $region25: #{conv_deconv_vqvae_forward.10} parent=23 // pred_check
        %p128 = pneg %p29
      $region26: #{conv_deconv_vqvae_forward.10} parent=23 // pred_check_branch
        %130 = sbr.rel (%p128) target = $region28
      $region27: #{conv_deconv_vqvae_forward.10} parent=23 // pred_region
        %s131 = smul.u32 8, %s9
        %p132 = scmp.lt.s32.totalorder %s131, 15
        %s133 = scalar_select %p132, %s131, 15
        %s134 = smul.addr %s133, 4
        %s135 = smul.addr %s134, 4
        %s136 = scalar_lea.vmem %s0, %s135
        %s137 = smul.u32 8, %s9
      $region28: #{conv_deconv_vqvae_forward.10} parent=23 // pred_fallthru
        _
    $region24: #{conv_deconv_vqvae_forward.10} parent=5 // pred_fallthru
      _
    %p138 = scmp.le.s32.totalorder 1, %s9
    %p139 = scmp.lt.s32.totalorder %s9, 3
    %p140 = pnand %p138, %p139
    %p141 = pneg %p140
    // Predicated region
    $region29: #{conv_deconv_vqvae_forward.10} parent=5 // pred_check
      _
    $region30: #{conv_deconv_vqvae_forward.10} parent=5 // pred_check_branch
      %143 = sbr.rel (%p140) target = $region32
    $region31: #{conv_deconv_vqvae_forward.10} parent=5 // pred_region
      %s144 = ssub.s32 %s9, 1
      %s145 = smul.u32 8, %s14
      %p146 = scmp.lt.s32.totalorder %s145, 15
      %s147 = scalar_select %p146, %s145, 15
      %s148 = smul.addr %s147, 4
      %s149 = smul.addr %s148, 4
      %s150 = scalar_lea.vmem %s0, %s149
      %p151 = pneg %p35
      %p152 = pneg %p32
      %p153 = pneg %p56
      %p154 = pneg %p53
      %p155 = pneg %p77
      %p156 = pneg %p74
      %p157 = pneg %p103
      %p158 = pneg %p100
      %s159 = smul.u32 8, %s14
      %p160 = scmp.lt.s32.totalorder %s159, 15
      %s161 = scalar_select %p160, %s159, 15
      %s162 = smul.addr %s161, 4
      %s163 = scalar_lea.vmem %s3, %s162
      %s164 = smul.u32 8, %s14
      %p165 = scmp.lt.s32.totalorder %s164, 15
      %s166 = scalar_select %p165, %s164, 15
      %s167 = smul.addr %s166, 4
      %s168 = smul.addr %s167, 4
      %s169 = scalar_lea.vmem %s0, %s168
      %s170 = smul.u32 8, %s14
      %s171 = smul.u32 8, %s14
      %p172 = scmp.lt.s32.totalorder %s171, 15
      %s173 = scalar_select %p172, %s171, 15
      %s174 = smul.addr %s173, 4
      %s175 = scalar_lea.vmem %s3, %s174
      %s176 = smul.u32 8, %s14
      %v178 = vld [vmem:[%s169] sm:$0xff]
      %v179 = vld [vmem:[%s169 + $0x8] sm:$0xff]
      %v180 = vld [vmem:[%s169 + $0x10] sm:$0xff]
      %v181 = vld [vmem:[%s169 + $0x18] sm:$0xff]
      %v182 = vld [vmem:[%s169 + $0x20] sm:$0xff]
      %v183 = vld [vmem:[%s169 + $0x28] sm:$0xff]
      %v184 = vld [vmem:[%s169 + $0x30] sm:$0xff]
      %v185 = vld [vmem:[%s169 + $0x38] sm:$0xff]
      %v186 = vld [vmem:[%s169 + $0x40] sm:$0xff]
      %v187 = vld [vmem:[%s169 + $0x48] sm:$0xff]
      %v188 = vld [vmem:[%s169 + $0x50] sm:$0xff]
      %v189 = vld [vmem:[%s169 + $0x58] sm:$0xff]
      %v190 = vld [vmem:[%s169 + $0x60] sm:$0xff]
      %v191 = vld [vmem:[%s169 + $0x68] sm:$0xff]
      %v192 = vld [vmem:[%s169 + $0x70] sm:$0xff]
      %v193 = vld [vmem:[%s169 + $0x78] sm:$0xff]
      %v194 = vld [vmem:[%s1] sm:$0xf]
      %v195 = vld [vmem:[%s1 + $0x4] sm:$0xf]
      %v196 = vld [vmem:[%s1 + $0x8] sm:$0xf]
      %v197 = vld [vmem:[%s1 + $0xc] sm:$0xf]
      %v198 = vld [vmem:[%s1 + $0x10] sm:$0xf]
      %v199 = vld [vmem:[%s1 + $0x14] sm:$0xf]
      %v200 = vld [vmem:[%s1 + $0x18] sm:$0xf]
      %v201 = vld [vmem:[%s1 + $0x1c] sm:$0xf]
      %v202 = vld [vmem:[%s1 + $0x20] sm:$0xf]
      %v203 = vld [vmem:[%s1 + $0x24] sm:$0xf]
      %v204 = vld [vmem:[%s1 + $0x28] sm:$0xf]
      %v205 = vld [vmem:[%s1 + $0x2c] sm:$0xf]
      %v206 = vld [vmem:[%s1 + $0x30] sm:$0xf]
      %v207 = vld [vmem:[%s1 + $0x34] sm:$0xf]
      %v208 = vld [vmem:[%s1 + $0x38] sm:$0xf]
      %v209 = vld [vmem:[%s1 + $0x3c] sm:$0xf]
      %v210 = vld [vmem:[%s1 + $0x40] sm:$0xf]
      %v211 = vld [vmem:[%s1 + $0x44] sm:$0xf]
      %v212 = vld [vmem:[%s1 + $0x48] sm:$0xf]
      %v213 = vld [vmem:[%s1 + $0x4c] sm:$0xf]
      %v214 = vld [vmem:[%s1 + $0x50] sm:$0xf]
      %v215 = vld [vmem:[%s1 + $0x54] sm:$0xf]
      %v216 = vld [vmem:[%s1 + $0x58] sm:$0xf]
      %v217 = vld [vmem:[%s1 + $0x5c] sm:$0xf]
      %v218 = vld [vmem:[%s1 + $0x60] sm:$0xf]
      %v219 = vld [vmem:[%s1 + $0x64] sm:$0xf]
      %v220 = vld [vmem:[%s1 + $0x68] sm:$0xf]
      %v221 = vld [vmem:[%s1 + $0x6c] sm:$0xf]
      %v222 = vld [vmem:[%s1 + $0x70] sm:$0xf]
      %v223 = vld [vmem:[%s1 + $0x74] sm:$0xf]
      %v224 = vld [vmem:[%s1 + $0x78] sm:$0xf]
      %v225 = vld [vmem:[%s1 + $0x7c] sm:$0xf]
      %v226 = vld [vmem:[%s1 + $0x80] sm:$0xf]
      %v227 = vld [vmem:[%s1 + $0x84] sm:$0xf]
      %v228 = vld [vmem:[%s1 + $0x88] sm:$0xf]
      %v229 = vld [vmem:[%s1 + $0x8c] sm:$0xf]
      %v230 = vld [vmem:[%s1 + $0x90] sm:$0xf]
      %v231 = vld [vmem:[%s1 + $0x94] sm:$0xf]
      %v232 = vld [vmem:[%s1 + $0x98] sm:$0xf]
      %v233 = vld [vmem:[%s1 + $0x9c] sm:$0xf]
      %v234 = vld [vmem:[%s1 + $0xa0] sm:$0xf]
      %v235 = vld [vmem:[%s1 + $0xa4] sm:$0xf]
      %v236 = vld [vmem:[%s1 + $0xa8] sm:$0xf]
      %v237 = vld [vmem:[%s1 + $0xac] sm:$0xf]
      %v238 = vld [vmem:[%s1 + $0xb0] sm:$0xf]
      %v239 = vld [vmem:[%s1 + $0xb4] sm:$0xf]
      %v240 = vld [vmem:[%s1 + $0xb8] sm:$0xf]
      %v241 = vld [vmem:[%s1 + $0xbc] sm:$0xf]
      %v242 = vld [vmem:[%s1 + $0xc0] sm:$0xf]
      %v243 = vld [vmem:[%s1 + $0xc4] sm:$0xf]
      %v244 = vld [vmem:[%s1 + $0xc8] sm:$0xf]
      %v245 = vld [vmem:[%s1 + $0xcc] sm:$0xf]
      %v246 = vld [vmem:[%s1 + $0xd0] sm:$0xf]
      %v247 = vld [vmem:[%s1 + $0xd4] sm:$0xf]
      %v248 = vld [vmem:[%s1 + $0xd8] sm:$0xf]
      %v249 = vld [vmem:[%s1 + $0xdc] sm:$0xf]
      %v250 = vld [vmem:[%s1 + $0xe0] sm:$0xf]
      %v251 = vld [vmem:[%s1 + $0xe4] sm:$0xf]
      %v252 = vld [vmem:[%s1 + $0xe8] sm:$0xf]
      %v253 = vld [vmem:[%s1 + $0xec] sm:$0xf]
      %v254 = vld [vmem:[%s1 + $0xf0] sm:$0xf]
      %v255 = vld [vmem:[%s1 + $0xf4] sm:$0xf]
      %v256 = vld [vmem:[%s1 + $0xf8] sm:$0xf]
      %v257 = vld [vmem:[%s1 + $0xfc] sm:$0xf]
      %v258 = vld [vmem:[%s2] sm:$0x1]
      %v260 = vlaneseq
      %v261 = vshrl.u32 %v260, 7
      %v262 = vsub.s32 0, %v261
      %v263 = vrot.slane %v258, %v262
      %v281 = vunpack.c.l.b16 %v178
      %v282 = vunpack.c.h.b16 %v178
      %v283 = vunpack.c.l.b16 %v179
      %v284 = vunpack.c.h.b16 %v179
      %v285 = vunpack.c.l.b16 %v180
      %v286 = vunpack.c.h.b16 %v180
      %v287 = vunpack.c.l.b16 %v181
      %v288 = vunpack.c.h.b16 %v181
      %v289 = vunpack.c.l.b16 %v182
      %v290 = vunpack.c.h.b16 %v182
      %v291 = vunpack.c.l.b16 %v183
      %v292 = vunpack.c.h.b16 %v183
      %v293 = vunpack.c.l.b16 %v184
      %v294 = vunpack.c.h.b16 %v184
      %v295 = vunpack.c.l.b16 %v185
      %v296 = vunpack.c.h.b16 %v185
      %v297 = vunpack.c.l.b16 %v186
      %v298 = vunpack.c.h.b16 %v186
      %v299 = vunpack.c.l.b16 %v187
      %v300 = vunpack.c.h.b16 %v187
      %v301 = vunpack.c.l.b16 %v188
      %v302 = vunpack.c.h.b16 %v188
      %v303 = vunpack.c.l.b16 %v189
      %v304 = vunpack.c.h.b16 %v189
      %v305 = vunpack.c.l.b16 %v190
      %v306 = vunpack.c.h.b16 %v190
      %v307 = vunpack.c.l.b16 %v191
      %v308 = vunpack.c.h.b16 %v191
      %v309 = vunpack.c.l.b16 %v192
      %v310 = vunpack.c.h.b16 %v192
      %v311 = vunpack.c.l.b16 %v193
      %v312 = vunpack.c.h.b16 %v193
      %v313 = vpack.c.b16 %v285, %v281
      %v314 = vpack.c.b16 %v286, %v282
      %v315 = vpack.c.b16 %v287, %v283
      %v316 = vpack.c.b16 %v288, %v284
      %v317 = vpack.c.b16 %v293, %v289
      %v318 = vpack.c.b16 %v294, %v290
      %v319 = vpack.c.b16 %v295, %v291
      %v320 = vpack.c.b16 %v296, %v292
      %v321 = vpack.c.b16 %v301, %v297
      %v322 = vpack.c.b16 %v302, %v298
      %v323 = vpack.c.b16 %v303, %v299
      %v324 = vpack.c.b16 %v304, %v300
      %v325 = vpack.c.b16 %v309, %v305
      %v326 = vpack.c.b16 %v310, %v306
      %v327 = vpack.c.b16 %v311, %v307
      %v328 = vpack.c.b16 %v312, %v308
      %v409 = vunpack.c.l.b16 %v194
      %v410 = vunpack.c.l.b16 %v195
      %v411 = vunpack.c.l.b16 %v196
      %v412 = vunpack.c.l.b16 %v197
      %v413 = vunpack.c.l.b16 %v198
      %v414 = vunpack.c.l.b16 %v199
      %v415 = vunpack.c.l.b16 %v200
      %v416 = vunpack.c.l.b16 %v201
      %v417 = vunpack.c.l.b16 %v202
      %v418 = vunpack.c.l.b16 %v203
      %v419 = vunpack.c.l.b16 %v204
      %v420 = vunpack.c.l.b16 %v205
      %v421 = vunpack.c.l.b16 %v206
      %v422 = vunpack.c.l.b16 %v207
      %v423 = vunpack.c.l.b16 %v208
      %v424 = vunpack.c.l.b16 %v209
      %v425 = vunpack.c.l.b16 %v210
      %v426 = vunpack.c.l.b16 %v211
      %v427 = vunpack.c.l.b16 %v212
      %v428 = vunpack.c.l.b16 %v213
      %v429 = vunpack.c.l.b16 %v214
      %v430 = vunpack.c.l.b16 %v215
      %v431 = vunpack.c.l.b16 %v216
      %v432 = vunpack.c.l.b16 %v217
      %v433 = vunpack.c.l.b16 %v218
      %v434 = vunpack.c.l.b16 %v219
      %v435 = vunpack.c.l.b16 %v220
      %v436 = vunpack.c.l.b16 %v221
      %v437 = vunpack.c.l.b16 %v222
      %v438 = vunpack.c.l.b16 %v223
      %v439 = vunpack.c.l.b16 %v224
      %v440 = vunpack.c.l.b16 %v225
      %v441 = vunpack.c.l.b16 %v226
      %v442 = vunpack.c.l.b16 %v227
      %v443 = vunpack.c.l.b16 %v228
      %v444 = vunpack.c.l.b16 %v229
      %v445 = vunpack.c.l.b16 %v230
      %v446 = vunpack.c.l.b16 %v231
      %v447 = vunpack.c.l.b16 %v232
      %v448 = vunpack.c.l.b16 %v233
      %v449 = vunpack.c.l.b16 %v234
      %v450 = vunpack.c.l.b16 %v235
      %v451 = vunpack.c.l.b16 %v236
      %v452 = vunpack.c.l.b16 %v237
      %v453 = vunpack.c.l.b16 %v238
      %v454 = vunpack.c.l.b16 %v239
      %v455 = vunpack.c.l.b16 %v240
      %v456 = vunpack.c.l.b16 %v241
      %v457 = vunpack.c.l.b16 %v242
      %v458 = vunpack.c.l.b16 %v243
      %v459 = vunpack.c.l.b16 %v244
      %v460 = vunpack.c.l.b16 %v245
      %v461 = vunpack.c.l.b16 %v246
      %v462 = vunpack.c.l.b16 %v247
      %v463 = vunpack.c.l.b16 %v248
      %v464 = vunpack.c.l.b16 %v249
      %v465 = vunpack.c.l.b16 %v250
      %v466 = vunpack.c.l.b16 %v251
      %v467 = vunpack.c.l.b16 %v252
      %v468 = vunpack.c.l.b16 %v253
      %v469 = vunpack.c.l.b16 %v254
      %v470 = vunpack.c.l.b16 %v255
      %v471 = vunpack.c.l.b16 %v256
      %v472 = vunpack.c.l.b16 %v257
      %v473 = vpack.c.b16 %v410, %v409
      %v474 = vpack.c.b16 %v412, %v411
      %v475 = vpack.c.b16 %v414, %v413
      %v476 = vpack.c.b16 %v416, %v415
      %v477 = vpack.c.b16 %v418, %v417
      %v478 = vpack.c.b16 %v420, %v419
      %v479 = vpack.c.b16 %v422, %v421
      %v480 = vpack.c.b16 %v424, %v423
      %v481 = vpack.c.b16 %v426, %v425
      %v482 = vpack.c.b16 %v428, %v427
      %v483 = vpack.c.b16 %v430, %v429
      %v484 = vpack.c.b16 %v432, %v431
      %v485 = vpack.c.b16 %v434, %v433
      %v486 = vpack.c.b16 %v436, %v435
      %v487 = vpack.c.b16 %v438, %v437
      %v488 = vpack.c.b16 %v440, %v439
      %v489 = vpack.c.b16 %v442, %v441
      %v490 = vpack.c.b16 %v444, %v443
      %v491 = vpack.c.b16 %v446, %v445
      %v492 = vpack.c.b16 %v448, %v447
      %v493 = vpack.c.b16 %v450, %v449
      %v494 = vpack.c.b16 %v452, %v451
      %v495 = vpack.c.b16 %v454, %v453
      %v496 = vpack.c.b16 %v456, %v455
      %v497 = vpack.c.b16 %v458, %v457
      %v498 = vpack.c.b16 %v460, %v459
      %v499 = vpack.c.b16 %v462, %v461
      %v500 = vpack.c.b16 %v464, %v463
      %v501 = vpack.c.b16 %v466, %v465
      %v502 = vpack.c.b16 %v468, %v467
      %v503 = vpack.c.b16 %v470, %v469
      %v504 = vpack.c.b16 %v472, %v471
      %537 = vmatprep.subr.bf16.mxu0 0
      %538 = vmatpush1.bf16.msra.mxu0 %v473
      %539 = vmatprep.subr.bf16.mxu0 0
      %540 = vmatpush1.bf16.msra.mxu0 %v474
      %541 = vmatprep.subr.bf16.mxu0 0
      %542 = vmatpush1.bf16.msra.mxu0 %v475
      %543 = vmatprep.subr.bf16.mxu0 0
      %544 = vmatpush1.bf16.msra.mxu0 %v476
      %545 = vmatprep.subr.bf16.mxu0 0
      %546 = vmatpush1.bf16.msra.mxu0 %v477
      %547 = vmatprep.subr.bf16.mxu0 0
      %548 = vmatpush1.bf16.msra.mxu0 %v478
      %549 = vmatprep.subr.bf16.mxu0 0
      %550 = vmatpush1.bf16.msra.mxu0 %v479
      %551 = vmatprep.subr.bf16.mxu0 0
      %552 = vmatpush1.bf16.msra.mxu0 %v480
      %553 = vmatprep.subr.bf16.mxu0 0
      %554 = vmatpush1.bf16.msra.mxu0 %v481
      %555 = vmatprep.subr.bf16.mxu0 0
      %556 = vmatpush1.bf16.msra.mxu0 %v482
      %557 = vmatprep.subr.bf16.mxu0 0
      %558 = vmatpush1.bf16.msra.mxu0 %v483
      %559 = vmatprep.subr.bf16.mxu0 0
      %560 = vmatpush1.bf16.msra.mxu0 %v484
      %561 = vmatprep.subr.bf16.mxu0 0
      %562 = vmatpush1.bf16.msra.mxu0 %v485
      %563 = vmatprep.subr.bf16.mxu0 0
      %564 = vmatpush1.bf16.msra.mxu0 %v486
      %565 = vmatprep.subr.bf16.mxu0 0
      %566 = vmatpush1.bf16.msra.mxu0 %v487
      %567 = vmatprep.subr.bf16.mxu0 0
      %568 = vmatpush1.bf16.msra.mxu0 %v488
      %569 = vmatprep.mubr.bf16.mxu0 %v314
      %570 = vmatmul.mubr.bf16.gmra.mrb[0].mxu0 %v313
      %v571 = vpop.f32.mrb[0].mxu0
      %v572 = vadd.f32 %v263, %v571
      %v573 = vpop.f32.mrb[0].mxu0
      %v574 = vpop.f32.mrb[0].mxu0
      %v575 = vadd.f32 %v263, %v574
      %v576 = vpop.f32.mrb[0].mxu0
      %577 = vmatprep.mubr.bf16.mxu0 %v318
      %578 = vmatmul.mubr.bf16.gmra.mrb[0].mxu0 %v317
      %v579 = vpop.f32.mrb[0].mxu0
      %v580 = vadd.f32 %v263, %v579
      %v581 = vpop.f32.mrb[0].mxu0
      %v582 = vpop.f32.mrb[0].mxu0
      %v583 = vadd.f32 %v263, %v582
      %v584 = vpop.f32.mrb[0].mxu0
      %585 = vmatprep.mubr.bf16.mxu0 %v322
      %586 = vmatmul.mubr.bf16.gmra.mrb[0].mxu0 %v321
      %v587 = vpop.f32.mrb[0].mxu0
      %v588 = vadd.f32 %v263, %v587
      %v589 = vpop.f32.mrb[0].mxu0
      %v590 = vpop.f32.mrb[0].mxu0
      %v591 = vadd.f32 %v263, %v590
      %v592 = vpop.f32.mrb[0].mxu0
      %593 = vmatprep.mubr.bf16.mxu0 %v326
      %594 = vmatmul.mubr.bf16.gmra.mrb[0].mxu0 %v325
      %v595 = vpop.f32.mrb[0].mxu0
      %v596 = vadd.f32 %v263, %v595
      %v597 = vpop.f32.mrb[0].mxu0
      %v598 = vpop.f32.mrb[0].mxu0
      %v599 = vadd.f32 %v263, %v598
      %v600 = vpop.f32.mrb[0].mxu0
      %601 = vdwg.mxu0
      %602 = vmatprep.subr.bf16.mxu0 0
      %603 = vmatpush1.bf16.msra.mxu0 %v489
      %604 = vmatprep.subr.bf16.mxu0 0
      %605 = vmatpush1.bf16.msra.mxu0 %v490
      %606 = vmatprep.subr.bf16.mxu0 0
      %607 = vmatpush1.bf16.msra.mxu0 %v491
      %608 = vmatprep.subr.bf16.mxu0 0
      %609 = vmatpush1.bf16.msra.mxu0 %v492
      %610 = vmatprep.subr.bf16.mxu0 0
      %611 = vmatpush1.bf16.msra.mxu0 %v493
      %612 = vmatprep.subr.bf16.mxu0 0
      %613 = vmatpush1.bf16.msra.mxu0 %v494
      %614 = vmatprep.subr.bf16.mxu0 0
      %615 = vmatpush1.bf16.msra.mxu0 %v495
      %616 = vmatprep.subr.bf16.mxu0 0
      %617 = vmatpush1.bf16.msra.mxu0 %v496
      %618 = vmatprep.subr.bf16.mxu0 0
      %619 = vmatpush1.bf16.msra.mxu0 %v497
      %620 = vmatprep.subr.bf16.mxu0 0
      %621 = vmatpush1.bf16.msra.mxu0 %v498
      %622 = vmatprep.subr.bf16.mxu0 0
      %623 = vmatpush1.bf16.msra.mxu0 %v499
      %624 = vmatprep.subr.bf16.mxu0 0
      %625 = vmatpush1.bf16.msra.mxu0 %v500
      %626 = vmatprep.subr.bf16.mxu0 0
      %627 = vmatpush1.bf16.msra.mxu0 %v501
      %628 = vmatprep.subr.bf16.mxu0 0
      %629 = vmatpush1.bf16.msra.mxu0 %v502
      %630 = vmatprep.subr.bf16.mxu0 0
      %631 = vmatpush1.bf16.msra.mxu0 %v503
      %632 = vmatprep.subr.bf16.mxu0 0
      %633 = vmatpush1.bf16.msra.mxu0 %v504
      %634 = vmatprep.mubr.bf16.mxu0 %v316
      %635 = vmatmul.mubr.bf16.gmra.mrb[0].mxu0 %v315
      %v636 = vpop.f32.mrb[0].mxu0
      %v637 = vadd.f32 %v572, %v636
      %v638 = vpop.f32.mrb[0].mxu0
      %v639 = vpop.f32.mrb[0].mxu0
      %v640 = vadd.f32 %v575, %v639
      %v641 = vpop.f32.mrb[0].mxu0
      %642 = vmatprep.mubr.bf16.mxu0 %v320
      %643 = vmatmul.mubr.bf16.gmra.mrb[0].mxu0 %v319
      %v644 = vpop.f32.mrb[0].mxu0
      %v645 = vadd.f32 %v580, %v644
      %v646 = vpop.f32.mrb[0].mxu0
      %v647 = vpop.f32.mrb[0].mxu0
      %v648 = vadd.f32 %v583, %v647
      %v649 = vpop.f32.mrb[0].mxu0
      %650 = vmatprep.mubr.bf16.mxu0 %v324
      %651 = vmatmul.mubr.bf16.gmra.mrb[0].mxu0 %v323
      %v652 = vpop.f32.mrb[0].mxu0
      %v653 = vadd.f32 %v588, %v652
      %v654 = vpop.f32.mrb[0].mxu0
      %v655 = vpop.f32.mrb[0].mxu0
      %v656 = vadd.f32 %v591, %v655
      %v657 = vpop.f32.mrb[0].mxu0
      %658 = vmatprep.mubr.bf16.mxu0 %v328
      %659 = vmatmul.mubr.bf16.gmra.mrb[0].mxu0 %v327
      %v660 = vpop.f32.mrb[0].mxu0
      %v661 = vadd.f32 %v596, %v660
      %v662 = vpop.f32.mrb[0].mxu0
      %v663 = vpop.f32.mrb[0].mxu0
      %v664 = vadd.f32 %v599, %v663
      %v665 = vpop.f32.mrb[0].mxu0
      %666 = vdwg.mxu0
      %vm667 = vcmp.gt.f32.partialorder %v637, 0.0
      %vm668 = vcmp.gt.f32.partialorder %v640, 0.0
      %vm669 = vcmp.gt.f32.partialorder %v645, 0.0
      %vm670 = vcmp.gt.f32.partialorder %v648, 0.0
      %vm671 = vcmp.gt.f32.partialorder %v653, 0.0
      %vm672 = vcmp.gt.f32.partialorder %v656, 0.0
      %vm673 = vcmp.gt.f32.partialorder %v661, 0.0
      %vm674 = vcmp.gt.f32.partialorder %v664, 0.0
      %v675 = vmul.f32 %v637, 0.2
      %v676 = vmul.f32 %v640, 0.2
      %v677 = vmul.f32 %v645, 0.2
      %v678 = vmul.f32 %v648, 0.2
      %v679 = vmul.f32 %v653, 0.2
      %v680 = vmul.f32 %v656, 0.2
      %v681 = vmul.f32 %v661, 0.2
      %v682 = vmul.f32 %v664, 0.2
      %v683 = vsel %vm667, %v637, %v675
      %v684 = vsel %vm668, %v640, %v676
      %v685 = vsel %vm669, %v645, %v677
      %v686 = vsel %vm670, %v648, %v678
      %v687 = vsel %vm671, %v653, %v679
      %v688 = vsel %vm672, %v656, %v680
      %v689 = vsel %vm673, %v661, %v681
      %v690 = vsel %vm674, %v664, %v682
      %v691 = vpack.c.bf16 %v684, %v683
      %v692 = vpack.c.bf16 %v686, %v685
      %v693 = vpack.c.bf16 %v688, %v687
      %v694 = vpack.c.bf16 %v690, %v689
      %v699 = vunpack.c.l.b16 %v691
      %v700 = vunpack.c.h.b16 %v691
      %v701 = vunpack.c.l.b16 %v692
      %v702 = vunpack.c.h.b16 %v692
      %v703 = vunpack.c.l.b16 %v693
      %v704 = vunpack.c.h.b16 %v693
      %v705 = vunpack.c.l.b16 %v694
      %v706 = vunpack.c.h.b16 %v694
      %v707 = vpack.c.b16 %v699, %v699
      %v708 = vpack.c.b16 %v700, %v700
      %v709 = vpack.c.b16 %v701, %v701
      %v710 = vpack.c.b16 %v702, %v702
      %v711 = vpack.c.b16 %v703, %v703
      %v712 = vpack.c.b16 %v704, %v704
      %v713 = vpack.c.b16 %v705, %v705
      %v714 = vpack.c.b16 %v706, %v706
      %vm723 = vcmask 519168
      %724 = vst.msk [vmem:[%s175] sm:$0xf] %vm723, %v707
      %725 = vst.msk [vmem:[%s175 + $0x4] sm:$0xf] %vm723, %v708
      %726 = vst.msk [vmem:[%s175 + $0x8] sm:$0xf] %vm723, %v709
      %727 = vst.msk [vmem:[%s175 + $0xc] sm:$0xf] %vm723, %v710
      %728 = vst.msk [vmem:[%s175 + $0x10] sm:$0xf] %vm723, %v711
      %729 = vst.msk [vmem:[%s175 + $0x14] sm:$0xf] %vm723, %v712
      %730 = vst.msk [vmem:[%s175 + $0x18] sm:$0xf] %vm723, %v713
      %731 = vst.msk [vmem:[%s175 + $0x1c] sm:$0xf] %vm723, %v714
      %s732 = smul.u32 8, %s14
      %p733 = scmp.lt.s32.totalorder %s732, 15
      %s734 = scalar_select %p733, %s732, 15
      %s735 = smul.addr %s734, 4
      %s736 = scalar_lea.vmem %s3, %s735
      // Predicated region
      $region33: #{conv_deconv_vqvae_forward.10} parent=31 // pred_check
        %p737 = pneg %p100
      $region34: #{conv_deconv_vqvae_forward.10} parent=31 // pred_check_branch
        %739 = sbr.rel (%p737) target = $region36
      $region35: #{conv_deconv_vqvae_forward.10} parent=31 // pred_region
        %s740 = smul.u32 8, %s14
      $region36: #{conv_deconv_vqvae_forward.10} parent=31 // pred_fallthru
        _
    $region32: #{conv_deconv_vqvae_forward.10} parent=5 // pred_fallthru
      _
    %p741 = scmp.le.s32.totalorder 2, %s9
    // Predicated region
    $region37: #{conv_deconv_vqvae_forward.10} parent=5 // pred_check
      %p742 = pneg %p741
    $region38: #{conv_deconv_vqvae_forward.10} parent=5 // pred_check_branch
      %744 = sbr.rel (%p742) target = $region40
    $region39: #{conv_deconv_vqvae_forward.10} parent=5 // pred_region
      %s745 = ssub.s32 %s9, 2
      // Predicated region
      $region41: #{conv_deconv_vqvae_forward.10} parent=39 // pred_check
        %p746 = pneg %p106
      $region42: #{conv_deconv_vqvae_forward.10} parent=39 // pred_check_branch
        %748 = sbr.rel (%p746) target = $region44
      $region43: #{conv_deconv_vqvae_forward.10} parent=39 // pred_region
        %s749 = smul.u32 8, %s15
        %p750 = scmp.lt.s32.totalorder %s749, 15
        %s751 = scalar_select %p750, %s749, 15
        %s752 = smul.addr %s751, 4
        %s753 = scalar_lea.vmem %s3, %s752
      $region44: #{conv_deconv_vqvae_forward.10} parent=39 // pred_fallthru
        _
    $region40: #{conv_deconv_vqvae_forward.10} parent=5 // pred_fallthru
      _
  $region6: #{conv_deconv_vqvae_forward.10} parent=0 // loop_footer
    %s13 = sadd.s32 1, %s9
  $region7: #{conv_deconv_vqvae_forward.10} parent=0 // loop_footer_branch
    %8 = sbr.rel target = $region3
  $region8: #{conv_deconv_vqvae_forward.10} parent=0 // loop_exit
    _

// kernel: conv_deconv_vqvae_forward.11
$region0: #{conv_deconv_vqvae_forward.11}
  #allocation0 [shape = 'u32[]', space=smem, size = 0x4, offset = 0x4, fixed_abs, tag = 'smem constant byte address 0x4 - core index']
  #allocation1 [shape = 'u32[144,128]{1,0:T(1,128)}', space=vmem, size = 0x12000, scoped, tag = 'internal scratch']
  %s0 = inlined_call_operand.vmem [shape: bf16[32,1024], index: 0, kind: input, shape index: {}]
  %s1 = inlined_call_operand.vmem [shape: bf16[1024,128], index: 1, kind: input, shape index: {}]
  %s2 = inlined_call_operand.vmem [shape: f32[1,128], index: 2, kind: input, shape index: {}]
  %s3 = inlined_call_operand.vmem [shape: bf16[32,128], index: 3, kind: output, shape index: {}]
  %s4 = sld [smem:[#allocation0]]
  $region45: #{conv_deconv_vqvae_forward.11} parent=0
    _
  %s6 = ssub.s32 1, %s4
  %s7 = scalar_select 0, %s6, %s4
  loop: start=0, step=1, limit=4
  $region2: #{conv_deconv_vqvae_forward.11} parent=0 // loop_pre_header
    _
  $region3: #{conv_deconv_vqvae_forward.11} parent=0 // loop_header
    %s9 = sphi 0, %s13
    %p10 = scmp.ge.s32.totalorder %s9, 4
    %s19 = sphi 0, %s21
    %s22 = sphi 0, %s19
    %s23 = sphi 0, %s22
    %s39 = sphi 0, %s23
    %s43 = sphi 0, %s43
    %s45 = sphi 0, %s43
    %s46 = sphi 0, %s45
    %s60 = sphi 0, %s46
    %s64 = sphi 0, %s64
    %s66 = sphi 0, %s64
    %s67 = sphi 0, %s66
    %s81 = sphi 0, %s67
    %s87 = sphi 0, %s89
    %s90 = sphi 0, %s87
    %s91 = sphi 0, %s90
    %s107 = sphi 0, %s91
  $region4: #{conv_deconv_vqvae_forward.11} parent=0 // loop_header_branch
    %12 = sbr.rel (%p10) target = $region8
  $region5: #{conv_deconv_vqvae_forward.11} parent=0 // loop_body
    %s14 = ssub.s32 %s9, 1
    %s15 = ssub.s32 %s9, 2
    %s16 = sadd.s32 %s9, 1
    %s17 = ssub.s32 %s9, %s16
    %p18 = scmp.eq.s32.totalorder %s17, 0
    %s20 = sadd.s32 %s19, 1
    %s21 = scalar_select %p18, %s19, %s20
    %p24 = pneg %p18
    %p25 = scmp.eq.s32.totalorder %s9, 1
    %p26 = por %p24, %p25
    %p27 = scmp.ne.s32.totalorder %s19, %s22
    %p28 = scmp.eq.s32.totalorder %s9, 0
    %p29 = por %p27, %p28
    %p30 = scmp.ne.s32.totalorder %s19, %s22
    %p31 = scmp.eq.s32.totalorder %s14, 1
    %p32 = por %p30, %p31
    %p33 = scmp.ne.s32.totalorder %s22, %s23
    %p34 = scmp.eq.s32.totalorder %s14, 0
    %p35 = por %p33, %p34
    %p36 = scmp.ne.s32.totalorder %s22, %s23
    %p37 = scmp.eq.s32.totalorder %s15, 1
    %p38 = por %p36, %p37
    %p40 = scmp.ne.s32.totalorder %s23, %s39
    %p41 = scmp.eq.s32.totalorder %s15, 0
    %p42 = por %p40, %p41
    %s44 = sadd.s32 %s43, 1
    %p47 = scmp.eq.s32.totalorder %s9, 1
    %p48 = scmp.ne.s32.totalorder %s43, %s45
    %p49 = scmp.eq.s32.totalorder %s9, 0
    %p50 = por %p48, %p49
    %p51 = scmp.ne.s32.totalorder %s43, %s45
    %p52 = scmp.eq.s32.totalorder %s14, 1
    %p53 = por %p51, %p52
    %p54 = scmp.ne.s32.totalorder %s45, %s46
    %p55 = scmp.eq.s32.totalorder %s14, 0
    %p56 = por %p54, %p55
    %p57 = scmp.ne.s32.totalorder %s45, %s46
    %p58 = scmp.eq.s32.totalorder %s15, 1
    %p59 = por %p57, %p58
    %p61 = scmp.ne.s32.totalorder %s46, %s60
    %p62 = scmp.eq.s32.totalorder %s15, 0
    %p63 = por %p61, %p62
    %s65 = sadd.s32 %s64, 1
    %p68 = scmp.eq.s32.totalorder %s9, 1
    %p69 = scmp.ne.s32.totalorder %s64, %s66
    %p70 = scmp.eq.s32.totalorder %s9, 0
    %p71 = por %p69, %p70
    %p72 = scmp.ne.s32.totalorder %s64, %s66
    %p73 = scmp.eq.s32.totalorder %s14, 1
    %p74 = por %p72, %p73
    %p75 = scmp.ne.s32.totalorder %s66, %s67
    %p76 = scmp.eq.s32.totalorder %s14, 0
    %p77 = por %p75, %p76
    %p78 = scmp.ne.s32.totalorder %s66, %s67
    %p79 = scmp.eq.s32.totalorder %s15, 1
    %p80 = por %p78, %p79
    %p82 = scmp.ne.s32.totalorder %s67, %s81
    %p83 = scmp.eq.s32.totalorder %s15, 0
    %p84 = por %p82, %p83
    %s85 = ssub.s32 %s9, %s16
    %p86 = scmp.eq.s32.totalorder %s85, 0
    %s88 = sadd.s32 %s87, 1
    %s89 = scalar_select %p86, %s87, %s88
    %p92 = pneg %p86
    %p93 = scmp.eq.s32.totalorder %s9, 1
    %p94 = por %p92, %p93
    %p95 = scmp.ne.s32.totalorder %s87, %s90
    %p96 = scmp.eq.s32.totalorder %s9, 0
    %p97 = por %p95, %p96
    %p98 = scmp.ne.s32.totalorder %s87, %s90
    %p99 = scmp.eq.s32.totalorder %s14, 1
    %p100 = por %p98, %p99
    %p101 = scmp.ne.s32.totalorder %s90, %s91
    %p102 = scmp.eq.s32.totalorder %s14, 0
    %p103 = por %p101, %p102
    %p104 = scmp.ne.s32.totalorder %s90, %s91
    %p105 = scmp.eq.s32.totalorder %s15, 1
    %p106 = por %p104, %p105
    %p108 = scmp.ne.s32.totalorder %s91, %s107
    %p109 = scmp.eq.s32.totalorder %s15, 0
    %p110 = por %p108, %p109
    %p111 = scmp.le.s32.totalorder 1, %s9
    %p112 = scmp.lt.s32.totalorder %s9, 3
    %p113 = pnand %p111, %p112
    %p114 = pneg %p113
    // Predicated region
    $region9: #{conv_deconv_vqvae_forward.11} parent=5 // pred_check
      _
    $region10: #{conv_deconv_vqvae_forward.11} parent=5 // pred_check_branch
      %116 = sbr.rel (%p113) target = $region12
    $region11: #{conv_deconv_vqvae_forward.11} parent=5 // pred_region
      %s117 = ssub.s32 %s9, 1
      // Predicated region
      $region13: #{conv_deconv_vqvae_forward.11} parent=11 // pred_check
        %p118 = pneg %p56
      $region14: #{conv_deconv_vqvae_forward.11} parent=11 // pred_check_branch
        %120 = sbr.rel (%p118) target = $region16
      $region15: #{conv_deconv_vqvae_forward.11} parent=11 // pred_region
        _
      $region16: #{conv_deconv_vqvae_forward.11} parent=11 // pred_fallthru
        _
      // Predicated region
      $region17: #{conv_deconv_vqvae_forward.11} parent=11 // pred_check
        %p121 = pneg %p77
      $region18: #{conv_deconv_vqvae_forward.11} parent=11 // pred_check_branch
        %123 = sbr.rel (%p121) target = $region20
      $region19: #{conv_deconv_vqvae_forward.11} parent=11 // pred_region
        _
      $region20: #{conv_deconv_vqvae_forward.11} parent=11 // pred_fallthru
        _
    $region12: #{conv_deconv_vqvae_forward.11} parent=5 // pred_fallthru
      _
    %p124 = scmp.lt.s32.totalorder %s9, 2
    // Predicated region
    $region21: #{conv_deconv_vqvae_forward.11} parent=5 // pred_check
      %p125 = pneg %p124
    $region22: #{conv_deconv_vqvae_forward.11} parent=5 // pred_check_branch
      %127 = sbr.rel (%p125) target = $region24
    $region23: #{conv_deconv_vqvae_forward.11} parent=5 // pred_region
      // Predicated region
      $region25: #{conv_deconv_vqvae_forward.11} parent=23 // pred_check
        %p128 = pneg %p29
      $region26: #{conv_deconv_vqvae_forward.11} parent=23 // pred_check_branch
        %130 = sbr.rel (%p128) target = $region28
      $region27: #{conv_deconv_vqvae_forward.11} parent=23 // pred_region
        %s131 = smul.u32 2, %s9
        %p132 = scmp.lt.s32.totalorder %s131, 3
        %s133 = scalar_select %p132, %s131, 3
        %s134 = smul.addr %s133, 8
        %s135 = smul.addr %s134, 4
        %s136 = scalar_lea.vmem %s0, %s135
        %s137 = smul.u32 2, %s9
      $region28: #{conv_deconv_vqvae_forward.11} parent=23 // pred_fallthru
        _
    $region24: #{conv_deconv_vqvae_forward.11} parent=5 // pred_fallthru
      _
    %p138 = scmp.le.s32.totalorder 1, %s9
    %p139 = scmp.lt.s32.totalorder %s9, 3
    %p140 = pnand %p138, %p139
    %p141 = pneg %p140
    // Predicated region
    $region29: #{conv_deconv_vqvae_forward.11} parent=5 // pred_check
      _
    $region30: #{conv_deconv_vqvae_forward.11} parent=5 // pred_check_branch
      %143 = sbr.rel (%p140) target = $region32
    $region31: #{conv_deconv_vqvae_forward.11} parent=5 // pred_region
      %s144 = ssub.s32 %s9, 1
      %s145 = smul.u32 2, %s14
      %p146 = scmp.lt.s32.totalorder %s145, 3
      %s147 = scalar_select %p146, %s145, 3
      %s148 = smul.addr %s147, 8
      %s149 = smul.addr %s148, 4
      %s150 = scalar_lea.vmem %s0, %s149
      %p151 = pneg %p35
      %p152 = pneg %p32
      %p153 = pneg %p56
      %p154 = pneg %p53
      %p155 = pneg %p77
      %p156 = pneg %p74
      %p157 = pneg %p103
      %p158 = pneg %p100
      %s159 = smul.u32 2, %s14
      %p160 = scmp.lt.s32.totalorder %s159, 3
      %s161 = scalar_select %p160, %s159, 3
      %s162 = smul.addr %s161, 4
      %s163 = scalar_lea.vmem %s3, %s162
      %s164 = smul.u32 2, %s14
      %p165 = scmp.lt.s32.totalorder %s164, 3
      %s166 = scalar_select %p165, %s164, 3
      %s167 = smul.addr %s166, 8
      %s168 = smul.addr %s167, 4
      %s169 = scalar_lea.vmem %s0, %s168
      %s170 = smul.u32 2, %s14
      %s171 = smul.u32 2, %s14
      %p172 = scmp.lt.s32.totalorder %s171, 3
      %s173 = scalar_select %p172, %s171, 3
      %s174 = smul.addr %s173, 4
      %s175 = scalar_lea.vmem %s3, %s174
      %s176 = smul.u32 2, %s14
      %v178 = vld [vmem:[%s169] sm:$0xff]
      %v179 = vld [vmem:[%s169 + $0x8] sm:$0xff]
      %v180 = vld [vmem:[%s169 + $0x10] sm:$0xff]
      %v181 = vld [vmem:[%s169 + $0x18] sm:$0xff]
      %v182 = vld [vmem:[%s169 + $0x20] sm:$0xff]
      %v183 = vld [vmem:[%s169 + $0x28] sm:$0xff]
      %v184 = vld [vmem:[%s169 + $0x30] sm:$0xff]
      %v185 = vld [vmem:[%s169 + $0x38] sm:$0xff]
      %v186 = vld [vmem:[%s1] sm:$0xf]
      %v187 = vld [vmem:[%s1 + $0x4] sm:$0xf]
      %v188 = vld [vmem:[%s1 + $0x8] sm:$0xf]
      %v189 = vld [vmem:[%s1 + $0xc] sm:$0xf]
      %v190 = vld [vmem:[%s1 + $0x10] sm:$0xf]
      %v191 = vld [vmem:[%s1 + $0x14] sm:$0xf]
      %v192 = vld [vmem:[%s1 + $0x18] sm:$0xf]
      %v193 = vld [vmem:[%s1 + $0x1c] sm:$0xf]
      %v194 = vld [vmem:[%s1 + $0x20] sm:$0xf]
      %v195 = vld [vmem:[%s1 + $0x24] sm:$0xf]
      %v196 = vld [vmem:[%s1 + $0x28] sm:$0xf]
      %v197 = vld [vmem:[%s1 + $0x2c] sm:$0xf]
      %v198 = vld [vmem:[%s1 + $0x30] sm:$0xf]
      %v199 = vld [vmem:[%s1 + $0x34] sm:$0xf]
      %v200 = vld [vmem:[%s1 + $0x38] sm:$0xf]
      %v201 = vld [vmem:[%s1 + $0x3c] sm:$0xf]
      %v202 = vld [vmem:[%s1 + $0x40] sm:$0xf]
      %v203 = vld [vmem:[%s1 + $0x44] sm:$0xf]
      %v204 = vld [vmem:[%s1 + $0x48] sm:$0xf]
      %v205 = vld [vmem:[%s1 + $0x4c] sm:$0xf]
      %v206 = vld [vmem:[%s1 + $0x50] sm:$0xf]
      %v207 = vld [vmem:[%s1 + $0x54] sm:$0xf]
      %v208 = vld [vmem:[%s1 + $0x58] sm:$0xf]
      %v209 = vld [vmem:[%s1 + $0x5c] sm:$0xf]
      %v210 = vld [vmem:[%s1 + $0x60] sm:$0xf]
      %v211 = vld [vmem:[%s1 + $0x64] sm:$0xf]
      %v212 = vld [vmem:[%s1 + $0x68] sm:$0xf]
      %v213 = vld [vmem:[%s1 + $0x6c] sm:$0xf]
      %v214 = vld [vmem:[%s1 + $0x70] sm:$0xf]
      %v215 = vld [vmem:[%s1 + $0x74] sm:$0xf]
      %v216 = vld [vmem:[%s1 + $0x78] sm:$0xf]
      %v217 = vld [vmem:[%s1 + $0x7c] sm:$0xf]
      %v218 = vld [vmem:[%s1 + $0x80] sm:$0xf]
      %v219 = vld [vmem:[%s1 + $0x84] sm:$0xf]
      %v220 = vld [vmem:[%s1 + $0x88] sm:$0xf]
      %v221 = vld [vmem:[%s1 + $0x8c] sm:$0xf]
      %v222 = vld [vmem:[%s1 + $0x90] sm:$0xf]
      %v223 = vld [vmem:[%s1 + $0x94] sm:$0xf]
      %v224 = vld [vmem:[%s1 + $0x98] sm:$0xf]
      %v225 = vld [vmem:[%s1 + $0x9c] sm:$0xf]
      %v226 = vld [vmem:[%s1 + $0xa0] sm:$0xf]
      %v227 = vld [vmem:[%s1 + $0xa4] sm:$0xf]
      %v228 = vld [vmem:[%s1 + $0xa8] sm:$0xf]
      %v229 = vld [vmem:[%s1 + $0xac] sm:$0xf]
      %v230 = vld [vmem:[%s1 + $0xb0] sm:$0xf]
      %v231 = vld [vmem:[%s1 + $0xb4] sm:$0xf]
      %v232 = vld [vmem:[%s1 + $0xb8] sm:$0xf]
      %v233 = vld [vmem:[%s1 + $0xbc] sm:$0xf]
      %v234 = vld [vmem:[%s1 + $0xc0] sm:$0xf]
      %v235 = vld [vmem:[%s1 + $0xc4] sm:$0xf]
      %v236 = vld [vmem:[%s1 + $0xc8] sm:$0xf]
      %v237 = vld [vmem:[%s1 + $0xcc] sm:$0xf]
      %v238 = vld [vmem:[%s1 + $0xd0] sm:$0xf]
      %v239 = vld [vmem:[%s1 + $0xd4] sm:$0xf]
      %v240 = vld [vmem:[%s1 + $0xd8] sm:$0xf]
      %v241 = vld [vmem:[%s1 + $0xdc] sm:$0xf]
      %v242 = vld [vmem:[%s1 + $0xe0] sm:$0xf]
      %v243 = vld [vmem:[%s1 + $0xe4] sm:$0xf]
      %v244 = vld [vmem:[%s1 + $0xe8] sm:$0xf]
      %v245 = vld [vmem:[%s1 + $0xec] sm:$0xf]
      %v246 = vld [vmem:[%s1 + $0xf0] sm:$0xf]
      %v247 = vld [vmem:[%s1 + $0xf4] sm:$0xf]
      %v248 = vld [vmem:[%s1 + $0xf8] sm:$0xf]
      %v249 = vld [vmem:[%s1 + $0xfc] sm:$0xf]
      %v250 = vld [vmem:[%s1 + $0x100] sm:$0xf]
      %v251 = vld [vmem:[%s1 + $0x104] sm:$0xf]
      %v252 = vld [vmem:[%s1 + $0x108] sm:$0xf]
      %v253 = vld [vmem:[%s1 + $0x10c] sm:$0xf]
      %v254 = vld [vmem:[%s1 + $0x110] sm:$0xf]
      %v255 = vld [vmem:[%s1 + $0x114] sm:$0xf]
      %v256 = vld [vmem:[%s1 + $0x118] sm:$0xf]
      %v257 = vld [vmem:[%s1 + $0x11c] sm:$0xf]
      %v258 = vld [vmem:[%s1 + $0x120] sm:$0xf]
      %v259 = vld [vmem:[%s1 + $0x124] sm:$0xf]
      %v260 = vld [vmem:[%s1 + $0x128] sm:$0xf]
      %v261 = vld [vmem:[%s1 + $0x12c] sm:$0xf]
      %v262 = vld [vmem:[%s1 + $0x130] sm:$0xf]
      %v263 = vld [vmem:[%s1 + $0x134] sm:$0xf]
      %v264 = vld [vmem:[%s1 + $0x138] sm:$0xf]
      %v265 = vld [vmem:[%s1 + $0x13c] sm:$0xf]
      %v266 = vld [vmem:[%s1 + $0x140] sm:$0xf]
      %v267 = vld [vmem:[%s1 + $0x144] sm:$0xf]
      %v268 = vld [vmem:[%s1 + $0x148] sm:$0xf]
      %v269 = vld [vmem:[%s1 + $0x14c] sm:$0xf]
      %v270 = vld [vmem:[%s1 + $0x150] sm:$0xf]
      %v271 = vld [vmem:[%s1 + $0x154] sm:$0xf]
      %v272 = vld [vmem:[%s1 + $0x158] sm:$0xf]
      %v273 = vld [vmem:[%s1 + $0x15c] sm:$0xf]
      %v274 = vld [vmem:[%s1 + $0x160] sm:$0xf]
      %v275 = vld [vmem:[%s1 + $0x164] sm:$0xf]
      %v276 = vld [vmem:[%s1 + $0x168] sm:$0xf]
      %v277 = vld [vmem:[%s1 + $0x16c] sm:$0xf]
      %v278 = vld [vmem:[%s1 + $0x170] sm:$0xf]
      %v279 = vld [vmem:[%s1 + $0x174] sm:$0xf]
      %v280 = vld [vmem:[%s1 + $0x178] sm:$0xf]
      %v281 = vld [vmem:[%s1 + $0x17c] sm:$0xf]
      %v282 = vld [vmem:[%s1 + $0x180] sm:$0xf]
      %v283 = vld [vmem:[%s1 + $0x184] sm:$0xf]
      %v284 = vld [vmem:[%s1 + $0x188] sm:$0xf]
      %v285 = vld [vmem:[%s1 + $0x18c] sm:$0xf]
      %v286 = vld [vmem:[%s1 + $0x190] sm:$0xf]
      %v287 = vld [vmem:[%s1 + $0x194] sm:$0xf]
      %v288 = vld [vmem:[%s1 + $0x198] sm:$0xf]
      %v289 = vld [vmem:[%s1 + $0x19c] sm:$0xf]
      %v290 = vld [vmem:[%s1 + $0x1a0] sm:$0xf]
      %v291 = vld [vmem:[%s1 + $0x1a4] sm:$0xf]
      %v292 = vld [vmem:[%s1 + $0x1a8] sm:$0xf]
      %v293 = vld [vmem:[%s1 + $0x1ac] sm:$0xf]
      %v294 = vld [vmem:[%s1 + $0x1b0] sm:$0xf]
      %v295 = vld [vmem:[%s1 + $0x1b4] sm:$0xf]
      %v296 = vld [vmem:[%s1 + $0x1b8] sm:$0xf]
      %v297 = vld [vmem:[%s1 + $0x1bc] sm:$0xf]
      %v298 = vld [vmem:[%s1 + $0x1c0] sm:$0xf]
      %v299 = vld [vmem:[%s1 + $0x1c4] sm:$0xf]
      %v300 = vld [vmem:[%s1 + $0x1c8] sm:$0xf]
      %v301 = vld [vmem:[%s1 + $0x1cc] sm:$0xf]
      %v302 = vld [vmem:[%s1 + $0x1d0] sm:$0xf]
      %v303 = vld [vmem:[%s1 + $0x1d4] sm:$0xf]
      %v304 = vld [vmem:[%s1 + $0x1d8] sm:$0xf]
      %v305 = vld [vmem:[%s1 + $0x1dc] sm:$0xf]
      %v306 = vld [vmem:[%s1 + $0x1e0] sm:$0xf]
      %v307 = vld [vmem:[%s1 + $0x1e4] sm:$0xf]
      %v308 = vld [vmem:[%s1 + $0x1e8] sm:$0xf]
      %v309 = vld [vmem:[%s1 + $0x1ec] sm:$0xf]
      %v310 = vld [vmem:[%s1 + $0x1f0] sm:$0xf]
      %v311 = vld [vmem:[%s1 + $0x1f4] sm:$0xf]
      %v312 = vld [vmem:[%s1 + $0x1f8] sm:$0xf]
      %v313 = vld [vmem:[%s1 + $0x1fc] sm:$0xf]
      %v314 = vld [vmem:[%s2] sm:$0x1]
      %v316 = vlaneseq
      %v317 = vshrl.u32 %v316, 7
      %v318 = vsub.s32 0, %v317
      %v319 = vrot.slane %v314, %v318
      %v329 = vunpack.c.l.b16 %v178
      %v330 = vunpack.c.h.b16 %v178
      %v331 = vunpack.c.l.b16 %v179
      %v332 = vunpack.c.h.b16 %v179
      %v333 = vunpack.c.l.b16 %v180
      %v334 = vunpack.c.h.b16 %v180
      %v335 = vunpack.c.l.b16 %v181
      %v336 = vunpack.c.h.b16 %v181
      %v337 = vunpack.c.l.b16 %v182
      %v338 = vunpack.c.h.b16 %v182
      %v339 = vunpack.c.l.b16 %v183
      %v340 = vunpack.c.h.b16 %v183
      %v341 = vunpack.c.l.b16 %v184
      %v342 = vunpack.c.h.b16 %v184
      %v343 = vunpack.c.l.b16 %v185
      %v344 = vunpack.c.h.b16 %v185
      %v345 = vpack.c.b16 %v337, %v329
      %v346 = vpack.c.b16 %v338, %v330
      %v347 = vpack.c.b16 %v339, %v331
      %v348 = vpack.c.b16 %v340, %v332
      %v349 = vpack.c.b16 %v341, %v333
      %v350 = vpack.c.b16 %v342, %v334
      %v351 = vpack.c.b16 %v343, %v335
      %v352 = vpack.c.b16 %v344, %v336
      %v489 = vunpack.c.l.b16 %v186
      %v490 = vunpack.c.l.b16 %v187
      %v491 = vunpack.c.l.b16 %v188
      %v492 = vunpack.c.l.b16 %v189
      %v493 = vunpack.c.l.b16 %v190
      %v494 = vunpack.c.l.b16 %v191
      %v495 = vunpack.c.l.b16 %v192
      %v496 = vunpack.c.l.b16 %v193
      %v497 = vunpack.c.l.b16 %v194
      %v498 = vunpack.c.l.b16 %v195
      %v499 = vunpack.c.l.b16 %v196
      %v500 = vunpack.c.l.b16 %v197
      %v501 = vunpack.c.l.b16 %v198
      %v502 = vunpack.c.l.b16 %v199
      %v503 = vunpack.c.l.b16 %v200
      %v504 = vunpack.c.l.b16 %v201
      %v505 = vunpack.c.l.b16 %v202
      %v506 = vunpack.c.l.b16 %v203
      %v507 = vunpack.c.l.b16 %v204
      %v508 = vunpack.c.l.b16 %v205
      %v509 = vunpack.c.l.b16 %v206
      %v510 = vunpack.c.l.b16 %v207
      %v511 = vunpack.c.l.b16 %v208
      %v512 = vunpack.c.l.b16 %v209
      %v513 = vunpack.c.l.b16 %v210
      %v514 = vunpack.c.l.b16 %v211
      %v515 = vunpack.c.l.b16 %v212
      %v516 = vunpack.c.l.b16 %v213
      %v517 = vunpack.c.l.b16 %v214
      %v518 = vunpack.c.l.b16 %v215
      %v519 = vunpack.c.l.b16 %v216
      %v520 = vunpack.c.l.b16 %v217
      %v521 = vunpack.c.l.b16 %v218
      %v522 = vunpack.c.l.b16 %v219
      %v523 = vunpack.c.l.b16 %v220
      %v524 = vunpack.c.l.b16 %v221
      %v525 = vunpack.c.l.b16 %v222
      %v526 = vunpack.c.l.b16 %v223
      %v527 = vunpack.c.l.b16 %v224
      %v528 = vunpack.c.l.b16 %v225
      %v529 = vunpack.c.l.b16 %v226
      %v530 = vunpack.c.l.b16 %v227
      %v531 = vunpack.c.l.b16 %v228
      %v532 = vunpack.c.l.b16 %v229
      %v533 = vunpack.c.l.b16 %v230
      %v534 = vunpack.c.l.b16 %v231
      %v535 = vunpack.c.l.b16 %v232
      %v536 = vunpack.c.l.b16 %v233
      %v537 = vunpack.c.l.b16 %v234
      %v538 = vunpack.c.l.b16 %v235
      %v539 = vunpack.c.l.b16 %v236
      %v540 = vunpack.c.l.b16 %v237
      %v541 = vunpack.c.l.b16 %v238
      %v542 = vunpack.c.l.b16 %v239
      %v543 = vunpack.c.l.b16 %v240
      %v544 = vunpack.c.l.b16 %v241
      %v545 = vunpack.c.l.b16 %v242
      %v546 = vunpack.c.l.b16 %v243
      %v547 = vunpack.c.l.b16 %v244
      %v548 = vunpack.c.l.b16 %v245
      %v549 = vunpack.c.l.b16 %v246
      %v550 = vunpack.c.l.b16 %v247
      %v551 = vunpack.c.l.b16 %v248
      %v552 = vunpack.c.l.b16 %v249
      %v553 = vunpack.c.l.b16 %v250
      %v554 = vunpack.c.l.b16 %v251
      %v555 = vunpack.c.l.b16 %v252
      %v556 = vunpack.c.l.b16 %v253
      %v557 = vunpack.c.l.b16 %v254
      %v558 = vunpack.c.l.b16 %v255
      %v559 = vunpack.c.l.b16 %v256
      %v560 = vunpack.c.l.b16 %v257
      %v561 = vunpack.c.l.b16 %v258
      %v562 = vunpack.c.l.b16 %v259
      %v563 = vunpack.c.l.b16 %v260
      %v564 = vunpack.c.l.b16 %v261
      %v565 = vunpack.c.l.b16 %v262
      %v566 = vunpack.c.l.b16 %v263
      %v567 = vunpack.c.l.b16 %v264
      %v568 = vunpack.c.l.b16 %v265
      %v569 = vunpack.c.l.b16 %v266
      %v570 = vunpack.c.l.b16 %v267
      %v571 = vunpack.c.l.b16 %v268
      %v572 = vunpack.c.l.b16 %v269
      %v573 = vunpack.c.l.b16 %v270
      %v574 = vunpack.c.l.b16 %v271
      %v575 = vunpack.c.l.b16 %v272
      %v576 = vunpack.c.l.b16 %v273
      %v577 = vunpack.c.l.b16 %v274
      %v578 = vunpack.c.l.b16 %v275
      %v579 = vunpack.c.l.b16 %v276
      %v580 = vunpack.c.l.b16 %v277
      %v581 = vunpack.c.l.b16 %v278
      %v582 = vunpack.c.l.b16 %v279
      %v583 = vunpack.c.l.b16 %v280
      %v584 = vunpack.c.l.b16 %v281
      %v585 = vunpack.c.l.b16 %v282
      %v586 = vunpack.c.l.b16 %v283
      %v587 = vunpack.c.l.b16 %v284
      %v588 = vunpack.c.l.b16 %v285
      %v589 = vunpack.c.l.b16 %v286
      %v590 = vunpack.c.l.b16 %v287
      %v591 = vunpack.c.l.b16 %v288
      %v592 = vunpack.c.l.b16 %v289
      %v593 = vunpack.c.l.b16 %v290
      %v594 = vunpack.c.l.b16 %v291
      %v595 = vunpack.c.l.b16 %v292
      %v596 = vunpack.c.l.b16 %v293
      %v597 = vunpack.c.l.b16 %v294
      %v598 = vunpack.c.l.b16 %v295
      %v599 = vunpack.c.l.b16 %v296
      %v600 = vunpack.c.l.b16 %v297
      %v601 = vunpack.c.l.b16 %v298
      %v602 = vunpack.c.l.b16 %v299
      %v603 = vunpack.c.l.b16 %v300
      %v604 = vunpack.c.l.b16 %v301
      %v605 = vunpack.c.l.b16 %v302
      %v606 = vunpack.c.l.b16 %v303
      %v607 = vunpack.c.l.b16 %v304
      %v608 = vunpack.c.l.b16 %v305
      %v609 = vunpack.c.l.b16 %v306
      %v610 = vunpack.c.l.b16 %v307
      %v611 = vunpack.c.l.b16 %v308
      %v612 = vunpack.c.l.b16 %v309
      %v613 = vunpack.c.l.b16 %v310
      %v614 = vunpack.c.l.b16 %v311
      %v615 = vunpack.c.l.b16 %v312
      %v616 = vunpack.c.l.b16 %v313
      %v617 = vpack.c.b16 %v490, %v489
      %v618 = vpack.c.b16 %v492, %v491
      %v619 = vpack.c.b16 %v494, %v493
      %v620 = vpack.c.b16 %v496, %v495
      %v621 = vpack.c.b16 %v498, %v497
      %v622 = vpack.c.b16 %v500, %v499
      %v623 = vpack.c.b16 %v502, %v501
      %v624 = vpack.c.b16 %v504, %v503
      %v625 = vpack.c.b16 %v506, %v505
      %v626 = vpack.c.b16 %v508, %v507
      %v627 = vpack.c.b16 %v510, %v509
      %v628 = vpack.c.b16 %v512, %v511
      %v629 = vpack.c.b16 %v514, %v513
      %v630 = vpack.c.b16 %v516, %v515
      %v631 = vpack.c.b16 %v518, %v517
      %v632 = vpack.c.b16 %v520, %v519
      %v633 = vpack.c.b16 %v522, %v521
      %v634 = vpack.c.b16 %v524, %v523
      %v635 = vpack.c.b16 %v526, %v525
      %v636 = vpack.c.b16 %v528, %v527
      %v637 = vpack.c.b16 %v530, %v529
      %v638 = vpack.c.b16 %v532, %v531
      %v639 = vpack.c.b16 %v534, %v533
      %v640 = vpack.c.b16 %v536, %v535
      %v641 = vpack.c.b16 %v538, %v537
      %v642 = vpack.c.b16 %v540, %v539
      %v643 = vpack.c.b16 %v542, %v541
      %v644 = vpack.c.b16 %v544, %v543
      %v645 = vpack.c.b16 %v546, %v545
      %v646 = vpack.c.b16 %v548, %v547
      %v647 = vpack.c.b16 %v550, %v549
      %v648 = vpack.c.b16 %v552, %v551
      %v649 = vpack.c.b16 %v554, %v553
      %v650 = vpack.c.b16 %v556, %v555
      %v651 = vpack.c.b16 %v558, %v557
      %v652 = vpack.c.b16 %v560, %v559
      %v653 = vpack.c.b16 %v562, %v561
      %v654 = vpack.c.b16 %v564, %v563
      %v655 = vpack.c.b16 %v566, %v565
      %v656 = vpack.c.b16 %v568, %v567
      %v657 = vpack.c.b16 %v570, %v569
      %v658 = vpack.c.b16 %v572, %v571
      %v659 = vpack.c.b16 %v574, %v573
      %v660 = vpack.c.b16 %v576, %v575
      %v661 = vpack.c.b16 %v578, %v577
      %v662 = vpack.c.b16 %v580, %v579
      %v663 = vpack.c.b16 %v582, %v581
      %v664 = vpack.c.b16 %v584, %v583
      %v665 = vpack.c.b16 %v586, %v585
      %v666 = vpack.c.b16 %v588, %v587
      %v667 = vpack.c.b16 %v590, %v589
      %v668 = vpack.c.b16 %v592, %v591
      %v669 = vpack.c.b16 %v594, %v593
      %v670 = vpack.c.b16 %v596, %v595
      %v671 = vpack.c.b16 %v598, %v597
      %v672 = vpack.c.b16 %v600, %v599
      %v673 = vpack.c.b16 %v602, %v601
      %v674 = vpack.c.b16 %v604, %v603
      %v675 = vpack.c.b16 %v606, %v605
      %v676 = vpack.c.b16 %v608, %v607
      %v677 = vpack.c.b16 %v610, %v609
      %v678 = vpack.c.b16 %v612, %v611
      %v679 = vpack.c.b16 %v614, %v613
      %v680 = vpack.c.b16 %v616, %v615
      %745 = vmatprep.subr.bf16.mxu0 0
      %746 = vmatpush1.bf16.msra.mxu0 %v617
      %747 = vmatprep.subr.bf16.mxu0 0
      %748 = vmatpush1.bf16.msra.mxu0 %v618
      %749 = vmatprep.subr.bf16.mxu0 0
      %750 = vmatpush1.bf16.msra.mxu0 %v619
      %751 = vmatprep.subr.bf16.mxu0 0
      %752 = vmatpush1.bf16.msra.mxu0 %v620
      %753 = vmatprep.subr.bf16.mxu0 0
      %754 = vmatpush1.bf16.msra.mxu0 %v621
      %755 = vmatprep.subr.bf16.mxu0 0
      %756 = vmatpush1.bf16.msra.mxu0 %v622
      %757 = vmatprep.subr.bf16.mxu0 0
      %758 = vmatpush1.bf16.msra.mxu0 %v623
      %759 = vmatprep.subr.bf16.mxu0 0
      %760 = vmatpush1.bf16.msra.mxu0 %v624
      %761 = vmatprep.subr.bf16.mxu0 0
      %762 = vmatpush1.bf16.msra.mxu0 %v625
      %763 = vmatprep.subr.bf16.mxu0 0
      %764 = vmatpush1.bf16.msra.mxu0 %v626
      %765 = vmatprep.subr.bf16.mxu0 0
      %766 = vmatpush1.bf16.msra.mxu0 %v627
      %767 = vmatprep.subr.bf16.mxu0 0
      %768 = vmatpush1.bf16.msra.mxu0 %v628
      %769 = vmatprep.subr.bf16.mxu0 0
      %770 = vmatpush1.bf16.msra.mxu0 %v629
      %771 = vmatprep.subr.bf16.mxu0 0
      %772 = vmatpush1.bf16.msra.mxu0 %v630
      %773 = vmatprep.subr.bf16.mxu0 0
      %774 = vmatpush1.bf16.msra.mxu0 %v631
      %775 = vmatprep.subr.bf16.mxu0 0
      %776 = vmatpush1.bf16.msra.mxu0 %v632
      %777 = vmatprep.mubr.bf16.mxu0 %v346
      %778 = vmatmul.mubr.bf16.gmra.mrb[0].mxu0 %v345
      %v779 = vpop.f32.mrb[0].mxu0
      %v780 = vadd.f32 %v319, %v779
      %v781 = vpop.f32.mrb[0].mxu0
      %v782 = vpop.f32.mrb[0].mxu0
      %v783 = vadd.f32 %v319, %v782
      %v784 = vpop.f32.mrb[0].mxu0
      %785 = vdwg.mxu0
      %786 = vmatprep.subr.bf16.mxu0 0
      %787 = vmatpush1.bf16.msra.mxu0 %v633
      %788 = vmatprep.subr.bf16.mxu0 0
      %789 = vmatpush1.bf16.msra.mxu0 %v634
      %790 = vmatprep.subr.bf16.mxu0 0
      %791 = vmatpush1.bf16.msra.mxu0 %v635
      %792 = vmatprep.subr.bf16.mxu0 0
      %793 = vmatpush1.bf16.msra.mxu0 %v636
      %794 = vmatprep.subr.bf16.mxu0 0
      %795 = vmatpush1.bf16.msra.mxu0 %v637
      %796 = vmatprep.subr.bf16.mxu0 0
      %797 = vmatpush1.bf16.msra.mxu0 %v638
      %798 = vmatprep.subr.bf16.mxu0 0
      %799 = vmatpush1.bf16.msra.mxu0 %v639
      %800 = vmatprep.subr.bf16.mxu0 0
      %801 = vmatpush1.bf16.msra.mxu0 %v640
      %802 = vmatprep.subr.bf16.mxu0 0
      %803 = vmatpush1.bf16.msra.mxu0 %v641
      %804 = vmatprep.subr.bf16.mxu0 0
      %805 = vmatpush1.bf16.msra.mxu0 %v642
      %806 = vmatprep.subr.bf16.mxu0 0
      %807 = vmatpush1.bf16.msra.mxu0 %v643
      %808 = vmatprep.subr.bf16.mxu0 0
      %809 = vmatpush1.bf16.msra.mxu0 %v644
      %810 = vmatprep.subr.bf16.mxu0 0
      %811 = vmatpush1.bf16.msra.mxu0 %v645
      %812 = vmatprep.subr.bf16.mxu0 0
      %813 = vmatpush1.bf16.msra.mxu0 %v646
      %814 = vmatprep.subr.bf16.mxu0 0
      %815 = vmatpush1.bf16.msra.mxu0 %v647
      %816 = vmatprep.subr.bf16.mxu0 0
      %817 = vmatpush1.bf16.msra.mxu0 %v648
      %818 = vmatprep.mubr.bf16.mxu0 %v348
      %819 = vmatmul.mubr.bf16.gmra.mrb[0].mxu0 %v347
      %v820 = vpop.f32.mrb[0].mxu0
      %v821 = vadd.f32 %v780, %v820
      %v822 = vpop.f32.mrb[0].mxu0
      %v823 = vpop.f32.mrb[0].mxu0
      %v824 = vadd.f32 %v783, %v823
      %v825 = vpop.f32.mrb[0].mxu0
      %826 = vdwg.mxu0
      %827 = vmatprep.subr.bf16.mxu0 0
      %828 = vmatpush1.bf16.msra.mxu0 %v649
      %829 = vmatprep.subr.bf16.mxu0 0
      %830 = vmatpush1.bf16.msra.mxu0 %v650
      %831 = vmatprep.subr.bf16.mxu0 0
      %832 = vmatpush1.bf16.msra.mxu0 %v651
      %833 = vmatprep.subr.bf16.mxu0 0
      %834 = vmatpush1.bf16.msra.mxu0 %v652
      %835 = vmatprep.subr.bf16.mxu0 0
      %836 = vmatpush1.bf16.msra.mxu0 %v653
      %837 = vmatprep.subr.bf16.mxu0 0
      %838 = vmatpush1.bf16.msra.mxu0 %v654
      %839 = vmatprep.subr.bf16.mxu0 0
      %840 = vmatpush1.bf16.msra.mxu0 %v655
      %841 = vmatprep.subr.bf16.mxu0 0
      %842 = vmatpush1.bf16.msra.mxu0 %v656
      %843 = vmatprep.subr.bf16.mxu0 0
      %844 = vmatpush1.bf16.msra.mxu0 %v657
      %845 = vmatprep.subr.bf16.mxu0 0
      %846 = vmatpush1.bf16.msra.mxu0 %v658
      %847 = vmatprep.subr.bf16.mxu0 0
      %848 = vmatpush1.bf16.msra.mxu0 %v659
      %849 = vmatprep.subr.bf16.mxu0 0
      %850 = vmatpush1.bf16.msra.mxu0 %v660
      %851 = vmatprep.subr.bf16.mxu0 0
      %852 = vmatpush1.bf16.msra.mxu0 %v661
      %853 = vmatprep.subr.bf16.mxu0 0
      %854 = vmatpush1.bf16.msra.mxu0 %v662
      %855 = vmatprep.subr.bf16.mxu0 0
      %856 = vmatpush1.bf16.msra.mxu0 %v663
      %857 = vmatprep.subr.bf16.mxu0 0
      %858 = vmatpush1.bf16.msra.mxu0 %v664
      %859 = vmatprep.mubr.bf16.mxu0 %v350
      %860 = vmatmul.mubr.bf16.gmra.mrb[0].mxu0 %v349
      %v861 = vpop.f32.mrb[0].mxu0
      %v862 = vadd.f32 %v821, %v861
      %v863 = vpop.f32.mrb[0].mxu0
      %v864 = vpop.f32.mrb[0].mxu0
      %v865 = vadd.f32 %v824, %v864
      %v866 = vpop.f32.mrb[0].mxu0
      %867 = vdwg.mxu0
      %868 = vmatprep.subr.bf16.mxu0 0
      %869 = vmatpush1.bf16.msra.mxu0 %v665
      %870 = vmatprep.subr.bf16.mxu0 0
      %871 = vmatpush1.bf16.msra.mxu0 %v666
      %872 = vmatprep.subr.bf16.mxu0 0
      %873 = vmatpush1.bf16.msra.mxu0 %v667
      %874 = vmatprep.subr.bf16.mxu0 0
      %875 = vmatpush1.bf16.msra.mxu0 %v668
      %876 = vmatprep.subr.bf16.mxu0 0
      %877 = vmatpush1.bf16.msra.mxu0 %v669
      %878 = vmatprep.subr.bf16.mxu0 0
      %879 = vmatpush1.bf16.msra.mxu0 %v670
      %880 = vmatprep.subr.bf16.mxu0 0
      %881 = vmatpush1.bf16.msra.mxu0 %v671
      %882 = vmatprep.subr.bf16.mxu0 0
      %883 = vmatpush1.bf16.msra.mxu0 %v672
      %884 = vmatprep.subr.bf16.mxu0 0
      %885 = vmatpush1.bf16.msra.mxu0 %v673
      %886 = vmatprep.subr.bf16.mxu0 0
      %887 = vmatpush1.bf16.msra.mxu0 %v674
      %888 = vmatprep.subr.bf16.mxu0 0
      %889 = vmatpush1.bf16.msra.mxu0 %v675
      %890 = vmatprep.subr.bf16.mxu0 0
      %891 = vmatpush1.bf16.msra.mxu0 %v676
      %892 = vmatprep.subr.bf16.mxu0 0
      %893 = vmatpush1.bf16.msra.mxu0 %v677
      %894 = vmatprep.subr.bf16.mxu0 0
      %895 = vmatpush1.bf16.msra.mxu0 %v678
      %896 = vmatprep.subr.bf16.mxu0 0
      %897 = vmatpush1.bf16.msra.mxu0 %v679
      %898 = vmatprep.subr.bf16.mxu0 0
      %899 = vmatpush1.bf16.msra.mxu0 %v680
      %900 = vmatprep.mubr.bf16.mxu0 %v352
      %901 = vmatmul.mubr.bf16.gmra.mrb[0].mxu0 %v351
      %v902 = vpop.f32.mrb[0].mxu0
      %v903 = vadd.f32 %v862, %v902
      %v904 = vpop.f32.mrb[0].mxu0
      %v905 = vpop.f32.mrb[0].mxu0
      %v906 = vadd.f32 %v865, %v905
      %v907 = vpop.f32.mrb[0].mxu0
      %908 = vdwg.mxu0
      %vm909 = vcmp.gt.f32.partialorder %v903, 0.0
      %vm910 = vcmp.gt.f32.partialorder %v906, 0.0
      %v911 = vmul.f32 %v903, 0.2
      %v912 = vmul.f32 %v906, 0.2
      %v913 = vsel %vm909, %v903, %v911
      %v914 = vsel %vm910, %v906, %v912
      %v915 = vpack.c.bf16 %v914, %v913
      %v917 = vunpack.c.l.b16 %v915
      %v918 = vunpack.c.h.b16 %v915
      %v919 = vpack.c.b16 %v917, %v917
      %v920 = vpack.c.b16 %v918, %v918
      %923 = vst [vmem:[%s175] sm:$0xf] %v919
      %924 = vst [vmem:[%s175 + $0x4] sm:$0xf] %v920
      %s925 = smul.u32 2, %s14
      %p926 = scmp.lt.s32.totalorder %s925, 3
      %s927 = scalar_select %p926, %s925, 3
      %s928 = smul.addr %s927, 4
      %s929 = scalar_lea.vmem %s3, %s928
      // Predicated region
      $region33: #{conv_deconv_vqvae_forward.11} parent=31 // pred_check
        %p930 = pneg %p100
      $region34: #{conv_deconv_vqvae_forward.11} parent=31 // pred_check_branch
        %932 = sbr.rel (%p930) target = $region36
      $region35: #{conv_deconv_vqvae_forward.11} parent=31 // pred_region
        %s933 = smul.u32 2, %s14
      $region36: #{conv_deconv_vqvae_forward.11} parent=31 // pred_fallthru
        _
    $region32: #{conv_deconv_vqvae_forward.11} parent=5 // pred_fallthru
      _
    %p934 = scmp.le.s32.totalorder 2, %s9
    // Predicated region
    $region37: #{conv_deconv_vqvae_forward.11} parent=5 // pred_check
      %p935 = pneg %p934
    $region38: #{conv_deconv_vqvae_forward.11} parent=5 // pred_check_branch
      %937 = sbr.rel (%p935) target = $region40
    $region39: #{conv_deconv_vqvae_forward.11} parent=5 // pred_region
      %s938 = ssub.s32 %s9, 2
      // Predicated region
      $region41: #{conv_deconv_vqvae_forward.11} parent=39 // pred_check
        %p939 = pneg %p106
      $region42: #{conv_deconv_vqvae_forward.11} parent=39 // pred_check_branch
        %941 = sbr.rel (%p939) target = $region44
      $region43: #{conv_deconv_vqvae_forward.11} parent=39 // pred_region
        %s942 = smul.u32 2, %s15
        %p943 = scmp.lt.s32.totalorder %s942, 3
        %s944 = scalar_select %p943, %s942, 3
        %s945 = smul.addr %s944, 4
        %s946 = scalar_lea.vmem %s3, %s945
      $region44: #{conv_deconv_vqvae_forward.11} parent=39 // pred_fallthru
        _
    $region40: #{conv_deconv_vqvae_forward.11} parent=5 // pred_fallthru
      _
  $region6: #{conv_deconv_vqvae_forward.11} parent=0 // loop_footer
    %s13 = sadd.s32 1, %s9
  $region7: #{conv_deconv_vqvae_forward.11} parent=0 // loop_footer_branch
    %8 = sbr.rel target = $region3
  $region8: #{conv_deconv_vqvae_forward.11} parent=0 // loop_exit
    _

// kernel: conv_deconv_vqvae_forward.13
$region0: #{conv_deconv_vqvae_forward.13}
  #allocation0 [shape = 'u32[]', space=smem, size = 0x4, offset = 0x4, fixed_abs, tag = 'smem constant byte address 0x4 - core index']
  #allocation1 [shape = 'u32[144,128]{1,0:T(1,128)}', space=vmem, size = 0x12000, scoped, tag = 'internal scratch']
  %s0 = inlined_call_operand.vmem [shape: bf16[2,1024], index: 0, kind: input, shape index: {}]
  %s1 = inlined_call_operand.vmem [shape: bf16[1024,64], index: 1, kind: input, shape index: {}]
  %s2 = inlined_call_operand.vmem [shape: f32[1,64], index: 2, kind: input, shape index: {}]
  %s3 = inlined_call_operand.vmem [shape: f32[64,64], index: 3, kind: input, shape index: {}]
  %s4 = inlined_call_operand.vmem [shape: f32[64,1024], index: 4, kind: input, shape index: {}]
  %s5 = inlined_call_operand.vmem [shape: f32[1,1024], index: 5, kind: input, shape index: {}]
  %s6 = inlined_call_operand.vmem [shape: bf16[2,1024], index: 6, kind: output, shape index: {0}]
  %s7 = inlined_call_operand.hbm [shape: f32[1,1], index: 7, kind: output, shape index: {1}]
  %8 = xla_tuple %s6, %s7
  %s9 = sld [smem:[#allocation0]]
  $region42: #{conv_deconv_vqvae_forward.13} parent=0
    _
  %s11 = ssub.s32 1, %s9
  %s12 = scalar_select 0, %s11, %s9
  $region1: #{conv_deconv_vqvae_forward.13} parent=0
    #allocation2 [shape = 'u8[512]{0}', space=vmem, size = 0x400, scoped, tag = 'output window, operand 1, single buffered']
    #allocation3 [shape = 's32[1]{0}', space=sflag, size = 0x4, scoped, tag = 'scoped memory for conv_deconv_vqvae_forward.13']
    %13 = vsyncpa [#allocation3], 0
    // Predicated region
    $region2: #{conv_deconv_vqvae_forward.13} parent=1 // pred_check
      _
    $region3: #{conv_deconv_vqvae_forward.13} parent=1 // pred_check_branch
      %15 = sbr.rel (0) target = $region5
    $region4: #{conv_deconv_vqvae_forward.13} parent=1 // pred_region
      _
    $region5: #{conv_deconv_vqvae_forward.13} parent=1 // pred_fallthru
      _
    // Predicated region
    $region6: #{conv_deconv_vqvae_forward.13} parent=1 // pred_check
      _
    $region7: #{conv_deconv_vqvae_forward.13} parent=1 // pred_check_branch
      %17 = sbr.rel (0) target = $region9
    $region8: #{conv_deconv_vqvae_forward.13} parent=1 // pred_region
      _
    $region9: #{conv_deconv_vqvae_forward.13} parent=1 // pred_fallthru
      _
    // Predicated region
    $region10: #{conv_deconv_vqvae_forward.13} parent=1 // pred_check
      _
    $region11: #{conv_deconv_vqvae_forward.13} parent=1 // pred_check_branch
      %19 = sbr.rel (0) target = $region13
    $region12: #{conv_deconv_vqvae_forward.13} parent=1 // pred_region
      _
    $region13: #{conv_deconv_vqvae_forward.13} parent=1 // pred_fallthru
      _
    // Predicated region
    $region14: #{conv_deconv_vqvae_forward.13} parent=1 // pred_check
      _
    $region15: #{conv_deconv_vqvae_forward.13} parent=1 // pred_check_branch
      %21 = sbr.rel (0) target = $region17
    $region16: #{conv_deconv_vqvae_forward.13} parent=1 // pred_region
      _
    $region17: #{conv_deconv_vqvae_forward.13} parent=1 // pred_fallthru
      _
    // Predicated region
    $region18: #{conv_deconv_vqvae_forward.13} parent=1 // pred_check
      _
    $region19: #{conv_deconv_vqvae_forward.13} parent=1 // pred_check_branch
      %23 = sbr.rel (0) target = $region21
    $region20: #{conv_deconv_vqvae_forward.13} parent=1 // pred_region
      _
    $region21: #{conv_deconv_vqvae_forward.13} parent=1 // pred_fallthru
      _
    // Predicated region
    $region22: #{conv_deconv_vqvae_forward.13} parent=1 // pred_check
      _
    $region23: #{conv_deconv_vqvae_forward.13} parent=1 // pred_check_branch
      %25 = sbr.rel (0) target = $region25
    $region24: #{conv_deconv_vqvae_forward.13} parent=1 // pred_region
      _
    $region25: #{conv_deconv_vqvae_forward.13} parent=1 // pred_fallthru
      _
    %v27 = vld [vmem:[%s0] sm:$0xff]
    %v28 = vld [vmem:[%s1] sm:$0xf]
    %v29 = vld [vmem:[%s1 + $0x4] sm:$0xf]
    %v30 = vld [vmem:[%s1 + $0x8] sm:$0xf]
    %v31 = vld [vmem:[%s1 + $0xc] sm:$0xf]
    %v32 = vld [vmem:[%s1 + $0x10] sm:$0xf]
    %v33 = vld [vmem:[%s1 + $0x14] sm:$0xf]
    %v34 = vld [vmem:[%s1 + $0x18] sm:$0xf]
    %v35 = vld [vmem:[%s1 + $0x1c] sm:$0xf]
    %v36 = vld [vmem:[%s1 + $0x20] sm:$0xf]
    %v37 = vld [vmem:[%s1 + $0x24] sm:$0xf]
    %v38 = vld [vmem:[%s1 + $0x28] sm:$0xf]
    %v39 = vld [vmem:[%s1 + $0x2c] sm:$0xf]
    %v40 = vld [vmem:[%s1 + $0x30] sm:$0xf]
    %v41 = vld [vmem:[%s1 + $0x34] sm:$0xf]
    %v42 = vld [vmem:[%s1 + $0x38] sm:$0xf]
    %v43 = vld [vmem:[%s1 + $0x3c] sm:$0xf]
    %v44 = vld [vmem:[%s1 + $0x40] sm:$0xf]
    %v45 = vld [vmem:[%s1 + $0x44] sm:$0xf]
    %v46 = vld [vmem:[%s1 + $0x48] sm:$0xf]
    %v47 = vld [vmem:[%s1 + $0x4c] sm:$0xf]
    %v48 = vld [vmem:[%s1 + $0x50] sm:$0xf]
    %v49 = vld [vmem:[%s1 + $0x54] sm:$0xf]
    %v50 = vld [vmem:[%s1 + $0x58] sm:$0xf]
    %v51 = vld [vmem:[%s1 + $0x5c] sm:$0xf]
    %v52 = vld [vmem:[%s1 + $0x60] sm:$0xf]
    %v53 = vld [vmem:[%s1 + $0x64] sm:$0xf]
    %v54 = vld [vmem:[%s1 + $0x68] sm:$0xf]
    %v55 = vld [vmem:[%s1 + $0x6c] sm:$0xf]
    %v56 = vld [vmem:[%s1 + $0x70] sm:$0xf]
    %v57 = vld [vmem:[%s1 + $0x74] sm:$0xf]
    %v58 = vld [vmem:[%s1 + $0x78] sm:$0xf]
    %v59 = vld [vmem:[%s1 + $0x7c] sm:$0xf]
    %v60 = vld [vmem:[%s1 + $0x80] sm:$0xf]
    %v61 = vld [vmem:[%s1 + $0x84] sm:$0xf]
    %v62 = vld [vmem:[%s1 + $0x88] sm:$0xf]
    %v63 = vld [vmem:[%s1 + $0x8c] sm:$0xf]
    %v64 = vld [vmem:[%s1 + $0x90] sm:$0xf]
    %v65 = vld [vmem:[%s1 + $0x94] sm:$0xf]
    %v66 = vld [vmem:[%s1 + $0x98] sm:$0xf]
    %v67 = vld [vmem:[%s1 + $0x9c] sm:$0xf]
    %v68 = vld [vmem:[%s1 + $0xa0] sm:$0xf]
    %v69 = vld [vmem:[%s1 + $0xa4] sm:$0xf]
    %v70 = vld [vmem:[%s1 + $0xa8] sm:$0xf]
    %v71 = vld [vmem:[%s1 + $0xac] sm:$0xf]
    %v72 = vld [vmem:[%s1 + $0xb0] sm:$0xf]
    %v73 = vld [vmem:[%s1 + $0xb4] sm:$0xf]
    %v74 = vld [vmem:[%s1 + $0xb8] sm:$0xf]
    %v75 = vld [vmem:[%s1 + $0xbc] sm:$0xf]
    %v76 = vld [vmem:[%s1 + $0xc0] sm:$0xf]
    %v77 = vld [vmem:[%s1 + $0xc4] sm:$0xf]
    %v78 = vld [vmem:[%s1 + $0xc8] sm:$0xf]
    %v79 = vld [vmem:[%s1 + $0xcc] sm:$0xf]
    %v80 = vld [vmem:[%s1 + $0xd0] sm:$0xf]
    %v81 = vld [vmem:[%s1 + $0xd4] sm:$0xf]
    %v82 = vld [vmem:[%s1 + $0xd8] sm:$0xf]
    %v83 = vld [vmem:[%s1 + $0xdc] sm:$0xf]
    %v84 = vld [vmem:[%s1 + $0xe0] sm:$0xf]
    %v85 = vld [vmem:[%s1 + $0xe4] sm:$0xf]
    %v86 = vld [vmem:[%s1 + $0xe8] sm:$0xf]
    %v87 = vld [vmem:[%s1 + $0xec] sm:$0xf]
    %v88 = vld [vmem:[%s1 + $0xf0] sm:$0xf]
    %v89 = vld [vmem:[%s1 + $0xf4] sm:$0xf]
    %v90 = vld [vmem:[%s1 + $0xf8] sm:$0xf]
    %v91 = vld [vmem:[%s1 + $0xfc] sm:$0xf]
    %v92 = vld [vmem:[%s1 + $0x100] sm:$0xf]
    %v93 = vld [vmem:[%s1 + $0x104] sm:$0xf]
    %v94 = vld [vmem:[%s1 + $0x108] sm:$0xf]
    %v95 = vld [vmem:[%s1 + $0x10c] sm:$0xf]
    %v96 = vld [vmem:[%s1 + $0x110] sm:$0xf]
    %v97 = vld [vmem:[%s1 + $0x114] sm:$0xf]
    %v98 = vld [vmem:[%s1 + $0x118] sm:$0xf]
    %v99 = vld [vmem:[%s1 + $0x11c] sm:$0xf]
    %v100 = vld [vmem:[%s1 + $0x120] sm:$0xf]
    %v101 = vld [vmem:[%s1 + $0x124] sm:$0xf]
    %v102 = vld [vmem:[%s1 + $0x128] sm:$0xf]
    %v103 = vld [vmem:[%s1 + $0x12c] sm:$0xf]
    %v104 = vld [vmem:[%s1 + $0x130] sm:$0xf]
    %v105 = vld [vmem:[%s1 + $0x134] sm:$0xf]
    %v106 = vld [vmem:[%s1 + $0x138] sm:$0xf]
    %v107 = vld [vmem:[%s1 + $0x13c] sm:$0xf]
    %v108 = vld [vmem:[%s1 + $0x140] sm:$0xf]
    %v109 = vld [vmem:[%s1 + $0x144] sm:$0xf]
    %v110 = vld [vmem:[%s1 + $0x148] sm:$0xf]
    %v111 = vld [vmem:[%s1 + $0x14c] sm:$0xf]
    %v112 = vld [vmem:[%s1 + $0x150] sm:$0xf]
    %v113 = vld [vmem:[%s1 + $0x154] sm:$0xf]
    %v114 = vld [vmem:[%s1 + $0x158] sm:$0xf]
    %v115 = vld [vmem:[%s1 + $0x15c] sm:$0xf]
    %v116 = vld [vmem:[%s1 + $0x160] sm:$0xf]
    %v117 = vld [vmem:[%s1 + $0x164] sm:$0xf]
    %v118 = vld [vmem:[%s1 + $0x168] sm:$0xf]
    %v119 = vld [vmem:[%s1 + $0x16c] sm:$0xf]
    %v120 = vld [vmem:[%s1 + $0x170] sm:$0xf]
    %v121 = vld [vmem:[%s1 + $0x174] sm:$0xf]
    %v122 = vld [vmem:[%s1 + $0x178] sm:$0xf]
    %v123 = vld [vmem:[%s1 + $0x17c] sm:$0xf]
    %v124 = vld [vmem:[%s1 + $0x180] sm:$0xf]
    %v125 = vld [vmem:[%s1 + $0x184] sm:$0xf]
    %v126 = vld [vmem:[%s1 + $0x188] sm:$0xf]
    %v127 = vld [vmem:[%s1 + $0x18c] sm:$0xf]
    %v128 = vld [vmem:[%s1 + $0x190] sm:$0xf]
    %v129 = vld [vmem:[%s1 + $0x194] sm:$0xf]
    %v130 = vld [vmem:[%s1 + $0x198] sm:$0xf]
    %v131 = vld [vmem:[%s1 + $0x19c] sm:$0xf]
    %v132 = vld [vmem:[%s1 + $0x1a0] sm:$0xf]
    %v133 = vld [vmem:[%s1 + $0x1a4] sm:$0xf]
    %v134 = vld [vmem:[%s1 + $0x1a8] sm:$0xf]
    %v135 = vld [vmem:[%s1 + $0x1ac] sm:$0xf]
    %v136 = vld [vmem:[%s1 + $0x1b0] sm:$0xf]
    %v137 = vld [vmem:[%s1 + $0x1b4] sm:$0xf]
    %v138 = vld [vmem:[%s1 + $0x1b8] sm:$0xf]
    %v139 = vld [vmem:[%s1 + $0x1bc] sm:$0xf]
    %v140 = vld [vmem:[%s1 + $0x1c0] sm:$0xf]
    %v141 = vld [vmem:[%s1 + $0x1c4] sm:$0xf]
    %v142 = vld [vmem:[%s1 + $0x1c8] sm:$0xf]
    %v143 = vld [vmem:[%s1 + $0x1cc] sm:$0xf]
    %v144 = vld [vmem:[%s1 + $0x1d0] sm:$0xf]
    %v145 = vld [vmem:[%s1 + $0x1d4] sm:$0xf]
    %v146 = vld [vmem:[%s1 + $0x1d8] sm:$0xf]
    %v147 = vld [vmem:[%s1 + $0x1dc] sm:$0xf]
    %v148 = vld [vmem:[%s1 + $0x1e0] sm:$0xf]
    %v149 = vld [vmem:[%s1 + $0x1e4] sm:$0xf]
    %v150 = vld [vmem:[%s1 + $0x1e8] sm:$0xf]
    %v151 = vld [vmem:[%s1 + $0x1ec] sm:$0xf]
    %v152 = vld [vmem:[%s1 + $0x1f0] sm:$0xf]
    %v153 = vld [vmem:[%s1 + $0x1f4] sm:$0xf]
    %v154 = vld [vmem:[%s1 + $0x1f8] sm:$0xf]
    %v155 = vld [vmem:[%s1 + $0x1fc] sm:$0xf]
    %v156 = vld [vmem:[%s2] sm:$0x1]
    %v158 = vlaneseq
    %v159 = vshrl.u32 %v158, 7
    %v160 = vsub.s32 0, %v159
    %v161 = vrot.slane %v156, %v160
    %v164 = vcombine.high %v27, %v27
    %v166 = vunpack.c.l.s4 1966171168
    %v167 = vunpack.c.0.s8 %v166
    %v168 = vlaneseq
    %v169 = vshrl.u32 %v168, 7
    %v170 = vsub.s32 %v167, %v169
    %v171 = vrot.slane %v27, %v170
    %v173 = vunpack.c.l.s4 1966171168
    %v174 = vunpack.c.0.s8 %v173
    %v175 = vlaneseq
    %v176 = vshrl.u32 %v175, 7
    %v177 = vsub.s32 %v174, %v176
    %v178 = vrot.slane %v164, %v177
    %v179 = vcombine.high %v171, %v171
    %v180 = vcombine.high %v178, %v178
    %v182 = vunpack.c.l.s4 1966171168
    %v183 = vunpack.c.0.s8 %v182
    %v184 = vlaneseq
    %v185 = vshrl.u32 %v184, 7
    %v186 = vsub.s32 %v183, %v185
    %v187 = vrot.slane %v171, %v186
    %v189 = vunpack.c.l.s4 1966171168
    %v190 = vunpack.c.0.s8 %v189
    %v191 = vlaneseq
    %v192 = vshrl.u32 %v191, 7
    %v193 = vsub.s32 %v190, %v192
    %v194 = vrot.slane %v178, %v193
    %v196 = vunpack.c.l.s4 1966171168
    %v197 = vunpack.c.0.s8 %v196
    %v198 = vlaneseq
    %v199 = vshrl.u32 %v198, 7
    %v200 = vsub.s32 %v197, %v199
    %v201 = vrot.slane %v179, %v200
    %v203 = vunpack.c.l.s4 1966171168
    %v204 = vunpack.c.0.s8 %v203
    %v205 = vlaneseq
    %v206 = vshrl.u32 %v205, 7
    %v207 = vsub.s32 %v204, %v206
    %v208 = vrot.slane %v180, %v207
    %v209 = vcombine.high %v187, %v187
    %v210 = vcombine.high %v194, %v194
    %v211 = vcombine.high %v201, %v201
    %v212 = vcombine.high %v208, %v208
    %v349 = vunpack.c.l.b16 %v28
    %v350 = vunpack.c.l.b16 %v29
    %v351 = vunpack.c.l.b16 %v30
    %v352 = vunpack.c.l.b16 %v31
    %v353 = vunpack.c.l.b16 %v32
    %v354 = vunpack.c.l.b16 %v33
    %v355 = vunpack.c.l.b16 %v34
    %v356 = vunpack.c.l.b16 %v35
    %v357 = vunpack.c.l.b16 %v36
    %v358 = vunpack.c.l.b16 %v37
    %v359 = vunpack.c.l.b16 %v38
    %v360 = vunpack.c.l.b16 %v39
    %v361 = vunpack.c.l.b16 %v40
    %v362 = vunpack.c.l.b16 %v41
    %v363 = vunpack.c.l.b16 %v42
    %v364 = vunpack.c.l.b16 %v43
    %v365 = vunpack.c.l.b16 %v44
    %v366 = vunpack.c.l.b16 %v45
    %v367 = vunpack.c.l.b16 %v46
    %v368 = vunpack.c.l.b16 %v47
    %v369 = vunpack.c.l.b16 %v48
    %v370 = vunpack.c.l.b16 %v49
    %v371 = vunpack.c.l.b16 %v50
    %v372 = vunpack.c.l.b16 %v51
    %v373 = vunpack.c.l.b16 %v52
    %v374 = vunpack.c.l.b16 %v53
    %v375 = vunpack.c.l.b16 %v54
    %v376 = vunpack.c.l.b16 %v55
    %v377 = vunpack.c.l.b16 %v56
    %v378 = vunpack.c.l.b16 %v57
    %v379 = vunpack.c.l.b16 %v58
    %v380 = vunpack.c.l.b16 %v59
    %v381 = vunpack.c.l.b16 %v60
    %v382 = vunpack.c.l.b16 %v61
    %v383 = vunpack.c.l.b16 %v62
    %v384 = vunpack.c.l.b16 %v63
    %v385 = vunpack.c.l.b16 %v64
    %v386 = vunpack.c.l.b16 %v65
    %v387 = vunpack.c.l.b16 %v66
    %v388 = vunpack.c.l.b16 %v67
    %v389 = vunpack.c.l.b16 %v68
    %v390 = vunpack.c.l.b16 %v69
    %v391 = vunpack.c.l.b16 %v70
    %v392 = vunpack.c.l.b16 %v71
    %v393 = vunpack.c.l.b16 %v72
    %v394 = vunpack.c.l.b16 %v73
    %v395 = vunpack.c.l.b16 %v74
    %v396 = vunpack.c.l.b16 %v75
    %v397 = vunpack.c.l.b16 %v76
    %v398 = vunpack.c.l.b16 %v77
    %v399 = vunpack.c.l.b16 %v78
    %v400 = vunpack.c.l.b16 %v79
    %v401 = vunpack.c.l.b16 %v80
    %v402 = vunpack.c.l.b16 %v81
    %v403 = vunpack.c.l.b16 %v82
    %v404 = vunpack.c.l.b16 %v83
    %v405 = vunpack.c.l.b16 %v84
    %v406 = vunpack.c.l.b16 %v85
    %v407 = vunpack.c.l.b16 %v86
    %v408 = vunpack.c.l.b16 %v87
    %v409 = vunpack.c.l.b16 %v88
    %v410 = vunpack.c.l.b16 %v89
    %v411 = vunpack.c.l.b16 %v90
    %v412 = vunpack.c.l.b16 %v91
    %v413 = vunpack.c.l.b16 %v92
    %v414 = vunpack.c.l.b16 %v93
    %v415 = vunpack.c.l.b16 %v94
    %v416 = vunpack.c.l.b16 %v95
    %v417 = vunpack.c.l.b16 %v96
    %v418 = vunpack.c.l.b16 %v97
    %v419 = vunpack.c.l.b16 %v98
    %v420 = vunpack.c.l.b16 %v99
    %v421 = vunpack.c.l.b16 %v100
    %v422 = vunpack.c.l.b16 %v101
    %v423 = vunpack.c.l.b16 %v102
    %v424 = vunpack.c.l.b16 %v103
    %v425 = vunpack.c.l.b16 %v104
    %v426 = vunpack.c.l.b16 %v105
    %v427 = vunpack.c.l.b16 %v106
    %v428 = vunpack.c.l.b16 %v107
    %v429 = vunpack.c.l.b16 %v108
    %v430 = vunpack.c.l.b16 %v109
    %v431 = vunpack.c.l.b16 %v110
    %v432 = vunpack.c.l.b16 %v111
    %v433 = vunpack.c.l.b16 %v112
    %v434 = vunpack.c.l.b16 %v113
    %v435 = vunpack.c.l.b16 %v114
    %v436 = vunpack.c.l.b16 %v115
    %v437 = vunpack.c.l.b16 %v116
    %v438 = vunpack.c.l.b16 %v117
    %v439 = vunpack.c.l.b16 %v118
    %v440 = vunpack.c.l.b16 %v119
    %v441 = vunpack.c.l.b16 %v120
    %v442 = vunpack.c.l.b16 %v121
    %v443 = vunpack.c.l.b16 %v122
    %v444 = vunpack.c.l.b16 %v123
    %v445 = vunpack.c.l.b16 %v124
    %v446 = vunpack.c.l.b16 %v125
    %v447 = vunpack.c.l.b16 %v126
    %v448 = vunpack.c.l.b16 %v127
    %v449 = vunpack.c.l.b16 %v128
    %v450 = vunpack.c.l.b16 %v129
    %v451 = vunpack.c.l.b16 %v130
    %v452 = vunpack.c.l.b16 %v131
    %v453 = vunpack.c.l.b16 %v132
    %v454 = vunpack.c.l.b16 %v133
    %v455 = vunpack.c.l.b16 %v134
    %v456 = vunpack.c.l.b16 %v135
    %v457 = vunpack.c.l.b16 %v136
    %v458 = vunpack.c.l.b16 %v137
    %v459 = vunpack.c.l.b16 %v138
    %v460 = vunpack.c.l.b16 %v139
    %v461 = vunpack.c.l.b16 %v140
    %v462 = vunpack.c.l.b16 %v141
    %v463 = vunpack.c.l.b16 %v142
    %v464 = vunpack.c.l.b16 %v143
    %v465 = vunpack.c.l.b16 %v144
    %v466 = vunpack.c.l.b16 %v145
    %v467 = vunpack.c.l.b16 %v146
    %v468 = vunpack.c.l.b16 %v147
    %v469 = vunpack.c.l.b16 %v148
    %v470 = vunpack.c.l.b16 %v149
    %v471 = vunpack.c.l.b16 %v150
    %v472 = vunpack.c.l.b16 %v151
    %v473 = vunpack.c.l.b16 %v152
    %v474 = vunpack.c.l.b16 %v153
    %v475 = vunpack.c.l.b16 %v154
    %v476 = vunpack.c.l.b16 %v155
    %v477 = vpack.c.b16 %v350, %v349
    %v478 = vpack.c.b16 %v352, %v351
    %v479 = vpack.c.b16 %v354, %v353
    %v480 = vpack.c.b16 %v356, %v355
    %v481 = vpack.c.b16 %v358, %v357
    %v482 = vpack.c.b16 %v360, %v359
    %v483 = vpack.c.b16 %v362, %v361
    %v484 = vpack.c.b16 %v364, %v363
    %v485 = vpack.c.b16 %v366, %v365
    %v486 = vpack.c.b16 %v368, %v367
    %v487 = vpack.c.b16 %v370, %v369
    %v488 = vpack.c.b16 %v372, %v371
    %v489 = vpack.c.b16 %v374, %v373
    %v490 = vpack.c.b16 %v376, %v375
    %v491 = vpack.c.b16 %v378, %v377
    %v492 = vpack.c.b16 %v380, %v379
    %v493 = vpack.c.b16 %v382, %v381
    %v494 = vpack.c.b16 %v384, %v383
    %v495 = vpack.c.b16 %v386, %v385
    %v496 = vpack.c.b16 %v388, %v387
    %v497 = vpack.c.b16 %v390, %v389
    %v498 = vpack.c.b16 %v392, %v391
    %v499 = vpack.c.b16 %v394, %v393
    %v500 = vpack.c.b16 %v396, %v395
    %v501 = vpack.c.b16 %v398, %v397
    %v502 = vpack.c.b16 %v400, %v399
    %v503 = vpack.c.b16 %v402, %v401
    %v504 = vpack.c.b16 %v404, %v403
    %v505 = vpack.c.b16 %v406, %v405
    %v506 = vpack.c.b16 %v408, %v407
    %v507 = vpack.c.b16 %v410, %v409
    %v508 = vpack.c.b16 %v412, %v411
    %v509 = vpack.c.b16 %v414, %v413
    %v510 = vpack.c.b16 %v416, %v415
    %v511 = vpack.c.b16 %v418, %v417
    %v512 = vpack.c.b16 %v420, %v419
    %v513 = vpack.c.b16 %v422, %v421
    %v514 = vpack.c.b16 %v424, %v423
    %v515 = vpack.c.b16 %v426, %v425
    %v516 = vpack.c.b16 %v428, %v427
    %v517 = vpack.c.b16 %v430, %v429
    %v518 = vpack.c.b16 %v432, %v431
    %v519 = vpack.c.b16 %v434, %v433
    %v520 = vpack.c.b16 %v436, %v435
    %v521 = vpack.c.b16 %v438, %v437
    %v522 = vpack.c.b16 %v440, %v439
    %v523 = vpack.c.b16 %v442, %v441
    %v524 = vpack.c.b16 %v444, %v443
    %v525 = vpack.c.b16 %v446, %v445
    %v526 = vpack.c.b16 %v448, %v447
    %v527 = vpack.c.b16 %v450, %v449
    %v528 = vpack.c.b16 %v452, %v451
    %v529 = vpack.c.b16 %v454, %v453
    %v530 = vpack.c.b16 %v456, %v455
    %v531 = vpack.c.b16 %v458, %v457
    %v532 = vpack.c.b16 %v460, %v459
    %v533 = vpack.c.b16 %v462, %v461
    %v534 = vpack.c.b16 %v464, %v463
    %v535 = vpack.c.b16 %v466, %v465
    %v536 = vpack.c.b16 %v468, %v467
    %v537 = vpack.c.b16 %v470, %v469
    %v538 = vpack.c.b16 %v472, %v471
    %v539 = vpack.c.b16 %v474, %v473
    %v540 = vpack.c.b16 %v476, %v475
    %605 = vmatprep.subr.bf16.mxu0 0
    %606 = vmatpush1.bf16.msra.mxu0 %v477
    %607 = vmatprep.subr.bf16.mxu0 0
    %608 = vmatpush1.bf16.msra.mxu0 %v478
    %609 = vmatprep.subr.bf16.mxu0 0
    %610 = vmatpush1.bf16.msra.mxu0 %v479
    %611 = vmatprep.subr.bf16.mxu0 0
    %612 = vmatpush1.bf16.msra.mxu0 %v480
    %613 = vmatprep.subr.bf16.mxu0 0
    %614 = vmatpush1.bf16.msra.mxu0 %v481
    %615 = vmatprep.subr.bf16.mxu0 0
    %616 = vmatpush1.bf16.msra.mxu0 %v482
    %617 = vmatprep.subr.bf16.mxu0 0
    %618 = vmatpush1.bf16.msra.mxu0 %v483
    %619 = vmatprep.subr.bf16.mxu0 0
    %620 = vmatpush1.bf16.msra.mxu0 %v484
    %621 = vmatprep.subr.bf16.mxu0 0
    %622 = vmatpush1.bf16.msra.mxu0 %v485
    %623 = vmatprep.subr.bf16.mxu0 0
    %624 = vmatpush1.bf16.msra.mxu0 %v486
    %625 = vmatprep.subr.bf16.mxu0 0
    %626 = vmatpush1.bf16.msra.mxu0 %v487
    %627 = vmatprep.subr.bf16.mxu0 0
    %628 = vmatpush1.bf16.msra.mxu0 %v488
    %629 = vmatprep.subr.bf16.mxu0 0
    %630 = vmatpush1.bf16.msra.mxu0 %v489
    %631 = vmatprep.subr.bf16.mxu0 0
    %632 = vmatpush1.bf16.msra.mxu0 %v490
    %633 = vmatprep.subr.bf16.mxu0 0
    %634 = vmatpush1.bf16.msra.mxu0 %v491
    %635 = vmatprep.subr.bf16.mxu0 0
    %636 = vmatpush1.bf16.msra.mxu0 %v492
    %637 = vmatprep.mubr.bf16.mxu0 %v201
    %638 = vmatmul.mubr.bf16.gmra.mrb[0].mxu0 %v187
    %v639 = vpop.f32.mrb[0].mxu0
    %v640 = vadd.f32 %v161, %v639
    %v641 = vpop.f32.mrb[0].mxu0
    %v642 = vpop.f32.mrb[0].mxu0
    %v643 = vpop.f32.mrb[0].mxu0
    %644 = vdwg.mxu0
    %645 = vmatprep.subr.bf16.mxu0 0
    %646 = vmatpush1.bf16.msra.mxu0 %v493
    %647 = vmatprep.subr.bf16.mxu0 0
    %648 = vmatpush1.bf16.msra.mxu0 %v494
    %649 = vmatprep.subr.bf16.mxu0 0
    %650 = vmatpush1.bf16.msra.mxu0 %v495
    %651 = vmatprep.subr.bf16.mxu0 0
    %652 = vmatpush1.bf16.msra.mxu0 %v496
    %653 = vmatprep.subr.bf16.mxu0 0
    %654 = vmatpush1.bf16.msra.mxu0 %v497
    %655 = vmatprep.subr.bf16.mxu0 0
    %656 = vmatpush1.bf16.msra.mxu0 %v498
    %657 = vmatprep.subr.bf16.mxu0 0
    %658 = vmatpush1.bf16.msra.mxu0 %v499
    %659 = vmatprep.subr.bf16.mxu0 0
    %660 = vmatpush1.bf16.msra.mxu0 %v500
    %661 = vmatprep.subr.bf16.mxu0 0
    %662 = vmatpush1.bf16.msra.mxu0 %v501
    %663 = vmatprep.subr.bf16.mxu0 0
    %664 = vmatpush1.bf16.msra.mxu0 %v502
    %665 = vmatprep.subr.bf16.mxu0 0
    %666 = vmatpush1.bf16.msra.mxu0 %v503
    %667 = vmatprep.subr.bf16.mxu0 0
    %668 = vmatpush1.bf16.msra.mxu0 %v504
    %669 = vmatprep.subr.bf16.mxu0 0
    %670 = vmatpush1.bf16.msra.mxu0 %v505
    %671 = vmatprep.subr.bf16.mxu0 0
    %672 = vmatpush1.bf16.msra.mxu0 %v506
    %673 = vmatprep.subr.bf16.mxu0 0
    %674 = vmatpush1.bf16.msra.mxu0 %v507
    %675 = vmatprep.subr.bf16.mxu0 0
    %676 = vmatpush1.bf16.msra.mxu0 %v508
    %677 = vmatprep.mubr.bf16.mxu0 %v211
    %678 = vmatmul.mubr.bf16.gmra.mrb[0].mxu0 %v209
    %v679 = vpop.f32.mrb[0].mxu0
    %v680 = vadd.f32 %v640, %v679
    %v681 = vpop.f32.mrb[0].mxu0
    %v682 = vpop.f32.mrb[0].mxu0
    %v683 = vpop.f32.mrb[0].mxu0
    %684 = vdwg.mxu0
    %685 = vmatprep.subr.bf16.mxu0 0
    %686 = vmatpush1.bf16.msra.mxu0 %v509
    %687 = vmatprep.subr.bf16.mxu0 0
    %688 = vmatpush1.bf16.msra.mxu0 %v510
    %689 = vmatprep.subr.bf16.mxu0 0
    %690 = vmatpush1.bf16.msra.mxu0 %v511
    %691 = vmatprep.subr.bf16.mxu0 0
    %692 = vmatpush1.bf16.msra.mxu0 %v512
    %693 = vmatprep.subr.bf16.mxu0 0
    %694 = vmatpush1.bf16.msra.mxu0 %v513
    %695 = vmatprep.subr.bf16.mxu0 0
    %696 = vmatpush1.bf16.msra.mxu0 %v514
    %697 = vmatprep.subr.bf16.mxu0 0
    %698 = vmatpush1.bf16.msra.mxu0 %v515
    %699 = vmatprep.subr.bf16.mxu0 0
    %700 = vmatpush1.bf16.msra.mxu0 %v516
    %701 = vmatprep.subr.bf16.mxu0 0
    %702 = vmatpush1.bf16.msra.mxu0 %v517
    %703 = vmatprep.subr.bf16.mxu0 0
    %704 = vmatpush1.bf16.msra.mxu0 %v518
    %705 = vmatprep.subr.bf16.mxu0 0
    %706 = vmatpush1.bf16.msra.mxu0 %v519
    %707 = vmatprep.subr.bf16.mxu0 0
    %708 = vmatpush1.bf16.msra.mxu0 %v520
    %709 = vmatprep.subr.bf16.mxu0 0
    %710 = vmatpush1.bf16.msra.mxu0 %v521
    %711 = vmatprep.subr.bf16.mxu0 0
    %712 = vmatpush1.bf16.msra.mxu0 %v522
    %713 = vmatprep.subr.bf16.mxu0 0
    %714 = vmatpush1.bf16.msra.mxu0 %v523
    %715 = vmatprep.subr.bf16.mxu0 0
    %716 = vmatpush1.bf16.msra.mxu0 %v524
    %717 = vmatprep.mubr.bf16.mxu0 %v208
    %718 = vmatmul.mubr.bf16.gmra.mrb[0].mxu0 %v194
    %v719 = vpop.f32.mrb[0].mxu0
    %v720 = vadd.f32 %v680, %v719
    %v721 = vpop.f32.mrb[0].mxu0
    %v722 = vpop.f32.mrb[0].mxu0
    %v723 = vpop.f32.mrb[0].mxu0
    %724 = vdwg.mxu0
    %725 = vmatprep.subr.bf16.mxu0 0
    %726 = vmatpush1.bf16.msra.mxu0 %v525
    %727 = vmatprep.subr.bf16.mxu0 0
    %728 = vmatpush1.bf16.msra.mxu0 %v526
    %729 = vmatprep.subr.bf16.mxu0 0
    %730 = vmatpush1.bf16.msra.mxu0 %v527
    %731 = vmatprep.subr.bf16.mxu0 0
    %732 = vmatpush1.bf16.msra.mxu0 %v528
    %733 = vmatprep.subr.bf16.mxu0 0
    %734 = vmatpush1.bf16.msra.mxu0 %v529
    %735 = vmatprep.subr.bf16.mxu0 0
    %736 = vmatpush1.bf16.msra.mxu0 %v530
    %737 = vmatprep.subr.bf16.mxu0 0
    %738 = vmatpush1.bf16.msra.mxu0 %v531
    %739 = vmatprep.subr.bf16.mxu0 0
    %740 = vmatpush1.bf16.msra.mxu0 %v532
    %741 = vmatprep.subr.bf16.mxu0 0
    %742 = vmatpush1.bf16.msra.mxu0 %v533
    %743 = vmatprep.subr.bf16.mxu0 0
    %744 = vmatpush1.bf16.msra.mxu0 %v534
    %745 = vmatprep.subr.bf16.mxu0 0
    %746 = vmatpush1.bf16.msra.mxu0 %v535
    %747 = vmatprep.subr.bf16.mxu0 0
    %748 = vmatpush1.bf16.msra.mxu0 %v536
    %749 = vmatprep.subr.bf16.mxu0 0
    %750 = vmatpush1.bf16.msra.mxu0 %v537
    %751 = vmatprep.subr.bf16.mxu0 0
    %752 = vmatpush1.bf16.msra.mxu0 %v538
    %753 = vmatprep.subr.bf16.mxu0 0
    %754 = vmatpush1.bf16.msra.mxu0 %v539
    %755 = vmatprep.subr.bf16.mxu0 0
    %756 = vmatpush1.bf16.msra.mxu0 %v540
    %757 = vmatprep.mubr.bf16.mxu0 %v212
    %758 = vmatmul.mubr.bf16.gmra.mrb[0].mxu0 %v210
    %v759 = vpop.f32.mrb[0].mxu0
    %v760 = vadd.f32 %v720, %v759
    %v761 = vpop.f32.mrb[0].mxu0
    %v762 = vpop.f32.mrb[0].mxu0
    %v763 = vpop.f32.mrb[0].mxu0
    %764 = vdwg.mxu0
    %v765 = vmax.f32 %v760, 0.0
    %v766 = vld [vmem:[%s3] sm:$0xff]
    %v767 = vld [vmem:[%s3 + $0x8] sm:$0xff]
    %v768 = vld [vmem:[%s3 + $0x10] sm:$0xff]
    %v769 = vld [vmem:[%s3 + $0x18] sm:$0xff]
    %v770 = vld [vmem:[%s3 + $0x20] sm:$0xff]
    %v771 = vld [vmem:[%s3 + $0x28] sm:$0xff]
    %v772 = vld [vmem:[%s3 + $0x30] sm:$0xff]
    %v773 = vld [vmem:[%s3 + $0x38] sm:$0xff]
    %v774 = vlaneseq
    %v775 = vshrl.u32 %v774, 7
    %v776 = vadd.s32 %v775, 8
    %v777 = vadd.s32 %v775, 16
    %v778 = vadd.s32 %v775, 24
    %v779 = vadd.s32 %v775, 32
    %v780 = vadd.s32 %v775, 40
    %v781 = vadd.s32 %v775, 48
    %v782 = vadd.s32 %v775, 56
    %v783 = vlaneseq
    %v784 = vand.u32 %v783, 127
    %v785 = vlaneseq
    %v786 = vshrl.u32 %v785, 7
    %v787 = vsub.s32 0, %v786
    %v788 = vrot.slane %v765, %v787
    %v789 = vsub.f32 %v788, %v766
    %v790 = vsub.f32 %v788, %v767
    %v791 = vsub.f32 %v788, %v768
    %v792 = vsub.f32 %v788, %v769
    %v793 = vsub.f32 %v788, %v770
    %v794 = vsub.f32 %v788, %v771
    %v795 = vsub.f32 %v788, %v772
    %v796 = vsub.f32 %v788, %v773
    %v797 = vmul.f32 %v789, %v789
    %v798 = vmul.f32 %v790, %v790
    %v799 = vmul.f32 %v791, %v791
    %v800 = vmul.f32 %v792, %v792
    %v801 = vmul.f32 %v793, %v793
    %v802 = vmul.f32 %v794, %v794
    %v803 = vmul.f32 %v795, %v795
    %v804 = vmul.f32 %v796, %v796
    %vm805 = vcmask 523264
    %v806 = vsel %vm805, %v797, 0.0
    %807 = vadd.xlane.f32.xlu0 %v806
    %v808 = vpop.xlane.xlu0 %807
    %v809 = vsel %vm805, %v798, 0.0
    %810 = vadd.xlane.f32.xlu0 %v809
    %v811 = vpop.xlane.xlu0 %810
    %v812 = vsel %vm805, %v799, 0.0
    %813 = vadd.xlane.f32.xlu0 %v812
    %v814 = vpop.xlane.xlu0 %813
    %v815 = vsel %vm805, %v800, 0.0
    %816 = vadd.xlane.f32.xlu0 %v815
    %v817 = vpop.xlane.xlu0 %816
    %v818 = vsel %vm805, %v801, 0.0
    %819 = vadd.xlane.f32.xlu0 %v818
    %v820 = vpop.xlane.xlu0 %819
    %v821 = vsel %vm805, %v802, 0.0
    %822 = vadd.xlane.f32.xlu0 %v821
    %v823 = vpop.xlane.xlu0 %822
    %v824 = vsel %vm805, %v803, 0.0
    %825 = vadd.xlane.f32.xlu0 %v824
    %v826 = vpop.xlane.xlu0 %825
    %v827 = vsel %vm805, %v804, 0.0
    %828 = vadd.xlane.f32.xlu0 %v827
    %v829 = vpop.xlane.xlu0 %828
    %v830 = vmin.f32 %v808, %v820
    %v831 = vmin.f32 %v811, %v823
    %v832 = vmin.f32 %v814, %v826
    %v833 = vmin.f32 %v817, %v829
    %v834 = vmin.f32 %v830, %v831
    %v835 = vmin.f32 %v832, %v833
    %v836 = vmin.f32 %v834, %v835
    %v837 = vrot.slane %v836, 4
    %v838 = vmin.f32 %v836, %v837
    %v839 = vrot.slane %v838, 2
    %v840 = vmin.f32 %v838, %v839
    %v841 = vrot.slane %v840, 1
    %v842 = vmin.f32 %v840, %v841
    %vm843 = vcmp.le.f32.partialorder %v808, %v842
    %vm844 = vcmp.le.f32.partialorder %v811, %v842
    %vm845 = vcmp.le.f32.partialorder %v814, %v842
    %vm846 = vcmp.le.f32.partialorder %v817, %v842
    %vm847 = vcmp.le.f32.partialorder %v820, %v842
    %vm848 = vcmp.le.f32.partialorder %v823, %v842
    %vm849 = vcmp.le.f32.partialorder %v826, %v842
    %vm850 = vcmp.le.f32.partialorder %v829, %v842
    %v851 = vsel %vm843, %v775, 64
    %v852 = vsel %vm844, %v776, 64
    %v853 = vsel %vm845, %v777, 64
    %v854 = vsel %vm846, %v778, 64
    %v855 = vsel %vm847, %v779, 64
    %v856 = vsel %vm848, %v780, 64
    %v857 = vsel %vm849, %v781, 64
    %v858 = vsel %vm850, %v782, 64
    %vm859 = vcmp.lt.s32.totalorder %v851, %v855
    %v860 = vsel %vm859, %v851, %v855
    %vm861 = vcmp.lt.s32.totalorder %v852, %v856
    %v862 = vsel %vm861, %v852, %v856
    %vm863 = vcmp.lt.s32.totalorder %v853, %v857
    %v864 = vsel %vm863, %v853, %v857
    %vm865 = vcmp.lt.s32.totalorder %v854, %v858
    %v866 = vsel %vm865, %v854, %v858
    %vm867 = vcmp.lt.s32.totalorder %v860, %v862
    %v868 = vsel %vm867, %v860, %v862
    %vm869 = vcmp.lt.s32.totalorder %v864, %v866
    %v870 = vsel %vm869, %v864, %v866
    %vm871 = vcmp.lt.s32.totalorder %v868, %v870
    %v872 = vsel %vm871, %v868, %v870
    %v873 = vrot.slane %v872, 4
    %vm874 = vcmp.lt.s32.totalorder %v872, %v873
    %v875 = vsel %vm874, %v872, %v873
    %v876 = vrot.slane %v875, 2
    %vm877 = vcmp.lt.s32.totalorder %v875, %v876
    %v878 = vsel %vm877, %v875, %v876
    %v879 = vrot.slane %v878, 1
    %vm880 = vcmp.lt.s32.totalorder %v878, %v879
    %v881 = vsel %vm880, %v878, %v879
    %vm882 = vcmp.eq.s32.totalorder %v784, %v881
    %v883 = vsel %vm882, 1, 0
    %v884 = vcvt.s32.f32 %v883
    %v885 = vlaneseq
    %v886 = vshrl.u32 %v885, 7
    %v887 = vsub.s32 1, %v886
    %v888 = vrot.slane %v765, %v887
    %v889 = vsub.f32 %v888, %v766
    %v890 = vsub.f32 %v888, %v767
    %v891 = vsub.f32 %v888, %v768
    %v892 = vsub.f32 %v888, %v769
    %v893 = vsub.f32 %v888, %v770
    %v894 = vsub.f32 %v888, %v771
    %v895 = vsub.f32 %v888, %v772
    %v896 = vsub.f32 %v888, %v773
    %v897 = vmul.f32 %v889, %v889
    %v898 = vmul.f32 %v890, %v890
    %v899 = vmul.f32 %v891, %v891
    %v900 = vmul.f32 %v892, %v892
    %v901 = vmul.f32 %v893, %v893
    %v902 = vmul.f32 %v894, %v894
    %v903 = vmul.f32 %v895, %v895
    %v904 = vmul.f32 %v896, %v896
    %v905 = vsel %vm805, %v897, 0.0
    %906 = vadd.xlane.f32.xlu0 %v905
    %v907 = vpop.xlane.xlu0 %906
    %v908 = vsel %vm805, %v898, 0.0
    %909 = vadd.xlane.f32.xlu0 %v908
    %v910 = vpop.xlane.xlu0 %909
    %v911 = vsel %vm805, %v899, 0.0
    %912 = vadd.xlane.f32.xlu0 %v911
    %v913 = vpop.xlane.xlu0 %912
    %v914 = vsel %vm805, %v900, 0.0
    %915 = vadd.xlane.f32.xlu0 %v914
    %v916 = vpop.xlane.xlu0 %915
    %v917 = vsel %vm805, %v901, 0.0
    %918 = vadd.xlane.f32.xlu0 %v917
    %v919 = vpop.xlane.xlu0 %918
    %v920 = vsel %vm805, %v902, 0.0
    %921 = vadd.xlane.f32.xlu0 %v920
    %v922 = vpop.xlane.xlu0 %921
    %v923 = vsel %vm805, %v903, 0.0
    %924 = vadd.xlane.f32.xlu0 %v923
    %v925 = vpop.xlane.xlu0 %924
    %v926 = vsel %vm805, %v904, 0.0
    %927 = vadd.xlane.f32.xlu0 %v926
    %v928 = vpop.xlane.xlu0 %927
    %v929 = vmin.f32 %v907, %v919
    %v930 = vmin.f32 %v910, %v922
    %v931 = vmin.f32 %v913, %v925
    %v932 = vmin.f32 %v916, %v928
    %v933 = vmin.f32 %v929, %v930
    %v934 = vmin.f32 %v931, %v932
    %v935 = vmin.f32 %v933, %v934
    %v936 = vrot.slane %v935, 4
    %v937 = vmin.f32 %v935, %v936
    %v938 = vrot.slane %v937, 2
    %v939 = vmin.f32 %v937, %v938
    %v940 = vrot.slane %v939, 1
    %v941 = vmin.f32 %v939, %v940
    %vm942 = vcmp.le.f32.partialorder %v907, %v941
    %vm943 = vcmp.le.f32.partialorder %v910, %v941
    %vm944 = vcmp.le.f32.partialorder %v913, %v941
    %vm945 = vcmp.le.f32.partialorder %v916, %v941
    %vm946 = vcmp.le.f32.partialorder %v919, %v941
    %vm947 = vcmp.le.f32.partialorder %v922, %v941
    %vm948 = vcmp.le.f32.partialorder %v925, %v941
    %vm949 = vcmp.le.f32.partialorder %v928, %v941
    %v950 = vsel %vm942, %v775, 64
    %v951 = vsel %vm943, %v776, 64
    %v952 = vsel %vm944, %v777, 64
    %v953 = vsel %vm945, %v778, 64
    %v954 = vsel %vm946, %v779, 64
    %v955 = vsel %vm947, %v780, 64
    %v956 = vsel %vm948, %v781, 64
    %v957 = vsel %vm949, %v782, 64
    %vm958 = vcmp.lt.s32.totalorder %v950, %v954
    %v959 = vsel %vm958, %v950, %v954
    %vm960 = vcmp.lt.s32.totalorder %v951, %v955
    %v961 = vsel %vm960, %v951, %v955
    %vm962 = vcmp.lt.s32.totalorder %v952, %v956
    %v963 = vsel %vm962, %v952, %v956
    %vm964 = vcmp.lt.s32.totalorder %v953, %v957
    %v965 = vsel %vm964, %v953, %v957
    %vm966 = vcmp.lt.s32.totalorder %v959, %v961
    %v967 = vsel %vm966, %v959, %v961
    %vm968 = vcmp.lt.s32.totalorder %v963, %v965
    %v969 = vsel %vm968, %v963, %v965
    %vm970 = vcmp.lt.s32.totalorder %v967, %v969
    %v971 = vsel %vm970, %v967, %v969
    %v972 = vrot.slane %v971, 4
    %vm973 = vcmp.lt.s32.totalorder %v971, %v972
    %v974 = vsel %vm973, %v971, %v972
    %v975 = vrot.slane %v974, 2
    %vm976 = vcmp.lt.s32.totalorder %v974, %v975
    %v977 = vsel %vm976, %v974, %v975
    %v978 = vrot.slane %v977, 1
    %vm979 = vcmp.lt.s32.totalorder %v977, %v978
    %v980 = vsel %vm979, %v977, %v978
    %vm981 = vcmp.eq.s32.totalorder %v784, %v980
    %v982 = vsel %vm981, 1, 0
    %v983 = vcvt.s32.f32 %v982
    %vm984 = vcmask 1040384
    %v985 = vsel %vm984, %v884, %v983
    %v987 = vsel %vm805, %v985, 0
    %989 = vmatprep.subr.mxu0 0.0
    %990 = vmatpush1.msra.mxu0 %v766
    %991 = vmatprep.subr.mxu0 0.0
    %992 = vmatpush1.msra.mxu0 %v767
    %993 = vmatprep.subr.mxu0 0.0
    %994 = vmatpush1.msra.mxu0 %v768
    %995 = vmatprep.subr.mxu0 0.0
    %996 = vmatpush1.msra.mxu0 %v769
    %997 = vmatprep.subr.mxu0 0.0
    %998 = vmatpush1.msra.mxu0 %v770
    %999 = vmatprep.subr.mxu0 0.0
    %1000 = vmatpush1.msra.mxu0 %v771
    %1001 = vmatprep.subr.mxu0 0.0
    %1002 = vmatpush1.msra.mxu0 %v772
    %1003 = vmatprep.subr.mxu0 0.0
    %1004 = vmatpush1.msra.mxu0 %v773
    %1005 = vmatprep.subr.mxu0 0.0
    %1006 = vmatpush1.msra.mxu0 0.0
    %1007 = vmatprep.subr.mxu0 0.0
    %1008 = vmatpush1.msra.mxu0 0.0
    %1009 = vmatprep.subr.mxu0 0.0
    %1010 = vmatpush1.msra.mxu0 0.0
    %1011 = vmatprep.subr.mxu0 0.0
    %1012 = vmatpush1.msra.mxu0 0.0
    %1013 = vmatprep.subr.mxu0 0.0
    %1014 = vmatpush1.msra.mxu0 0.0
    %1015 = vmatprep.subr.mxu0 0.0
    %1016 = vmatpush1.msra.mxu0 0.0
    %1017 = vmatprep.subr.mxu0 0.0
    %1018 = vmatpush1.msra.mxu0 0.0
    %1019 = vmatprep.subr.mxu0 0.0
    %1020 = vmatpush1.msra.mxu0 0.0
    %1021 = vmatprep.subr.mxu0 0.0
    %1022 = vmatpush1.msra.mxu0 0.0
    %1023 = vmatprep.subr.mxu0 0.0
    %1024 = vmatpush1.msra.mxu0 0.0
    %1025 = vmatprep.subr.mxu0 0.0
    %1026 = vmatpush1.msra.mxu0 0.0
    %1027 = vmatprep.subr.mxu0 0.0
    %1028 = vmatpush1.msra.mxu0 0.0
    %1029 = vmatprep.subr.mxu0 0.0
    %1030 = vmatpush1.msra.mxu0 0.0
    %1031 = vmatprep.subr.mxu0 0.0
    %1032 = vmatpush1.msra.mxu0 0.0
    %1033 = vmatprep.subr.mxu0 0.0
    %1034 = vmatpush1.msra.mxu0 0.0
    %1035 = vmatprep.subr.mxu0 0.0
    %1036 = vmatpush1.msra.mxu0 0.0
    %1037 = vmatprep.subr.mxu0 0.0
    %1038 = vmatpush1.msra.mxu0 0.0
    %1039 = vmatprep.subr.mxu0 0.0
    %1040 = vmatpush1.msra.mxu0 0.0
    %1041 = vmatprep.subr.mxu0 0.0
    %1042 = vmatpush1.msra.mxu0 0.0
    %1043 = vmatprep.subr.mxu0 0.0
    %1044 = vmatpush1.msra.mxu0 0.0
    %1045 = vmatprep.subr.mxu0 0.0
    %1046 = vmatpush1.msra.mxu0 0.0
    %1047 = vmatprep.subr.mxu0 0.0
    %1048 = vmatpush1.msra.mxu0 0.0
    %1049 = vmatprep.subr.mxu0 0.0
    %1050 = vmatpush1.msra.mxu0 0.0
    %1051 = vmatprep.subr.mxu0 0.0
    %1052 = vmatpush1.msra.mxu0 0.0
    %1053 = vmatprep.mubr.f32.mxu0 0.0
    %1054 = vmatmul.mubr.f32.gmra.mrb[0].mxu0 %v987
    %v1055 = vpop.f32.mrb[0].mxu0
    %v1056 = vadd.f32 0.0, %v1055
    %v1057 = vpop.f32.mrb[0].mxu0
    %1058 = vdwg.mxu0
    %v1059 = vsub.f32 %v1056, %v765
    %v1060 = vmul.f32 %v1059, %v1059
    %vm1061 = vcmask 517120
    %v1062 = vsel %vm1061, %v1060, 0.0
    %1063 = vadd.xlane.f32.xlu0 %v1062
    %v1064 = vpop.xlane.xlu0 %1063
    %vm1065 = vcmask 1041408
    %v1066 = vsel %vm1065, %v1064, 0.0
    %v1067 = vrot.slane %v1066, 4
    %v1068 = vadd.f32 %v1066, %v1067
    %v1069 = vrot.slane %v1068, 2
    %v1070 = vadd.f32 %v1068, %v1069
    %v1071 = vrot.slane %v1070, 1
    %v1072 = vadd.f32 %v1070, %v1071
    %v1073 = vmul.f32 %v1072, 1.25
    %v1074 = vrcp.pop 128.0
    %v1075 = vmul.f32 %v1073, %v1074
    %vm1076 = vcmask 0
    %1077 = vst.msk [vmem:[#allocation2] sm:$0x1] %vm1076, %v1075
    %v1078 = vld [vmem:[%s4] sm:$0xff]
    %v1079 = vld [vmem:[%s4 + $0x8] sm:$0xff]
    %v1080 = vld [vmem:[%s4 + $0x10] sm:$0xff]
    %v1081 = vld [vmem:[%s4 + $0x18] sm:$0xff]
    %v1082 = vld [vmem:[%s4 + $0x20] sm:$0xff]
    %v1083 = vld [vmem:[%s4 + $0x28] sm:$0xff]
    %v1084 = vld [vmem:[%s4 + $0x30] sm:$0xff]
    %v1085 = vld [vmem:[%s4 + $0x38] sm:$0xff]
    %v1086 = vld [vmem:[%s4 + $0x40] sm:$0xff]
    %v1087 = vld [vmem:[%s4 + $0x48] sm:$0xff]
    %v1088 = vld [vmem:[%s4 + $0x50] sm:$0xff]
    %v1089 = vld [vmem:[%s4 + $0x58] sm:$0xff]
    %v1090 = vld [vmem:[%s4 + $0x60] sm:$0xff]
    %v1091 = vld [vmem:[%s4 + $0x68] sm:$0xff]
    %v1092 = vld [vmem:[%s4 + $0x70] sm:$0xff]
    %v1093 = vld [vmem:[%s4 + $0x78] sm:$0xff]
    %v1094 = vld [vmem:[%s4 + $0x80] sm:$0xff]
    %v1095 = vld [vmem:[%s4 + $0x88] sm:$0xff]
    %v1096 = vld [vmem:[%s4 + $0x90] sm:$0xff]
    %v1097 = vld [vmem:[%s4 + $0x98] sm:$0xff]
    %v1098 = vld [vmem:[%s4 + $0xa0] sm:$0xff]
    %v1099 = vld [vmem:[%s4 + $0xa8] sm:$0xff]
    %v1100 = vld [vmem:[%s4 + $0xb0] sm:$0xff]
    %v1101 = vld [vmem:[%s4 + $0xb8] sm:$0xff]
    %v1102 = vld [vmem:[%s4 + $0xc0] sm:$0xff]
    %v1103 = vld [vmem:[%s4 + $0xc8] sm:$0xff]
    %v1104 = vld [vmem:[%s4 + $0xd0] sm:$0xff]
    %v1105 = vld [vmem:[%s4 + $0xd8] sm:$0xff]
    %v1106 = vld [vmem:[%s4 + $0xe0] sm:$0xff]
    %v1107 = vld [vmem:[%s4 + $0xe8] sm:$0xff]
    %v1108 = vld [vmem:[%s4 + $0xf0] sm:$0xff]
    %v1109 = vld [vmem:[%s4 + $0xf8] sm:$0xff]
    %v1110 = vld [vmem:[%s4 + $0x100] sm:$0xff]
    %v1111 = vld [vmem:[%s4 + $0x108] sm:$0xff]
    %v1112 = vld [vmem:[%s4 + $0x110] sm:$0xff]
    %v1113 = vld [vmem:[%s4 + $0x118] sm:$0xff]
    %v1114 = vld [vmem:[%s4 + $0x120] sm:$0xff]
    %v1115 = vld [vmem:[%s4 + $0x128] sm:$0xff]
    %v1116 = vld [vmem:[%s4 + $0x130] sm:$0xff]
    %v1117 = vld [vmem:[%s4 + $0x138] sm:$0xff]
    %v1118 = vld [vmem:[%s4 + $0x140] sm:$0xff]
    %v1119 = vld [vmem:[%s4 + $0x148] sm:$0xff]
    %v1120 = vld [vmem:[%s4 + $0x150] sm:$0xff]
    %v1121 = vld [vmem:[%s4 + $0x158] sm:$0xff]
    %v1122 = vld [vmem:[%s4 + $0x160] sm:$0xff]
    %v1123 = vld [vmem:[%s4 + $0x168] sm:$0xff]
    %v1124 = vld [vmem:[%s4 + $0x170] sm:$0xff]
    %v1125 = vld [vmem:[%s4 + $0x178] sm:$0xff]
    %v1126 = vld [vmem:[%s4 + $0x180] sm:$0xff]
    %v1127 = vld [vmem:[%s4 + $0x188] sm:$0xff]
    %v1128 = vld [vmem:[%s4 + $0x190] sm:$0xff]
    %v1129 = vld [vmem:[%s4 + $0x198] sm:$0xff]
    %v1130 = vld [vmem:[%s4 + $0x1a0] sm:$0xff]
    %v1131 = vld [vmem:[%s4 + $0x1a8] sm:$0xff]
    %v1132 = vld [vmem:[%s4 + $0x1b0] sm:$0xff]
    %v1133 = vld [vmem:[%s4 + $0x1b8] sm:$0xff]
    %v1134 = vld [vmem:[%s4 + $0x1c0] sm:$0xff]
    %v1135 = vld [vmem:[%s4 + $0x1c8] sm:$0xff]
    %v1136 = vld [vmem:[%s4 + $0x1d0] sm:$0xff]
    %v1137 = vld [vmem:[%s4 + $0x1d8] sm:$0xff]
    %v1138 = vld [vmem:[%s4 + $0x1e0] sm:$0xff]
    %v1139 = vld [vmem:[%s4 + $0x1e8] sm:$0xff]
    %v1140 = vld [vmem:[%s4 + $0x1f0] sm:$0xff]
    %v1141 = vld [vmem:[%s4 + $0x1f8] sm:$0xff]
    %v1142 = vld [vmem:[%s5] sm:$0xff]
    %v1144 = vlaneseq
    %v1145 = vshrl.u32 %v1144, 7
    %v1146 = vsub.s32 0, %v1145
    %v1147 = vrot.slane %v1142, %v1146
    %v1148 = vlaneseq
    %v1149 = vshrl.u32 %v1148, 7
    %v1150 = vsub.s32 1, %v1149
    %v1151 = vrot.slane %v1142, %v1150
    %v1152 = vlaneseq
    %v1153 = vshrl.u32 %v1152, 7
    %v1154 = vsub.s32 2, %v1153
    %v1155 = vrot.slane %v1142, %v1154
    %v1156 = vlaneseq
    %v1157 = vshrl.u32 %v1156, 7
    %v1158 = vsub.s32 3, %v1157
    %v1159 = vrot.slane %v1142, %v1158
    %v1160 = vlaneseq
    %v1161 = vshrl.u32 %v1160, 7
    %v1162 = vsub.s32 4, %v1161
    %v1163 = vrot.slane %v1142, %v1162
    %v1164 = vlaneseq
    %v1165 = vshrl.u32 %v1164, 7
    %v1166 = vsub.s32 5, %v1165
    %v1167 = vrot.slane %v1142, %v1166
    %v1168 = vlaneseq
    %v1169 = vshrl.u32 %v1168, 7
    %v1170 = vsub.s32 6, %v1169
    %v1171 = vrot.slane %v1142, %v1170
    %v1172 = vlaneseq
    %v1173 = vshrl.u32 %v1172, 7
    %v1174 = vsub.s32 7, %v1173
    %v1175 = vrot.slane %v1142, %v1174
    %v1185 = vsel %vm805, %v1056, 0
    %1187 = vmatprep.subr.mxu0 %v1079
    %1188 = vmatpush1.msra.mxu0 %v1078
    %1189 = vmatprep.subr.mxu0 %v1087
    %1190 = vmatpush1.msra.mxu0 %v1086
    %1191 = vmatprep.subr.mxu0 %v1095
    %1192 = vmatpush1.msra.mxu0 %v1094
    %1193 = vmatprep.subr.mxu0 %v1103
    %1194 = vmatpush1.msra.mxu0 %v1102
    %1195 = vmatprep.subr.mxu0 %v1111
    %1196 = vmatpush1.msra.mxu0 %v1110
    %1197 = vmatprep.subr.mxu0 %v1119
    %1198 = vmatpush1.msra.mxu0 %v1118
    %1199 = vmatprep.subr.mxu0 %v1127
    %1200 = vmatpush1.msra.mxu0 %v1126
    %1201 = vmatprep.subr.mxu0 %v1135
    %1202 = vmatpush1.msra.mxu0 %v1134
    %1203 = vmatprep.subr.mxu0 0.0
    %1204 = vmatpush1.msra.mxu0 0.0
    %1205 = vmatprep.subr.mxu0 0.0
    %1206 = vmatpush1.msra.mxu0 0.0
    %1207 = vmatprep.subr.mxu0 0.0
    %1208 = vmatpush1.msra.mxu0 0.0
    %1209 = vmatprep.subr.mxu0 0.0
    %1210 = vmatpush1.msra.mxu0 0.0
    %1211 = vmatprep.subr.mxu0 0.0
    %1212 = vmatpush1.msra.mxu0 0.0
    %1213 = vmatprep.subr.mxu0 0.0
    %1214 = vmatpush1.msra.mxu0 0.0
    %1215 = vmatprep.subr.mxu0 0.0
    %1216 = vmatpush1.msra.mxu0 0.0
    %1217 = vmatprep.subr.mxu0 0.0
    %1218 = vmatpush1.msra.mxu0 0.0
    %1219 = vmatprep.subr.mxu0 0.0
    %1220 = vmatpush1.msra.mxu0 0.0
    %1221 = vmatprep.subr.mxu0 0.0
    %1222 = vmatpush1.msra.mxu0 0.0
    %1223 = vmatprep.subr.mxu0 0.0
    %1224 = vmatpush1.msra.mxu0 0.0
    %1225 = vmatprep.subr.mxu0 0.0
    %1226 = vmatpush1.msra.mxu0 0.0
    %1227 = vmatprep.subr.mxu0 0.0
    %1228 = vmatpush1.msra.mxu0 0.0
    %1229 = vmatprep.subr.mxu0 0.0
    %1230 = vmatpush1.msra.mxu0 0.0
    %1231 = vmatprep.subr.mxu0 0.0
    %1232 = vmatpush1.msra.mxu0 0.0
    %1233 = vmatprep.subr.mxu0 0.0
    %1234 = vmatpush1.msra.mxu0 0.0
    %1235 = vmatprep.subr.mxu0 0.0
    %1236 = vmatpush1.msra.mxu0 0.0
    %1237 = vmatprep.subr.mxu0 0.0
    %1238 = vmatpush1.msra.mxu0 0.0
    %1239 = vmatprep.subr.mxu0 0.0
    %1240 = vmatpush1.msra.mxu0 0.0
    %1241 = vmatprep.subr.mxu0 0.0
    %1242 = vmatpush1.msra.mxu0 0.0
    %1243 = vmatprep.subr.mxu0 0.0
    %1244 = vmatpush1.msra.mxu0 0.0
    %1245 = vmatprep.subr.mxu0 0.0
    %1246 = vmatpush1.msra.mxu0 0.0
    %1247 = vmatprep.subr.mxu0 0.0
    %1248 = vmatpush1.msra.mxu0 0.0
    %1249 = vmatprep.subr.mxu0 0.0
    %1250 = vmatpush1.msra.mxu0 0.0
    %1251 = vmatprep.mubr.f32.mxu0 0.0
    %1252 = vmatmul.mubr.f32.gmra.mrb[0].mxu0 %v1185
    %v1253 = vpop.f32.mrb[0].mxu0
    %v1254 = vadd.f32 %v1147, %v1253
    %v1255 = vpop.f32.mrb[0].mxu0
    %v1256 = vadd.f32 %v1151, %v1255
    %1257 = vdwg.mxu0
    %1258 = vmatprep.subr.mxu0 %v1081
    %1259 = vmatpush1.msra.mxu0 %v1080
    %1260 = vmatprep.subr.mxu0 %v1089
    %1261 = vmatpush1.msra.mxu0 %v1088
    %1262 = vmatprep.subr.mxu0 %v1097
    %1263 = vmatpush1.msra.mxu0 %v1096
    %1264 = vmatprep.subr.mxu0 %v1105
    %1265 = vmatpush1.msra.mxu0 %v1104
    %1266 = vmatprep.subr.mxu0 %v1113
    %1267 = vmatpush1.msra.mxu0 %v1112
    %1268 = vmatprep.subr.mxu0 %v1121
    %1269 = vmatpush1.msra.mxu0 %v1120
    %1270 = vmatprep.subr.mxu0 %v1129
    %1271 = vmatpush1.msra.mxu0 %v1128
    %1272 = vmatprep.subr.mxu0 %v1137
    %1273 = vmatpush1.msra.mxu0 %v1136
    %1274 = vmatprep.subr.mxu0 0.0
    %1275 = vmatpush1.msra.mxu0 0.0
    %1276 = vmatprep.subr.mxu0 0.0
    %1277 = vmatpush1.msra.mxu0 0.0
    %1278 = vmatprep.subr.mxu0 0.0
    %1279 = vmatpush1.msra.mxu0 0.0
    %1280 = vmatprep.subr.mxu0 0.0
    %1281 = vmatpush1.msra.mxu0 0.0
    %1282 = vmatprep.subr.mxu0 0.0
    %1283 = vmatpush1.msra.mxu0 0.0
    %1284 = vmatprep.subr.mxu0 0.0
    %1285 = vmatpush1.msra.mxu0 0.0
    %1286 = vmatprep.subr.mxu0 0.0
    %1287 = vmatpush1.msra.mxu0 0.0
    %1288 = vmatprep.subr.mxu0 0.0
    %1289 = vmatpush1.msra.mxu0 0.0
    %1290 = vmatprep.subr.mxu0 0.0
    %1291 = vmatpush1.msra.mxu0 0.0
    %1292 = vmatprep.subr.mxu0 0.0
    %1293 = vmatpush1.msra.mxu0 0.0
    %1294 = vmatprep.subr.mxu0 0.0
    %1295 = vmatpush1.msra.mxu0 0.0
    %1296 = vmatprep.subr.mxu0 0.0
    %1297 = vmatpush1.msra.mxu0 0.0
    %1298 = vmatprep.subr.mxu0 0.0
    %1299 = vmatpush1.msra.mxu0 0.0
    %1300 = vmatprep.subr.mxu0 0.0
    %1301 = vmatpush1.msra.mxu0 0.0
    %1302 = vmatprep.subr.mxu0 0.0
    %1303 = vmatpush1.msra.mxu0 0.0
    %1304 = vmatprep.subr.mxu0 0.0
    %1305 = vmatpush1.msra.mxu0 0.0
    %1306 = vmatprep.subr.mxu0 0.0
    %1307 = vmatpush1.msra.mxu0 0.0
    %1308 = vmatprep.subr.mxu0 0.0
    %1309 = vmatpush1.msra.mxu0 0.0
    %1310 = vmatprep.subr.mxu0 0.0
    %1311 = vmatpush1.msra.mxu0 0.0
    %1312 = vmatprep.subr.mxu0 0.0
    %1313 = vmatpush1.msra.mxu0 0.0
    %1314 = vmatprep.subr.mxu0 0.0
    %1315 = vmatpush1.msra.mxu0 0.0
    %1316 = vmatprep.subr.mxu0 0.0
    %1317 = vmatpush1.msra.mxu0 0.0
    %1318 = vmatprep.subr.mxu0 0.0
    %1319 = vmatpush1.msra.mxu0 0.0
    %1320 = vmatprep.subr.mxu0 0.0
    %1321 = vmatpush1.msra.mxu0 0.0
    %1322 = vmatprep.mubr.f32.mxu0 0.0
    %1323 = vmatmul.mubr.f32.gmra.mrb[0].mxu0 %v1185
    %v1324 = vpop.f32.mrb[0].mxu0
    %v1325 = vadd.f32 %v1155, %v1324
    %v1326 = vpop.f32.mrb[0].mxu0
    %v1327 = vadd.f32 %v1159, %v1326
    %1328 = vdwg.mxu0
    %1329 = vmatprep.subr.mxu0 %v1083
    %1330 = vmatpush1.msra.mxu0 %v1082
    %1331 = vmatprep.subr.mxu0 %v1091
    %1332 = vmatpush1.msra.mxu0 %v1090
    %1333 = vmatprep.subr.mxu0 %v1099
    %1334 = vmatpush1.msra.mxu0 %v1098
    %1335 = vmatprep.subr.mxu0 %v1107
    %1336 = vmatpush1.msra.mxu0 %v1106
    %1337 = vmatprep.subr.mxu0 %v1115
    %1338 = vmatpush1.msra.mxu0 %v1114
    %1339 = vmatprep.subr.mxu0 %v1123
    %1340 = vmatpush1.msra.mxu0 %v1122
    %1341 = vmatprep.subr.mxu0 %v1131
    %1342 = vmatpush1.msra.mxu0 %v1130
    %1343 = vmatprep.subr.mxu0 %v1139
    %1344 = vmatpush1.msra.mxu0 %v1138
    %1345 = vmatprep.subr.mxu0 0.0
    %1346 = vmatpush1.msra.mxu0 0.0
    %1347 = vmatprep.subr.mxu0 0.0
    %1348 = vmatpush1.msra.mxu0 0.0
    %1349 = vmatprep.subr.mxu0 0.0
    %1350 = vmatpush1.msra.mxu0 0.0
    %1351 = vmatprep.subr.mxu0 0.0
    %1352 = vmatpush1.msra.mxu0 0.0
    %1353 = vmatprep.subr.mxu0 0.0
    %1354 = vmatpush1.msra.mxu0 0.0
    %1355 = vmatprep.subr.mxu0 0.0
    %1356 = vmatpush1.msra.mxu0 0.0
    %1357 = vmatprep.subr.mxu0 0.0
    %1358 = vmatpush1.msra.mxu0 0.0
    %1359 = vmatprep.subr.mxu0 0.0
    %1360 = vmatpush1.msra.mxu0 0.0
    %1361 = vmatprep.subr.mxu0 0.0
    %1362 = vmatpush1.msra.mxu0 0.0
    %1363 = vmatprep.subr.mxu0 0.0
    %1364 = vmatpush1.msra.mxu0 0.0
    %1365 = vmatprep.subr.mxu0 0.0
    %1366 = vmatpush1.msra.mxu0 0.0
    %1367 = vmatprep.subr.mxu0 0.0
    %1368 = vmatpush1.msra.mxu0 0.0
    %1369 = vmatprep.subr.mxu0 0.0
    %1370 = vmatpush1.msra.mxu0 0.0
    %1371 = vmatprep.subr.mxu0 0.0
    %1372 = vmatpush1.msra.mxu0 0.0
    %1373 = vmatprep.subr.mxu0 0.0
    %1374 = vmatpush1.msra.mxu0 0.0
    %1375 = vmatprep.subr.mxu0 0.0
    %1376 = vmatpush1.msra.mxu0 0.0
    %1377 = vmatprep.subr.mxu0 0.0
    %1378 = vmatpush1.msra.mxu0 0.0
    %1379 = vmatprep.subr.mxu0 0.0
    %1380 = vmatpush1.msra.mxu0 0.0
    %1381 = vmatprep.subr.mxu0 0.0
    %1382 = vmatpush1.msra.mxu0 0.0
    %1383 = vmatprep.subr.mxu0 0.0
    %1384 = vmatpush1.msra.mxu0 0.0
    %1385 = vmatprep.subr.mxu0 0.0
    %1386 = vmatpush1.msra.mxu0 0.0
    %1387 = vmatprep.subr.mxu0 0.0
    %1388 = vmatpush1.msra.mxu0 0.0
    %1389 = vmatprep.subr.mxu0 0.0
    %1390 = vmatpush1.msra.mxu0 0.0
    %1391 = vmatprep.subr.mxu0 0.0
    %1392 = vmatpush1.msra.mxu0 0.0
    %1393 = vmatprep.mubr.f32.mxu0 0.0
    %1394 = vmatmul.mubr.f32.gmra.mrb[0].mxu0 %v1185
    %v1395 = vpop.f32.mrb[0].mxu0
    %v1396 = vadd.f32 %v1163, %v1395
    %v1397 = vpop.f32.mrb[0].mxu0
    %v1398 = vadd.f32 %v1167, %v1397
    %1399 = vdwg.mxu0
    %1400 = vmatprep.subr.mxu0 %v1085
    %1401 = vmatpush1.msra.mxu0 %v1084
    %1402 = vmatprep.subr.mxu0 %v1093
    %1403 = vmatpush1.msra.mxu0 %v1092
    %1404 = vmatprep.subr.mxu0 %v1101
    %1405 = vmatpush1.msra.mxu0 %v1100
    %1406 = vmatprep.subr.mxu0 %v1109
    %1407 = vmatpush1.msra.mxu0 %v1108
    %1408 = vmatprep.subr.mxu0 %v1117
    %1409 = vmatpush1.msra.mxu0 %v1116
    %1410 = vmatprep.subr.mxu0 %v1125
    %1411 = vmatpush1.msra.mxu0 %v1124
    %1412 = vmatprep.subr.mxu0 %v1133
    %1413 = vmatpush1.msra.mxu0 %v1132
    %1414 = vmatprep.subr.mxu0 %v1141
    %1415 = vmatpush1.msra.mxu0 %v1140
    %1416 = vmatprep.subr.mxu0 0.0
    %1417 = vmatpush1.msra.mxu0 0.0
    %1418 = vmatprep.subr.mxu0 0.0
    %1419 = vmatpush1.msra.mxu0 0.0
    %1420 = vmatprep.subr.mxu0 0.0
    %1421 = vmatpush1.msra.mxu0 0.0
    %1422 = vmatprep.subr.mxu0 0.0
    %1423 = vmatpush1.msra.mxu0 0.0
    %1424 = vmatprep.subr.mxu0 0.0
    %1425 = vmatpush1.msra.mxu0 0.0
    %1426 = vmatprep.subr.mxu0 0.0
    %1427 = vmatpush1.msra.mxu0 0.0
    %1428 = vmatprep.subr.mxu0 0.0
    %1429 = vmatpush1.msra.mxu0 0.0
    %1430 = vmatprep.subr.mxu0 0.0
    %1431 = vmatpush1.msra.mxu0 0.0
    %1432 = vmatprep.subr.mxu0 0.0
    %1433 = vmatpush1.msra.mxu0 0.0
    %1434 = vmatprep.subr.mxu0 0.0
    %1435 = vmatpush1.msra.mxu0 0.0
    %1436 = vmatprep.subr.mxu0 0.0
    %1437 = vmatpush1.msra.mxu0 0.0
    %1438 = vmatprep.subr.mxu0 0.0
    %1439 = vmatpush1.msra.mxu0 0.0
    %1440 = vmatprep.subr.mxu0 0.0
    %1441 = vmatpush1.msra.mxu0 0.0
    %1442 = vmatprep.subr.mxu0 0.0
    %1443 = vmatpush1.msra.mxu0 0.0
    %1444 = vmatprep.subr.mxu0 0.0
    %1445 = vmatpush1.msra.mxu0 0.0
    %1446 = vmatprep.subr.mxu0 0.0
    %1447 = vmatpush1.msra.mxu0 0.0
    %1448 = vmatprep.subr.mxu0 0.0
    %1449 = vmatpush1.msra.mxu0 0.0
    %1450 = vmatprep.subr.mxu0 0.0
    %1451 = vmatpush1.msra.mxu0 0.0
    %1452 = vmatprep.subr.mxu0 0.0
    %1453 = vmatpush1.msra.mxu0 0.0
    %1454 = vmatprep.subr.mxu0 0.0
    %1455 = vmatpush1.msra.mxu0 0.0
    %1456 = vmatprep.subr.mxu0 0.0
    %1457 = vmatpush1.msra.mxu0 0.0
    %1458 = vmatprep.subr.mxu0 0.0
    %1459 = vmatpush1.msra.mxu0 0.0
    %1460 = vmatprep.subr.mxu0 0.0
    %1461 = vmatpush1.msra.mxu0 0.0
    %1462 = vmatprep.subr.mxu0 0.0
    %1463 = vmatpush1.msra.mxu0 0.0
    %1464 = vmatprep.mubr.f32.mxu0 0.0
    %1465 = vmatmul.mubr.f32.gmra.mrb[0].mxu0 %v1185
    %v1466 = vpop.f32.mrb[0].mxu0
    %v1467 = vadd.f32 %v1171, %v1466
    %v1468 = vpop.f32.mrb[0].mxu0
    %v1469 = vadd.f32 %v1175, %v1468
    %1470 = vdwg.mxu0
    %v1471 = vmax.f32 %v1254, 0.0
    %v1472 = vmax.f32 %v1256, 0.0
    %v1473 = vmax.f32 %v1325, 0.0
    %v1474 = vmax.f32 %v1327, 0.0
    %v1475 = vmax.f32 %v1396, 0.0
    %v1476 = vmax.f32 %v1398, 0.0
    %v1477 = vmax.f32 %v1467, 0.0
    %v1478 = vmax.f32 %v1469, 0.0
    %v1479 = vpack.c.bf16 %v1471, %v1471
    %v1480 = vpack.c.bf16 %v1472, %v1472
    %v1481 = vpack.c.bf16 %v1473, %v1473
    %v1482 = vpack.c.bf16 %v1474, %v1474
    %v1483 = vpack.c.bf16 %v1475, %v1475
    %v1484 = vpack.c.bf16 %v1476, %v1476
    %v1485 = vpack.c.bf16 %v1477, %v1477
    %v1486 = vpack.c.bf16 %v1478, %v1478
    %v1495 = vcombine.low %v1479, %v1480
    %v1496 = vcombine.low %v1481, %v1482
    %v1497 = vcombine.low %v1483, %v1484
    %v1498 = vcombine.low %v1485, %v1486
    %v1500 = vunpack.c.l.s4 1966171168
    %v1501 = vunpack.c.0.s8 %v1500
    %v1502 = vlaneseq
    %v1503 = vshrl.u32 %v1502, 7
    %v1504 = vsub.s32 %v1501, %v1503
    %v1505 = vrot.slane %v1495, %v1504
    %v1507 = vunpack.c.l.s4 1966171168
    %v1508 = vunpack.c.0.s8 %v1507
    %v1509 = vlaneseq
    %v1510 = vshrl.u32 %v1509, 7
    %v1511 = vsub.s32 %v1508, %v1510
    %v1512 = vrot.slane %v1496, %v1511
    %v1514 = vunpack.c.l.s4 1966171168
    %v1515 = vunpack.c.0.s8 %v1514
    %v1516 = vlaneseq
    %v1517 = vshrl.u32 %v1516, 7
    %v1518 = vsub.s32 %v1515, %v1517
    %v1519 = vrot.slane %v1497, %v1518
    %v1521 = vunpack.c.l.s4 1966171168
    %v1522 = vunpack.c.0.s8 %v1521
    %v1523 = vlaneseq
    %v1524 = vshrl.u32 %v1523, 7
    %v1525 = vsub.s32 %v1522, %v1524
    %v1526 = vrot.slane %v1498, %v1525
    %v1527 = vcombine.low %v1505, %v1512
    %v1528 = vcombine.low %v1519, %v1526
    %v1530 = vunpack.c.l.s4 1966171168
    %v1531 = vunpack.c.0.s8 %v1530
    %v1532 = vlaneseq
    %v1533 = vshrl.u32 %v1532, 7
    %v1534 = vsub.s32 %v1531, %v1533
    %v1535 = vrot.slane %v1527, %v1534
    %v1537 = vunpack.c.l.s4 1966171168
    %v1538 = vunpack.c.0.s8 %v1537
    %v1539 = vlaneseq
    %v1540 = vshrl.u32 %v1539, 7
    %v1541 = vsub.s32 %v1538, %v1540
    %v1542 = vrot.slane %v1528, %v1541
    %v1543 = vcombine.low %v1535, %v1542
    %1545 = vst [vmem:[%s6] sm:$0xff] %v1543
    // Predicated region
    $region26: #{conv_deconv_vqvae_forward.13} parent=1 // pred_check
      _
    $region27: #{conv_deconv_vqvae_forward.13} parent=1 // pred_check_branch
      %1547 = sbr.rel (0) target = $region29
    $region28: #{conv_deconv_vqvae_forward.13} parent=1 // pred_region
      _
    $region29: #{conv_deconv_vqvae_forward.13} parent=1 // pred_fallthru
      _
    // Predicated region
    $region30: #{conv_deconv_vqvae_forward.13} parent=1 // pred_check
      _
    $region31: #{conv_deconv_vqvae_forward.13} parent=1 // pred_check_branch
      %1549 = sbr.rel (0) target = $region33
    $region32: #{conv_deconv_vqvae_forward.13} parent=1 // pred_region
      %s1551 = ssub.s32 16, 16
      %1552 = vsyncadd [#allocation3], %s1551
      %s1554 = sshll.u32 [#allocation2], 4
      %s1555 = int_to_ptr.vmem [resolvable:$true] %s1554
      %1557 = dma.vmem_to_hbm [thread:$0]  %s1555, 16, %s7, [#allocation3]
    $region33: #{conv_deconv_vqvae_forward.13} parent=1 // pred_fallthru
      _
    // Predicated region
    $region34: #{conv_deconv_vqvae_forward.13} parent=1 // pred_check
      _
    $region35: #{conv_deconv_vqvae_forward.13} parent=1 // pred_check_branch
      %1559 = sbr.rel (0) target = $region37
    $region36: #{conv_deconv_vqvae_forward.13} parent=1 // pred_region
      _
    $region37: #{conv_deconv_vqvae_forward.13} parent=1 // pred_fallthru
      _
    // Predicated region
    $region38: #{conv_deconv_vqvae_forward.13} parent=1 // pred_check
      _
    $region39: #{conv_deconv_vqvae_forward.13} parent=1 // pred_check_branch
      %1561 = sbr.rel (0) target = $region41
    $region40: #{conv_deconv_vqvae_forward.13} parent=1 // pred_region
      %1562 = dma.done [#allocation3], 16
    $region41: #{conv_deconv_vqvae_forward.13} parent=1 // pred_fallthru
      _
    %1563 = vsyncpa [#allocation3], 1

// kernel: conv_deconv_vqvae_forward.12
$region0: #{conv_deconv_vqvae_forward.12}
  #allocation0 [shape = 'u32[]', space=smem, size = 0x4, offset = 0x4, fixed_abs, tag = 'smem constant byte address 0x4 - core index']
  #allocation1 [shape = 'u32[144,128]{1,0:T(1,128)}', space=vmem, size = 0x12000, scoped, tag = 'internal scratch']
  %s0 = inlined_call_operand.vmem [shape: bf16[8,2048], index: 0, kind: input, shape index: {}]
  %s1 = inlined_call_operand.vmem [shape: bf16[2048,256], index: 1, kind: input, shape index: {}]
  %s2 = inlined_call_operand.vmem [shape: f32[1,256], index: 2, kind: input, shape index: {}]
  %s3 = inlined_call_operand.vmem [shape: bf16[8,256], index: 3, kind: output, shape index: {}]
  %s4 = sld [smem:[#allocation0]]
  $region22: #{conv_deconv_vqvae_forward.12} parent=0
    _
  %s6 = ssub.s32 1, %s4
  %s7 = scalar_select 0, %s6, %s4
  // Predicated region
  $region2: #{conv_deconv_vqvae_forward.12} parent=0 // pred_check
    _
  $region3: #{conv_deconv_vqvae_forward.12} parent=0 // pred_check_branch
    %9 = sbr.rel (0) target = $region5
  $region4: #{conv_deconv_vqvae_forward.12} parent=0 // pred_region
    _
  $region5: #{conv_deconv_vqvae_forward.12} parent=0 // pred_fallthru
    _
  // Predicated region
  $region6: #{conv_deconv_vqvae_forward.12} parent=0 // pred_check
    _
  $region7: #{conv_deconv_vqvae_forward.12} parent=0 // pred_check_branch
    %11 = sbr.rel (0) target = $region9
  $region8: #{conv_deconv_vqvae_forward.12} parent=0 // pred_region
    _
  $region9: #{conv_deconv_vqvae_forward.12} parent=0 // pred_fallthru
    _
  // Predicated region
  $region10: #{conv_deconv_vqvae_forward.12} parent=0 // pred_check
    _
  $region11: #{conv_deconv_vqvae_forward.12} parent=0 // pred_check_branch
    %13 = sbr.rel (0) target = $region13
  $region12: #{conv_deconv_vqvae_forward.12} parent=0 // pred_region
    _
  $region13: #{conv_deconv_vqvae_forward.12} parent=0 // pred_fallthru
    _
  %v14 = vld [vmem:[%s0] sm:$0xff]
  %v15 = vld [vmem:[%s0 + $0x8] sm:$0xff]
  %v16 = vld [vmem:[%s0 + $0x10] sm:$0xff]
  %v17 = vld [vmem:[%s0 + $0x18] sm:$0xff]
  %v18 = vld [vmem:[%s0 + $0x20] sm:$0xff]
  %v19 = vld [vmem:[%s0 + $0x28] sm:$0xff]
  %v20 = vld [vmem:[%s0 + $0x30] sm:$0xff]
  %v21 = vld [vmem:[%s0 + $0x38] sm:$0xff]
  %v22 = vld [vmem:[%s1] sm:$0xff]
  %v23 = vld [vmem:[%s1 + $0x8] sm:$0xff]
  %v24 = vld [vmem:[%s1 + $0x10] sm:$0xff]
  %v25 = vld [vmem:[%s1 + $0x18] sm:$0xff]
  %v26 = vld [vmem:[%s1 + $0x20] sm:$0xff]
  %v27 = vld [vmem:[%s1 + $0x28] sm:$0xff]
  %v28 = vld [vmem:[%s1 + $0x30] sm:$0xff]
  %v29 = vld [vmem:[%s1 + $0x38] sm:$0xff]
  %v30 = vld [vmem:[%s1 + $0x40] sm:$0xff]
  %v31 = vld [vmem:[%s1 + $0x48] sm:$0xff]
  %v32 = vld [vmem:[%s1 + $0x50] sm:$0xff]
  %v33 = vld [vmem:[%s1 + $0x58] sm:$0xff]
  %v34 = vld [vmem:[%s1 + $0x60] sm:$0xff]
  %v35 = vld [vmem:[%s1 + $0x68] sm:$0xff]
  %v36 = vld [vmem:[%s1 + $0x70] sm:$0xff]
  %v37 = vld [vmem:[%s1 + $0x78] sm:$0xff]
  %v38 = vld [vmem:[%s1 + $0x80] sm:$0xff]
  %v39 = vld [vmem:[%s1 + $0x88] sm:$0xff]
  %v40 = vld [vmem:[%s1 + $0x90] sm:$0xff]
  %v41 = vld [vmem:[%s1 + $0x98] sm:$0xff]
  %v42 = vld [vmem:[%s1 + $0xa0] sm:$0xff]
  %v43 = vld [vmem:[%s1 + $0xa8] sm:$0xff]
  %v44 = vld [vmem:[%s1 + $0xb0] sm:$0xff]
  %v45 = vld [vmem:[%s1 + $0xb8] sm:$0xff]
  %v46 = vld [vmem:[%s1 + $0xc0] sm:$0xff]
  %v47 = vld [vmem:[%s1 + $0xc8] sm:$0xff]
  %v48 = vld [vmem:[%s1 + $0xd0] sm:$0xff]
  %v49 = vld [vmem:[%s1 + $0xd8] sm:$0xff]
  %v50 = vld [vmem:[%s1 + $0xe0] sm:$0xff]
  %v51 = vld [vmem:[%s1 + $0xe8] sm:$0xff]
  %v52 = vld [vmem:[%s1 + $0xf0] sm:$0xff]
  %v53 = vld [vmem:[%s1 + $0xf8] sm:$0xff]
  %v54 = vld [vmem:[%s1 + $0x100] sm:$0xff]
  %v55 = vld [vmem:[%s1 + $0x108] sm:$0xff]
  %v56 = vld [vmem:[%s1 + $0x110] sm:$0xff]
  %v57 = vld [vmem:[%s1 + $0x118] sm:$0xff]
  %v58 = vld [vmem:[%s1 + $0x120] sm:$0xff]
  %v59 = vld [vmem:[%s1 + $0x128] sm:$0xff]
  %v60 = vld [vmem:[%s1 + $0x130] sm:$0xff]
  %v61 = vld [vmem:[%s1 + $0x138] sm:$0xff]
  %v62 = vld [vmem:[%s1 + $0x140] sm:$0xff]
  %v63 = vld [vmem:[%s1 + $0x148] sm:$0xff]
  %v64 = vld [vmem:[%s1 + $0x150] sm:$0xff]
  %v65 = vld [vmem:[%s1 + $0x158] sm:$0xff]
  %v66 = vld [vmem:[%s1 + $0x160] sm:$0xff]
  %v67 = vld [vmem:[%s1 + $0x168] sm:$0xff]
  %v68 = vld [vmem:[%s1 + $0x170] sm:$0xff]
  %v69 = vld [vmem:[%s1 + $0x178] sm:$0xff]
  %v70 = vld [vmem:[%s1 + $0x180] sm:$0xff]
  %v71 = vld [vmem:[%s1 + $0x188] sm:$0xff]
  %v72 = vld [vmem:[%s1 + $0x190] sm:$0xff]
  %v73 = vld [vmem:[%s1 + $0x198] sm:$0xff]
  %v74 = vld [vmem:[%s1 + $0x1a0] sm:$0xff]
  %v75 = vld [vmem:[%s1 + $0x1a8] sm:$0xff]
  %v76 = vld [vmem:[%s1 + $0x1b0] sm:$0xff]
  %v77 = vld [vmem:[%s1 + $0x1b8] sm:$0xff]
  %v78 = vld [vmem:[%s1 + $0x1c0] sm:$0xff]
  %v79 = vld [vmem:[%s1 + $0x1c8] sm:$0xff]
  %v80 = vld [vmem:[%s1 + $0x1d0] sm:$0xff]
  %v81 = vld [vmem:[%s1 + $0x1d8] sm:$0xff]
  %v82 = vld [vmem:[%s1 + $0x1e0] sm:$0xff]
  %v83 = vld [vmem:[%s1 + $0x1e8] sm:$0xff]
  %v84 = vld [vmem:[%s1 + $0x1f0] sm:$0xff]
  %v85 = vld [vmem:[%s1 + $0x1f8] sm:$0xff]
  %v86 = vld [vmem:[%s1 + $0x200] sm:$0xff]
  %v87 = vld [vmem:[%s1 + $0x208] sm:$0xff]
  %v88 = vld [vmem:[%s1 + $0x210] sm:$0xff]
  %v89 = vld [vmem:[%s1 + $0x218] sm:$0xff]
  %v90 = vld [vmem:[%s1 + $0x220] sm:$0xff]
  %v91 = vld [vmem:[%s1 + $0x228] sm:$0xff]
  %v92 = vld [vmem:[%s1 + $0x230] sm:$0xff]
  %v93 = vld [vmem:[%s1 + $0x238] sm:$0xff]
  %v94 = vld [vmem:[%s1 + $0x240] sm:$0xff]
  %v95 = vld [vmem:[%s1 + $0x248] sm:$0xff]
  %v96 = vld [vmem:[%s1 + $0x250] sm:$0xff]
  %v97 = vld [vmem:[%s1 + $0x258] sm:$0xff]
  %v98 = vld [vmem:[%s1 + $0x260] sm:$0xff]
  %v99 = vld [vmem:[%s1 + $0x268] sm:$0xff]
  %v100 = vld [vmem:[%s1 + $0x270] sm:$0xff]
  %v101 = vld [vmem:[%s1 + $0x278] sm:$0xff]
  %v102 = vld [vmem:[%s1 + $0x280] sm:$0xff]
  %v103 = vld [vmem:[%s1 + $0x288] sm:$0xff]
  %v104 = vld [vmem:[%s1 + $0x290] sm:$0xff]
  %v105 = vld [vmem:[%s1 + $0x298] sm:$0xff]
  %v106 = vld [vmem:[%s1 + $0x2a0] sm:$0xff]
  %v107 = vld [vmem:[%s1 + $0x2a8] sm:$0xff]
  %v108 = vld [vmem:[%s1 + $0x2b0] sm:$0xff]
  %v109 = vld [vmem:[%s1 + $0x2b8] sm:$0xff]
  %v110 = vld [vmem:[%s1 + $0x2c0] sm:$0xff]
  %v111 = vld [vmem:[%s1 + $0x2c8] sm:$0xff]
  %v112 = vld [vmem:[%s1 + $0x2d0] sm:$0xff]
  %v113 = vld [vmem:[%s1 + $0x2d8] sm:$0xff]
  %v114 = vld [vmem:[%s1 + $0x2e0] sm:$0xff]
  %v115 = vld [vmem:[%s1 + $0x2e8] sm:$0xff]
  %v116 = vld [vmem:[%s1 + $0x2f0] sm:$0xff]
  %v117 = vld [vmem:[%s1 + $0x2f8] sm:$0xff]
  %v118 = vld [vmem:[%s1 + $0x300] sm:$0xff]
  %v119 = vld [vmem:[%s1 + $0x308] sm:$0xff]
  %v120 = vld [vmem:[%s1 + $0x310] sm:$0xff]
  %v121 = vld [vmem:[%s1 + $0x318] sm:$0xff]
  %v122 = vld [vmem:[%s1 + $0x320] sm:$0xff]
  %v123 = vld [vmem:[%s1 + $0x328] sm:$0xff]
  %v124 = vld [vmem:[%s1 + $0x330] sm:$0xff]
  %v125 = vld [vmem:[%s1 + $0x338] sm:$0xff]
  %v126 = vld [vmem:[%s1 + $0x340] sm:$0xff]
  %v127 = vld [vmem:[%s1 + $0x348] sm:$0xff]
  %v128 = vld [vmem:[%s1 + $0x350] sm:$0xff]
  %v129 = vld [vmem:[%s1 + $0x358] sm:$0xff]
  %v130 = vld [vmem:[%s1 + $0x360] sm:$0xff]
  %v131 = vld [vmem:[%s1 + $0x368] sm:$0xff]
  %v132 = vld [vmem:[%s1 + $0x370] sm:$0xff]
  %v133 = vld [vmem:[%s1 + $0x378] sm:$0xff]
  %v134 = vld [vmem:[%s1 + $0x380] sm:$0xff]
  %v135 = vld [vmem:[%s1 + $0x388] sm:$0xff]
  %v136 = vld [vmem:[%s1 + $0x390] sm:$0xff]
  %v137 = vld [vmem:[%s1 + $0x398] sm:$0xff]
  %v138 = vld [vmem:[%s1 + $0x3a0] sm:$0xff]
  %v139 = vld [vmem:[%s1 + $0x3a8] sm:$0xff]
  %v140 = vld [vmem:[%s1 + $0x3b0] sm:$0xff]
  %v141 = vld [vmem:[%s1 + $0x3b8] sm:$0xff]
  %v142 = vld [vmem:[%s1 + $0x3c0] sm:$0xff]
  %v143 = vld [vmem:[%s1 + $0x3c8] sm:$0xff]
  %v144 = vld [vmem:[%s1 + $0x3d0] sm:$0xff]
  %v145 = vld [vmem:[%s1 + $0x3d8] sm:$0xff]
  %v146 = vld [vmem:[%s1 + $0x3e0] sm:$0xff]
  %v147 = vld [vmem:[%s1 + $0x3e8] sm:$0xff]
  %v148 = vld [vmem:[%s1 + $0x3f0] sm:$0xff]
  %v149 = vld [vmem:[%s1 + $0x3f8] sm:$0xff]
  %v150 = vld [vmem:[%s1 + $0x400] sm:$0xff]
  %v151 = vld [vmem:[%s1 + $0x408] sm:$0xff]
  %v152 = vld [vmem:[%s1 + $0x410] sm:$0xff]
  %v153 = vld [vmem:[%s1 + $0x418] sm:$0xff]
  %v154 = vld [vmem:[%s1 + $0x420] sm:$0xff]
  %v155 = vld [vmem:[%s1 + $0x428] sm:$0xff]
  %v156 = vld [vmem:[%s1 + $0x430] sm:$0xff]
  %v157 = vld [vmem:[%s1 + $0x438] sm:$0xff]
  %v158 = vld [vmem:[%s1 + $0x440] sm:$0xff]
  %v159 = vld [vmem:[%s1 + $0x448] sm:$0xff]
  %v160 = vld [vmem:[%s1 + $0x450] sm:$0xff]
  %v161 = vld [vmem:[%s1 + $0x458] sm:$0xff]
  %v162 = vld [vmem:[%s1 + $0x460] sm:$0xff]
  %v163 = vld [vmem:[%s1 + $0x468] sm:$0xff]
  %v164 = vld [vmem:[%s1 + $0x470] sm:$0xff]
  %v165 = vld [vmem:[%s1 + $0x478] sm:$0xff]
  %v166 = vld [vmem:[%s1 + $0x480] sm:$0xff]
  %v167 = vld [vmem:[%s1 + $0x488] sm:$0xff]
  %v168 = vld [vmem:[%s1 + $0x490] sm:$0xff]
  %v169 = vld [vmem:[%s1 + $0x498] sm:$0xff]
  %v170 = vld [vmem:[%s1 + $0x4a0] sm:$0xff]
  %v171 = vld [vmem:[%s1 + $0x4a8] sm:$0xff]
  %v172 = vld [vmem:[%s1 + $0x4b0] sm:$0xff]
  %v173 = vld [vmem:[%s1 + $0x4b8] sm:$0xff]
  %v174 = vld [vmem:[%s1 + $0x4c0] sm:$0xff]
  %v175 = vld [vmem:[%s1 + $0x4c8] sm:$0xff]
  %v176 = vld [vmem:[%s1 + $0x4d0] sm:$0xff]
  %v177 = vld [vmem:[%s1 + $0x4d8] sm:$0xff]
  %v178 = vld [vmem:[%s1 + $0x4e0] sm:$0xff]
  %v179 = vld [vmem:[%s1 + $0x4e8] sm:$0xff]
  %v180 = vld [vmem:[%s1 + $0x4f0] sm:$0xff]
  %v181 = vld [vmem:[%s1 + $0x4f8] sm:$0xff]
  %v182 = vld [vmem:[%s1 + $0x500] sm:$0xff]
  %v183 = vld [vmem:[%s1 + $0x508] sm:$0xff]
  %v184 = vld [vmem:[%s1 + $0x510] sm:$0xff]
  %v185 = vld [vmem:[%s1 + $0x518] sm:$0xff]
  %v186 = vld [vmem:[%s1 + $0x520] sm:$0xff]
  %v187 = vld [vmem:[%s1 + $0x528] sm:$0xff]
  %v188 = vld [vmem:[%s1 + $0x530] sm:$0xff]
  %v189 = vld [vmem:[%s1 + $0x538] sm:$0xff]
  %v190 = vld [vmem:[%s1 + $0x540] sm:$0xff]
  %v191 = vld [vmem:[%s1 + $0x548] sm:$0xff]
  %v192 = vld [vmem:[%s1 + $0x550] sm:$0xff]
  %v193 = vld [vmem:[%s1 + $0x558] sm:$0xff]
  %v194 = vld [vmem:[%s1 + $0x560] sm:$0xff]
  %v195 = vld [vmem:[%s1 + $0x568] sm:$0xff]
  %v196 = vld [vmem:[%s1 + $0x570] sm:$0xff]
  %v197 = vld [vmem:[%s1 + $0x578] sm:$0xff]
  %v198 = vld [vmem:[%s1 + $0x580] sm:$0xff]
  %v199 = vld [vmem:[%s1 + $0x588] sm:$0xff]
  %v200 = vld [vmem:[%s1 + $0x590] sm:$0xff]
  %v201 = vld [vmem:[%s1 + $0x598] sm:$0xff]
  %v202 = vld [vmem:[%s1 + $0x5a0] sm:$0xff]
  %v203 = vld [vmem:[%s1 + $0x5a8] sm:$0xff]
  %v204 = vld [vmem:[%s1 + $0x5b0] sm:$0xff]
  %v205 = vld [vmem:[%s1 + $0x5b8] sm:$0xff]
  %v206 = vld [vmem:[%s1 + $0x5c0] sm:$0xff]
  %v207 = vld [vmem:[%s1 + $0x5c8] sm:$0xff]
  %v208 = vld [vmem:[%s1 + $0x5d0] sm:$0xff]
  %v209 = vld [vmem:[%s1 + $0x5d8] sm:$0xff]
  %v210 = vld [vmem:[%s1 + $0x5e0] sm:$0xff]
  %v211 = vld [vmem:[%s1 + $0x5e8] sm:$0xff]
  %v212 = vld [vmem:[%s1 + $0x5f0] sm:$0xff]
  %v213 = vld [vmem:[%s1 + $0x5f8] sm:$0xff]
  %v214 = vld [vmem:[%s1 + $0x600] sm:$0xff]
  %v215 = vld [vmem:[%s1 + $0x608] sm:$0xff]
  %v216 = vld [vmem:[%s1 + $0x610] sm:$0xff]
  %v217 = vld [vmem:[%s1 + $0x618] sm:$0xff]
  %v218 = vld [vmem:[%s1 + $0x620] sm:$0xff]
  %v219 = vld [vmem:[%s1 + $0x628] sm:$0xff]
  %v220 = vld [vmem:[%s1 + $0x630] sm:$0xff]
  %v221 = vld [vmem:[%s1 + $0x638] sm:$0xff]
  %v222 = vld [vmem:[%s1 + $0x640] sm:$0xff]
  %v223 = vld [vmem:[%s1 + $0x648] sm:$0xff]
  %v224 = vld [vmem:[%s1 + $0x650] sm:$0xff]
  %v225 = vld [vmem:[%s1 + $0x658] sm:$0xff]
  %v226 = vld [vmem:[%s1 + $0x660] sm:$0xff]
  %v227 = vld [vmem:[%s1 + $0x668] sm:$0xff]
  %v228 = vld [vmem:[%s1 + $0x670] sm:$0xff]
  %v229 = vld [vmem:[%s1 + $0x678] sm:$0xff]
  %v230 = vld [vmem:[%s1 + $0x680] sm:$0xff]
  %v231 = vld [vmem:[%s1 + $0x688] sm:$0xff]
  %v232 = vld [vmem:[%s1 + $0x690] sm:$0xff]
  %v233 = vld [vmem:[%s1 + $0x698] sm:$0xff]
  %v234 = vld [vmem:[%s1 + $0x6a0] sm:$0xff]
  %v235 = vld [vmem:[%s1 + $0x6a8] sm:$0xff]
  %v236 = vld [vmem:[%s1 + $0x6b0] sm:$0xff]
  %v237 = vld [vmem:[%s1 + $0x6b8] sm:$0xff]
  %v238 = vld [vmem:[%s1 + $0x6c0] sm:$0xff]
  %v239 = vld [vmem:[%s1 + $0x6c8] sm:$0xff]
  %v240 = vld [vmem:[%s1 + $0x6d0] sm:$0xff]
  %v241 = vld [vmem:[%s1 + $0x6d8] sm:$0xff]
  %v242 = vld [vmem:[%s1 + $0x6e0] sm:$0xff]
  %v243 = vld [vmem:[%s1 + $0x6e8] sm:$0xff]
  %v244 = vld [vmem:[%s1 + $0x6f0] sm:$0xff]
  %v245 = vld [vmem:[%s1 + $0x6f8] sm:$0xff]
  %v246 = vld [vmem:[%s1 + $0x700] sm:$0xff]
  %v247 = vld [vmem:[%s1 + $0x708] sm:$0xff]
  %v248 = vld [vmem:[%s1 + $0x710] sm:$0xff]
  %v249 = vld [vmem:[%s1 + $0x718] sm:$0xff]
  %v250 = vld [vmem:[%s1 + $0x720] sm:$0xff]
  %v251 = vld [vmem:[%s1 + $0x728] sm:$0xff]
  %v252 = vld [vmem:[%s1 + $0x730] sm:$0xff]
  %v253 = vld [vmem:[%s1 + $0x738] sm:$0xff]
  %v254 = vld [vmem:[%s1 + $0x740] sm:$0xff]
  %v255 = vld [vmem:[%s1 + $0x748] sm:$0xff]
  %v256 = vld [vmem:[%s1 + $0x750] sm:$0xff]
  %v257 = vld [vmem:[%s1 + $0x758] sm:$0xff]
  %v258 = vld [vmem:[%s1 + $0x760] sm:$0xff]
  %v259 = vld [vmem:[%s1 + $0x768] sm:$0xff]
  %v260 = vld [vmem:[%s1 + $0x770] sm:$0xff]
  %v261 = vld [vmem:[%s1 + $0x778] sm:$0xff]
  %v262 = vld [vmem:[%s1 + $0x780] sm:$0xff]
  %v263 = vld [vmem:[%s1 + $0x788] sm:$0xff]
  %v264 = vld [vmem:[%s1 + $0x790] sm:$0xff]
  %v265 = vld [vmem:[%s1 + $0x798] sm:$0xff]
  %v266 = vld [vmem:[%s1 + $0x7a0] sm:$0xff]
  %v267 = vld [vmem:[%s1 + $0x7a8] sm:$0xff]
  %v268 = vld [vmem:[%s1 + $0x7b0] sm:$0xff]
  %v269 = vld [vmem:[%s1 + $0x7b8] sm:$0xff]
  %v270 = vld [vmem:[%s1 + $0x7c0] sm:$0xff]
  %v271 = vld [vmem:[%s1 + $0x7c8] sm:$0xff]
  %v272 = vld [vmem:[%s1 + $0x7d0] sm:$0xff]
  %v273 = vld [vmem:[%s1 + $0x7d8] sm:$0xff]
  %v274 = vld [vmem:[%s1 + $0x7e0] sm:$0xff]
  %v275 = vld [vmem:[%s1 + $0x7e8] sm:$0xff]
  %v276 = vld [vmem:[%s1 + $0x7f0] sm:$0xff]
  %v277 = vld [vmem:[%s1 + $0x7f8] sm:$0xff]
  %v278 = vld [vmem:[%s2] sm:$0x3]
  %v280 = vlaneseq
  %v281 = vshrl.u32 %v280, 7
  %v282 = vsub.s32 0, %v281
  %v283 = vrot.slane %v278, %v282
  %v284 = vlaneseq
  %v285 = vshrl.u32 %v284, 7
  %v286 = vsub.s32 1, %v285
  %v287 = vrot.slane %v278, %v286
  %v298 = vunpack.c.l.b16 %v14
  %v299 = vunpack.c.h.b16 %v14
  %v300 = vunpack.c.l.b16 %v15
  %v301 = vunpack.c.h.b16 %v15
  %v302 = vunpack.c.l.b16 %v16
  %v303 = vunpack.c.h.b16 %v16
  %v304 = vunpack.c.l.b16 %v17
  %v305 = vunpack.c.h.b16 %v17
  %v306 = vunpack.c.l.b16 %v18
  %v307 = vunpack.c.h.b16 %v18
  %v308 = vunpack.c.l.b16 %v19
  %v309 = vunpack.c.h.b16 %v19
  %v310 = vunpack.c.l.b16 %v20
  %v311 = vunpack.c.h.b16 %v20
  %v312 = vunpack.c.l.b16 %v21
  %v313 = vunpack.c.h.b16 %v21
  %v314 = vpack.c.b16 %v298, %v298
  %v315 = vpack.c.b16 %v299, %v299
  %v316 = vpack.c.b16 %v300, %v300
  %v317 = vpack.c.b16 %v301, %v301
  %v318 = vpack.c.b16 %v302, %v302
  %v319 = vpack.c.b16 %v303, %v303
  %v320 = vpack.c.b16 %v304, %v304
  %v321 = vpack.c.b16 %v305, %v305
  %v322 = vpack.c.b16 %v306, %v306
  %v323 = vpack.c.b16 %v307, %v307
  %v324 = vpack.c.b16 %v308, %v308
  %v325 = vpack.c.b16 %v309, %v309
  %v326 = vpack.c.b16 %v310, %v310
  %v327 = vpack.c.b16 %v311, %v311
  %v328 = vpack.c.b16 %v312, %v312
  %v329 = vpack.c.b16 %v313, %v313
  %v602 = vunpack.c.l.b16 %v22
  %v603 = vunpack.c.h.b16 %v22
  %v604 = vunpack.c.l.b16 %v23
  %v605 = vunpack.c.h.b16 %v23
  %v606 = vunpack.c.l.b16 %v24
  %v607 = vunpack.c.h.b16 %v24
  %v608 = vunpack.c.l.b16 %v25
  %v609 = vunpack.c.h.b16 %v25
  %v610 = vunpack.c.l.b16 %v26
  %v611 = vunpack.c.h.b16 %v26
  %v612 = vunpack.c.l.b16 %v27
  %v613 = vunpack.c.h.b16 %v27
  %v614 = vunpack.c.l.b16 %v28
  %v615 = vunpack.c.h.b16 %v28
  %v616 = vunpack.c.l.b16 %v29
  %v617 = vunpack.c.h.b16 %v29
  %v618 = vunpack.c.l.b16 %v30
  %v619 = vunpack.c.h.b16 %v30
  %v620 = vunpack.c.l.b16 %v31
  %v621 = vunpack.c.h.b16 %v31
  %v622 = vunpack.c.l.b16 %v32
  %v623 = vunpack.c.h.b16 %v32
  %v624 = vunpack.c.l.b16 %v33
  %v625 = vunpack.c.h.b16 %v33
  %v626 = vunpack.c.l.b16 %v34
  %v627 = vunpack.c.h.b16 %v34
  %v628 = vunpack.c.l.b16 %v35
  %v629 = vunpack.c.h.b16 %v35
  %v630 = vunpack.c.l.b16 %v36
  %v631 = vunpack.c.h.b16 %v36
  %v632 = vunpack.c.l.b16 %v37
  %v633 = vunpack.c.h.b16 %v37
  %v634 = vunpack.c.l.b16 %v38
  %v635 = vunpack.c.h.b16 %v38
  %v636 = vunpack.c.l.b16 %v39
  %v637 = vunpack.c.h.b16 %v39
  %v638 = vunpack.c.l.b16 %v40
  %v639 = vunpack.c.h.b16 %v40
  %v640 = vunpack.c.l.b16 %v41
  %v641 = vunpack.c.h.b16 %v41
  %v642 = vunpack.c.l.b16 %v42
  %v643 = vunpack.c.h.b16 %v42
  %v644 = vunpack.c.l.b16 %v43
  %v645 = vunpack.c.h.b16 %v43
  %v646 = vunpack.c.l.b16 %v44
  %v647 = vunpack.c.h.b16 %v44
  %v648 = vunpack.c.l.b16 %v45
  %v649 = vunpack.c.h.b16 %v45
  %v650 = vunpack.c.l.b16 %v46
  %v651 = vunpack.c.h.b16 %v46
  %v652 = vunpack.c.l.b16 %v47
  %v653 = vunpack.c.h.b16 %v47
  %v654 = vunpack.c.l.b16 %v48
  %v655 = vunpack.c.h.b16 %v48
  %v656 = vunpack.c.l.b16 %v49
  %v657 = vunpack.c.h.b16 %v49
  %v658 = vunpack.c.l.b16 %v50
  %v659 = vunpack.c.h.b16 %v50
  %v660 = vunpack.c.l.b16 %v51
  %v661 = vunpack.c.h.b16 %v51
  %v662 = vunpack.c.l.b16 %v52
  %v663 = vunpack.c.h.b16 %v52
  %v664 = vunpack.c.l.b16 %v53
  %v665 = vunpack.c.h.b16 %v53
  %v666 = vunpack.c.l.b16 %v54
  %v667 = vunpack.c.h.b16 %v54
  %v668 = vunpack.c.l.b16 %v55
  %v669 = vunpack.c.h.b16 %v55
  %v670 = vunpack.c.l.b16 %v56
  %v671 = vunpack.c.h.b16 %v56
  %v672 = vunpack.c.l.b16 %v57
  %v673 = vunpack.c.h.b16 %v57
  %v674 = vunpack.c.l.b16 %v58
  %v675 = vunpack.c.h.b16 %v58
  %v676 = vunpack.c.l.b16 %v59
  %v677 = vunpack.c.h.b16 %v59
  %v678 = vunpack.c.l.b16 %v60
  %v679 = vunpack.c.h.b16 %v60
  %v680 = vunpack.c.l.b16 %v61
  %v681 = vunpack.c.h.b16 %v61
  %v682 = vunpack.c.l.b16 %v62
  %v683 = vunpack.c.h.b16 %v62
  %v684 = vunpack.c.l.b16 %v63
  %v685 = vunpack.c.h.b16 %v63
  %v686 = vunpack.c.l.b16 %v64
  %v687 = vunpack.c.h.b16 %v64
  %v688 = vunpack.c.l.b16 %v65
  %v689 = vunpack.c.h.b16 %v65
  %v690 = vunpack.c.l.b16 %v66
  %v691 = vunpack.c.h.b16 %v66
  %v692 = vunpack.c.l.b16 %v67
  %v693 = vunpack.c.h.b16 %v67
  %v694 = vunpack.c.l.b16 %v68
  %v695 = vunpack.c.h.b16 %v68
  %v696 = vunpack.c.l.b16 %v69
  %v697 = vunpack.c.h.b16 %v69
  %v698 = vunpack.c.l.b16 %v70
  %v699 = vunpack.c.h.b16 %v70
  %v700 = vunpack.c.l.b16 %v71
  %v701 = vunpack.c.h.b16 %v71
  %v702 = vunpack.c.l.b16 %v72
  %v703 = vunpack.c.h.b16 %v72
  %v704 = vunpack.c.l.b16 %v73
  %v705 = vunpack.c.h.b16 %v73
  %v706 = vunpack.c.l.b16 %v74
  %v707 = vunpack.c.h.b16 %v74
  %v708 = vunpack.c.l.b16 %v75
  %v709 = vunpack.c.h.b16 %v75
  %v710 = vunpack.c.l.b16 %v76
  %v711 = vunpack.c.h.b16 %v76
  %v712 = vunpack.c.l.b16 %v77
  %v713 = vunpack.c.h.b16 %v77
  %v714 = vunpack.c.l.b16 %v78
  %v715 = vunpack.c.h.b16 %v78
  %v716 = vunpack.c.l.b16 %v79
  %v717 = vunpack.c.h.b16 %v79
  %v718 = vunpack.c.l.b16 %v80
  %v719 = vunpack.c.h.b16 %v80
  %v720 = vunpack.c.l.b16 %v81
  %v721 = vunpack.c.h.b16 %v81
  %v722 = vunpack.c.l.b16 %v82
  %v723 = vunpack.c.h.b16 %v82
  %v724 = vunpack.c.l.b16 %v83
  %v725 = vunpack.c.h.b16 %v83
  %v726 = vunpack.c.l.b16 %v84
  %v727 = vunpack.c.h.b16 %v84
  %v728 = vunpack.c.l.b16 %v85
  %v729 = vunpack.c.h.b16 %v85
  %v730 = vunpack.c.l.b16 %v86
  %v731 = vunpack.c.h.b16 %v86
  %v732 = vunpack.c.l.b16 %v87
  %v733 = vunpack.c.h.b16 %v87
  %v734 = vunpack.c.l.b16 %v88
  %v735 = vunpack.c.h.b16 %v88
  %v736 = vunpack.c.l.b16 %v89
  %v737 = vunpack.c.h.b16 %v89
  %v738 = vunpack.c.l.b16 %v90
  %v739 = vunpack.c.h.b16 %v90
  %v740 = vunpack.c.l.b16 %v91
  %v741 = vunpack.c.h.b16 %v91
  %v742 = vunpack.c.l.b16 %v92
  %v743 = vunpack.c.h.b16 %v92
  %v744 = vunpack.c.l.b16 %v93
  %v745 = vunpack.c.h.b16 %v93
  %v746 = vunpack.c.l.b16 %v94
  %v747 = vunpack.c.h.b16 %v94
  %v748 = vunpack.c.l.b16 %v95
  %v749 = vunpack.c.h.b16 %v95
  %v750 = vunpack.c.l.b16 %v96
  %v751 = vunpack.c.h.b16 %v96
  %v752 = vunpack.c.l.b16 %v97
  %v753 = vunpack.c.h.b16 %v97
  %v754 = vunpack.c.l.b16 %v98
  %v755 = vunpack.c.h.b16 %v98
  %v756 = vunpack.c.l.b16 %v99
  %v757 = vunpack.c.h.b16 %v99
  %v758 = vunpack.c.l.b16 %v100
  %v759 = vunpack.c.h.b16 %v100
  %v760 = vunpack.c.l.b16 %v101
  %v761 = vunpack.c.h.b16 %v101
  %v762 = vunpack.c.l.b16 %v102
  %v763 = vunpack.c.h.b16 %v102
  %v764 = vunpack.c.l.b16 %v103
  %v765 = vunpack.c.h.b16 %v103
  %v766 = vunpack.c.l.b16 %v104
  %v767 = vunpack.c.h.b16 %v104
  %v768 = vunpack.c.l.b16 %v105
  %v769 = vunpack.c.h.b16 %v105
  %v770 = vunpack.c.l.b16 %v106
  %v771 = vunpack.c.h.b16 %v106
  %v772 = vunpack.c.l.b16 %v107
  %v773 = vunpack.c.h.b16 %v107
  %v774 = vunpack.c.l.b16 %v108
  %v775 = vunpack.c.h.b16 %v108
  %v776 = vunpack.c.l.b16 %v109
  %v777 = vunpack.c.h.b16 %v109
  %v778 = vunpack.c.l.b16 %v110
  %v779 = vunpack.c.h.b16 %v110
  %v780 = vunpack.c.l.b16 %v111
  %v781 = vunpack.c.h.b16 %v111
  %v782 = vunpack.c.l.b16 %v112
  %v783 = vunpack.c.h.b16 %v112
  %v784 = vunpack.c.l.b16 %v113
  %v785 = vunpack.c.h.b16 %v113
  %v786 = vunpack.c.l.b16 %v114
  %v787 = vunpack.c.h.b16 %v114
  %v788 = vunpack.c.l.b16 %v115
  %v789 = vunpack.c.h.b16 %v115
  %v790 = vunpack.c.l.b16 %v116
  %v791 = vunpack.c.h.b16 %v116
  %v792 = vunpack.c.l.b16 %v117
  %v793 = vunpack.c.h.b16 %v117
  %v794 = vunpack.c.l.b16 %v118
  %v795 = vunpack.c.h.b16 %v118
  %v796 = vunpack.c.l.b16 %v119
  %v797 = vunpack.c.h.b16 %v119
  %v798 = vunpack.c.l.b16 %v120
  %v799 = vunpack.c.h.b16 %v120
  %v800 = vunpack.c.l.b16 %v121
  %v801 = vunpack.c.h.b16 %v121
  %v802 = vunpack.c.l.b16 %v122
  %v803 = vunpack.c.h.b16 %v122
  %v804 = vunpack.c.l.b16 %v123
  %v805 = vunpack.c.h.b16 %v123
  %v806 = vunpack.c.l.b16 %v124
  %v807 = vunpack.c.h.b16 %v124
  %v808 = vunpack.c.l.b16 %v125
  %v809 = vunpack.c.h.b16 %v125
  %v810 = vunpack.c.l.b16 %v126
  %v811 = vunpack.c.h.b16 %v126
  %v812 = vunpack.c.l.b16 %v127
  %v813 = vunpack.c.h.b16 %v127
  %v814 = vunpack.c.l.b16 %v128
  %v815 = vunpack.c.h.b16 %v128
  %v816 = vunpack.c.l.b16 %v129
  %v817 = vunpack.c.h.b16 %v129
  %v818 = vunpack.c.l.b16 %v130
  %v819 = vunpack.c.h.b16 %v130
  %v820 = vunpack.c.l.b16 %v131
  %v821 = vunpack.c.h.b16 %v131
  %v822 = vunpack.c.l.b16 %v132
  %v823 = vunpack.c.h.b16 %v132
  %v824 = vunpack.c.l.b16 %v133
  %v825 = vunpack.c.h.b16 %v133
  %v826 = vunpack.c.l.b16 %v134
  %v827 = vunpack.c.h.b16 %v134
  %v828 = vunpack.c.l.b16 %v135
  %v829 = vunpack.c.h.b16 %v135
  %v830 = vunpack.c.l.b16 %v136
  %v831 = vunpack.c.h.b16 %v136
  %v832 = vunpack.c.l.b16 %v137
  %v833 = vunpack.c.h.b16 %v137
  %v834 = vunpack.c.l.b16 %v138
  %v835 = vunpack.c.h.b16 %v138
  %v836 = vunpack.c.l.b16 %v139
  %v837 = vunpack.c.h.b16 %v139
  %v838 = vunpack.c.l.b16 %v140
  %v839 = vunpack.c.h.b16 %v140
  %v840 = vunpack.c.l.b16 %v141
  %v841 = vunpack.c.h.b16 %v141
  %v842 = vunpack.c.l.b16 %v142
  %v843 = vunpack.c.h.b16 %v142
  %v844 = vunpack.c.l.b16 %v143
  %v845 = vunpack.c.h.b16 %v143
  %v846 = vunpack.c.l.b16 %v144
  %v847 = vunpack.c.h.b16 %v144
  %v848 = vunpack.c.l.b16 %v145
  %v849 = vunpack.c.h.b16 %v145
  %v850 = vunpack.c.l.b16 %v146
  %v851 = vunpack.c.h.b16 %v146
  %v852 = vunpack.c.l.b16 %v147
  %v853 = vunpack.c.h.b16 %v147
  %v854 = vunpack.c.l.b16 %v148
  %v855 = vunpack.c.h.b16 %v148
  %v856 = vunpack.c.l.b16 %v149
  %v857 = vunpack.c.h.b16 %v149
  %v858 = vunpack.c.l.b16 %v150
  %v859 = vunpack.c.h.b16 %v150
  %v860 = vunpack.c.l.b16 %v151
  %v861 = vunpack.c.h.b16 %v151
  %v862 = vunpack.c.l.b16 %v152
  %v863 = vunpack.c.h.b16 %v152
  %v864 = vunpack.c.l.b16 %v153
  %v865 = vunpack.c.h.b16 %v153
  %v866 = vunpack.c.l.b16 %v154
  %v867 = vunpack.c.h.b16 %v154
  %v868 = vunpack.c.l.b16 %v155
  %v869 = vunpack.c.h.b16 %v155
  %v870 = vunpack.c.l.b16 %v156
  %v871 = vunpack.c.h.b16 %v156
  %v872 = vunpack.c.l.b16 %v157
  %v873 = vunpack.c.h.b16 %v157
  %v874 = vunpack.c.l.b16 %v158
  %v875 = vunpack.c.h.b16 %v158
  %v876 = vunpack.c.l.b16 %v159
  %v877 = vunpack.c.h.b16 %v159
  %v878 = vunpack.c.l.b16 %v160
  %v879 = vunpack.c.h.b16 %v160
  %v880 = vunpack.c.l.b16 %v161
  %v881 = vunpack.c.h.b16 %v161
  %v882 = vunpack.c.l.b16 %v162
  %v883 = vunpack.c.h.b16 %v162
  %v884 = vunpack.c.l.b16 %v163
  %v885 = vunpack.c.h.b16 %v163
  %v886 = vunpack.c.l.b16 %v164
  %v887 = vunpack.c.h.b16 %v164
  %v888 = vunpack.c.l.b16 %v165
  %v889 = vunpack.c.h.b16 %v165
  %v890 = vunpack.c.l.b16 %v166
  %v891 = vunpack.c.h.b16 %v166
  %v892 = vunpack.c.l.b16 %v167
  %v893 = vunpack.c.h.b16 %v167
  %v894 = vunpack.c.l.b16 %v168
  %v895 = vunpack.c.h.b16 %v168
  %v896 = vunpack.c.l.b16 %v169
  %v897 = vunpack.c.h.b16 %v169
  %v898 = vunpack.c.l.b16 %v170
  %v899 = vunpack.c.h.b16 %v170
  %v900 = vunpack.c.l.b16 %v171
  %v901 = vunpack.c.h.b16 %v171
  %v902 = vunpack.c.l.b16 %v172
  %v903 = vunpack.c.h.b16 %v172
  %v904 = vunpack.c.l.b16 %v173
  %v905 = vunpack.c.h.b16 %v173
  %v906 = vunpack.c.l.b16 %v174
  %v907 = vunpack.c.h.b16 %v174
  %v908 = vunpack.c.l.b16 %v175
  %v909 = vunpack.c.h.b16 %v175
  %v910 = vunpack.c.l.b16 %v176
  %v911 = vunpack.c.h.b16 %v176
  %v912 = vunpack.c.l.b16 %v177
  %v913 = vunpack.c.h.b16 %v177
  %v914 = vunpack.c.l.b16 %v178
  %v915 = vunpack.c.h.b16 %v178
  %v916 = vunpack.c.l.b16 %v179
  %v917 = vunpack.c.h.b16 %v179
  %v918 = vunpack.c.l.b16 %v180
  %v919 = vunpack.c.h.b16 %v180
  %v920 = vunpack.c.l.b16 %v181
  %v921 = vunpack.c.h.b16 %v181
  %v922 = vunpack.c.l.b16 %v182
  %v923 = vunpack.c.h.b16 %v182
  %v924 = vunpack.c.l.b16 %v183
  %v925 = vunpack.c.h.b16 %v183
  %v926 = vunpack.c.l.b16 %v184
  %v927 = vunpack.c.h.b16 %v184
  %v928 = vunpack.c.l.b16 %v185
  %v929 = vunpack.c.h.b16 %v185
  %v930 = vunpack.c.l.b16 %v186
  %v931 = vunpack.c.h.b16 %v186
  %v932 = vunpack.c.l.b16 %v187
  %v933 = vunpack.c.h.b16 %v187
  %v934 = vunpack.c.l.b16 %v188
  %v935 = vunpack.c.h.b16 %v188
  %v936 = vunpack.c.l.b16 %v189
  %v937 = vunpack.c.h.b16 %v189
  %v938 = vunpack.c.l.b16 %v190
  %v939 = vunpack.c.h.b16 %v190
  %v940 = vunpack.c.l.b16 %v191
  %v941 = vunpack.c.h.b16 %v191
  %v942 = vunpack.c.l.b16 %v192
  %v943 = vunpack.c.h.b16 %v192
  %v944 = vunpack.c.l.b16 %v193
  %v945 = vunpack.c.h.b16 %v193
  %v946 = vunpack.c.l.b16 %v194
  %v947 = vunpack.c.h.b16 %v194
  %v948 = vunpack.c.l.b16 %v195
  %v949 = vunpack.c.h.b16 %v195
  %v950 = vunpack.c.l.b16 %v196
  %v951 = vunpack.c.h.b16 %v196
  %v952 = vunpack.c.l.b16 %v197
  %v953 = vunpack.c.h.b16 %v197
  %v954 = vunpack.c.l.b16 %v198
  %v955 = vunpack.c.h.b16 %v198
  %v956 = vunpack.c.l.b16 %v199
  %v957 = vunpack.c.h.b16 %v199
  %v958 = vunpack.c.l.b16 %v200
  %v959 = vunpack.c.h.b16 %v200
  %v960 = vunpack.c.l.b16 %v201
  %v961 = vunpack.c.h.b16 %v201
  %v962 = vunpack.c.l.b16 %v202
  %v963 = vunpack.c.h.b16 %v202
  %v964 = vunpack.c.l.b16 %v203
  %v965 = vunpack.c.h.b16 %v203
  %v966 = vunpack.c.l.b16 %v204
  %v967 = vunpack.c.h.b16 %v204
  %v968 = vunpack.c.l.b16 %v205
  %v969 = vunpack.c.h.b16 %v205
  %v970 = vunpack.c.l.b16 %v206
  %v971 = vunpack.c.h.b16 %v206
  %v972 = vunpack.c.l.b16 %v207
  %v973 = vunpack.c.h.b16 %v207
  %v974 = vunpack.c.l.b16 %v208
  %v975 = vunpack.c.h.b16 %v208
  %v976 = vunpack.c.l.b16 %v209
  %v977 = vunpack.c.h.b16 %v209
  %v978 = vunpack.c.l.b16 %v210
  %v979 = vunpack.c.h.b16 %v210
  %v980 = vunpack.c.l.b16 %v211
  %v981 = vunpack.c.h.b16 %v211
  %v982 = vunpack.c.l.b16 %v212
  %v983 = vunpack.c.h.b16 %v212
  %v984 = vunpack.c.l.b16 %v213
  %v985 = vunpack.c.h.b16 %v213
  %v986 = vunpack.c.l.b16 %v214
  %v987 = vunpack.c.h.b16 %v214
  %v988 = vunpack.c.l.b16 %v215
  %v989 = vunpack.c.h.b16 %v215
  %v990 = vunpack.c.l.b16 %v216
  %v991 = vunpack.c.h.b16 %v216
  %v992 = vunpack.c.l.b16 %v217
  %v993 = vunpack.c.h.b16 %v217
  %v994 = vunpack.c.l.b16 %v218
  %v995 = vunpack.c.h.b16 %v218
  %v996 = vunpack.c.l.b16 %v219
  %v997 = vunpack.c.h.b16 %v219
  %v998 = vunpack.c.l.b16 %v220
  %v999 = vunpack.c.h.b16 %v220
  %v1000 = vunpack.c.l.b16 %v221
  %v1001 = vunpack.c.h.b16 %v221
  %v1002 = vunpack.c.l.b16 %v222
  %v1003 = vunpack.c.h.b16 %v222
  %v1004 = vunpack.c.l.b16 %v223
  %v1005 = vunpack.c.h.b16 %v223
  %v1006 = vunpack.c.l.b16 %v224
  %v1007 = vunpack.c.h.b16 %v224
  %v1008 = vunpack.c.l.b16 %v225
  %v1009 = vunpack.c.h.b16 %v225
  %v1010 = vunpack.c.l.b16 %v226
  %v1011 = vunpack.c.h.b16 %v226
  %v1012 = vunpack.c.l.b16 %v227
  %v1013 = vunpack.c.h.b16 %v227
  %v1014 = vunpack.c.l.b16 %v228
  %v1015 = vunpack.c.h.b16 %v228
  %v1016 = vunpack.c.l.b16 %v229
  %v1017 = vunpack.c.h.b16 %v229
  %v1018 = vunpack.c.l.b16 %v230
  %v1019 = vunpack.c.h.b16 %v230
  %v1020 = vunpack.c.l.b16 %v231
  %v1021 = vunpack.c.h.b16 %v231
  %v1022 = vunpack.c.l.b16 %v232
  %v1023 = vunpack.c.h.b16 %v232
  %v1024 = vunpack.c.l.b16 %v233
  %v1025 = vunpack.c.h.b16 %v233
  %v1026 = vunpack.c.l.b16 %v234
  %v1027 = vunpack.c.h.b16 %v234
  %v1028 = vunpack.c.l.b16 %v235
  %v1029 = vunpack.c.h.b16 %v235
  %v1030 = vunpack.c.l.b16 %v236
  %v1031 = vunpack.c.h.b16 %v236
  %v1032 = vunpack.c.l.b16 %v237
  %v1033 = vunpack.c.h.b16 %v237
  %v1034 = vunpack.c.l.b16 %v238
  %v1035 = vunpack.c.h.b16 %v238
  %v1036 = vunpack.c.l.b16 %v239
  %v1037 = vunpack.c.h.b16 %v239
  %v1038 = vunpack.c.l.b16 %v240
  %v1039 = vunpack.c.h.b16 %v240
  %v1040 = vunpack.c.l.b16 %v241
  %v1041 = vunpack.c.h.b16 %v241
  %v1042 = vunpack.c.l.b16 %v242
  %v1043 = vunpack.c.h.b16 %v242
  %v1044 = vunpack.c.l.b16 %v243
  %v1045 = vunpack.c.h.b16 %v243
  %v1046 = vunpack.c.l.b16 %v244
  %v1047 = vunpack.c.h.b16 %v244
  %v1048 = vunpack.c.l.b16 %v245
  %v1049 = vunpack.c.h.b16 %v245
  %v1050 = vunpack.c.l.b16 %v246
  %v1051 = vunpack.c.h.b16 %v246
  %v1052 = vunpack.c.l.b16 %v247
  %v1053 = vunpack.c.h.b16 %v247
  %v1054 = vunpack.c.l.b16 %v248
  %v1055 = vunpack.c.h.b16 %v248
  %v1056 = vunpack.c.l.b16 %v249
  %v1057 = vunpack.c.h.b16 %v249
  %v1058 = vunpack.c.l.b16 %v250
  %v1059 = vunpack.c.h.b16 %v250
  %v1060 = vunpack.c.l.b16 %v251
  %v1061 = vunpack.c.h.b16 %v251
  %v1062 = vunpack.c.l.b16 %v252
  %v1063 = vunpack.c.h.b16 %v252
  %v1064 = vunpack.c.l.b16 %v253
  %v1065 = vunpack.c.h.b16 %v253
  %v1066 = vunpack.c.l.b16 %v254
  %v1067 = vunpack.c.h.b16 %v254
  %v1068 = vunpack.c.l.b16 %v255
  %v1069 = vunpack.c.h.b16 %v255
  %v1070 = vunpack.c.l.b16 %v256
  %v1071 = vunpack.c.h.b16 %v256
  %v1072 = vunpack.c.l.b16 %v257
  %v1073 = vunpack.c.h.b16 %v257
  %v1074 = vunpack.c.l.b16 %v258
  %v1075 = vunpack.c.h.b16 %v258
  %v1076 = vunpack.c.l.b16 %v259
  %v1077 = vunpack.c.h.b16 %v259
  %v1078 = vunpack.c.l.b16 %v260
  %v1079 = vunpack.c.h.b16 %v260
  %v1080 = vunpack.c.l.b16 %v261
  %v1081 = vunpack.c.h.b16 %v261
  %v1082 = vunpack.c.l.b16 %v262
  %v1083 = vunpack.c.h.b16 %v262
  %v1084 = vunpack.c.l.b16 %v263
  %v1085 = vunpack.c.h.b16 %v263
  %v1086 = vunpack.c.l.b16 %v264
  %v1087 = vunpack.c.h.b16 %v264
  %v1088 = vunpack.c.l.b16 %v265
  %v1089 = vunpack.c.h.b16 %v265
  %v1090 = vunpack.c.l.b16 %v266
  %v1091 = vunpack.c.h.b16 %v266
  %v1092 = vunpack.c.l.b16 %v267
  %v1093 = vunpack.c.h.b16 %v267
  %v1094 = vunpack.c.l.b16 %v268
  %v1095 = vunpack.c.h.b16 %v268
  %v1096 = vunpack.c.l.b16 %v269
  %v1097 = vunpack.c.h.b16 %v269
  %v1098 = vunpack.c.l.b16 %v270
  %v1099 = vunpack.c.h.b16 %v270
  %v1100 = vunpack.c.l.b16 %v271
  %v1101 = vunpack.c.h.b16 %v271
  %v1102 = vunpack.c.l.b16 %v272
  %v1103 = vunpack.c.h.b16 %v272
  %v1104 = vunpack.c.l.b16 %v273
  %v1105 = vunpack.c.h.b16 %v273
  %v1106 = vunpack.c.l.b16 %v274
  %v1107 = vunpack.c.h.b16 %v274
  %v1108 = vunpack.c.l.b16 %v275
  %v1109 = vunpack.c.h.b16 %v275
  %v1110 = vunpack.c.l.b16 %v276
  %v1111 = vunpack.c.h.b16 %v276
  %v1112 = vunpack.c.l.b16 %v277
  %v1113 = vunpack.c.h.b16 %v277
  %v1114 = vpack.c.b16 %v604, %v602
  %v1115 = vpack.c.b16 %v605, %v603
  %v1116 = vpack.c.b16 %v608, %v606
  %v1117 = vpack.c.b16 %v609, %v607
  %v1118 = vpack.c.b16 %v612, %v610
  %v1119 = vpack.c.b16 %v613, %v611
  %v1120 = vpack.c.b16 %v616, %v614
  %v1121 = vpack.c.b16 %v617, %v615
  %v1122 = vpack.c.b16 %v620, %v618
  %v1123 = vpack.c.b16 %v621, %v619
  %v1124 = vpack.c.b16 %v624, %v622
  %v1125 = vpack.c.b16 %v625, %v623
  %v1126 = vpack.c.b16 %v628, %v626
  %v1127 = vpack.c.b16 %v629, %v627
  %v1128 = vpack.c.b16 %v632, %v630
  %v1129 = vpack.c.b16 %v633, %v631
  %v1130 = vpack.c.b16 %v636, %v634
  %v1131 = vpack.c.b16 %v637, %v635
  %v1132 = vpack.c.b16 %v640, %v638
  %v1133 = vpack.c.b16 %v641, %v639
  %v1134 = vpack.c.b16 %v644, %v642
  %v1135 = vpack.c.b16 %v645, %v643
  %v1136 = vpack.c.b16 %v648, %v646
  %v1137 = vpack.c.b16 %v649, %v647
  %v1138 = vpack.c.b16 %v652, %v650
  %v1139 = vpack.c.b16 %v653, %v651
  %v1140 = vpack.c.b16 %v656, %v654
  %v1141 = vpack.c.b16 %v657, %v655
  %v1142 = vpack.c.b16 %v660, %v658
  %v1143 = vpack.c.b16 %v661, %v659
  %v1144 = vpack.c.b16 %v664, %v662
  %v1145 = vpack.c.b16 %v665, %v663
  %v1146 = vpack.c.b16 %v668, %v666
  %v1147 = vpack.c.b16 %v669, %v667
  %v1148 = vpack.c.b16 %v672, %v670
  %v1149 = vpack.c.b16 %v673, %v671
  %v1150 = vpack.c.b16 %v676, %v674
  %v1151 = vpack.c.b16 %v677, %v675
  %v1152 = vpack.c.b16 %v680, %v678
  %v1153 = vpack.c.b16 %v681, %v679
  %v1154 = vpack.c.b16 %v684, %v682
  %v1155 = vpack.c.b16 %v685, %v683
  %v1156 = vpack.c.b16 %v688, %v686
  %v1157 = vpack.c.b16 %v689, %v687
  %v1158 = vpack.c.b16 %v692, %v690
  %v1159 = vpack.c.b16 %v693, %v691
  %v1160 = vpack.c.b16 %v696, %v694
  %v1161 = vpack.c.b16 %v697, %v695
  %v1162 = vpack.c.b16 %v700, %v698
  %v1163 = vpack.c.b16 %v701, %v699
  %v1164 = vpack.c.b16 %v704, %v702
  %v1165 = vpack.c.b16 %v705, %v703
  %v1166 = vpack.c.b16 %v708, %v706
  %v1167 = vpack.c.b16 %v709, %v707
  %v1168 = vpack.c.b16 %v712, %v710
  %v1169 = vpack.c.b16 %v713, %v711
  %v1170 = vpack.c.b16 %v716, %v714
  %v1171 = vpack.c.b16 %v717, %v715
  %v1172 = vpack.c.b16 %v720, %v718
  %v1173 = vpack.c.b16 %v721, %v719
  %v1174 = vpack.c.b16 %v724, %v722
  %v1175 = vpack.c.b16 %v725, %v723
  %v1176 = vpack.c.b16 %v728, %v726
  %v1177 = vpack.c.b16 %v729, %v727
  %v1178 = vpack.c.b16 %v732, %v730
  %v1179 = vpack.c.b16 %v733, %v731
  %v1180 = vpack.c.b16 %v736, %v734
  %v1181 = vpack.c.b16 %v737, %v735
  %v1182 = vpack.c.b16 %v740, %v738
  %v1183 = vpack.c.b16 %v741, %v739
  %v1184 = vpack.c.b16 %v744, %v742
  %v1185 = vpack.c.b16 %v745, %v743
  %v1186 = vpack.c.b16 %v748, %v746
  %v1187 = vpack.c.b16 %v749, %v747
  %v1188 = vpack.c.b16 %v752, %v750
  %v1189 = vpack.c.b16 %v753, %v751
  %v1190 = vpack.c.b16 %v756, %v754
  %v1191 = vpack.c.b16 %v757, %v755
  %v1192 = vpack.c.b16 %v760, %v758
  %v1193 = vpack.c.b16 %v761, %v759
  %v1194 = vpack.c.b16 %v764, %v762
  %v1195 = vpack.c.b16 %v765, %v763
  %v1196 = vpack.c.b16 %v768, %v766
  %v1197 = vpack.c.b16 %v769, %v767
  %v1198 = vpack.c.b16 %v772, %v770
  %v1199 = vpack.c.b16 %v773, %v771
  %v1200 = vpack.c.b16 %v776, %v774
  %v1201 = vpack.c.b16 %v777, %v775
  %v1202 = vpack.c.b16 %v780, %v778
  %v1203 = vpack.c.b16 %v781, %v779
  %v1204 = vpack.c.b16 %v784, %v782
  %v1205 = vpack.c.b16 %v785, %v783
  %v1206 = vpack.c.b16 %v788, %v786
  %v1207 = vpack.c.b16 %v789, %v787
  %v1208 = vpack.c.b16 %v792, %v790
  %v1209 = vpack.c.b16 %v793, %v791
  %v1210 = vpack.c.b16 %v796, %v794
  %v1211 = vpack.c.b16 %v797, %v795
  %v1212 = vpack.c.b16 %v800, %v798
  %v1213 = vpack.c.b16 %v801, %v799
  %v1214 = vpack.c.b16 %v804, %v802
  %v1215 = vpack.c.b16 %v805, %v803
  %v1216 = vpack.c.b16 %v808, %v806
  %v1217 = vpack.c.b16 %v809, %v807
  %v1218 = vpack.c.b16 %v812, %v810
  %v1219 = vpack.c.b16 %v813, %v811
  %v1220 = vpack.c.b16 %v816, %v814
  %v1221 = vpack.c.b16 %v817, %v815
  %v1222 = vpack.c.b16 %v820, %v818
  %v1223 = vpack.c.b16 %v821, %v819
  %v1224 = vpack.c.b16 %v824, %v822
  %v1225 = vpack.c.b16 %v825, %v823
  %v1226 = vpack.c.b16 %v828, %v826
  %v1227 = vpack.c.b16 %v829, %v827
  %v1228 = vpack.c.b16 %v832, %v830
  %v1229 = vpack.c.b16 %v833, %v831
  %v1230 = vpack.c.b16 %v836, %v834
  %v1231 = vpack.c.b16 %v837, %v835
  %v1232 = vpack.c.b16 %v840, %v838
  %v1233 = vpack.c.b16 %v841, %v839
  %v1234 = vpack.c.b16 %v844, %v842
  %v1235 = vpack.c.b16 %v845, %v843
  %v1236 = vpack.c.b16 %v848, %v846
  %v1237 = vpack.c.b16 %v849, %v847
  %v1238 = vpack.c.b16 %v852, %v850
  %v1239 = vpack.c.b16 %v853, %v851
  %v1240 = vpack.c.b16 %v856, %v854
  %v1241 = vpack.c.b16 %v857, %v855
  %v1242 = vpack.c.b16 %v860, %v858
  %v1243 = vpack.c.b16 %v861, %v859
  %v1244 = vpack.c.b16 %v864, %v862
  %v1245 = vpack.c.b16 %v865, %v863
  %v1246 = vpack.c.b16 %v868, %v866
  %v1247 = vpack.c.b16 %v869, %v867
  %v1248 = vpack.c.b16 %v872, %v870
  %v1249 = vpack.c.b16 %v873, %v871
  %v1250 = vpack.c.b16 %v876, %v874
  %v1251 = vpack.c.b16 %v877, %v875
  %v1252 = vpack.c.b16 %v880, %v878
  %v1253 = vpack.c.b16 %v881, %v879
  %v1254 = vpack.c.b16 %v884, %v882
  %v1255 = vpack.c.b16 %v885, %v883
  %v1256 = vpack.c.b16 %v888, %v886
  %v1257 = vpack.c.b16 %v889, %v887
  %v1258 = vpack.c.b16 %v892, %v890
  %v1259 = vpack.c.b16 %v893, %v891
  %v1260 = vpack.c.b16 %v896, %v894
  %v1261 = vpack.c.b16 %v897, %v895
  %v1262 = vpack.c.b16 %v900, %v898
  %v1263 = vpack.c.b16 %v901, %v899
  %v1264 = vpack.c.b16 %v904, %v902
  %v1265 = vpack.c.b16 %v905, %v903
  %v1266 = vpack.c.b16 %v908, %v906
  %v1267 = vpack.c.b16 %v909, %v907
  %v1268 = vpack.c.b16 %v912, %v910
  %v1269 = vpack.c.b16 %v913, %v911
  %v1270 = vpack.c.b16 %v916, %v914
  %v1271 = vpack.c.b16 %v917, %v915
  %v1272 = vpack.c.b16 %v920, %v918
  %v1273 = vpack.c.b16 %v921, %v919
  %v1274 = vpack.c.b16 %v924, %v922
  %v1275 = vpack.c.b16 %v925, %v923
  %v1276 = vpack.c.b16 %v928, %v926
  %v1277 = vpack.c.b16 %v929, %v927
  %v1278 = vpack.c.b16 %v932, %v930
  %v1279 = vpack.c.b16 %v933, %v931
  %v1280 = vpack.c.b16 %v936, %v934
  %v1281 = vpack.c.b16 %v937, %v935
  %v1282 = vpack.c.b16 %v940, %v938
  %v1283 = vpack.c.b16 %v941, %v939
  %v1284 = vpack.c.b16 %v944, %v942
  %v1285 = vpack.c.b16 %v945, %v943
  %v1286 = vpack.c.b16 %v948, %v946
  %v1287 = vpack.c.b16 %v949, %v947
  %v1288 = vpack.c.b16 %v952, %v950
  %v1289 = vpack.c.b16 %v953, %v951
  %v1290 = vpack.c.b16 %v956, %v954
  %v1291 = vpack.c.b16 %v957, %v955
  %v1292 = vpack.c.b16 %v960, %v958
  %v1293 = vpack.c.b16 %v961, %v959
  %v1294 = vpack.c.b16 %v964, %v962
  %v1295 = vpack.c.b16 %v965, %v963
  %v1296 = vpack.c.b16 %v968, %v966
  %v1297 = vpack.c.b16 %v969, %v967
  %v1298 = vpack.c.b16 %v972, %v970
  %v1299 = vpack.c.b16 %v973, %v971
  %v1300 = vpack.c.b16 %v976, %v974
  %v1301 = vpack.c.b16 %v977, %v975
  %v1302 = vpack.c.b16 %v980, %v978
  %v1303 = vpack.c.b16 %v981, %v979
  %v1304 = vpack.c.b16 %v984, %v982
  %v1305 = vpack.c.b16 %v985, %v983
  %v1306 = vpack.c.b16 %v988, %v986
  %v1307 = vpack.c.b16 %v989, %v987
  %v1308 = vpack.c.b16 %v992, %v990
  %v1309 = vpack.c.b16 %v993, %v991
  %v1310 = vpack.c.b16 %v996, %v994
  %v1311 = vpack.c.b16 %v997, %v995
  %v1312 = vpack.c.b16 %v1000, %v998
  %v1313 = vpack.c.b16 %v1001, %v999
  %v1314 = vpack.c.b16 %v1004, %v1002
  %v1315 = vpack.c.b16 %v1005, %v1003
  %v1316 = vpack.c.b16 %v1008, %v1006
  %v1317 = vpack.c.b16 %v1009, %v1007
  %v1318 = vpack.c.b16 %v1012, %v1010
  %v1319 = vpack.c.b16 %v1013, %v1011
  %v1320 = vpack.c.b16 %v1016, %v1014
  %v1321 = vpack.c.b16 %v1017, %v1015
  %v1322 = vpack.c.b16 %v1020, %v1018
  %v1323 = vpack.c.b16 %v1021, %v1019
  %v1324 = vpack.c.b16 %v1024, %v1022
  %v1325 = vpack.c.b16 %v1025, %v1023
  %v1326 = vpack.c.b16 %v1028, %v1026
  %v1327 = vpack.c.b16 %v1029, %v1027
  %v1328 = vpack.c.b16 %v1032, %v1030
  %v1329 = vpack.c.b16 %v1033, %v1031
  %v1330 = vpack.c.b16 %v1036, %v1034
  %v1331 = vpack.c.b16 %v1037, %v1035
  %v1332 = vpack.c.b16 %v1040, %v1038
  %v1333 = vpack.c.b16 %v1041, %v1039
  %v1334 = vpack.c.b16 %v1044, %v1042
  %v1335 = vpack.c.b16 %v1045, %v1043
  %v1336 = vpack.c.b16 %v1048, %v1046
  %v1337 = vpack.c.b16 %v1049, %v1047
  %v1338 = vpack.c.b16 %v1052, %v1050
  %v1339 = vpack.c.b16 %v1053, %v1051
  %v1340 = vpack.c.b16 %v1056, %v1054
  %v1341 = vpack.c.b16 %v1057, %v1055
  %v1342 = vpack.c.b16 %v1060, %v1058
  %v1343 = vpack.c.b16 %v1061, %v1059
  %v1344 = vpack.c.b16 %v1064, %v1062
  %v1345 = vpack.c.b16 %v1065, %v1063
  %v1346 = vpack.c.b16 %v1068, %v1066
  %v1347 = vpack.c.b16 %v1069, %v1067
  %v1348 = vpack.c.b16 %v1072, %v1070
  %v1349 = vpack.c.b16 %v1073, %v1071
  %v1350 = vpack.c.b16 %v1076, %v1074
  %v1351 = vpack.c.b16 %v1077, %v1075
  %v1352 = vpack.c.b16 %v1080, %v1078
  %v1353 = vpack.c.b16 %v1081, %v1079
  %v1354 = vpack.c.b16 %v1084, %v1082
  %v1355 = vpack.c.b16 %v1085, %v1083
  %v1356 = vpack.c.b16 %v1088, %v1086
  %v1357 = vpack.c.b16 %v1089, %v1087
  %v1358 = vpack.c.b16 %v1092, %v1090
  %v1359 = vpack.c.b16 %v1093, %v1091
  %v1360 = vpack.c.b16 %v1096, %v1094
  %v1361 = vpack.c.b16 %v1097, %v1095
  %v1362 = vpack.c.b16 %v1100, %v1098
  %v1363 = vpack.c.b16 %v1101, %v1099
  %v1364 = vpack.c.b16 %v1104, %v1102
  %v1365 = vpack.c.b16 %v1105, %v1103
  %v1366 = vpack.c.b16 %v1108, %v1106
  %v1367 = vpack.c.b16 %v1109, %v1107
  %v1368 = vpack.c.b16 %v1112, %v1110
  %v1369 = vpack.c.b16 %v1113, %v1111
  %1626 = vmatprep.subr.bf16.mxu0 %v1115
  %1627 = vmatpush1.bf16.msra.mxu0 %v1114
  %1628 = vmatprep.subr.bf16.mxu0 %v1117
  %1629 = vmatpush1.bf16.msra.mxu0 %v1116
  %1630 = vmatprep.subr.bf16.mxu0 %v1119
  %1631 = vmatpush1.bf16.msra.mxu0 %v1118
  %1632 = vmatprep.subr.bf16.mxu0 %v1121
  %1633 = vmatpush1.bf16.msra.mxu0 %v1120
  %1634 = vmatprep.subr.bf16.mxu0 %v1123
  %1635 = vmatpush1.bf16.msra.mxu0 %v1122
  %1636 = vmatprep.subr.bf16.mxu0 %v1125
  %1637 = vmatpush1.bf16.msra.mxu0 %v1124
  %1638 = vmatprep.subr.bf16.mxu0 %v1127
  %1639 = vmatpush1.bf16.msra.mxu0 %v1126
  %1640 = vmatprep.subr.bf16.mxu0 %v1129
  %1641 = vmatpush1.bf16.msra.mxu0 %v1128
  %1642 = vmatprep.subr.bf16.mxu0 %v1131
  %1643 = vmatpush1.bf16.msra.mxu0 %v1130
  %1644 = vmatprep.subr.bf16.mxu0 %v1133
  %1645 = vmatpush1.bf16.msra.mxu0 %v1132
  %1646 = vmatprep.subr.bf16.mxu0 %v1135
  %1647 = vmatpush1.bf16.msra.mxu0 %v1134
  %1648 = vmatprep.subr.bf16.mxu0 %v1137
  %1649 = vmatpush1.bf16.msra.mxu0 %v1136
  %1650 = vmatprep.subr.bf16.mxu0 %v1139
  %1651 = vmatpush1.bf16.msra.mxu0 %v1138
  %1652 = vmatprep.subr.bf16.mxu0 %v1141
  %1653 = vmatpush1.bf16.msra.mxu0 %v1140
  %1654 = vmatprep.subr.bf16.mxu0 %v1143
  %1655 = vmatpush1.bf16.msra.mxu0 %v1142
  %1656 = vmatprep.subr.bf16.mxu0 %v1145
  %1657 = vmatpush1.bf16.msra.mxu0 %v1144
  %1658 = vmatprep.mubr.bf16.mxu0 %v315
  %1659 = vmatmul.mubr.bf16.gmra.mrb[0].mxu0 %v314
  %v1660 = vpop.f32.mrb[0].mxu0
  %v1661 = vadd.f32 %v283, %v1660
  %v1662 = vpop.f32.mrb[0].mxu0
  %v1663 = vadd.f32 %v287, %v1662
  %v1664 = vpop.f32.mrb[0].mxu0
  %v1665 = vpop.f32.mrb[0].mxu0
  %1666 = vdwg.mxu0
  %1667 = vmatprep.subr.bf16.mxu0 %v1147
  %1668 = vmatpush1.bf16.msra.mxu0 %v1146
  %1669 = vmatprep.subr.bf16.mxu0 %v1149
  %1670 = vmatpush1.bf16.msra.mxu0 %v1148
  %1671 = vmatprep.subr.bf16.mxu0 %v1151
  %1672 = vmatpush1.bf16.msra.mxu0 %v1150
  %1673 = vmatprep.subr.bf16.mxu0 %v1153
  %1674 = vmatpush1.bf16.msra.mxu0 %v1152
  %1675 = vmatprep.subr.bf16.mxu0 %v1155
  %1676 = vmatpush1.bf16.msra.mxu0 %v1154
  %1677 = vmatprep.subr.bf16.mxu0 %v1157
  %1678 = vmatpush1.bf16.msra.mxu0 %v1156
  %1679 = vmatprep.subr.bf16.mxu0 %v1159
  %1680 = vmatpush1.bf16.msra.mxu0 %v1158
  %1681 = vmatprep.subr.bf16.mxu0 %v1161
  %1682 = vmatpush1.bf16.msra.mxu0 %v1160
  %1683 = vmatprep.subr.bf16.mxu0 %v1163
  %1684 = vmatpush1.bf16.msra.mxu0 %v1162
  %1685 = vmatprep.subr.bf16.mxu0 %v1165
  %1686 = vmatpush1.bf16.msra.mxu0 %v1164
  %1687 = vmatprep.subr.bf16.mxu0 %v1167
  %1688 = vmatpush1.bf16.msra.mxu0 %v1166
  %1689 = vmatprep.subr.bf16.mxu0 %v1169
  %1690 = vmatpush1.bf16.msra.mxu0 %v1168
  %1691 = vmatprep.subr.bf16.mxu0 %v1171
  %1692 = vmatpush1.bf16.msra.mxu0 %v1170
  %1693 = vmatprep.subr.bf16.mxu0 %v1173
  %1694 = vmatpush1.bf16.msra.mxu0 %v1172
  %1695 = vmatprep.subr.bf16.mxu0 %v1175
  %1696 = vmatpush1.bf16.msra.mxu0 %v1174
  %1697 = vmatprep.subr.bf16.mxu0 %v1177
  %1698 = vmatpush1.bf16.msra.mxu0 %v1176
  %1699 = vmatprep.mubr.bf16.mxu0 %v317
  %1700 = vmatmul.mubr.bf16.gmra.mrb[0].mxu0 %v316
  %v1701 = vpop.f32.mrb[0].mxu0
  %v1702 = vadd.f32 %v1661, %v1701
  %v1703 = vpop.f32.mrb[0].mxu0
  %v1704 = vadd.f32 %v1663, %v1703
  %v1705 = vpop.f32.mrb[0].mxu0
  %v1706 = vpop.f32.mrb[0].mxu0
  %1707 = vdwg.mxu0
  %1708 = vmatprep.subr.bf16.mxu0 %v1179
  %1709 = vmatpush1.bf16.msra.mxu0 %v1178
  %1710 = vmatprep.subr.bf16.mxu0 %v1181
  %1711 = vmatpush1.bf16.msra.mxu0 %v1180
  %1712 = vmatprep.subr.bf16.mxu0 %v1183
  %1713 = vmatpush1.bf16.msra.mxu0 %v1182
  %1714 = vmatprep.subr.bf16.mxu0 %v1185
  %1715 = vmatpush1.bf16.msra.mxu0 %v1184
  %1716 = vmatprep.subr.bf16.mxu0 %v1187
  %1717 = vmatpush1.bf16.msra.mxu0 %v1186
  %1718 = vmatprep.subr.bf16.mxu0 %v1189
  %1719 = vmatpush1.bf16.msra.mxu0 %v1188
  %1720 = vmatprep.subr.bf16.mxu0 %v1191
  %1721 = vmatpush1.bf16.msra.mxu0 %v1190
  %1722 = vmatprep.subr.bf16.mxu0 %v1193
  %1723 = vmatpush1.bf16.msra.mxu0 %v1192
  %1724 = vmatprep.subr.bf16.mxu0 %v1195
  %1725 = vmatpush1.bf16.msra.mxu0 %v1194
  %1726 = vmatprep.subr.bf16.mxu0 %v1197
  %1727 = vmatpush1.bf16.msra.mxu0 %v1196
  %1728 = vmatprep.subr.bf16.mxu0 %v1199
  %1729 = vmatpush1.bf16.msra.mxu0 %v1198
  %1730 = vmatprep.subr.bf16.mxu0 %v1201
  %1731 = vmatpush1.bf16.msra.mxu0 %v1200
  %1732 = vmatprep.subr.bf16.mxu0 %v1203
  %1733 = vmatpush1.bf16.msra.mxu0 %v1202
  %1734 = vmatprep.subr.bf16.mxu0 %v1205
  %1735 = vmatpush1.bf16.msra.mxu0 %v1204
  %1736 = vmatprep.subr.bf16.mxu0 %v1207
  %1737 = vmatpush1.bf16.msra.mxu0 %v1206
  %1738 = vmatprep.subr.bf16.mxu0 %v1209
  %1739 = vmatpush1.bf16.msra.mxu0 %v1208
  %1740 = vmatprep.mubr.bf16.mxu0 %v319
  %1741 = vmatmul.mubr.bf16.gmra.mrb[0].mxu0 %v318
  %v1742 = vpop.f32.mrb[0].mxu0
  %v1743 = vadd.f32 %v1702, %v1742
  %v1744 = vpop.f32.mrb[0].mxu0
  %v1745 = vadd.f32 %v1704, %v1744
  %v1746 = vpop.f32.mrb[0].mxu0
  %v1747 = vpop.f32.mrb[0].mxu0
  %1748 = vdwg.mxu0
  %1749 = vmatprep.subr.bf16.mxu0 %v1211
  %1750 = vmatpush1.bf16.msra.mxu0 %v1210
  %1751 = vmatprep.subr.bf16.mxu0 %v1213
  %1752 = vmatpush1.bf16.msra.mxu0 %v1212
  %1753 = vmatprep.subr.bf16.mxu0 %v1215
  %1754 = vmatpush1.bf16.msra.mxu0 %v1214
  %1755 = vmatprep.subr.bf16.mxu0 %v1217
  %1756 = vmatpush1.bf16.msra.mxu0 %v1216
  %1757 = vmatprep.subr.bf16.mxu0 %v1219
  %1758 = vmatpush1.bf16.msra.mxu0 %v1218
  %1759 = vmatprep.subr.bf16.mxu0 %v1221
  %1760 = vmatpush1.bf16.msra.mxu0 %v1220
  %1761 = vmatprep.subr.bf16.mxu0 %v1223
  %1762 = vmatpush1.bf16.msra.mxu0 %v1222
  %1763 = vmatprep.subr.bf16.mxu0 %v1225
  %1764 = vmatpush1.bf16.msra.mxu0 %v1224
  %1765 = vmatprep.subr.bf16.mxu0 %v1227
  %1766 = vmatpush1.bf16.msra.mxu0 %v1226
  %1767 = vmatprep.subr.bf16.mxu0 %v1229
  %1768 = vmatpush1.bf16.msra.mxu0 %v1228
  %1769 = vmatprep.subr.bf16.mxu0 %v1231
  %1770 = vmatpush1.bf16.msra.mxu0 %v1230
  %1771 = vmatprep.subr.bf16.mxu0 %v1233
  %1772 = vmatpush1.bf16.msra.mxu0 %v1232
  %1773 = vmatprep.subr.bf16.mxu0 %v1235
  %1774 = vmatpush1.bf16.msra.mxu0 %v1234
  %1775 = vmatprep.subr.bf16.mxu0 %v1237
  %1776 = vmatpush1.bf16.msra.mxu0 %v1236
  %1777 = vmatprep.subr.bf16.mxu0 %v1239
  %1778 = vmatpush1.bf16.msra.mxu0 %v1238
  %1779 = vmatprep.subr.bf16.mxu0 %v1241
  %1780 = vmatpush1.bf16.msra.mxu0 %v1240
  %1781 = vmatprep.mubr.bf16.mxu0 %v321
  %1782 = vmatmul.mubr.bf16.gmra.mrb[0].mxu0 %v320
  %v1783 = vpop.f32.mrb[0].mxu0
  %v1784 = vadd.f32 %v1743, %v1783
  %v1785 = vpop.f32.mrb[0].mxu0
  %v1786 = vadd.f32 %v1745, %v1785
  %v1787 = vpop.f32.mrb[0].mxu0
  %v1788 = vpop.f32.mrb[0].mxu0
  %1789 = vdwg.mxu0
  %1790 = vmatprep.subr.bf16.mxu0 %v1243
  %1791 = vmatpush1.bf16.msra.mxu0 %v1242
  %1792 = vmatprep.subr.bf16.mxu0 %v1245
  %1793 = vmatpush1.bf16.msra.mxu0 %v1244
  %1794 = vmatprep.subr.bf16.mxu0 %v1247
  %1795 = vmatpush1.bf16.msra.mxu0 %v1246
  %1796 = vmatprep.subr.bf16.mxu0 %v1249
  %1797 = vmatpush1.bf16.msra.mxu0 %v1248
  %1798 = vmatprep.subr.bf16.mxu0 %v1251
  %1799 = vmatpush1.bf16.msra.mxu0 %v1250
  %1800 = vmatprep.subr.bf16.mxu0 %v1253
  %1801 = vmatpush1.bf16.msra.mxu0 %v1252
  %1802 = vmatprep.subr.bf16.mxu0 %v1255
  %1803 = vmatpush1.bf16.msra.mxu0 %v1254
  %1804 = vmatprep.subr.bf16.mxu0 %v1257
  %1805 = vmatpush1.bf16.msra.mxu0 %v1256
  %1806 = vmatprep.subr.bf16.mxu0 %v1259
  %1807 = vmatpush1.bf16.msra.mxu0 %v1258
  %1808 = vmatprep.subr.bf16.mxu0 %v1261
  %1809 = vmatpush1.bf16.msra.mxu0 %v1260
  %1810 = vmatprep.subr.bf16.mxu0 %v1263
  %1811 = vmatpush1.bf16.msra.mxu0 %v1262
  %1812 = vmatprep.subr.bf16.mxu0 %v1265
  %1813 = vmatpush1.bf16.msra.mxu0 %v1264
  %1814 = vmatprep.subr.bf16.mxu0 %v1267
  %1815 = vmatpush1.bf16.msra.mxu0 %v1266
  %1816 = vmatprep.subr.bf16.mxu0 %v1269
  %1817 = vmatpush1.bf16.msra.mxu0 %v1268
  %1818 = vmatprep.subr.bf16.mxu0 %v1271
  %1819 = vmatpush1.bf16.msra.mxu0 %v1270
  %1820 = vmatprep.subr.bf16.mxu0 %v1273
  %1821 = vmatpush1.bf16.msra.mxu0 %v1272
  %1822 = vmatprep.mubr.bf16.mxu0 %v323
  %1823 = vmatmul.mubr.bf16.gmra.mrb[0].mxu0 %v322
  %v1824 = vpop.f32.mrb[0].mxu0
  %v1825 = vadd.f32 %v1784, %v1824
  %v1826 = vpop.f32.mrb[0].mxu0
  %v1827 = vadd.f32 %v1786, %v1826
  %v1828 = vpop.f32.mrb[0].mxu0
  %v1829 = vpop.f32.mrb[0].mxu0
  %1830 = vdwg.mxu0
  %1831 = vmatprep.subr.bf16.mxu0 %v1275
  %1832 = vmatpush1.bf16.msra.mxu0 %v1274
  %1833 = vmatprep.subr.bf16.mxu0 %v1277
  %1834 = vmatpush1.bf16.msra.mxu0 %v1276
  %1835 = vmatprep.subr.bf16.mxu0 %v1279
  %1836 = vmatpush1.bf16.msra.mxu0 %v1278
  %1837 = vmatprep.subr.bf16.mxu0 %v1281
  %1838 = vmatpush1.bf16.msra.mxu0 %v1280
  %1839 = vmatprep.subr.bf16.mxu0 %v1283
  %1840 = vmatpush1.bf16.msra.mxu0 %v1282
  %1841 = vmatprep.subr.bf16.mxu0 %v1285
  %1842 = vmatpush1.bf16.msra.mxu0 %v1284
  %1843 = vmatprep.subr.bf16.mxu0 %v1287
  %1844 = vmatpush1.bf16.msra.mxu0 %v1286
  %1845 = vmatprep.subr.bf16.mxu0 %v1289
  %1846 = vmatpush1.bf16.msra.mxu0 %v1288
  %1847 = vmatprep.subr.bf16.mxu0 %v1291
  %1848 = vmatpush1.bf16.msra.mxu0 %v1290
  %1849 = vmatprep.subr.bf16.mxu0 %v1293
  %1850 = vmatpush1.bf16.msra.mxu0 %v1292
  %1851 = vmatprep.subr.bf16.mxu0 %v1295
  %1852 = vmatpush1.bf16.msra.mxu0 %v1294
  %1853 = vmatprep.subr.bf16.mxu0 %v1297
  %1854 = vmatpush1.bf16.msra.mxu0 %v1296
  %1855 = vmatprep.subr.bf16.mxu0 %v1299
  %1856 = vmatpush1.bf16.msra.mxu0 %v1298
  %1857 = vmatprep.subr.bf16.mxu0 %v1301
  %1858 = vmatpush1.bf16.msra.mxu0 %v1300
  %1859 = vmatprep.subr.bf16.mxu0 %v1303
  %1860 = vmatpush1.bf16.msra.mxu0 %v1302
  %1861 = vmatprep.subr.bf16.mxu0 %v1305
  %1862 = vmatpush1.bf16.msra.mxu0 %v1304
  %1863 = vmatprep.mubr.bf16.mxu0 %v325
  %1864 = vmatmul.mubr.bf16.gmra.mrb[0].mxu0 %v324
  %v1865 = vpop.f32.mrb[0].mxu0
  %v1866 = vadd.f32 %v1825, %v1865
  %v1867 = vpop.f32.mrb[0].mxu0
  %v1868 = vadd.f32 %v1827, %v1867
  %v1869 = vpop.f32.mrb[0].mxu0
  %v1870 = vpop.f32.mrb[0].mxu0
  %1871 = vdwg.mxu0
  %1872 = vmatprep.subr.bf16.mxu0 %v1307
  %1873 = vmatpush1.bf16.msra.mxu0 %v1306
  %1874 = vmatprep.subr.bf16.mxu0 %v1309
  %1875 = vmatpush1.bf16.msra.mxu0 %v1308
  %1876 = vmatprep.subr.bf16.mxu0 %v1311
  %1877 = vmatpush1.bf16.msra.mxu0 %v1310
  %1878 = vmatprep.subr.bf16.mxu0 %v1313
  %1879 = vmatpush1.bf16.msra.mxu0 %v1312
  %1880 = vmatprep.subr.bf16.mxu0 %v1315
  %1881 = vmatpush1.bf16.msra.mxu0 %v1314
  %1882 = vmatprep.subr.bf16.mxu0 %v1317
  %1883 = vmatpush1.bf16.msra.mxu0 %v1316
  %1884 = vmatprep.subr.bf16.mxu0 %v1319
  %1885 = vmatpush1.bf16.msra.mxu0 %v1318
  %1886 = vmatprep.subr.bf16.mxu0 %v1321
  %1887 = vmatpush1.bf16.msra.mxu0 %v1320
  %1888 = vmatprep.subr.bf16.mxu0 %v1323
  %1889 = vmatpush1.bf16.msra.mxu0 %v1322
  %1890 = vmatprep.subr.bf16.mxu0 %v1325
  %1891 = vmatpush1.bf16.msra.mxu0 %v1324
  %1892 = vmatprep.subr.bf16.mxu0 %v1327
  %1893 = vmatpush1.bf16.msra.mxu0 %v1326
  %1894 = vmatprep.subr.bf16.mxu0 %v1329
  %1895 = vmatpush1.bf16.msra.mxu0 %v1328
  %1896 = vmatprep.subr.bf16.mxu0 %v1331
  %1897 = vmatpush1.bf16.msra.mxu0 %v1330
  %1898 = vmatprep.subr.bf16.mxu0 %v1333
  %1899 = vmatpush1.bf16.msra.mxu0 %v1332
  %1900 = vmatprep.subr.bf16.mxu0 %v1335
  %1901 = vmatpush1.bf16.msra.mxu0 %v1334
  %1902 = vmatprep.subr.bf16.mxu0 %v1337
  %1903 = vmatpush1.bf16.msra.mxu0 %v1336
  %1904 = vmatprep.mubr.bf16.mxu0 %v327
  %1905 = vmatmul.mubr.bf16.gmra.mrb[0].mxu0 %v326
  %v1906 = vpop.f32.mrb[0].mxu0
  %v1907 = vadd.f32 %v1866, %v1906
  %v1908 = vpop.f32.mrb[0].mxu0
  %v1909 = vadd.f32 %v1868, %v1908
  %v1910 = vpop.f32.mrb[0].mxu0
  %v1911 = vpop.f32.mrb[0].mxu0
  %1912 = vdwg.mxu0
  %1913 = vmatprep.subr.bf16.mxu0 %v1339
  %1914 = vmatpush1.bf16.msra.mxu0 %v1338
  %1915 = vmatprep.subr.bf16.mxu0 %v1341
  %1916 = vmatpush1.bf16.msra.mxu0 %v1340
  %1917 = vmatprep.subr.bf16.mxu0 %v1343
  %1918 = vmatpush1.bf16.msra.mxu0 %v1342
  %1919 = vmatprep.subr.bf16.mxu0 %v1345
  %1920 = vmatpush1.bf16.msra.mxu0 %v1344
  %1921 = vmatprep.subr.bf16.mxu0 %v1347
  %1922 = vmatpush1.bf16.msra.mxu0 %v1346
  %1923 = vmatprep.subr.bf16.mxu0 %v1349
  %1924 = vmatpush1.bf16.msra.mxu0 %v1348
  %1925 = vmatprep.subr.bf16.mxu0 %v1351
  %1926 = vmatpush1.bf16.msra.mxu0 %v1350
  %1927 = vmatprep.subr.bf16.mxu0 %v1353
  %1928 = vmatpush1.bf16.msra.mxu0 %v1352
  %1929 = vmatprep.subr.bf16.mxu0 %v1355
  %1930 = vmatpush1.bf16.msra.mxu0 %v1354
  %1931 = vmatprep.subr.bf16.mxu0 %v1357
  %1932 = vmatpush1.bf16.msra.mxu0 %v1356
  %1933 = vmatprep.subr.bf16.mxu0 %v1359
  %1934 = vmatpush1.bf16.msra.mxu0 %v1358
  %1935 = vmatprep.subr.bf16.mxu0 %v1361
  %1936 = vmatpush1.bf16.msra.mxu0 %v1360
  %1937 = vmatprep.subr.bf16.mxu0 %v1363
  %1938 = vmatpush1.bf16.msra.mxu0 %v1362
  %1939 = vmatprep.subr.bf16.mxu0 %v1365
  %1940 = vmatpush1.bf16.msra.mxu0 %v1364
  %1941 = vmatprep.subr.bf16.mxu0 %v1367
  %1942 = vmatpush1.bf16.msra.mxu0 %v1366
  %1943 = vmatprep.subr.bf16.mxu0 %v1369
  %1944 = vmatpush1.bf16.msra.mxu0 %v1368
  %1945 = vmatprep.mubr.bf16.mxu0 %v329
  %1946 = vmatmul.mubr.bf16.gmra.mrb[0].mxu0 %v328
  %v1947 = vpop.f32.mrb[0].mxu0
  %v1948 = vadd.f32 %v1907, %v1947
  %v1949 = vpop.f32.mrb[0].mxu0
  %v1950 = vadd.f32 %v1909, %v1949
  %v1951 = vpop.f32.mrb[0].mxu0
  %v1952 = vpop.f32.mrb[0].mxu0
  %1953 = vdwg.mxu0
  %vm1954 = vcmp.gt.f32.partialorder %v1948, 0.0
  %vm1955 = vcmp.gt.f32.partialorder %v1950, 0.0
  %v1956 = vmul.f32 %v1948, 0.2
  %v1957 = vmul.f32 %v1950, 0.2
  %v1958 = vsel %vm1954, %v1948, %v1956
  %v1959 = vsel %vm1955, %v1950, %v1957
  %v1960 = vpack.c.bf16 %v1958, %v1958
  %v1961 = vpack.c.bf16 %v1959, %v1959
  %v1964 = vunpack.c.l.b16 %v1960
  %v1965 = vunpack.c.l.b16 %v1961
  %v1966 = vpack.c.b16 %v1965, %v1964
  %1968 = vst [vmem:[%s3] sm:$0xff] %v1966
  // Predicated region
  $region14: #{conv_deconv_vqvae_forward.12} parent=0 // pred_check
    _
  $region15: #{conv_deconv_vqvae_forward.12} parent=0 // pred_check_branch
    %1970 = sbr.rel (0) target = $region17
  $region16: #{conv_deconv_vqvae_forward.12} parent=0 // pred_region
    _
  $region17: #{conv_deconv_vqvae_forward.12} parent=0 // pred_fallthru
    _
  // Predicated region
  $region18: #{conv_deconv_vqvae_forward.12} parent=0 // pred_check
    _
  $region19: #{conv_deconv_vqvae_forward.12} parent=0 // pred_check_branch
    %1972 = sbr.rel (0) target = $region21
  $region20: #{conv_deconv_vqvae_forward.12} parent=0 // pred_region
    _
  $region21: #{conv_deconv_vqvae_forward.12} parent=0 // pred_fallthru
    _

// kernel: conv_deconv_vqvae_forward.15
$region0: #{conv_deconv_vqvae_forward.15}
  #allocation0 [shape = 'u32[]', space=smem, size = 0x4, offset = 0x4, fixed_abs, tag = 'smem constant byte address 0x4 - core index']
  #allocation1 [shape = 'u32[144,128]{1,0:T(1,128)}', space=vmem, size = 0x12000, scoped, tag = 'internal scratch']
  %s0 = inlined_call_operand.vmem [shape: bf16[32,1152], index: 0, kind: input, shape index: {}]
  %s1 = inlined_call_operand.vmem [shape: bf16[1152,256], index: 1, kind: input, shape index: {}]
  %s2 = inlined_call_operand.vmem [shape: f32[1,256], index: 2, kind: input, shape index: {}]
  %s3 = inlined_call_operand.vmem [shape: bf16[32,256], index: 3, kind: output, shape index: {}]
  %s4 = sld [smem:[#allocation0]]
  $region45: #{conv_deconv_vqvae_forward.15} parent=0
    _
  %s6 = ssub.s32 1, %s4
  %s7 = scalar_select 0, %s6, %s4
  loop: start=0, step=1, limit=4
  $region2: #{conv_deconv_vqvae_forward.15} parent=0 // loop_pre_header
    _
  $region3: #{conv_deconv_vqvae_forward.15} parent=0 // loop_header
    %s9 = sphi 0, %s13
    %p10 = scmp.ge.s32.totalorder %s9, 4
    %s19 = sphi 0, %s21
    %s22 = sphi 0, %s19
    %s23 = sphi 0, %s22
    %s39 = sphi 0, %s23
    %s43 = sphi 0, %s43
    %s45 = sphi 0, %s43
    %s46 = sphi 0, %s45
    %s60 = sphi 0, %s46
    %s64 = sphi 0, %s64
    %s66 = sphi 0, %s64
    %s67 = sphi 0, %s66
    %s81 = sphi 0, %s67
    %s87 = sphi 0, %s89
    %s90 = sphi 0, %s87
    %s91 = sphi 0, %s90
    %s107 = sphi 0, %s91
  $region4: #{conv_deconv_vqvae_forward.15} parent=0 // loop_header_branch
    %12 = sbr.rel (%p10) target = $region8
  $region5: #{conv_deconv_vqvae_forward.15} parent=0 // loop_body
    %s14 = ssub.s32 %s9, 1
    %s15 = ssub.s32 %s9, 2
    %s16 = sadd.s32 %s9, 1
    %s17 = ssub.s32 %s9, %s16
    %p18 = scmp.eq.s32.totalorder %s17, 0
    %s20 = sadd.s32 %s19, 1
    %s21 = scalar_select %p18, %s19, %s20
    %p24 = pneg %p18
    %p25 = scmp.eq.s32.totalorder %s9, 1
    %p26 = por %p24, %p25
    %p27 = scmp.ne.s32.totalorder %s19, %s22
    %p28 = scmp.eq.s32.totalorder %s9, 0
    %p29 = por %p27, %p28
    %p30 = scmp.ne.s32.totalorder %s19, %s22
    %p31 = scmp.eq.s32.totalorder %s14, 1
    %p32 = por %p30, %p31
    %p33 = scmp.ne.s32.totalorder %s22, %s23
    %p34 = scmp.eq.s32.totalorder %s14, 0
    %p35 = por %p33, %p34
    %p36 = scmp.ne.s32.totalorder %s22, %s23
    %p37 = scmp.eq.s32.totalorder %s15, 1
    %p38 = por %p36, %p37
    %p40 = scmp.ne.s32.totalorder %s23, %s39
    %p41 = scmp.eq.s32.totalorder %s15, 0
    %p42 = por %p40, %p41
    %s44 = sadd.s32 %s43, 1
    %p47 = scmp.eq.s32.totalorder %s9, 1
    %p48 = scmp.ne.s32.totalorder %s43, %s45
    %p49 = scmp.eq.s32.totalorder %s9, 0
    %p50 = por %p48, %p49
    %p51 = scmp.ne.s32.totalorder %s43, %s45
    %p52 = scmp.eq.s32.totalorder %s14, 1
    %p53 = por %p51, %p52
    %p54 = scmp.ne.s32.totalorder %s45, %s46
    %p55 = scmp.eq.s32.totalorder %s14, 0
    %p56 = por %p54, %p55
    %p57 = scmp.ne.s32.totalorder %s45, %s46
    %p58 = scmp.eq.s32.totalorder %s15, 1
    %p59 = por %p57, %p58
    %p61 = scmp.ne.s32.totalorder %s46, %s60
    %p62 = scmp.eq.s32.totalorder %s15, 0
    %p63 = por %p61, %p62
    %s65 = sadd.s32 %s64, 1
    %p68 = scmp.eq.s32.totalorder %s9, 1
    %p69 = scmp.ne.s32.totalorder %s64, %s66
    %p70 = scmp.eq.s32.totalorder %s9, 0
    %p71 = por %p69, %p70
    %p72 = scmp.ne.s32.totalorder %s64, %s66
    %p73 = scmp.eq.s32.totalorder %s14, 1
    %p74 = por %p72, %p73
    %p75 = scmp.ne.s32.totalorder %s66, %s67
    %p76 = scmp.eq.s32.totalorder %s14, 0
    %p77 = por %p75, %p76
    %p78 = scmp.ne.s32.totalorder %s66, %s67
    %p79 = scmp.eq.s32.totalorder %s15, 1
    %p80 = por %p78, %p79
    %p82 = scmp.ne.s32.totalorder %s67, %s81
    %p83 = scmp.eq.s32.totalorder %s15, 0
    %p84 = por %p82, %p83
    %s85 = ssub.s32 %s9, %s16
    %p86 = scmp.eq.s32.totalorder %s85, 0
    %s88 = sadd.s32 %s87, 1
    %s89 = scalar_select %p86, %s87, %s88
    %p92 = pneg %p86
    %p93 = scmp.eq.s32.totalorder %s9, 1
    %p94 = por %p92, %p93
    %p95 = scmp.ne.s32.totalorder %s87, %s90
    %p96 = scmp.eq.s32.totalorder %s9, 0
    %p97 = por %p95, %p96
    %p98 = scmp.ne.s32.totalorder %s87, %s90
    %p99 = scmp.eq.s32.totalorder %s14, 1
    %p100 = por %p98, %p99
    %p101 = scmp.ne.s32.totalorder %s90, %s91
    %p102 = scmp.eq.s32.totalorder %s14, 0
    %p103 = por %p101, %p102
    %p104 = scmp.ne.s32.totalorder %s90, %s91
    %p105 = scmp.eq.s32.totalorder %s15, 1
    %p106 = por %p104, %p105
    %p108 = scmp.ne.s32.totalorder %s91, %s107
    %p109 = scmp.eq.s32.totalorder %s15, 0
    %p110 = por %p108, %p109
    %p111 = scmp.le.s32.totalorder 1, %s9
    %p112 = scmp.lt.s32.totalorder %s9, 3
    %p113 = pnand %p111, %p112
    %p114 = pneg %p113
    // Predicated region
    $region9: #{conv_deconv_vqvae_forward.15} parent=5 // pred_check
      _
    $region10: #{conv_deconv_vqvae_forward.15} parent=5 // pred_check_branch
      %116 = sbr.rel (%p113) target = $region12
    $region11: #{conv_deconv_vqvae_forward.15} parent=5 // pred_region
      %s117 = ssub.s32 %s9, 1
      // Predicated region
      $region13: #{conv_deconv_vqvae_forward.15} parent=11 // pred_check
        %p118 = pneg %p56
      $region14: #{conv_deconv_vqvae_forward.15} parent=11 // pred_check_branch
        %120 = sbr.rel (%p118) target = $region16
      $region15: #{conv_deconv_vqvae_forward.15} parent=11 // pred_region
        _
      $region16: #{conv_deconv_vqvae_forward.15} parent=11 // pred_fallthru
        _
      // Predicated region
      $region17: #{conv_deconv_vqvae_forward.15} parent=11 // pred_check
        %p121 = pneg %p77
      $region18: #{conv_deconv_vqvae_forward.15} parent=11 // pred_check_branch
        %123 = sbr.rel (%p121) target = $region20
      $region19: #{conv_deconv_vqvae_forward.15} parent=11 // pred_region
        _
      $region20: #{conv_deconv_vqvae_forward.15} parent=11 // pred_fallthru
        _
    $region12: #{conv_deconv_vqvae_forward.15} parent=5 // pred_fallthru
      _
    %p124 = scmp.lt.s32.totalorder %s9, 2
    // Predicated region
    $region21: #{conv_deconv_vqvae_forward.15} parent=5 // pred_check
      %p125 = pneg %p124
    $region22: #{conv_deconv_vqvae_forward.15} parent=5 // pred_check_branch
      %127 = sbr.rel (%p125) target = $region24
    $region23: #{conv_deconv_vqvae_forward.15} parent=5 // pred_region
      // Predicated region
      $region25: #{conv_deconv_vqvae_forward.15} parent=23 // pred_check
        %p128 = pneg %p29
      $region26: #{conv_deconv_vqvae_forward.15} parent=23 // pred_check_branch
        %130 = sbr.rel (%p128) target = $region28
      $region27: #{conv_deconv_vqvae_forward.15} parent=23 // pred_region
        %s131 = smul.u32 2, %s9
        %p132 = scmp.lt.s32.totalorder %s131, 3
        %s133 = scalar_select %p132, %s131, 3
        %s134 = smul.addr %s133, 9
        %s135 = smul.addr %s134, 4
        %s136 = scalar_lea.vmem %s0, %s135
        %s137 = smul.u32 2, %s9
      $region28: #{conv_deconv_vqvae_forward.15} parent=23 // pred_fallthru
        _
    $region24: #{conv_deconv_vqvae_forward.15} parent=5 // pred_fallthru
      _
    %p138 = scmp.le.s32.totalorder 1, %s9
    %p139 = scmp.lt.s32.totalorder %s9, 3
    %p140 = pnand %p138, %p139
    %p141 = pneg %p140
    // Predicated region
    $region29: #{conv_deconv_vqvae_forward.15} parent=5 // pred_check
      _
    $region30: #{conv_deconv_vqvae_forward.15} parent=5 // pred_check_branch
      %143 = sbr.rel (%p140) target = $region32
    $region31: #{conv_deconv_vqvae_forward.15} parent=5 // pred_region
      %s144 = ssub.s32 %s9, 1
      %s145 = smul.u32 2, %s14
      %p146 = scmp.lt.s32.totalorder %s145, 3
      %s147 = scalar_select %p146, %s145, 3
      %s148 = smul.addr %s147, 9
      %s149 = smul.addr %s148, 4
      %s150 = scalar_lea.vmem %s0, %s149
      %p151 = pneg %p35
      %p152 = pneg %p32
      %p153 = pneg %p56
      %p154 = pneg %p53
      %p155 = pneg %p77
      %p156 = pneg %p74
      %p157 = pneg %p103
      %p158 = pneg %p100
      %s159 = smul.u32 2, %s14
      %p160 = scmp.lt.s32.totalorder %s159, 3
      %s161 = scalar_select %p160, %s159, 3
      %s162 = smul.addr %s161, 2
      %s163 = smul.addr %s162, 4
      %s164 = scalar_lea.vmem %s3, %s163
      %s165 = smul.u32 2, %s14
      %p166 = scmp.lt.s32.totalorder %s165, 3
      %s167 = scalar_select %p166, %s165, 3
      %s168 = smul.addr %s167, 9
      %s169 = smul.addr %s168, 4
      %s170 = scalar_lea.vmem %s0, %s169
      %s171 = smul.u32 2, %s14
      %s172 = smul.u32 2, %s14
      %p173 = scmp.lt.s32.totalorder %s172, 3
      %s174 = scalar_select %p173, %s172, 3
      %s175 = smul.addr %s174, 2
      %s176 = smul.addr %s175, 4
      %s177 = scalar_lea.vmem %s3, %s176
      %s178 = smul.u32 2, %s14
      %v180 = vld [vmem:[%s170] sm:$0xff]
      %v181 = vld [vmem:[%s170 + $0x8] sm:$0xff]
      %v182 = vld [vmem:[%s170 + $0x10] sm:$0xff]
      %v183 = vld [vmem:[%s170 + $0x18] sm:$0xff]
      %v184 = vld [vmem:[%s170 + $0x20] sm:$0xf]
      %v185 = vld [vmem:[%s170 + $0x24] sm:$0xff]
      %v186 = vld [vmem:[%s170 + $0x2c] sm:$0xff]
      %v187 = vld [vmem:[%s170 + $0x34] sm:$0xff]
      %v188 = vld [vmem:[%s170 + $0x3c] sm:$0xff]
      %v189 = vld [vmem:[%s170 + $0x44] sm:$0xf]
      %v190 = vld [vmem:[%s1] sm:$0xff]
      %v191 = vld [vmem:[%s1 + $0x8] sm:$0xff]
      %v192 = vld [vmem:[%s1 + $0x10] sm:$0xff]
      %v193 = vld [vmem:[%s1 + $0x18] sm:$0xff]
      %v194 = vld [vmem:[%s1 + $0x20] sm:$0xff]
      %v195 = vld [vmem:[%s1 + $0x28] sm:$0xff]
      %v196 = vld [vmem:[%s1 + $0x30] sm:$0xff]
      %v197 = vld [vmem:[%s1 + $0x38] sm:$0xff]
      %v198 = vld [vmem:[%s1 + $0x40] sm:$0xff]
      %v199 = vld [vmem:[%s1 + $0x48] sm:$0xff]
      %v200 = vld [vmem:[%s1 + $0x50] sm:$0xff]
      %v201 = vld [vmem:[%s1 + $0x58] sm:$0xff]
      %v202 = vld [vmem:[%s1 + $0x60] sm:$0xff]
      %v203 = vld [vmem:[%s1 + $0x68] sm:$0xff]
      %v204 = vld [vmem:[%s1 + $0x70] sm:$0xff]
      %v205 = vld [vmem:[%s1 + $0x78] sm:$0xff]
      %v206 = vld [vmem:[%s1 + $0x80] sm:$0xff]
      %v207 = vld [vmem:[%s1 + $0x88] sm:$0xff]
      %v208 = vld [vmem:[%s1 + $0x90] sm:$0xff]
      %v209 = vld [vmem:[%s1 + $0x98] sm:$0xff]
      %v210 = vld [vmem:[%s1 + $0xa0] sm:$0xff]
      %v211 = vld [vmem:[%s1 + $0xa8] sm:$0xff]
      %v212 = vld [vmem:[%s1 + $0xb0] sm:$0xff]
      %v213 = vld [vmem:[%s1 + $0xb8] sm:$0xff]
      %v214 = vld [vmem:[%s1 + $0xc0] sm:$0xff]
      %v215 = vld [vmem:[%s1 + $0xc8] sm:$0xff]
      %v216 = vld [vmem:[%s1 + $0xd0] sm:$0xff]
      %v217 = vld [vmem:[%s1 + $0xd8] sm:$0xff]
      %v218 = vld [vmem:[%s1 + $0xe0] sm:$0xff]
      %v219 = vld [vmem:[%s1 + $0xe8] sm:$0xff]
      %v220 = vld [vmem:[%s1 + $0xf0] sm:$0xff]
      %v221 = vld [vmem:[%s1 + $0xf8] sm:$0xff]
      %v222 = vld [vmem:[%s1 + $0x100] sm:$0xff]
      %v223 = vld [vmem:[%s1 + $0x108] sm:$0xff]
      %v224 = vld [vmem:[%s1 + $0x110] sm:$0xff]
      %v225 = vld [vmem:[%s1 + $0x118] sm:$0xff]
      %v226 = vld [vmem:[%s1 + $0x120] sm:$0xff]
      %v227 = vld [vmem:[%s1 + $0x128] sm:$0xff]
      %v228 = vld [vmem:[%s1 + $0x130] sm:$0xff]
      %v229 = vld [vmem:[%s1 + $0x138] sm:$0xff]
      %v230 = vld [vmem:[%s1 + $0x140] sm:$0xff]
      %v231 = vld [vmem:[%s1 + $0x148] sm:$0xff]
      %v232 = vld [vmem:[%s1 + $0x150] sm:$0xff]
      %v233 = vld [vmem:[%s1 + $0x158] sm:$0xff]
      %v234 = vld [vmem:[%s1 + $0x160] sm:$0xff]
      %v235 = vld [vmem:[%s1 + $0x168] sm:$0xff]
      %v236 = vld [vmem:[%s1 + $0x170] sm:$0xff]
      %v237 = vld [vmem:[%s1 + $0x178] sm:$0xff]
      %v238 = vld [vmem:[%s1 + $0x180] sm:$0xff]
      %v239 = vld [vmem:[%s1 + $0x188] sm:$0xff]
      %v240 = vld [vmem:[%s1 + $0x190] sm:$0xff]
      %v241 = vld [vmem:[%s1 + $0x198] sm:$0xff]
      %v242 = vld [vmem:[%s1 + $0x1a0] sm:$0xff]
      %v243 = vld [vmem:[%s1 + $0x1a8] sm:$0xff]
      %v244 = vld [vmem:[%s1 + $0x1b0] sm:$0xff]
      %v245 = vld [vmem:[%s1 + $0x1b8] sm:$0xff]
      %v246 = vld [vmem:[%s1 + $0x1c0] sm:$0xff]
      %v247 = vld [vmem:[%s1 + $0x1c8] sm:$0xff]
      %v248 = vld [vmem:[%s1 + $0x1d0] sm:$0xff]
      %v249 = vld [vmem:[%s1 + $0x1d8] sm:$0xff]
      %v250 = vld [vmem:[%s1 + $0x1e0] sm:$0xff]
      %v251 = vld [vmem:[%s1 + $0x1e8] sm:$0xff]
      %v252 = vld [vmem:[%s1 + $0x1f0] sm:$0xff]
      %v253 = vld [vmem:[%s1 + $0x1f8] sm:$0xff]
      %v254 = vld [vmem:[%s1 + $0x200] sm:$0xff]
      %v255 = vld [vmem:[%s1 + $0x208] sm:$0xff]
      %v256 = vld [vmem:[%s1 + $0x210] sm:$0xff]
      %v257 = vld [vmem:[%s1 + $0x218] sm:$0xff]
      %v258 = vld [vmem:[%s1 + $0x220] sm:$0xff]
      %v259 = vld [vmem:[%s1 + $0x228] sm:$0xff]
      %v260 = vld [vmem:[%s1 + $0x230] sm:$0xff]
      %v261 = vld [vmem:[%s1 + $0x238] sm:$0xff]
      %v262 = vld [vmem:[%s1 + $0x240] sm:$0xff]
      %v263 = vld [vmem:[%s1 + $0x248] sm:$0xff]
      %v264 = vld [vmem:[%s1 + $0x250] sm:$0xff]
      %v265 = vld [vmem:[%s1 + $0x258] sm:$0xff]
      %v266 = vld [vmem:[%s1 + $0x260] sm:$0xff]
      %v267 = vld [vmem:[%s1 + $0x268] sm:$0xff]
      %v268 = vld [vmem:[%s1 + $0x270] sm:$0xff]
      %v269 = vld [vmem:[%s1 + $0x278] sm:$0xff]
      %v270 = vld [vmem:[%s1 + $0x280] sm:$0xff]
      %v271 = vld [vmem:[%s1 + $0x288] sm:$0xff]
      %v272 = vld [vmem:[%s1 + $0x290] sm:$0xff]
      %v273 = vld [vmem:[%s1 + $0x298] sm:$0xff]
      %v274 = vld [vmem:[%s1 + $0x2a0] sm:$0xff]
      %v275 = vld [vmem:[%s1 + $0x2a8] sm:$0xff]
      %v276 = vld [vmem:[%s1 + $0x2b0] sm:$0xff]
      %v277 = vld [vmem:[%s1 + $0x2b8] sm:$0xff]
      %v278 = vld [vmem:[%s1 + $0x2c0] sm:$0xff]
      %v279 = vld [vmem:[%s1 + $0x2c8] sm:$0xff]
      %v280 = vld [vmem:[%s1 + $0x2d0] sm:$0xff]
      %v281 = vld [vmem:[%s1 + $0x2d8] sm:$0xff]
      %v282 = vld [vmem:[%s1 + $0x2e0] sm:$0xff]
      %v283 = vld [vmem:[%s1 + $0x2e8] sm:$0xff]
      %v284 = vld [vmem:[%s1 + $0x2f0] sm:$0xff]
      %v285 = vld [vmem:[%s1 + $0x2f8] sm:$0xff]
      %v286 = vld [vmem:[%s1 + $0x300] sm:$0xff]
      %v287 = vld [vmem:[%s1 + $0x308] sm:$0xff]
      %v288 = vld [vmem:[%s1 + $0x310] sm:$0xff]
      %v289 = vld [vmem:[%s1 + $0x318] sm:$0xff]
      %v290 = vld [vmem:[%s1 + $0x320] sm:$0xff]
      %v291 = vld [vmem:[%s1 + $0x328] sm:$0xff]
      %v292 = vld [vmem:[%s1 + $0x330] sm:$0xff]
      %v293 = vld [vmem:[%s1 + $0x338] sm:$0xff]
      %v294 = vld [vmem:[%s1 + $0x340] sm:$0xff]
      %v295 = vld [vmem:[%s1 + $0x348] sm:$0xff]
      %v296 = vld [vmem:[%s1 + $0x350] sm:$0xff]
      %v297 = vld [vmem:[%s1 + $0x358] sm:$0xff]
      %v298 = vld [vmem:[%s1 + $0x360] sm:$0xff]
      %v299 = vld [vmem:[%s1 + $0x368] sm:$0xff]
      %v300 = vld [vmem:[%s1 + $0x370] sm:$0xff]
      %v301 = vld [vmem:[%s1 + $0x378] sm:$0xff]
      %v302 = vld [vmem:[%s1 + $0x380] sm:$0xff]
      %v303 = vld [vmem:[%s1 + $0x388] sm:$0xff]
      %v304 = vld [vmem:[%s1 + $0x390] sm:$0xff]
      %v305 = vld [vmem:[%s1 + $0x398] sm:$0xff]
      %v306 = vld [vmem:[%s1 + $0x3a0] sm:$0xff]
      %v307 = vld [vmem:[%s1 + $0x3a8] sm:$0xff]
      %v308 = vld [vmem:[%s1 + $0x3b0] sm:$0xff]
      %v309 = vld [vmem:[%s1 + $0x3b8] sm:$0xff]
      %v310 = vld [vmem:[%s1 + $0x3c0] sm:$0xff]
      %v311 = vld [vmem:[%s1 + $0x3c8] sm:$0xff]
      %v312 = vld [vmem:[%s1 + $0x3d0] sm:$0xff]
      %v313 = vld [vmem:[%s1 + $0x3d8] sm:$0xff]
      %v314 = vld [vmem:[%s1 + $0x3e0] sm:$0xff]
      %v315 = vld [vmem:[%s1 + $0x3e8] sm:$0xff]
      %v316 = vld [vmem:[%s1 + $0x3f0] sm:$0xff]
      %v317 = vld [vmem:[%s1 + $0x3f8] sm:$0xff]
      %v318 = vld [vmem:[%s1 + $0x400] sm:$0xff]
      %v319 = vld [vmem:[%s1 + $0x408] sm:$0xff]
      %v320 = vld [vmem:[%s1 + $0x410] sm:$0xff]
      %v321 = vld [vmem:[%s1 + $0x418] sm:$0xff]
      %v322 = vld [vmem:[%s1 + $0x420] sm:$0xff]
      %v323 = vld [vmem:[%s1 + $0x428] sm:$0xff]
      %v324 = vld [vmem:[%s1 + $0x430] sm:$0xff]
      %v325 = vld [vmem:[%s1 + $0x438] sm:$0xff]
      %v326 = vld [vmem:[%s1 + $0x440] sm:$0xff]
      %v327 = vld [vmem:[%s1 + $0x448] sm:$0xff]
      %v328 = vld [vmem:[%s1 + $0x450] sm:$0xff]
      %v329 = vld [vmem:[%s1 + $0x458] sm:$0xff]
      %v330 = vld [vmem:[%s1 + $0x460] sm:$0xff]
      %v331 = vld [vmem:[%s1 + $0x468] sm:$0xff]
      %v332 = vld [vmem:[%s1 + $0x470] sm:$0xff]
      %v333 = vld [vmem:[%s1 + $0x478] sm:$0xff]
      %v334 = vld [vmem:[%s2] sm:$0x3]
      %v336 = vlaneseq
      %v337 = vshrl.u32 %v336, 7
      %v338 = vsub.s32 0, %v337
      %v339 = vrot.slane %v334, %v338
      %v340 = vlaneseq
      %v341 = vshrl.u32 %v340, 7
      %v342 = vsub.s32 1, %v341
      %v343 = vrot.slane %v334, %v342
      %v356 = vunpack.c.l.b16 %v180
      %v357 = vunpack.c.h.b16 %v180
      %v358 = vunpack.c.l.b16 %v181
      %v359 = vunpack.c.h.b16 %v181
      %v360 = vunpack.c.l.b16 %v182
      %v361 = vunpack.c.h.b16 %v182
      %v362 = vunpack.c.l.b16 %v183
      %v363 = vunpack.c.h.b16 %v183
      %v364 = vunpack.c.l.b16 %v184
      %v365 = vunpack.c.l.b16 %v185
      %v366 = vunpack.c.h.b16 %v185
      %v367 = vunpack.c.l.b16 %v186
      %v368 = vunpack.c.h.b16 %v186
      %v369 = vunpack.c.l.b16 %v187
      %v370 = vunpack.c.h.b16 %v187
      %v371 = vunpack.c.l.b16 %v188
      %v372 = vunpack.c.h.b16 %v188
      %v373 = vunpack.c.l.b16 %v189
      %v374 = vpack.c.b16 %v365, %v356
      %v375 = vpack.c.b16 %v366, %v357
      %v376 = vpack.c.b16 %v367, %v358
      %v377 = vpack.c.b16 %v368, %v359
      %v378 = vpack.c.b16 %v369, %v360
      %v379 = vpack.c.b16 %v370, %v361
      %v380 = vpack.c.b16 %v371, %v362
      %v381 = vpack.c.b16 %v372, %v363
      %v382 = vpack.c.b16 %v373, %v364
      %v536 = vunpack.c.l.b16 %v190
      %v537 = vunpack.c.h.b16 %v190
      %v538 = vunpack.c.l.b16 %v191
      %v539 = vunpack.c.h.b16 %v191
      %v540 = vunpack.c.l.b16 %v192
      %v541 = vunpack.c.h.b16 %v192
      %v542 = vunpack.c.l.b16 %v193
      %v543 = vunpack.c.h.b16 %v193
      %v544 = vunpack.c.l.b16 %v194
      %v545 = vunpack.c.h.b16 %v194
      %v546 = vunpack.c.l.b16 %v195
      %v547 = vunpack.c.h.b16 %v195
      %v548 = vunpack.c.l.b16 %v196
      %v549 = vunpack.c.h.b16 %v196
      %v550 = vunpack.c.l.b16 %v197
      %v551 = vunpack.c.h.b16 %v197
      %v552 = vunpack.c.l.b16 %v198
      %v553 = vunpack.c.h.b16 %v198
      %v554 = vunpack.c.l.b16 %v199
      %v555 = vunpack.c.h.b16 %v199
      %v556 = vunpack.c.l.b16 %v200
      %v557 = vunpack.c.h.b16 %v200
      %v558 = vunpack.c.l.b16 %v201
      %v559 = vunpack.c.h.b16 %v201
      %v560 = vunpack.c.l.b16 %v202
      %v561 = vunpack.c.h.b16 %v202
      %v562 = vunpack.c.l.b16 %v203
      %v563 = vunpack.c.h.b16 %v203
      %v564 = vunpack.c.l.b16 %v204
      %v565 = vunpack.c.h.b16 %v204
      %v566 = vunpack.c.l.b16 %v205
      %v567 = vunpack.c.h.b16 %v205
      %v568 = vunpack.c.l.b16 %v206
      %v569 = vunpack.c.h.b16 %v206
      %v570 = vunpack.c.l.b16 %v207
      %v571 = vunpack.c.h.b16 %v207
      %v572 = vunpack.c.l.b16 %v208
      %v573 = vunpack.c.h.b16 %v208
      %v574 = vunpack.c.l.b16 %v209
      %v575 = vunpack.c.h.b16 %v209
      %v576 = vunpack.c.l.b16 %v210
      %v577 = vunpack.c.h.b16 %v210
      %v578 = vunpack.c.l.b16 %v211
      %v579 = vunpack.c.h.b16 %v211
      %v580 = vunpack.c.l.b16 %v212
      %v581 = vunpack.c.h.b16 %v212
      %v582 = vunpack.c.l.b16 %v213
      %v583 = vunpack.c.h.b16 %v213
      %v584 = vunpack.c.l.b16 %v214
      %v585 = vunpack.c.h.b16 %v214
      %v586 = vunpack.c.l.b16 %v215
      %v587 = vunpack.c.h.b16 %v215
      %v588 = vunpack.c.l.b16 %v216
      %v589 = vunpack.c.h.b16 %v216
      %v590 = vunpack.c.l.b16 %v217
      %v591 = vunpack.c.h.b16 %v217
      %v592 = vunpack.c.l.b16 %v218
      %v593 = vunpack.c.h.b16 %v218
      %v594 = vunpack.c.l.b16 %v219
      %v595 = vunpack.c.h.b16 %v219
      %v596 = vunpack.c.l.b16 %v220
      %v597 = vunpack.c.h.b16 %v220
      %v598 = vunpack.c.l.b16 %v221
      %v599 = vunpack.c.h.b16 %v221
      %v600 = vunpack.c.l.b16 %v222
      %v601 = vunpack.c.h.b16 %v222
      %v602 = vunpack.c.l.b16 %v223
      %v603 = vunpack.c.h.b16 %v223
      %v604 = vunpack.c.l.b16 %v224
      %v605 = vunpack.c.h.b16 %v224
      %v606 = vunpack.c.l.b16 %v225
      %v607 = vunpack.c.h.b16 %v225
      %v608 = vunpack.c.l.b16 %v226
      %v609 = vunpack.c.h.b16 %v226
      %v610 = vunpack.c.l.b16 %v227
      %v611 = vunpack.c.h.b16 %v227
      %v612 = vunpack.c.l.b16 %v228
      %v613 = vunpack.c.h.b16 %v228
      %v614 = vunpack.c.l.b16 %v229
      %v615 = vunpack.c.h.b16 %v229
      %v616 = vunpack.c.l.b16 %v230
      %v617 = vunpack.c.h.b16 %v230
      %v618 = vunpack.c.l.b16 %v231
      %v619 = vunpack.c.h.b16 %v231
      %v620 = vunpack.c.l.b16 %v232
      %v621 = vunpack.c.h.b16 %v232
      %v622 = vunpack.c.l.b16 %v233
      %v623 = vunpack.c.h.b16 %v233
      %v624 = vunpack.c.l.b16 %v234
      %v625 = vunpack.c.h.b16 %v234
      %v626 = vunpack.c.l.b16 %v235
      %v627 = vunpack.c.h.b16 %v235
      %v628 = vunpack.c.l.b16 %v236
      %v629 = vunpack.c.h.b16 %v236
      %v630 = vunpack.c.l.b16 %v237
      %v631 = vunpack.c.h.b16 %v237
      %v632 = vunpack.c.l.b16 %v238
      %v633 = vunpack.c.h.b16 %v238
      %v634 = vunpack.c.l.b16 %v239
      %v635 = vunpack.c.h.b16 %v239
      %v636 = vunpack.c.l.b16 %v240
      %v637 = vunpack.c.h.b16 %v240
      %v638 = vunpack.c.l.b16 %v241
      %v639 = vunpack.c.h.b16 %v241
      %v640 = vunpack.c.l.b16 %v242
      %v641 = vunpack.c.h.b16 %v242
      %v642 = vunpack.c.l.b16 %v243
      %v643 = vunpack.c.h.b16 %v243
      %v644 = vunpack.c.l.b16 %v244
      %v645 = vunpack.c.h.b16 %v244
      %v646 = vunpack.c.l.b16 %v245
      %v647 = vunpack.c.h.b16 %v245
      %v648 = vunpack.c.l.b16 %v246
      %v649 = vunpack.c.h.b16 %v246
      %v650 = vunpack.c.l.b16 %v247
      %v651 = vunpack.c.h.b16 %v247
      %v652 = vunpack.c.l.b16 %v248
      %v653 = vunpack.c.h.b16 %v248
      %v654 = vunpack.c.l.b16 %v249
      %v655 = vunpack.c.h.b16 %v249
      %v656 = vunpack.c.l.b16 %v250
      %v657 = vunpack.c.h.b16 %v250
      %v658 = vunpack.c.l.b16 %v251
      %v659 = vunpack.c.h.b16 %v251
      %v660 = vunpack.c.l.b16 %v252
      %v661 = vunpack.c.h.b16 %v252
      %v662 = vunpack.c.l.b16 %v253
      %v663 = vunpack.c.h.b16 %v253
      %v664 = vunpack.c.l.b16 %v254
      %v665 = vunpack.c.h.b16 %v254
      %v666 = vunpack.c.l.b16 %v255
      %v667 = vunpack.c.h.b16 %v255
      %v668 = vunpack.c.l.b16 %v256
      %v669 = vunpack.c.h.b16 %v256
      %v670 = vunpack.c.l.b16 %v257
      %v671 = vunpack.c.h.b16 %v257
      %v672 = vunpack.c.l.b16 %v258
      %v673 = vunpack.c.h.b16 %v258
      %v674 = vunpack.c.l.b16 %v259
      %v675 = vunpack.c.h.b16 %v259
      %v676 = vunpack.c.l.b16 %v260
      %v677 = vunpack.c.h.b16 %v260
      %v678 = vunpack.c.l.b16 %v261
      %v679 = vunpack.c.h.b16 %v261
      %v680 = vunpack.c.l.b16 %v262
      %v681 = vunpack.c.h.b16 %v262
      %v682 = vunpack.c.l.b16 %v263
      %v683 = vunpack.c.h.b16 %v263
      %v684 = vunpack.c.l.b16 %v264
      %v685 = vunpack.c.h.b16 %v264
      %v686 = vunpack.c.l.b16 %v265
      %v687 = vunpack.c.h.b16 %v265
      %v688 = vunpack.c.l.b16 %v266
      %v689 = vunpack.c.h.b16 %v266
      %v690 = vunpack.c.l.b16 %v267
      %v691 = vunpack.c.h.b16 %v267
      %v692 = vunpack.c.l.b16 %v268
      %v693 = vunpack.c.h.b16 %v268
      %v694 = vunpack.c.l.b16 %v269
      %v695 = vunpack.c.h.b16 %v269
      %v696 = vunpack.c.l.b16 %v270
      %v697 = vunpack.c.h.b16 %v270
      %v698 = vunpack.c.l.b16 %v271
      %v699 = vunpack.c.h.b16 %v271
      %v700 = vunpack.c.l.b16 %v272
      %v701 = vunpack.c.h.b16 %v272
      %v702 = vunpack.c.l.b16 %v273
      %v703 = vunpack.c.h.b16 %v273
      %v704 = vunpack.c.l.b16 %v274
      %v705 = vunpack.c.h.b16 %v274
      %v706 = vunpack.c.l.b16 %v275
      %v707 = vunpack.c.h.b16 %v275
      %v708 = vunpack.c.l.b16 %v276
      %v709 = vunpack.c.h.b16 %v276
      %v710 = vunpack.c.l.b16 %v277
      %v711 = vunpack.c.h.b16 %v277
      %v712 = vunpack.c.l.b16 %v278
      %v713 = vunpack.c.h.b16 %v278
      %v714 = vunpack.c.l.b16 %v279
      %v715 = vunpack.c.h.b16 %v279
      %v716 = vunpack.c.l.b16 %v280
      %v717 = vunpack.c.h.b16 %v280
      %v718 = vunpack.c.l.b16 %v281
      %v719 = vunpack.c.h.b16 %v281
      %v720 = vunpack.c.l.b16 %v282
      %v721 = vunpack.c.h.b16 %v282
      %v722 = vunpack.c.l.b16 %v283
      %v723 = vunpack.c.h.b16 %v283
      %v724 = vunpack.c.l.b16 %v284
      %v725 = vunpack.c.h.b16 %v284
      %v726 = vunpack.c.l.b16 %v285
      %v727 = vunpack.c.h.b16 %v285
      %v728 = vunpack.c.l.b16 %v286
      %v729 = vunpack.c.h.b16 %v286
      %v730 = vunpack.c.l.b16 %v287
      %v731 = vunpack.c.h.b16 %v287
      %v732 = vunpack.c.l.b16 %v288
      %v733 = vunpack.c.h.b16 %v288
      %v734 = vunpack.c.l.b16 %v289
      %v735 = vunpack.c.h.b16 %v289
      %v736 = vunpack.c.l.b16 %v290
      %v737 = vunpack.c.h.b16 %v290
      %v738 = vunpack.c.l.b16 %v291
      %v739 = vunpack.c.h.b16 %v291
      %v740 = vunpack.c.l.b16 %v292
      %v741 = vunpack.c.h.b16 %v292
      %v742 = vunpack.c.l.b16 %v293
      %v743 = vunpack.c.h.b16 %v293
      %v744 = vunpack.c.l.b16 %v294
      %v745 = vunpack.c.h.b16 %v294
      %v746 = vunpack.c.l.b16 %v295
      %v747 = vunpack.c.h.b16 %v295
      %v748 = vunpack.c.l.b16 %v296
      %v749 = vunpack.c.h.b16 %v296
      %v750 = vunpack.c.l.b16 %v297
      %v751 = vunpack.c.h.b16 %v297
      %v752 = vunpack.c.l.b16 %v298
      %v753 = vunpack.c.h.b16 %v298
      %v754 = vunpack.c.l.b16 %v299
      %v755 = vunpack.c.h.b16 %v299
      %v756 = vunpack.c.l.b16 %v300
      %v757 = vunpack.c.h.b16 %v300
      %v758 = vunpack.c.l.b16 %v301
      %v759 = vunpack.c.h.b16 %v301
      %v760 = vunpack.c.l.b16 %v302
      %v761 = vunpack.c.h.b16 %v302
      %v762 = vunpack.c.l.b16 %v303
      %v763 = vunpack.c.h.b16 %v303
      %v764 = vunpack.c.l.b16 %v304
      %v765 = vunpack.c.h.b16 %v304
      %v766 = vunpack.c.l.b16 %v305
      %v767 = vunpack.c.h.b16 %v305
      %v768 = vunpack.c.l.b16 %v306
      %v769 = vunpack.c.h.b16 %v306
      %v770 = vunpack.c.l.b16 %v307
      %v771 = vunpack.c.h.b16 %v307
      %v772 = vunpack.c.l.b16 %v308
      %v773 = vunpack.c.h.b16 %v308
      %v774 = vunpack.c.l.b16 %v309
      %v775 = vunpack.c.h.b16 %v309
      %v776 = vunpack.c.l.b16 %v310
      %v777 = vunpack.c.h.b16 %v310
      %v778 = vunpack.c.l.b16 %v311
      %v779 = vunpack.c.h.b16 %v311
      %v780 = vunpack.c.l.b16 %v312
      %v781 = vunpack.c.h.b16 %v312
      %v782 = vunpack.c.l.b16 %v313
      %v783 = vunpack.c.h.b16 %v313
      %v784 = vunpack.c.l.b16 %v314
      %v785 = vunpack.c.h.b16 %v314
      %v786 = vunpack.c.l.b16 %v315
      %v787 = vunpack.c.h.b16 %v315
      %v788 = vunpack.c.l.b16 %v316
      %v789 = vunpack.c.h.b16 %v316
      %v790 = vunpack.c.l.b16 %v317
      %v791 = vunpack.c.h.b16 %v317
      %v792 = vunpack.c.l.b16 %v318
      %v793 = vunpack.c.h.b16 %v318
      %v794 = vunpack.c.l.b16 %v319
      %v795 = vunpack.c.h.b16 %v319
      %v796 = vunpack.c.l.b16 %v320
      %v797 = vunpack.c.h.b16 %v320
      %v798 = vunpack.c.l.b16 %v321
      %v799 = vunpack.c.h.b16 %v321
      %v800 = vunpack.c.l.b16 %v322
      %v801 = vunpack.c.h.b16 %v322
      %v802 = vunpack.c.l.b16 %v323
      %v803 = vunpack.c.h.b16 %v323
      %v804 = vunpack.c.l.b16 %v324
      %v805 = vunpack.c.h.b16 %v324
      %v806 = vunpack.c.l.b16 %v325
      %v807 = vunpack.c.h.b16 %v325
      %v808 = vunpack.c.l.b16 %v326
      %v809 = vunpack.c.h.b16 %v326
      %v810 = vunpack.c.l.b16 %v327
      %v811 = vunpack.c.h.b16 %v327
      %v812 = vunpack.c.l.b16 %v328
      %v813 = vunpack.c.h.b16 %v328
      %v814 = vunpack.c.l.b16 %v329
      %v815 = vunpack.c.h.b16 %v329
      %v816 = vunpack.c.l.b16 %v330
      %v817 = vunpack.c.h.b16 %v330
      %v818 = vunpack.c.l.b16 %v331
      %v819 = vunpack.c.h.b16 %v331
      %v820 = vunpack.c.l.b16 %v332
      %v821 = vunpack.c.h.b16 %v332
      %v822 = vunpack.c.l.b16 %v333
      %v823 = vunpack.c.h.b16 %v333
      %v824 = vpack.c.b16 %v538, %v536
      %v825 = vpack.c.b16 %v539, %v537
      %v826 = vpack.c.b16 %v542, %v540
      %v827 = vpack.c.b16 %v543, %v541
      %v828 = vpack.c.b16 %v546, %v544
      %v829 = vpack.c.b16 %v547, %v545
      %v830 = vpack.c.b16 %v550, %v548
      %v831 = vpack.c.b16 %v551, %v549
      %v832 = vpack.c.b16 %v554, %v552
      %v833 = vpack.c.b16 %v555, %v553
      %v834 = vpack.c.b16 %v558, %v556
      %v835 = vpack.c.b16 %v559, %v557
      %v836 = vpack.c.b16 %v562, %v560
      %v837 = vpack.c.b16 %v563, %v561
      %v838 = vpack.c.b16 %v566, %v564
      %v839 = vpack.c.b16 %v567, %v565
      %v840 = vpack.c.b16 %v570, %v568
      %v841 = vpack.c.b16 %v571, %v569
      %v842 = vpack.c.b16 %v574, %v572
      %v843 = vpack.c.b16 %v575, %v573
      %v844 = vpack.c.b16 %v578, %v576
      %v845 = vpack.c.b16 %v579, %v577
      %v846 = vpack.c.b16 %v582, %v580
      %v847 = vpack.c.b16 %v583, %v581
      %v848 = vpack.c.b16 %v586, %v584
      %v849 = vpack.c.b16 %v587, %v585
      %v850 = vpack.c.b16 %v590, %v588
      %v851 = vpack.c.b16 %v591, %v589
      %v852 = vpack.c.b16 %v594, %v592
      %v853 = vpack.c.b16 %v595, %v593
      %v854 = vpack.c.b16 %v598, %v596
      %v855 = vpack.c.b16 %v599, %v597
      %v856 = vpack.c.b16 %v602, %v600
      %v857 = vpack.c.b16 %v603, %v601
      %v858 = vpack.c.b16 %v606, %v604
      %v859 = vpack.c.b16 %v607, %v605
      %v860 = vpack.c.b16 %v610, %v608
      %v861 = vpack.c.b16 %v611, %v609
      %v862 = vpack.c.b16 %v614, %v612
      %v863 = vpack.c.b16 %v615, %v613
      %v864 = vpack.c.b16 %v618, %v616
      %v865 = vpack.c.b16 %v619, %v617
      %v866 = vpack.c.b16 %v622, %v620
      %v867 = vpack.c.b16 %v623, %v621
      %v868 = vpack.c.b16 %v626, %v624
      %v869 = vpack.c.b16 %v627, %v625
      %v870 = vpack.c.b16 %v630, %v628
      %v871 = vpack.c.b16 %v631, %v629
      %v872 = vpack.c.b16 %v634, %v632
      %v873 = vpack.c.b16 %v635, %v633
      %v874 = vpack.c.b16 %v638, %v636
      %v875 = vpack.c.b16 %v639, %v637
      %v876 = vpack.c.b16 %v642, %v640
      %v877 = vpack.c.b16 %v643, %v641
      %v878 = vpack.c.b16 %v646, %v644
      %v879 = vpack.c.b16 %v647, %v645
      %v880 = vpack.c.b16 %v650, %v648
      %v881 = vpack.c.b16 %v651, %v649
      %v882 = vpack.c.b16 %v654, %v652
      %v883 = vpack.c.b16 %v655, %v653
      %v884 = vpack.c.b16 %v658, %v656
      %v885 = vpack.c.b16 %v659, %v657
      %v886 = vpack.c.b16 %v662, %v660
      %v887 = vpack.c.b16 %v663, %v661
      %v888 = vpack.c.b16 %v666, %v664
      %v889 = vpack.c.b16 %v667, %v665
      %v890 = vpack.c.b16 %v670, %v668
      %v891 = vpack.c.b16 %v671, %v669
      %v892 = vpack.c.b16 %v674, %v672
      %v893 = vpack.c.b16 %v675, %v673
      %v894 = vpack.c.b16 %v678, %v676
      %v895 = vpack.c.b16 %v679, %v677
      %v896 = vpack.c.b16 %v682, %v680
      %v897 = vpack.c.b16 %v683, %v681
      %v898 = vpack.c.b16 %v686, %v684
      %v899 = vpack.c.b16 %v687, %v685
      %v900 = vpack.c.b16 %v690, %v688
      %v901 = vpack.c.b16 %v691, %v689
      %v902 = vpack.c.b16 %v694, %v692
      %v903 = vpack.c.b16 %v695, %v693
      %v904 = vpack.c.b16 %v698, %v696
      %v905 = vpack.c.b16 %v699, %v697
      %v906 = vpack.c.b16 %v702, %v700
      %v907 = vpack.c.b16 %v703, %v701
      %v908 = vpack.c.b16 %v706, %v704
      %v909 = vpack.c.b16 %v707, %v705
      %v910 = vpack.c.b16 %v710, %v708
      %v911 = vpack.c.b16 %v711, %v709
      %v912 = vpack.c.b16 %v714, %v712
      %v913 = vpack.c.b16 %v715, %v713
      %v914 = vpack.c.b16 %v718, %v716
      %v915 = vpack.c.b16 %v719, %v717
      %v916 = vpack.c.b16 %v722, %v720
      %v917 = vpack.c.b16 %v723, %v721
      %v918 = vpack.c.b16 %v726, %v724
      %v919 = vpack.c.b16 %v727, %v725
      %v920 = vpack.c.b16 %v730, %v728
      %v921 = vpack.c.b16 %v731, %v729
      %v922 = vpack.c.b16 %v734, %v732
      %v923 = vpack.c.b16 %v735, %v733
      %v924 = vpack.c.b16 %v738, %v736
      %v925 = vpack.c.b16 %v739, %v737
      %v926 = vpack.c.b16 %v742, %v740
      %v927 = vpack.c.b16 %v743, %v741
      %v928 = vpack.c.b16 %v746, %v744
      %v929 = vpack.c.b16 %v747, %v745
      %v930 = vpack.c.b16 %v750, %v748
      %v931 = vpack.c.b16 %v751, %v749
      %v932 = vpack.c.b16 %v754, %v752
      %v933 = vpack.c.b16 %v755, %v753
      %v934 = vpack.c.b16 %v758, %v756
      %v935 = vpack.c.b16 %v759, %v757
      %v936 = vpack.c.b16 %v762, %v760
      %v937 = vpack.c.b16 %v763, %v761
      %v938 = vpack.c.b16 %v766, %v764
      %v939 = vpack.c.b16 %v767, %v765
      %v940 = vpack.c.b16 %v770, %v768
      %v941 = vpack.c.b16 %v771, %v769
      %v942 = vpack.c.b16 %v774, %v772
      %v943 = vpack.c.b16 %v775, %v773
      %v944 = vpack.c.b16 %v778, %v776
      %v945 = vpack.c.b16 %v779, %v777
      %v946 = vpack.c.b16 %v782, %v780
      %v947 = vpack.c.b16 %v783, %v781
      %v948 = vpack.c.b16 %v786, %v784
      %v949 = vpack.c.b16 %v787, %v785
      %v950 = vpack.c.b16 %v790, %v788
      %v951 = vpack.c.b16 %v791, %v789
      %v952 = vpack.c.b16 %v794, %v792
      %v953 = vpack.c.b16 %v795, %v793
      %v954 = vpack.c.b16 %v798, %v796
      %v955 = vpack.c.b16 %v799, %v797
      %v956 = vpack.c.b16 %v802, %v800
      %v957 = vpack.c.b16 %v803, %v801
      %v958 = vpack.c.b16 %v806, %v804
      %v959 = vpack.c.b16 %v807, %v805
      %v960 = vpack.c.b16 %v810, %v808
      %v961 = vpack.c.b16 %v811, %v809
      %v962 = vpack.c.b16 %v814, %v812
      %v963 = vpack.c.b16 %v815, %v813
      %v964 = vpack.c.b16 %v818, %v816
      %v965 = vpack.c.b16 %v819, %v817
      %v966 = vpack.c.b16 %v822, %v820
      %v967 = vpack.c.b16 %v823, %v821
      %1112 = vmatprep.subr.bf16.mxu0 %v825
      %1113 = vmatpush1.bf16.msra.mxu0 %v824
      %1114 = vmatprep.subr.bf16.mxu0 %v827
      %1115 = vmatpush1.bf16.msra.mxu0 %v826
      %1116 = vmatprep.subr.bf16.mxu0 %v829
      %1117 = vmatpush1.bf16.msra.mxu0 %v828
      %1118 = vmatprep.subr.bf16.mxu0 %v831
      %1119 = vmatpush1.bf16.msra.mxu0 %v830
      %1120 = vmatprep.subr.bf16.mxu0 %v833
      %1121 = vmatpush1.bf16.msra.mxu0 %v832
      %1122 = vmatprep.subr.bf16.mxu0 %v835
      %1123 = vmatpush1.bf16.msra.mxu0 %v834
      %1124 = vmatprep.subr.bf16.mxu0 %v837
      %1125 = vmatpush1.bf16.msra.mxu0 %v836
      %1126 = vmatprep.subr.bf16.mxu0 %v839
      %1127 = vmatpush1.bf16.msra.mxu0 %v838
      %1128 = vmatprep.subr.bf16.mxu0 %v841
      %1129 = vmatpush1.bf16.msra.mxu0 %v840
      %1130 = vmatprep.subr.bf16.mxu0 %v843
      %1131 = vmatpush1.bf16.msra.mxu0 %v842
      %1132 = vmatprep.subr.bf16.mxu0 %v845
      %1133 = vmatpush1.bf16.msra.mxu0 %v844
      %1134 = vmatprep.subr.bf16.mxu0 %v847
      %1135 = vmatpush1.bf16.msra.mxu0 %v846
      %1136 = vmatprep.subr.bf16.mxu0 %v849
      %1137 = vmatpush1.bf16.msra.mxu0 %v848
      %1138 = vmatprep.subr.bf16.mxu0 %v851
      %1139 = vmatpush1.bf16.msra.mxu0 %v850
      %1140 = vmatprep.subr.bf16.mxu0 %v853
      %1141 = vmatpush1.bf16.msra.mxu0 %v852
      %1142 = vmatprep.subr.bf16.mxu0 %v855
      %1143 = vmatpush1.bf16.msra.mxu0 %v854
      %1144 = vmatprep.mubr.bf16.mxu0 %v375
      %1145 = vmatmul.mubr.bf16.gmra.mrb[0].mxu0 %v374
      %v1146 = vpop.f32.mrb[0].mxu0
      %v1147 = vadd.f32 %v339, %v1146
      %v1148 = vpop.f32.mrb[0].mxu0
      %v1149 = vadd.f32 %v343, %v1148
      %v1150 = vpop.f32.mrb[0].mxu0
      %v1151 = vadd.f32 %v339, %v1150
      %v1152 = vpop.f32.mrb[0].mxu0
      %v1153 = vadd.f32 %v343, %v1152
      %1154 = vdwg.mxu0
      %1155 = vmatprep.subr.bf16.mxu0 %v857
      %1156 = vmatpush1.bf16.msra.mxu0 %v856
      %1157 = vmatprep.subr.bf16.mxu0 %v859
      %1158 = vmatpush1.bf16.msra.mxu0 %v858
      %1159 = vmatprep.subr.bf16.mxu0 %v861
      %1160 = vmatpush1.bf16.msra.mxu0 %v860
      %1161 = vmatprep.subr.bf16.mxu0 %v863
      %1162 = vmatpush1.bf16.msra.mxu0 %v862
      %1163 = vmatprep.subr.bf16.mxu0 %v865
      %1164 = vmatpush1.bf16.msra.mxu0 %v864
      %1165 = vmatprep.subr.bf16.mxu0 %v867
      %1166 = vmatpush1.bf16.msra.mxu0 %v866
      %1167 = vmatprep.subr.bf16.mxu0 %v869
      %1168 = vmatpush1.bf16.msra.mxu0 %v868
      %1169 = vmatprep.subr.bf16.mxu0 %v871
      %1170 = vmatpush1.bf16.msra.mxu0 %v870
      %1171 = vmatprep.subr.bf16.mxu0 %v873
      %1172 = vmatpush1.bf16.msra.mxu0 %v872
      %1173 = vmatprep.subr.bf16.mxu0 %v875
      %1174 = vmatpush1.bf16.msra.mxu0 %v874
      %1175 = vmatprep.subr.bf16.mxu0 %v877
      %1176 = vmatpush1.bf16.msra.mxu0 %v876
      %1177 = vmatprep.subr.bf16.mxu0 %v879
      %1178 = vmatpush1.bf16.msra.mxu0 %v878
      %1179 = vmatprep.subr.bf16.mxu0 %v881
      %1180 = vmatpush1.bf16.msra.mxu0 %v880
      %1181 = vmatprep.subr.bf16.mxu0 %v883
      %1182 = vmatpush1.bf16.msra.mxu0 %v882
      %1183 = vmatprep.subr.bf16.mxu0 %v885
      %1184 = vmatpush1.bf16.msra.mxu0 %v884
      %1185 = vmatprep.subr.bf16.mxu0 %v887
      %1186 = vmatpush1.bf16.msra.mxu0 %v886
      %1187 = vmatprep.mubr.bf16.mxu0 %v377
      %1188 = vmatmul.mubr.bf16.gmra.mrb[0].mxu0 %v376
      %v1189 = vpop.f32.mrb[0].mxu0
      %v1190 = vadd.f32 %v1147, %v1189
      %v1191 = vpop.f32.mrb[0].mxu0
      %v1192 = vadd.f32 %v1149, %v1191
      %v1193 = vpop.f32.mrb[0].mxu0
      %v1194 = vadd.f32 %v1151, %v1193
      %v1195 = vpop.f32.mrb[0].mxu0
      %v1196 = vadd.f32 %v1153, %v1195
      %1197 = vdwg.mxu0
      %1198 = vmatprep.subr.bf16.mxu0 %v889
      %1199 = vmatpush1.bf16.msra.mxu0 %v888
      %1200 = vmatprep.subr.bf16.mxu0 %v891
      %1201 = vmatpush1.bf16.msra.mxu0 %v890
      %1202 = vmatprep.subr.bf16.mxu0 %v893
      %1203 = vmatpush1.bf16.msra.mxu0 %v892
      %1204 = vmatprep.subr.bf16.mxu0 %v895
      %1205 = vmatpush1.bf16.msra.mxu0 %v894
      %1206 = vmatprep.subr.bf16.mxu0 %v897
      %1207 = vmatpush1.bf16.msra.mxu0 %v896
      %1208 = vmatprep.subr.bf16.mxu0 %v899
      %1209 = vmatpush1.bf16.msra.mxu0 %v898
      %1210 = vmatprep.subr.bf16.mxu0 %v901
      %1211 = vmatpush1.bf16.msra.mxu0 %v900
      %1212 = vmatprep.subr.bf16.mxu0 %v903
      %1213 = vmatpush1.bf16.msra.mxu0 %v902
      %1214 = vmatprep.subr.bf16.mxu0 %v905
      %1215 = vmatpush1.bf16.msra.mxu0 %v904
      %1216 = vmatprep.subr.bf16.mxu0 %v907
      %1217 = vmatpush1.bf16.msra.mxu0 %v906
      %1218 = vmatprep.subr.bf16.mxu0 %v909
      %1219 = vmatpush1.bf16.msra.mxu0 %v908
      %1220 = vmatprep.subr.bf16.mxu0 %v911
      %1221 = vmatpush1.bf16.msra.mxu0 %v910
      %1222 = vmatprep.subr.bf16.mxu0 %v913
      %1223 = vmatpush1.bf16.msra.mxu0 %v912
      %1224 = vmatprep.subr.bf16.mxu0 %v915
      %1225 = vmatpush1.bf16.msra.mxu0 %v914
      %1226 = vmatprep.subr.bf16.mxu0 %v917
      %1227 = vmatpush1.bf16.msra.mxu0 %v916
      %1228 = vmatprep.subr.bf16.mxu0 %v919
      %1229 = vmatpush1.bf16.msra.mxu0 %v918
      %1230 = vmatprep.mubr.bf16.mxu0 %v379
      %1231 = vmatmul.mubr.bf16.gmra.mrb[0].mxu0 %v378
      %v1232 = vpop.f32.mrb[0].mxu0
      %v1233 = vadd.f32 %v1190, %v1232
      %v1234 = vpop.f32.mrb[0].mxu0
      %v1235 = vadd.f32 %v1192, %v1234
      %v1236 = vpop.f32.mrb[0].mxu0
      %v1237 = vadd.f32 %v1194, %v1236
      %v1238 = vpop.f32.mrb[0].mxu0
      %v1239 = vadd.f32 %v1196, %v1238
      %1240 = vdwg.mxu0
      %1241 = vmatprep.subr.bf16.mxu0 %v921
      %1242 = vmatpush1.bf16.msra.mxu0 %v920
      %1243 = vmatprep.subr.bf16.mxu0 %v923
      %1244 = vmatpush1.bf16.msra.mxu0 %v922
      %1245 = vmatprep.subr.bf16.mxu0 %v925
      %1246 = vmatpush1.bf16.msra.mxu0 %v924
      %1247 = vmatprep.subr.bf16.mxu0 %v927
      %1248 = vmatpush1.bf16.msra.mxu0 %v926
      %1249 = vmatprep.subr.bf16.mxu0 %v929
      %1250 = vmatpush1.bf16.msra.mxu0 %v928
      %1251 = vmatprep.subr.bf16.mxu0 %v931
      %1252 = vmatpush1.bf16.msra.mxu0 %v930
      %1253 = vmatprep.subr.bf16.mxu0 %v933
      %1254 = vmatpush1.bf16.msra.mxu0 %v932
      %1255 = vmatprep.subr.bf16.mxu0 %v935
      %1256 = vmatpush1.bf16.msra.mxu0 %v934
      %1257 = vmatprep.subr.bf16.mxu0 %v937
      %1258 = vmatpush1.bf16.msra.mxu0 %v936
      %1259 = vmatprep.subr.bf16.mxu0 %v939
      %1260 = vmatpush1.bf16.msra.mxu0 %v938
      %1261 = vmatprep.subr.bf16.mxu0 %v941
      %1262 = vmatpush1.bf16.msra.mxu0 %v940
      %1263 = vmatprep.subr.bf16.mxu0 %v943
      %1264 = vmatpush1.bf16.msra.mxu0 %v942
      %1265 = vmatprep.subr.bf16.mxu0 %v945
      %1266 = vmatpush1.bf16.msra.mxu0 %v944
      %1267 = vmatprep.subr.bf16.mxu0 %v947
      %1268 = vmatpush1.bf16.msra.mxu0 %v946
      %1269 = vmatprep.subr.bf16.mxu0 %v949
      %1270 = vmatpush1.bf16.msra.mxu0 %v948
      %1271 = vmatprep.subr.bf16.mxu0 %v951
      %1272 = vmatpush1.bf16.msra.mxu0 %v950
      %1273 = vmatprep.mubr.bf16.mxu0 %v381
      %1274 = vmatmul.mubr.bf16.gmra.mrb[0].mxu0 %v380
      %v1275 = vpop.f32.mrb[0].mxu0
      %v1276 = vadd.f32 %v1233, %v1275
      %v1277 = vpop.f32.mrb[0].mxu0
      %v1278 = vadd.f32 %v1235, %v1277
      %v1279 = vpop.f32.mrb[0].mxu0
      %v1280 = vadd.f32 %v1237, %v1279
      %v1281 = vpop.f32.mrb[0].mxu0
      %v1282 = vadd.f32 %v1239, %v1281
      %1283 = vdwg.mxu0
      %1284 = vmatprep.subr.bf16.mxu0 %v953
      %1285 = vmatpush1.bf16.msra.mxu0 %v952
      %1286 = vmatprep.subr.bf16.mxu0 %v955
      %1287 = vmatpush1.bf16.msra.mxu0 %v954
      %1288 = vmatprep.subr.bf16.mxu0 %v957
      %1289 = vmatpush1.bf16.msra.mxu0 %v956
      %1290 = vmatprep.subr.bf16.mxu0 %v959
      %1291 = vmatpush1.bf16.msra.mxu0 %v958
      %1292 = vmatprep.subr.bf16.mxu0 %v961
      %1293 = vmatpush1.bf16.msra.mxu0 %v960
      %1294 = vmatprep.subr.bf16.mxu0 %v963
      %1295 = vmatpush1.bf16.msra.mxu0 %v962
      %1296 = vmatprep.subr.bf16.mxu0 %v965
      %1297 = vmatpush1.bf16.msra.mxu0 %v964
      %1298 = vmatprep.subr.bf16.mxu0 %v967
      %1299 = vmatpush1.bf16.msra.mxu0 %v966
      %1300 = vmatprep.subr.bf16.mxu0 0
      %1301 = vmatpush1.bf16.msra.mxu0 0
      %1302 = vmatprep.subr.bf16.mxu0 0
      %1303 = vmatpush1.bf16.msra.mxu0 0
      %1304 = vmatprep.subr.bf16.mxu0 0
      %1305 = vmatpush1.bf16.msra.mxu0 0
      %1306 = vmatprep.subr.bf16.mxu0 0
      %1307 = vmatpush1.bf16.msra.mxu0 0
      %1308 = vmatprep.subr.bf16.mxu0 0
      %1309 = vmatpush1.bf16.msra.mxu0 0
      %1310 = vmatprep.subr.bf16.mxu0 0
      %1311 = vmatpush1.bf16.msra.mxu0 0
      %1312 = vmatprep.subr.bf16.mxu0 0
      %1313 = vmatpush1.bf16.msra.mxu0 0
      %1314 = vmatprep.subr.bf16.mxu0 0
      %1315 = vmatpush1.bf16.msra.mxu0 0
      %1316 = vmatprep.mubr.bf16.mxu0 0
      %1317 = vmatmul.mubr.bf16.gmra.mrb[0].mxu0 %v382
      %v1318 = vpop.f32.mrb[0].mxu0
      %v1319 = vadd.f32 %v1276, %v1318
      %v1320 = vpop.f32.mrb[0].mxu0
      %v1321 = vadd.f32 %v1278, %v1320
      %v1322 = vpop.f32.mrb[0].mxu0
      %v1323 = vadd.f32 %v1280, %v1322
      %v1324 = vpop.f32.mrb[0].mxu0
      %v1325 = vadd.f32 %v1282, %v1324
      %1326 = vdwg.mxu0
      %v1327 = vmax.f32 %v1319, 0.0
      %v1328 = vmax.f32 %v1321, 0.0
      %v1329 = vmax.f32 %v1323, 0.0
      %v1330 = vmax.f32 %v1325, 0.0
      %v1331 = vpack.c.bf16 %v1329, %v1327
      %v1332 = vpack.c.bf16 %v1330, %v1328
      %v1335 = vunpack.c.l.b16 %v1331
      %v1336 = vunpack.c.l.b16 %v1332
      %v1337 = vunpack.c.h.b16 %v1331
      %v1338 = vunpack.c.h.b16 %v1332
      %v1339 = vpack.c.b16 %v1336, %v1335
      %v1340 = vpack.c.b16 %v1338, %v1337
      %1343 = vst [vmem:[%s177] sm:$0xff] %v1339
      %1344 = vst [vmem:[%s177 + $0x8] sm:$0xff] %v1340
      %s1345 = smul.u32 2, %s14
      %p1346 = scmp.lt.s32.totalorder %s1345, 3
      %s1347 = scalar_select %p1346, %s1345, 3
      %s1348 = smul.addr %s1347, 2
      %s1349 = smul.addr %s1348, 4
      %s1350 = scalar_lea.vmem %s3, %s1349
      // Predicated region
      $region33: #{conv_deconv_vqvae_forward.15} parent=31 // pred_check
        %p1351 = pneg %p100
      $region34: #{conv_deconv_vqvae_forward.15} parent=31 // pred_check_branch
        %1353 = sbr.rel (%p1351) target = $region36
      $region35: #{conv_deconv_vqvae_forward.15} parent=31 // pred_region
        %s1354 = smul.u32 2, %s14
      $region36: #{conv_deconv_vqvae_forward.15} parent=31 // pred_fallthru
        _
    $region32: #{conv_deconv_vqvae_forward.15} parent=5 // pred_fallthru
      _
    %p1355 = scmp.le.s32.totalorder 2, %s9
    // Predicated region
    $region37: #{conv_deconv_vqvae_forward.15} parent=5 // pred_check
      %p1356 = pneg %p1355
    $region38: #{conv_deconv_vqvae_forward.15} parent=5 // pred_check_branch
      %1358 = sbr.rel (%p1356) target = $region40
    $region39: #{conv_deconv_vqvae_forward.15} parent=5 // pred_region
      %s1359 = ssub.s32 %s9, 2
      // Predicated region
      $region41: #{conv_deconv_vqvae_forward.15} parent=39 // pred_check
        %p1360 = pneg %p106
      $region42: #{conv_deconv_vqvae_forward.15} parent=39 // pred_check_branch
        %1362 = sbr.rel (%p1360) target = $region44
      $region43: #{conv_deconv_vqvae_forward.15} parent=39 // pred_region
        %s1363 = smul.u32 2, %s15
        %p1364 = scmp.lt.s32.totalorder %s1363, 3
        %s1365 = scalar_select %p1364, %s1363, 3
        %s1366 = smul.addr %s1365, 2
        %s1367 = smul.addr %s1366, 4
        %s1368 = scalar_lea.vmem %s3, %s1367
      $region44: #{conv_deconv_vqvae_forward.15} parent=39 // pred_fallthru
        _
    $region40: #{conv_deconv_vqvae_forward.15} parent=5 // pred_fallthru
      _
  $region6: #{conv_deconv_vqvae_forward.15} parent=0 // loop_footer
    %s13 = sadd.s32 1, %s9
  $region7: #{conv_deconv_vqvae_forward.15} parent=0 // loop_footer_branch
    %8 = sbr.rel target = $region3
  $region8: #{conv_deconv_vqvae_forward.15} parent=0 // loop_exit
    _

// kernel: conv_deconv_vqvae_forward.16
$region0: #{conv_deconv_vqvae_forward.16}
  #allocation0 [shape = 'u32[]', space=smem, size = 0x4, offset = 0x4, fixed_abs, tag = 'smem constant byte address 0x4 - core index']
  #allocation1 [shape = 'u32[144,128]{1,0:T(1,128)}', space=vmem, size = 0x12000, scoped, tag = 'internal scratch']
  %s0 = inlined_call_operand.vmem [shape: bf16[128,576], index: 0, kind: input, shape index: {}]
  %s1 = inlined_call_operand.vmem [shape: bf16[576,128], index: 1, kind: input, shape index: {}]
  %s2 = inlined_call_operand.vmem [shape: f32[1,128], index: 2, kind: input, shape index: {}]
  %s3 = inlined_call_operand.vmem [shape: bf16[128,128], index: 3, kind: output, shape index: {}]
  %s4 = sld [smem:[#allocation0]]
  $region45: #{conv_deconv_vqvae_forward.16} parent=0
    _
  %s6 = ssub.s32 1, %s4
  %s7 = scalar_select 0, %s6, %s4
  loop: start=0, step=1, limit=4
  $region2: #{conv_deconv_vqvae_forward.16} parent=0 // loop_pre_header
    _
  $region3: #{conv_deconv_vqvae_forward.16} parent=0 // loop_header
    %s9 = sphi 0, %s13
    %p10 = scmp.ge.s32.totalorder %s9, 4
    %s19 = sphi 0, %s21
    %s22 = sphi 0, %s19
    %s23 = sphi 0, %s22
    %s39 = sphi 0, %s23
    %s43 = sphi 0, %s43
    %s45 = sphi 0, %s43
    %s46 = sphi 0, %s45
    %s60 = sphi 0, %s46
    %s64 = sphi 0, %s64
    %s66 = sphi 0, %s64
    %s67 = sphi 0, %s66
    %s81 = sphi 0, %s67
    %s87 = sphi 0, %s89
    %s90 = sphi 0, %s87
    %s91 = sphi 0, %s90
    %s107 = sphi 0, %s91
  $region4: #{conv_deconv_vqvae_forward.16} parent=0 // loop_header_branch
    %12 = sbr.rel (%p10) target = $region8
  $region5: #{conv_deconv_vqvae_forward.16} parent=0 // loop_body
    %s14 = ssub.s32 %s9, 1
    %s15 = ssub.s32 %s9, 2
    %s16 = sadd.s32 %s9, 1
    %s17 = ssub.s32 %s9, %s16
    %p18 = scmp.eq.s32.totalorder %s17, 0
    %s20 = sadd.s32 %s19, 1
    %s21 = scalar_select %p18, %s19, %s20
    %p24 = pneg %p18
    %p25 = scmp.eq.s32.totalorder %s9, 1
    %p26 = por %p24, %p25
    %p27 = scmp.ne.s32.totalorder %s19, %s22
    %p28 = scmp.eq.s32.totalorder %s9, 0
    %p29 = por %p27, %p28
    %p30 = scmp.ne.s32.totalorder %s19, %s22
    %p31 = scmp.eq.s32.totalorder %s14, 1
    %p32 = por %p30, %p31
    %p33 = scmp.ne.s32.totalorder %s22, %s23
    %p34 = scmp.eq.s32.totalorder %s14, 0
    %p35 = por %p33, %p34
    %p36 = scmp.ne.s32.totalorder %s22, %s23
    %p37 = scmp.eq.s32.totalorder %s15, 1
    %p38 = por %p36, %p37
    %p40 = scmp.ne.s32.totalorder %s23, %s39
    %p41 = scmp.eq.s32.totalorder %s15, 0
    %p42 = por %p40, %p41
    %s44 = sadd.s32 %s43, 1
    %p47 = scmp.eq.s32.totalorder %s9, 1
    %p48 = scmp.ne.s32.totalorder %s43, %s45
    %p49 = scmp.eq.s32.totalorder %s9, 0
    %p50 = por %p48, %p49
    %p51 = scmp.ne.s32.totalorder %s43, %s45
    %p52 = scmp.eq.s32.totalorder %s14, 1
    %p53 = por %p51, %p52
    %p54 = scmp.ne.s32.totalorder %s45, %s46
    %p55 = scmp.eq.s32.totalorder %s14, 0
    %p56 = por %p54, %p55
    %p57 = scmp.ne.s32.totalorder %s45, %s46
    %p58 = scmp.eq.s32.totalorder %s15, 1
    %p59 = por %p57, %p58
    %p61 = scmp.ne.s32.totalorder %s46, %s60
    %p62 = scmp.eq.s32.totalorder %s15, 0
    %p63 = por %p61, %p62
    %s65 = sadd.s32 %s64, 1
    %p68 = scmp.eq.s32.totalorder %s9, 1
    %p69 = scmp.ne.s32.totalorder %s64, %s66
    %p70 = scmp.eq.s32.totalorder %s9, 0
    %p71 = por %p69, %p70
    %p72 = scmp.ne.s32.totalorder %s64, %s66
    %p73 = scmp.eq.s32.totalorder %s14, 1
    %p74 = por %p72, %p73
    %p75 = scmp.ne.s32.totalorder %s66, %s67
    %p76 = scmp.eq.s32.totalorder %s14, 0
    %p77 = por %p75, %p76
    %p78 = scmp.ne.s32.totalorder %s66, %s67
    %p79 = scmp.eq.s32.totalorder %s15, 1
    %p80 = por %p78, %p79
    %p82 = scmp.ne.s32.totalorder %s67, %s81
    %p83 = scmp.eq.s32.totalorder %s15, 0
    %p84 = por %p82, %p83
    %s85 = ssub.s32 %s9, %s16
    %p86 = scmp.eq.s32.totalorder %s85, 0
    %s88 = sadd.s32 %s87, 1
    %s89 = scalar_select %p86, %s87, %s88
    %p92 = pneg %p86
    %p93 = scmp.eq.s32.totalorder %s9, 1
    %p94 = por %p92, %p93
    %p95 = scmp.ne.s32.totalorder %s87, %s90
    %p96 = scmp.eq.s32.totalorder %s9, 0
    %p97 = por %p95, %p96
    %p98 = scmp.ne.s32.totalorder %s87, %s90
    %p99 = scmp.eq.s32.totalorder %s14, 1
    %p100 = por %p98, %p99
    %p101 = scmp.ne.s32.totalorder %s90, %s91
    %p102 = scmp.eq.s32.totalorder %s14, 0
    %p103 = por %p101, %p102
    %p104 = scmp.ne.s32.totalorder %s90, %s91
    %p105 = scmp.eq.s32.totalorder %s15, 1
    %p106 = por %p104, %p105
    %p108 = scmp.ne.s32.totalorder %s91, %s107
    %p109 = scmp.eq.s32.totalorder %s15, 0
    %p110 = por %p108, %p109
    %p111 = scmp.le.s32.totalorder 1, %s9
    %p112 = scmp.lt.s32.totalorder %s9, 3
    %p113 = pnand %p111, %p112
    %p114 = pneg %p113
    // Predicated region
    $region9: #{conv_deconv_vqvae_forward.16} parent=5 // pred_check
      _
    $region10: #{conv_deconv_vqvae_forward.16} parent=5 // pred_check_branch
      %116 = sbr.rel (%p113) target = $region12
    $region11: #{conv_deconv_vqvae_forward.16} parent=5 // pred_region
      %s117 = ssub.s32 %s9, 1
      // Predicated region
      $region13: #{conv_deconv_vqvae_forward.16} parent=11 // pred_check
        %p118 = pneg %p56
      $region14: #{conv_deconv_vqvae_forward.16} parent=11 // pred_check_branch
        %120 = sbr.rel (%p118) target = $region16
      $region15: #{conv_deconv_vqvae_forward.16} parent=11 // pred_region
        _
      $region16: #{conv_deconv_vqvae_forward.16} parent=11 // pred_fallthru
        _
      // Predicated region
      $region17: #{conv_deconv_vqvae_forward.16} parent=11 // pred_check
        %p121 = pneg %p77
      $region18: #{conv_deconv_vqvae_forward.16} parent=11 // pred_check_branch
        %123 = sbr.rel (%p121) target = $region20
      $region19: #{conv_deconv_vqvae_forward.16} parent=11 // pred_region
        _
      $region20: #{conv_deconv_vqvae_forward.16} parent=11 // pred_fallthru
        _
    $region12: #{conv_deconv_vqvae_forward.16} parent=5 // pred_fallthru
      _
    %p124 = scmp.lt.s32.totalorder %s9, 2
    // Predicated region
    $region21: #{conv_deconv_vqvae_forward.16} parent=5 // pred_check
      %p125 = pneg %p124
    $region22: #{conv_deconv_vqvae_forward.16} parent=5 // pred_check_branch
      %127 = sbr.rel (%p125) target = $region24
    $region23: #{conv_deconv_vqvae_forward.16} parent=5 // pred_region
      // Predicated region
      $region25: #{conv_deconv_vqvae_forward.16} parent=23 // pred_check
        %p128 = pneg %p29
      $region26: #{conv_deconv_vqvae_forward.16} parent=23 // pred_check_branch
        %130 = sbr.rel (%p128) target = $region28
      $region27: #{conv_deconv_vqvae_forward.16} parent=23 // pred_region
        %s131 = smul.u32 8, %s9
        %p132 = scmp.lt.s32.totalorder %s131, 15
        %s133 = scalar_select %p132, %s131, 15
        %s134 = smul.addr %s133, 5
        %s135 = smul.addr %s134, 4
        %s136 = scalar_lea.vmem %s0, %s135
        %s137 = smul.u32 8, %s9
      $region28: #{conv_deconv_vqvae_forward.16} parent=23 // pred_fallthru
        _
    $region24: #{conv_deconv_vqvae_forward.16} parent=5 // pred_fallthru
      _
    %p138 = scmp.le.s32.totalorder 1, %s9
    %p139 = scmp.lt.s32.totalorder %s9, 3
    %p140 = pnand %p138, %p139
    %p141 = pneg %p140
    // Predicated region
    $region29: #{conv_deconv_vqvae_forward.16} parent=5 // pred_check
      _
    $region30: #{conv_deconv_vqvae_forward.16} parent=5 // pred_check_branch
      %143 = sbr.rel (%p140) target = $region32
    $region31: #{conv_deconv_vqvae_forward.16} parent=5 // pred_region
      %s144 = ssub.s32 %s9, 1
      %s145 = smul.u32 8, %s14
      %p146 = scmp.lt.s32.totalorder %s145, 15
      %s147 = scalar_select %p146, %s145, 15
      %s148 = smul.addr %s147, 5
      %s149 = smul.addr %s148, 4
      %s150 = scalar_lea.vmem %s0, %s149
      %p151 = pneg %p35
      %p152 = pneg %p32
      %p153 = pneg %p56
      %p154 = pneg %p53
      %p155 = pneg %p77
      %p156 = pneg %p74
      %p157 = pneg %p103
      %p158 = pneg %p100
      %s159 = smul.u32 8, %s14
      %p160 = scmp.lt.s32.totalorder %s159, 15
      %s161 = scalar_select %p160, %s159, 15
      %s162 = smul.addr %s161, 4
      %s163 = scalar_lea.vmem %s3, %s162
      %s164 = smul.u32 8, %s14
      %p165 = scmp.lt.s32.totalorder %s164, 15
      %s166 = scalar_select %p165, %s164, 15
      %s167 = smul.addr %s166, 5
      %s168 = smul.addr %s167, 4
      %s169 = scalar_lea.vmem %s0, %s168
      %s170 = smul.u32 8, %s14
      %s171 = smul.u32 8, %s14
      %p172 = scmp.lt.s32.totalorder %s171, 15
      %s173 = scalar_select %p172, %s171, 15
      %s174 = smul.addr %s173, 4
      %s175 = scalar_lea.vmem %s3, %s174
      %s176 = smul.u32 8, %s14
      %v178 = vld [vmem:[%s169] sm:$0xff]
      %v179 = vld [vmem:[%s169 + $0x8] sm:$0xff]
      %v180 = vld [vmem:[%s169 + $0x10] sm:$0xf]
      %v181 = vld [vmem:[%s169 + $0x14] sm:$0xff]
      %v182 = vld [vmem:[%s169 + $0x1c] sm:$0xff]
      %v183 = vld [vmem:[%s169 + $0x24] sm:$0xf]
      %v184 = vld [vmem:[%s169 + $0x28] sm:$0xff]
      %v185 = vld [vmem:[%s169 + $0x30] sm:$0xff]
      %v186 = vld [vmem:[%s169 + $0x38] sm:$0xf]
      %v187 = vld [vmem:[%s169 + $0x3c] sm:$0xff]
      %v188 = vld [vmem:[%s169 + $0x44] sm:$0xff]
      %v189 = vld [vmem:[%s169 + $0x4c] sm:$0xf]
      %v190 = vld [vmem:[%s169 + $0x50] sm:$0xff]
      %v191 = vld [vmem:[%s169 + $0x58] sm:$0xff]
      %v192 = vld [vmem:[%s169 + $0x60] sm:$0xf]
      %v193 = vld [vmem:[%s169 + $0x64] sm:$0xff]
      %v194 = vld [vmem:[%s169 + $0x6c] sm:$0xff]
      %v195 = vld [vmem:[%s169 + $0x74] sm:$0xf]
      %v196 = vld [vmem:[%s169 + $0x78] sm:$0xff]
      %v197 = vld [vmem:[%s169 + $0x80] sm:$0xff]
      %v198 = vld [vmem:[%s169 + $0x88] sm:$0xf]
      %v199 = vld [vmem:[%s169 + $0x8c] sm:$0xff]
      %v200 = vld [vmem:[%s169 + $0x94] sm:$0xff]
      %v201 = vld [vmem:[%s169 + $0x9c] sm:$0xf]
      %v202 = vld [vmem:[%s1] sm:$0xf]
      %v203 = vld [vmem:[%s1 + $0x4] sm:$0xf]
      %v204 = vld [vmem:[%s1 + $0x8] sm:$0xf]
      %v205 = vld [vmem:[%s1 + $0xc] sm:$0xf]
      %v206 = vld [vmem:[%s1 + $0x10] sm:$0xf]
      %v207 = vld [vmem:[%s1 + $0x14] sm:$0xf]
      %v208 = vld [vmem:[%s1 + $0x18] sm:$0xf]
      %v209 = vld [vmem:[%s1 + $0x1c] sm:$0xf]
      %v210 = vld [vmem:[%s1 + $0x20] sm:$0xf]
      %v211 = vld [vmem:[%s1 + $0x24] sm:$0xf]
      %v212 = vld [vmem:[%s1 + $0x28] sm:$0xf]
      %v213 = vld [vmem:[%s1 + $0x2c] sm:$0xf]
      %v214 = vld [vmem:[%s1 + $0x30] sm:$0xf]
      %v215 = vld [vmem:[%s1 + $0x34] sm:$0xf]
      %v216 = vld [vmem:[%s1 + $0x38] sm:$0xf]
      %v217 = vld [vmem:[%s1 + $0x3c] sm:$0xf]
      %v218 = vld [vmem:[%s1 + $0x40] sm:$0xf]
      %v219 = vld [vmem:[%s1 + $0x44] sm:$0xf]
      %v220 = vld [vmem:[%s1 + $0x48] sm:$0xf]
      %v221 = vld [vmem:[%s1 + $0x4c] sm:$0xf]
      %v222 = vld [vmem:[%s1 + $0x50] sm:$0xf]
      %v223 = vld [vmem:[%s1 + $0x54] sm:$0xf]
      %v224 = vld [vmem:[%s1 + $0x58] sm:$0xf]
      %v225 = vld [vmem:[%s1 + $0x5c] sm:$0xf]
      %v226 = vld [vmem:[%s1 + $0x60] sm:$0xf]
      %v227 = vld [vmem:[%s1 + $0x64] sm:$0xf]
      %v228 = vld [vmem:[%s1 + $0x68] sm:$0xf]
      %v229 = vld [vmem:[%s1 + $0x6c] sm:$0xf]
      %v230 = vld [vmem:[%s1 + $0x70] sm:$0xf]
      %v231 = vld [vmem:[%s1 + $0x74] sm:$0xf]
      %v232 = vld [vmem:[%s1 + $0x78] sm:$0xf]
      %v233 = vld [vmem:[%s1 + $0x7c] sm:$0xf]
      %v234 = vld [vmem:[%s1 + $0x80] sm:$0xf]
      %v235 = vld [vmem:[%s1 + $0x84] sm:$0xf]
      %v236 = vld [vmem:[%s1 + $0x88] sm:$0xf]
      %v237 = vld [vmem:[%s1 + $0x8c] sm:$0xf]
      %v238 = vld [vmem:[%s1 + $0x90] sm:$0xf]
      %v239 = vld [vmem:[%s1 + $0x94] sm:$0xf]
      %v240 = vld [vmem:[%s1 + $0x98] sm:$0xf]
      %v241 = vld [vmem:[%s1 + $0x9c] sm:$0xf]
      %v242 = vld [vmem:[%s1 + $0xa0] sm:$0xf]
      %v243 = vld [vmem:[%s1 + $0xa4] sm:$0xf]
      %v244 = vld [vmem:[%s1 + $0xa8] sm:$0xf]
      %v245 = vld [vmem:[%s1 + $0xac] sm:$0xf]
      %v246 = vld [vmem:[%s1 + $0xb0] sm:$0xf]
      %v247 = vld [vmem:[%s1 + $0xb4] sm:$0xf]
      %v248 = vld [vmem:[%s1 + $0xb8] sm:$0xf]
      %v249 = vld [vmem:[%s1 + $0xbc] sm:$0xf]
      %v250 = vld [vmem:[%s1 + $0xc0] sm:$0xf]
      %v251 = vld [vmem:[%s1 + $0xc4] sm:$0xf]
      %v252 = vld [vmem:[%s1 + $0xc8] sm:$0xf]
      %v253 = vld [vmem:[%s1 + $0xcc] sm:$0xf]
      %v254 = vld [vmem:[%s1 + $0xd0] sm:$0xf]
      %v255 = vld [vmem:[%s1 + $0xd4] sm:$0xf]
      %v256 = vld [vmem:[%s1 + $0xd8] sm:$0xf]
      %v257 = vld [vmem:[%s1 + $0xdc] sm:$0xf]
      %v258 = vld [vmem:[%s1 + $0xe0] sm:$0xf]
      %v259 = vld [vmem:[%s1 + $0xe4] sm:$0xf]
      %v260 = vld [vmem:[%s1 + $0xe8] sm:$0xf]
      %v261 = vld [vmem:[%s1 + $0xec] sm:$0xf]
      %v262 = vld [vmem:[%s1 + $0xf0] sm:$0xf]
      %v263 = vld [vmem:[%s1 + $0xf4] sm:$0xf]
      %v264 = vld [vmem:[%s1 + $0xf8] sm:$0xf]
      %v265 = vld [vmem:[%s1 + $0xfc] sm:$0xf]
      %v266 = vld [vmem:[%s1 + $0x100] sm:$0xf]
      %v267 = vld [vmem:[%s1 + $0x104] sm:$0xf]
      %v268 = vld [vmem:[%s1 + $0x108] sm:$0xf]
      %v269 = vld [vmem:[%s1 + $0x10c] sm:$0xf]
      %v270 = vld [vmem:[%s1 + $0x110] sm:$0xf]
      %v271 = vld [vmem:[%s1 + $0x114] sm:$0xf]
      %v272 = vld [vmem:[%s1 + $0x118] sm:$0xf]
      %v273 = vld [vmem:[%s1 + $0x11c] sm:$0xf]
      %v274 = vld [vmem:[%s2] sm:$0x1]
      %v276 = vlaneseq
      %v277 = vshrl.u32 %v276, 7
      %v278 = vsub.s32 0, %v277
      %v279 = vrot.slane %v274, %v278
      %v305 = vunpack.c.l.b16 %v178
      %v306 = vunpack.c.h.b16 %v178
      %v307 = vunpack.c.l.b16 %v179
      %v308 = vunpack.c.h.b16 %v179
      %v309 = vunpack.c.l.b16 %v180
      %v310 = vunpack.c.l.b16 %v181
      %v311 = vunpack.c.h.b16 %v181
      %v312 = vunpack.c.l.b16 %v182
      %v313 = vunpack.c.h.b16 %v182
      %v314 = vunpack.c.l.b16 %v183
      %v315 = vunpack.c.l.b16 %v184
      %v316 = vunpack.c.h.b16 %v184
      %v317 = vunpack.c.l.b16 %v185
      %v318 = vunpack.c.h.b16 %v185
      %v319 = vunpack.c.l.b16 %v186
      %v320 = vunpack.c.l.b16 %v187
      %v321 = vunpack.c.h.b16 %v187
      %v322 = vunpack.c.l.b16 %v188
      %v323 = vunpack.c.h.b16 %v188
      %v324 = vunpack.c.l.b16 %v189
      %v325 = vunpack.c.l.b16 %v190
      %v326 = vunpack.c.h.b16 %v190
      %v327 = vunpack.c.l.b16 %v191
      %v328 = vunpack.c.h.b16 %v191
      %v329 = vunpack.c.l.b16 %v192
      %v330 = vunpack.c.l.b16 %v193
      %v331 = vunpack.c.h.b16 %v193
      %v332 = vunpack.c.l.b16 %v194
      %v333 = vunpack.c.h.b16 %v194
      %v334 = vunpack.c.l.b16 %v195
      %v335 = vunpack.c.l.b16 %v196
      %v336 = vunpack.c.h.b16 %v196
      %v337 = vunpack.c.l.b16 %v197
      %v338 = vunpack.c.h.b16 %v197
      %v339 = vunpack.c.l.b16 %v198
      %v340 = vunpack.c.l.b16 %v199
      %v341 = vunpack.c.h.b16 %v199
      %v342 = vunpack.c.l.b16 %v200
      %v343 = vunpack.c.h.b16 %v200
      %v344 = vunpack.c.l.b16 %v201
      %v345 = vpack.c.b16 %v310, %v305
      %v346 = vpack.c.b16 %v311, %v306
      %v347 = vpack.c.b16 %v312, %v307
      %v348 = vpack.c.b16 %v313, %v308
      %v349 = vpack.c.b16 %v314, %v309
      %v350 = vpack.c.b16 %v320, %v315
      %v351 = vpack.c.b16 %v321, %v316
      %v352 = vpack.c.b16 %v322, %v317
      %v353 = vpack.c.b16 %v323, %v318
      %v354 = vpack.c.b16 %v324, %v319
      %v355 = vpack.c.b16 %v330, %v325
      %v356 = vpack.c.b16 %v331, %v326
      %v357 = vpack.c.b16 %v332, %v327
      %v358 = vpack.c.b16 %v333, %v328
      %v359 = vpack.c.b16 %v334, %v329
      %v360 = vpack.c.b16 %v340, %v335
      %v361 = vpack.c.b16 %v341, %v336
      %v362 = vpack.c.b16 %v342, %v337
      %v363 = vpack.c.b16 %v343, %v338
      %v364 = vpack.c.b16 %v344, %v339
      %v453 = vunpack.c.l.b16 %v202
      %v454 = vunpack.c.l.b16 %v203
      %v455 = vunpack.c.l.b16 %v204
      %v456 = vunpack.c.l.b16 %v205
      %v457 = vunpack.c.l.b16 %v206
      %v458 = vunpack.c.l.b16 %v207
      %v459 = vunpack.c.l.b16 %v208
      %v460 = vunpack.c.l.b16 %v209
      %v461 = vunpack.c.l.b16 %v210
      %v462 = vunpack.c.l.b16 %v211
      %v463 = vunpack.c.l.b16 %v212
      %v464 = vunpack.c.l.b16 %v213
      %v465 = vunpack.c.l.b16 %v214
      %v466 = vunpack.c.l.b16 %v215
      %v467 = vunpack.c.l.b16 %v216
      %v468 = vunpack.c.l.b16 %v217
      %v469 = vunpack.c.l.b16 %v218
      %v470 = vunpack.c.l.b16 %v219
      %v471 = vunpack.c.l.b16 %v220
      %v472 = vunpack.c.l.b16 %v221
      %v473 = vunpack.c.l.b16 %v222
      %v474 = vunpack.c.l.b16 %v223
      %v475 = vunpack.c.l.b16 %v224
      %v476 = vunpack.c.l.b16 %v225
      %v477 = vunpack.c.l.b16 %v226
      %v478 = vunpack.c.l.b16 %v227
      %v479 = vunpack.c.l.b16 %v228
      %v480 = vunpack.c.l.b16 %v229
      %v481 = vunpack.c.l.b16 %v230
      %v482 = vunpack.c.l.b16 %v231
      %v483 = vunpack.c.l.b16 %v232
      %v484 = vunpack.c.l.b16 %v233
      %v485 = vunpack.c.l.b16 %v234
      %v486 = vunpack.c.l.b16 %v235
      %v487 = vunpack.c.l.b16 %v236
      %v488 = vunpack.c.l.b16 %v237
      %v489 = vunpack.c.l.b16 %v238
      %v490 = vunpack.c.l.b16 %v239
      %v491 = vunpack.c.l.b16 %v240
      %v492 = vunpack.c.l.b16 %v241
      %v493 = vunpack.c.l.b16 %v242
      %v494 = vunpack.c.l.b16 %v243
      %v495 = vunpack.c.l.b16 %v244
      %v496 = vunpack.c.l.b16 %v245
      %v497 = vunpack.c.l.b16 %v246
      %v498 = vunpack.c.l.b16 %v247
      %v499 = vunpack.c.l.b16 %v248
      %v500 = vunpack.c.l.b16 %v249
      %v501 = vunpack.c.l.b16 %v250
      %v502 = vunpack.c.l.b16 %v251
      %v503 = vunpack.c.l.b16 %v252
      %v504 = vunpack.c.l.b16 %v253
      %v505 = vunpack.c.l.b16 %v254
      %v506 = vunpack.c.l.b16 %v255
      %v507 = vunpack.c.l.b16 %v256
      %v508 = vunpack.c.l.b16 %v257
      %v509 = vunpack.c.l.b16 %v258
      %v510 = vunpack.c.l.b16 %v259
      %v511 = vunpack.c.l.b16 %v260
      %v512 = vunpack.c.l.b16 %v261
      %v513 = vunpack.c.l.b16 %v262
      %v514 = vunpack.c.l.b16 %v263
      %v515 = vunpack.c.l.b16 %v264
      %v516 = vunpack.c.l.b16 %v265
      %v517 = vunpack.c.l.b16 %v266
      %v518 = vunpack.c.l.b16 %v267
      %v519 = vunpack.c.l.b16 %v268
      %v520 = vunpack.c.l.b16 %v269
      %v521 = vunpack.c.l.b16 %v270
      %v522 = vunpack.c.l.b16 %v271
      %v523 = vunpack.c.l.b16 %v272
      %v524 = vunpack.c.l.b16 %v273
      %v525 = vpack.c.b16 %v454, %v453
      %v526 = vpack.c.b16 %v456, %v455
      %v527 = vpack.c.b16 %v458, %v457
      %v528 = vpack.c.b16 %v460, %v459
      %v529 = vpack.c.b16 %v462, %v461
      %v530 = vpack.c.b16 %v464, %v463
      %v531 = vpack.c.b16 %v466, %v465
      %v532 = vpack.c.b16 %v468, %v467
      %v533 = vpack.c.b16 %v470, %v469
      %v534 = vpack.c.b16 %v472, %v471
      %v535 = vpack.c.b16 %v474, %v473
      %v536 = vpack.c.b16 %v476, %v475
      %v537 = vpack.c.b16 %v478, %v477
      %v538 = vpack.c.b16 %v480, %v479
      %v539 = vpack.c.b16 %v482, %v481
      %v540 = vpack.c.b16 %v484, %v483
      %v541 = vpack.c.b16 %v486, %v485
      %v542 = vpack.c.b16 %v488, %v487
      %v543 = vpack.c.b16 %v490, %v489
      %v544 = vpack.c.b16 %v492, %v491
      %v545 = vpack.c.b16 %v494, %v493
      %v546 = vpack.c.b16 %v496, %v495
      %v547 = vpack.c.b16 %v498, %v497
      %v548 = vpack.c.b16 %v500, %v499
      %v549 = vpack.c.b16 %v502, %v501
      %v550 = vpack.c.b16 %v504, %v503
      %v551 = vpack.c.b16 %v506, %v505
      %v552 = vpack.c.b16 %v508, %v507
      %v553 = vpack.c.b16 %v510, %v509
      %v554 = vpack.c.b16 %v512, %v511
      %v555 = vpack.c.b16 %v514, %v513
      %v556 = vpack.c.b16 %v516, %v515
      %v557 = vpack.c.b16 %v518, %v517
      %v558 = vpack.c.b16 %v520, %v519
      %v559 = vpack.c.b16 %v522, %v521
      %v560 = vpack.c.b16 %v524, %v523
      %vm597 = vcmask 523264
      %v599 = vsel %vm597, %v349, 0
      %v602 = vsel %vm597, %v354, 0
      %v605 = vsel %vm597, %v359, 0
      %v608 = vsel %vm597, %v364, 0
      %610 = vmatprep.subr.bf16.mxu0 0
      %611 = vmatpush1.bf16.msra.mxu0 %v525
      %612 = vmatprep.subr.bf16.mxu0 0
      %613 = vmatpush1.bf16.msra.mxu0 %v526
      %614 = vmatprep.subr.bf16.mxu0 0
      %615 = vmatpush1.bf16.msra.mxu0 %v527
      %616 = vmatprep.subr.bf16.mxu0 0
      %617 = vmatpush1.bf16.msra.mxu0 %v528
      %618 = vmatprep.subr.bf16.mxu0 0
      %619 = vmatpush1.bf16.msra.mxu0 %v529
      %620 = vmatprep.subr.bf16.mxu0 0
      %621 = vmatpush1.bf16.msra.mxu0 %v530
      %622 = vmatprep.subr.bf16.mxu0 0
      %623 = vmatpush1.bf16.msra.mxu0 %v531
      %624 = vmatprep.subr.bf16.mxu0 0
      %625 = vmatpush1.bf16.msra.mxu0 %v532
      %626 = vmatprep.subr.bf16.mxu0 0
      %627 = vmatpush1.bf16.msra.mxu0 %v533
      %628 = vmatprep.subr.bf16.mxu0 0
      %629 = vmatpush1.bf16.msra.mxu0 %v534
      %630 = vmatprep.subr.bf16.mxu0 0
      %631 = vmatpush1.bf16.msra.mxu0 %v535
      %632 = vmatprep.subr.bf16.mxu0 0
      %633 = vmatpush1.bf16.msra.mxu0 %v536
      %634 = vmatprep.subr.bf16.mxu0 0
      %635 = vmatpush1.bf16.msra.mxu0 %v537
      %636 = vmatprep.subr.bf16.mxu0 0
      %637 = vmatpush1.bf16.msra.mxu0 %v538
      %638 = vmatprep.subr.bf16.mxu0 0
      %639 = vmatpush1.bf16.msra.mxu0 %v539
      %640 = vmatprep.subr.bf16.mxu0 0
      %641 = vmatpush1.bf16.msra.mxu0 %v540
      %642 = vmatprep.mubr.bf16.mxu0 %v346
      %643 = vmatmul.mubr.bf16.gmra.mrb[0].mxu0 %v345
      %v644 = vpop.f32.mrb[0].mxu0
      %v645 = vadd.f32 %v279, %v644
      %v646 = vpop.f32.mrb[0].mxu0
      %v647 = vpop.f32.mrb[0].mxu0
      %v648 = vadd.f32 %v279, %v647
      %v649 = vpop.f32.mrb[0].mxu0
      %650 = vmatprep.mubr.bf16.mxu0 %v351
      %651 = vmatmul.mubr.bf16.gmra.mrb[0].mxu0 %v350
      %v652 = vpop.f32.mrb[0].mxu0
      %v653 = vadd.f32 %v279, %v652
      %v654 = vpop.f32.mrb[0].mxu0
      %v655 = vpop.f32.mrb[0].mxu0
      %v656 = vadd.f32 %v279, %v655
      %v657 = vpop.f32.mrb[0].mxu0
      %658 = vmatprep.mubr.bf16.mxu0 %v356
      %659 = vmatmul.mubr.bf16.gmra.mrb[0].mxu0 %v355
      %v660 = vpop.f32.mrb[0].mxu0
      %v661 = vadd.f32 %v279, %v660
      %v662 = vpop.f32.mrb[0].mxu0
      %v663 = vpop.f32.mrb[0].mxu0
      %v664 = vadd.f32 %v279, %v663
      %v665 = vpop.f32.mrb[0].mxu0
      %666 = vmatprep.mubr.bf16.mxu0 %v361
      %667 = vmatmul.mubr.bf16.gmra.mrb[0].mxu0 %v360
      %v668 = vpop.f32.mrb[0].mxu0
      %v669 = vadd.f32 %v279, %v668
      %v670 = vpop.f32.mrb[0].mxu0
      %v671 = vpop.f32.mrb[0].mxu0
      %v672 = vadd.f32 %v279, %v671
      %v673 = vpop.f32.mrb[0].mxu0
      %674 = vdwg.mxu0
      %675 = vmatprep.subr.bf16.mxu0 0
      %676 = vmatpush1.bf16.msra.mxu0 %v541
      %677 = vmatprep.subr.bf16.mxu0 0
      %678 = vmatpush1.bf16.msra.mxu0 %v542
      %679 = vmatprep.subr.bf16.mxu0 0
      %680 = vmatpush1.bf16.msra.mxu0 %v543
      %681 = vmatprep.subr.bf16.mxu0 0
      %682 = vmatpush1.bf16.msra.mxu0 %v544
      %683 = vmatprep.subr.bf16.mxu0 0
      %684 = vmatpush1.bf16.msra.mxu0 %v545
      %685 = vmatprep.subr.bf16.mxu0 0
      %686 = vmatpush1.bf16.msra.mxu0 %v546
      %687 = vmatprep.subr.bf16.mxu0 0
      %688 = vmatpush1.bf16.msra.mxu0 %v547
      %689 = vmatprep.subr.bf16.mxu0 0
      %690 = vmatpush1.bf16.msra.mxu0 %v548
      %691 = vmatprep.subr.bf16.mxu0 0
      %692 = vmatpush1.bf16.msra.mxu0 %v549
      %693 = vmatprep.subr.bf16.mxu0 0
      %694 = vmatpush1.bf16.msra.mxu0 %v550
      %695 = vmatprep.subr.bf16.mxu0 0
      %696 = vmatpush1.bf16.msra.mxu0 %v551
      %697 = vmatprep.subr.bf16.mxu0 0
      %698 = vmatpush1.bf16.msra.mxu0 %v552
      %699 = vmatprep.subr.bf16.mxu0 0
      %700 = vmatpush1.bf16.msra.mxu0 %v553
      %701 = vmatprep.subr.bf16.mxu0 0
      %702 = vmatpush1.bf16.msra.mxu0 %v554
      %703 = vmatprep.subr.bf16.mxu0 0
      %704 = vmatpush1.bf16.msra.mxu0 %v555
      %705 = vmatprep.subr.bf16.mxu0 0
      %706 = vmatpush1.bf16.msra.mxu0 %v556
      %707 = vmatprep.mubr.bf16.mxu0 %v348
      %708 = vmatmul.mubr.bf16.gmra.mrb[0].mxu0 %v347
      %v709 = vpop.f32.mrb[0].mxu0
      %v710 = vadd.f32 %v645, %v709
      %v711 = vpop.f32.mrb[0].mxu0
      %v712 = vpop.f32.mrb[0].mxu0
      %v713 = vadd.f32 %v648, %v712
      %v714 = vpop.f32.mrb[0].mxu0
      %715 = vmatprep.mubr.bf16.mxu0 %v353
      %716 = vmatmul.mubr.bf16.gmra.mrb[0].mxu0 %v352
      %v717 = vpop.f32.mrb[0].mxu0
      %v718 = vadd.f32 %v653, %v717
      %v719 = vpop.f32.mrb[0].mxu0
      %v720 = vpop.f32.mrb[0].mxu0
      %v721 = vadd.f32 %v656, %v720
      %v722 = vpop.f32.mrb[0].mxu0
      %723 = vmatprep.mubr.bf16.mxu0 %v358
      %724 = vmatmul.mubr.bf16.gmra.mrb[0].mxu0 %v357
      %v725 = vpop.f32.mrb[0].mxu0
      %v726 = vadd.f32 %v661, %v725
      %v727 = vpop.f32.mrb[0].mxu0
      %v728 = vpop.f32.mrb[0].mxu0
      %v729 = vadd.f32 %v664, %v728
      %v730 = vpop.f32.mrb[0].mxu0
      %731 = vmatprep.mubr.bf16.mxu0 %v363
      %732 = vmatmul.mubr.bf16.gmra.mrb[0].mxu0 %v362
      %v733 = vpop.f32.mrb[0].mxu0
      %v734 = vadd.f32 %v669, %v733
      %v735 = vpop.f32.mrb[0].mxu0
      %v736 = vpop.f32.mrb[0].mxu0
      %v737 = vadd.f32 %v672, %v736
      %v738 = vpop.f32.mrb[0].mxu0
      %739 = vdwg.mxu0
      %740 = vmatprep.subr.bf16.mxu0 0
      %741 = vmatpush1.bf16.msra.mxu0 %v557
      %742 = vmatprep.subr.bf16.mxu0 0
      %743 = vmatpush1.bf16.msra.mxu0 %v558
      %744 = vmatprep.subr.bf16.mxu0 0
      %745 = vmatpush1.bf16.msra.mxu0 %v559
      %746 = vmatprep.subr.bf16.mxu0 0
      %747 = vmatpush1.bf16.msra.mxu0 %v560
      %748 = vmatprep.subr.bf16.mxu0 0
      %749 = vmatpush1.bf16.msra.mxu0 0
      %750 = vmatprep.subr.bf16.mxu0 0
      %751 = vmatpush1.bf16.msra.mxu0 0
      %752 = vmatprep.subr.bf16.mxu0 0
      %753 = vmatpush1.bf16.msra.mxu0 0
      %754 = vmatprep.subr.bf16.mxu0 0
      %755 = vmatpush1.bf16.msra.mxu0 0
      %756 = vmatprep.subr.bf16.mxu0 0
      %757 = vmatpush1.bf16.msra.mxu0 0
      %758 = vmatprep.subr.bf16.mxu0 0
      %759 = vmatpush1.bf16.msra.mxu0 0
      %760 = vmatprep.subr.bf16.mxu0 0
      %761 = vmatpush1.bf16.msra.mxu0 0
      %762 = vmatprep.subr.bf16.mxu0 0
      %763 = vmatpush1.bf16.msra.mxu0 0
      %764 = vmatprep.subr.bf16.mxu0 0
      %765 = vmatpush1.bf16.msra.mxu0 0
      %766 = vmatprep.subr.bf16.mxu0 0
      %767 = vmatpush1.bf16.msra.mxu0 0
      %768 = vmatprep.subr.bf16.mxu0 0
      %769 = vmatpush1.bf16.msra.mxu0 0
      %770 = vmatprep.subr.bf16.mxu0 0
      %771 = vmatpush1.bf16.msra.mxu0 0
      %772 = vmatprep.mubr.bf16.mxu0 0
      %773 = vmatmul.mubr.bf16.gmra.mrb[0].mxu0 %v599
      %v774 = vpop.f32.mrb[0].mxu0
      %v775 = vadd.f32 %v710, %v774
      %v776 = vpop.f32.mrb[0].mxu0
      %v777 = vpop.f32.mrb[0].mxu0
      %v778 = vadd.f32 %v713, %v777
      %v779 = vpop.f32.mrb[0].mxu0
      %780 = vmatprep.mubr.bf16.mxu0 0
      %781 = vmatmul.mubr.bf16.gmra.mrb[0].mxu0 %v602
      %v782 = vpop.f32.mrb[0].mxu0
      %v783 = vadd.f32 %v718, %v782
      %v784 = vpop.f32.mrb[0].mxu0
      %v785 = vpop.f32.mrb[0].mxu0
      %v786 = vadd.f32 %v721, %v785
      %v787 = vpop.f32.mrb[0].mxu0
      %788 = vmatprep.mubr.bf16.mxu0 0
      %789 = vmatmul.mubr.bf16.gmra.mrb[0].mxu0 %v605
      %v790 = vpop.f32.mrb[0].mxu0
      %v791 = vadd.f32 %v726, %v790
      %v792 = vpop.f32.mrb[0].mxu0
      %v793 = vpop.f32.mrb[0].mxu0
      %v794 = vadd.f32 %v729, %v793
      %v795 = vpop.f32.mrb[0].mxu0
      %796 = vmatprep.mubr.bf16.mxu0 0
      %797 = vmatmul.mubr.bf16.gmra.mrb[0].mxu0 %v608
      %v798 = vpop.f32.mrb[0].mxu0
      %v799 = vadd.f32 %v734, %v798
      %v800 = vpop.f32.mrb[0].mxu0
      %v801 = vpop.f32.mrb[0].mxu0
      %v802 = vadd.f32 %v737, %v801
      %v803 = vpop.f32.mrb[0].mxu0
      %804 = vdwg.mxu0
      %v805 = vmax.f32 %v775, 0.0
      %v806 = vmax.f32 %v778, 0.0
      %v807 = vmax.f32 %v783, 0.0
      %v808 = vmax.f32 %v786, 0.0
      %v809 = vmax.f32 %v791, 0.0
      %v810 = vmax.f32 %v794, 0.0
      %v811 = vmax.f32 %v799, 0.0
      %v812 = vmax.f32 %v802, 0.0
      %v813 = vpack.c.bf16 %v806, %v805
      %v814 = vpack.c.bf16 %v808, %v807
      %v815 = vpack.c.bf16 %v810, %v809
      %v816 = vpack.c.bf16 %v812, %v811
      %v821 = vunpack.c.l.b16 %v813
      %v822 = vunpack.c.h.b16 %v813
      %v823 = vunpack.c.l.b16 %v814
      %v824 = vunpack.c.h.b16 %v814
      %v825 = vunpack.c.l.b16 %v815
      %v826 = vunpack.c.h.b16 %v815
      %v827 = vunpack.c.l.b16 %v816
      %v828 = vunpack.c.h.b16 %v816
      %v829 = vpack.c.b16 %v821, %v821
      %v830 = vpack.c.b16 %v822, %v822
      %v831 = vpack.c.b16 %v823, %v823
      %v832 = vpack.c.b16 %v824, %v824
      %v833 = vpack.c.b16 %v825, %v825
      %v834 = vpack.c.b16 %v826, %v826
      %v835 = vpack.c.b16 %v827, %v827
      %v836 = vpack.c.b16 %v828, %v828
      %845 = vst [vmem:[%s175] sm:$0xf] %v829
      %846 = vst [vmem:[%s175 + $0x4] sm:$0xf] %v830
      %847 = vst [vmem:[%s175 + $0x8] sm:$0xf] %v831
      %848 = vst [vmem:[%s175 + $0xc] sm:$0xf] %v832
      %849 = vst [vmem:[%s175 + $0x10] sm:$0xf] %v833
      %850 = vst [vmem:[%s175 + $0x14] sm:$0xf] %v834
      %851 = vst [vmem:[%s175 + $0x18] sm:$0xf] %v835
      %852 = vst [vmem:[%s175 + $0x1c] sm:$0xf] %v836
      %s853 = smul.u32 8, %s14
      %p854 = scmp.lt.s32.totalorder %s853, 15
      %s855 = scalar_select %p854, %s853, 15
      %s856 = smul.addr %s855, 4
      %s857 = scalar_lea.vmem %s3, %s856
      // Predicated region
      $region33: #{conv_deconv_vqvae_forward.16} parent=31 // pred_check
        %p858 = pneg %p100
      $region34: #{conv_deconv_vqvae_forward.16} parent=31 // pred_check_branch
        %860 = sbr.rel (%p858) target = $region36
      $region35: #{conv_deconv_vqvae_forward.16} parent=31 // pred_region
        %s861 = smul.u32 8, %s14
      $region36: #{conv_deconv_vqvae_forward.16} parent=31 // pred_fallthru
        _
    $region32: #{conv_deconv_vqvae_forward.16} parent=5 // pred_fallthru
      _
    %p862 = scmp.le.s32.totalorder 2, %s9
    // Predicated region
    $region37: #{conv_deconv_vqvae_forward.16} parent=5 // pred_check
      %p863 = pneg %p862
    $region38: #{conv_deconv_vqvae_forward.16} parent=5 // pred_check_branch
      %865 = sbr.rel (%p863) target = $region40
    $region39: #{conv_deconv_vqvae_forward.16} parent=5 // pred_region
      %s866 = ssub.s32 %s9, 2
      // Predicated region
      $region41: #{conv_deconv_vqvae_forward.16} parent=39 // pred_check
        %p867 = pneg %p106
      $region42: #{conv_deconv_vqvae_forward.16} parent=39 // pred_check_branch
        %869 = sbr.rel (%p867) target = $region44
      $region43: #{conv_deconv_vqvae_forward.16} parent=39 // pred_region
        %s870 = smul.u32 8, %s15
        %p871 = scmp.lt.s32.totalorder %s870, 15
        %s872 = scalar_select %p871, %s870, 15
        %s873 = smul.addr %s872, 4
        %s874 = scalar_lea.vmem %s3, %s873
      $region44: #{conv_deconv_vqvae_forward.16} parent=39 // pred_fallthru
        _
    $region40: #{conv_deconv_vqvae_forward.16} parent=5 // pred_fallthru
      _
  $region6: #{conv_deconv_vqvae_forward.16} parent=0 // loop_footer
    %s13 = sadd.s32 1, %s9
  $region7: #{conv_deconv_vqvae_forward.16} parent=0 // loop_footer_branch
    %8 = sbr.rel target = $region3
  $region8: #{conv_deconv_vqvae_forward.16} parent=0 // loop_exit
    _

// kernel: conv_deconv_vqvae_forward.14
$region0: #{conv_deconv_vqvae_forward.14}
  #allocation0 [shape = 'u32[]', space=smem, size = 0x4, offset = 0x4, fixed_abs, tag = 'smem constant byte address 0x4 - core index']
  #allocation1 [shape = 'u32[144,128]{1,0:T(1,128)}', space=vmem, size = 0x12000, scoped, tag = 'internal scratch']
  %s0 = inlined_call_operand.vmem [shape: bf16[8,2304], index: 0, kind: input, shape index: {}]
  %s1 = inlined_call_operand.vmem [shape: bf16[2304,512], index: 1, kind: input, shape index: {}]
  %s2 = inlined_call_operand.vmem [shape: f32[1,512], index: 2, kind: input, shape index: {}]
  %s3 = inlined_call_operand.vmem [shape: bf16[8,512], index: 3, kind: output, shape index: {}]
  %s4 = sld [smem:[#allocation0]]
  $region22: #{conv_deconv_vqvae_forward.14} parent=0
    _
  %s6 = ssub.s32 1, %s4
  %s7 = scalar_select 0, %s6, %s4
  // Predicated region
  $region2: #{conv_deconv_vqvae_forward.14} parent=0 // pred_check
    _
  $region3: #{conv_deconv_vqvae_forward.14} parent=0 // pred_check_branch
    %9 = sbr.rel (0) target = $region5
  $region4: #{conv_deconv_vqvae_forward.14} parent=0 // pred_region
    _
  $region5: #{conv_deconv_vqvae_forward.14} parent=0 // pred_fallthru
    _
  // Predicated region
  $region6: #{conv_deconv_vqvae_forward.14} parent=0 // pred_check
    _
  $region7: #{conv_deconv_vqvae_forward.14} parent=0 // pred_check_branch
    %11 = sbr.rel (0) target = $region9
  $region8: #{conv_deconv_vqvae_forward.14} parent=0 // pred_region
    _
  $region9: #{conv_deconv_vqvae_forward.14} parent=0 // pred_fallthru
    _
  // Predicated region
  $region10: #{conv_deconv_vqvae_forward.14} parent=0 // pred_check
    _
  $region11: #{conv_deconv_vqvae_forward.14} parent=0 // pred_check_branch
    %13 = sbr.rel (0) target = $region13
  $region12: #{conv_deconv_vqvae_forward.14} parent=0 // pred_region
    _
  $region13: #{conv_deconv_vqvae_forward.14} parent=0 // pred_fallthru
    _
  %v14 = vld [vmem:[%s0] sm:$0xff]
  %v15 = vld [vmem:[%s0 + $0x8] sm:$0xff]
  %v16 = vld [vmem:[%s0 + $0x10] sm:$0xff]
  %v17 = vld [vmem:[%s0 + $0x18] sm:$0xff]
  %v18 = vld [vmem:[%s0 + $0x20] sm:$0xff]
  %v19 = vld [vmem:[%s0 + $0x28] sm:$0xff]
  %v20 = vld [vmem:[%s0 + $0x30] sm:$0xff]
  %v21 = vld [vmem:[%s0 + $0x38] sm:$0xff]
  %v22 = vld [vmem:[%s0 + $0x40] sm:$0xff]
  %v23 = vld [vmem:[%s1] sm:$0xff]
  %v24 = vld [vmem:[%s1 + $0x8] sm:$0xff]
  %v25 = vld [vmem:[%s1 + $0x10] sm:$0xff]
  %v26 = vld [vmem:[%s1 + $0x18] sm:$0xff]
  %v27 = vld [vmem:[%s1 + $0x20] sm:$0xff]
  %v28 = vld [vmem:[%s1 + $0x28] sm:$0xff]
  %v29 = vld [vmem:[%s1 + $0x30] sm:$0xff]
  %v30 = vld [vmem:[%s1 + $0x38] sm:$0xff]
  %v31 = vld [vmem:[%s1 + $0x40] sm:$0xff]
  %v32 = vld [vmem:[%s1 + $0x48] sm:$0xff]
  %v33 = vld [vmem:[%s1 + $0x50] sm:$0xff]
  %v34 = vld [vmem:[%s1 + $0x58] sm:$0xff]
  %v35 = vld [vmem:[%s1 + $0x60] sm:$0xff]
  %v36 = vld [vmem:[%s1 + $0x68] sm:$0xff]
  %v37 = vld [vmem:[%s1 + $0x70] sm:$0xff]
  %v38 = vld [vmem:[%s1 + $0x78] sm:$0xff]
  %v39 = vld [vmem:[%s1 + $0x80] sm:$0xff]
  %v40 = vld [vmem:[%s1 + $0x88] sm:$0xff]
  %v41 = vld [vmem:[%s1 + $0x90] sm:$0xff]
  %v42 = vld [vmem:[%s1 + $0x98] sm:$0xff]
  %v43 = vld [vmem:[%s1 + $0xa0] sm:$0xff]
  %v44 = vld [vmem:[%s1 + $0xa8] sm:$0xff]
  %v45 = vld [vmem:[%s1 + $0xb0] sm:$0xff]
  %v46 = vld [vmem:[%s1 + $0xb8] sm:$0xff]
  %v47 = vld [vmem:[%s1 + $0xc0] sm:$0xff]
  %v48 = vld [vmem:[%s1 + $0xc8] sm:$0xff]
  %v49 = vld [vmem:[%s1 + $0xd0] sm:$0xff]
  %v50 = vld [vmem:[%s1 + $0xd8] sm:$0xff]
  %v51 = vld [vmem:[%s1 + $0xe0] sm:$0xff]
  %v52 = vld [vmem:[%s1 + $0xe8] sm:$0xff]
  %v53 = vld [vmem:[%s1 + $0xf0] sm:$0xff]
  %v54 = vld [vmem:[%s1 + $0xf8] sm:$0xff]
  %v55 = vld [vmem:[%s1 + $0x100] sm:$0xff]
  %v56 = vld [vmem:[%s1 + $0x108] sm:$0xff]
  %v57 = vld [vmem:[%s1 + $0x110] sm:$0xff]
  %v58 = vld [vmem:[%s1 + $0x118] sm:$0xff]
  %v59 = vld [vmem:[%s1 + $0x120] sm:$0xff]
  %v60 = vld [vmem:[%s1 + $0x128] sm:$0xff]
  %v61 = vld [vmem:[%s1 + $0x130] sm:$0xff]
  %v62 = vld [vmem:[%s1 + $0x138] sm:$0xff]
  %v63 = vld [vmem:[%s1 + $0x140] sm:$0xff]
  %v64 = vld [vmem:[%s1 + $0x148] sm:$0xff]
  %v65 = vld [vmem:[%s1 + $0x150] sm:$0xff]
  %v66 = vld [vmem:[%s1 + $0x158] sm:$0xff]
  %v67 = vld [vmem:[%s1 + $0x160] sm:$0xff]
  %v68 = vld [vmem:[%s1 + $0x168] sm:$0xff]
  %v69 = vld [vmem:[%s1 + $0x170] sm:$0xff]
  %v70 = vld [vmem:[%s1 + $0x178] sm:$0xff]
  %v71 = vld [vmem:[%s1 + $0x180] sm:$0xff]
  %v72 = vld [vmem:[%s1 + $0x188] sm:$0xff]
  %v73 = vld [vmem:[%s1 + $0x190] sm:$0xff]
  %v74 = vld [vmem:[%s1 + $0x198] sm:$0xff]
  %v75 = vld [vmem:[%s1 + $0x1a0] sm:$0xff]
  %v76 = vld [vmem:[%s1 + $0x1a8] sm:$0xff]
  %v77 = vld [vmem:[%s1 + $0x1b0] sm:$0xff]
  %v78 = vld [vmem:[%s1 + $0x1b8] sm:$0xff]
  %v79 = vld [vmem:[%s1 + $0x1c0] sm:$0xff]
  %v80 = vld [vmem:[%s1 + $0x1c8] sm:$0xff]
  %v81 = vld [vmem:[%s1 + $0x1d0] sm:$0xff]
  %v82 = vld [vmem:[%s1 + $0x1d8] sm:$0xff]
  %v83 = vld [vmem:[%s1 + $0x1e0] sm:$0xff]
  %v84 = vld [vmem:[%s1 + $0x1e8] sm:$0xff]
  %v85 = vld [vmem:[%s1 + $0x1f0] sm:$0xff]
  %v86 = vld [vmem:[%s1 + $0x1f8] sm:$0xff]
  %v87 = vld [vmem:[%s1 + $0x200] sm:$0xff]
  %v88 = vld [vmem:[%s1 + $0x208] sm:$0xff]
  %v89 = vld [vmem:[%s1 + $0x210] sm:$0xff]
  %v90 = vld [vmem:[%s1 + $0x218] sm:$0xff]
  %v91 = vld [vmem:[%s1 + $0x220] sm:$0xff]
  %v92 = vld [vmem:[%s1 + $0x228] sm:$0xff]
  %v93 = vld [vmem:[%s1 + $0x230] sm:$0xff]
  %v94 = vld [vmem:[%s1 + $0x238] sm:$0xff]
  %v95 = vld [vmem:[%s1 + $0x240] sm:$0xff]
  %v96 = vld [vmem:[%s1 + $0x248] sm:$0xff]
  %v97 = vld [vmem:[%s1 + $0x250] sm:$0xff]
  %v98 = vld [vmem:[%s1 + $0x258] sm:$0xff]
  %v99 = vld [vmem:[%s1 + $0x260] sm:$0xff]
  %v100 = vld [vmem:[%s1 + $0x268] sm:$0xff]
  %v101 = vld [vmem:[%s1 + $0x270] sm:$0xff]
  %v102 = vld [vmem:[%s1 + $0x278] sm:$0xff]
  %v103 = vld [vmem:[%s1 + $0x280] sm:$0xff]
  %v104 = vld [vmem:[%s1 + $0x288] sm:$0xff]
  %v105 = vld [vmem:[%s1 + $0x290] sm:$0xff]
  %v106 = vld [vmem:[%s1 + $0x298] sm:$0xff]
  %v107 = vld [vmem:[%s1 + $0x2a0] sm:$0xff]
  %v108 = vld [vmem:[%s1 + $0x2a8] sm:$0xff]
  %v109 = vld [vmem:[%s1 + $0x2b0] sm:$0xff]
  %v110 = vld [vmem:[%s1 + $0x2b8] sm:$0xff]
  %v111 = vld [vmem:[%s1 + $0x2c0] sm:$0xff]
  %v112 = vld [vmem:[%s1 + $0x2c8] sm:$0xff]
  %v113 = vld [vmem:[%s1 + $0x2d0] sm:$0xff]
  %v114 = vld [vmem:[%s1 + $0x2d8] sm:$0xff]
  %v115 = vld [vmem:[%s1 + $0x2e0] sm:$0xff]
  %v116 = vld [vmem:[%s1 + $0x2e8] sm:$0xff]
  %v117 = vld [vmem:[%s1 + $0x2f0] sm:$0xff]
  %v118 = vld [vmem:[%s1 + $0x2f8] sm:$0xff]
  %v119 = vld [vmem:[%s1 + $0x300] sm:$0xff]
  %v120 = vld [vmem:[%s1 + $0x308] sm:$0xff]
  %v121 = vld [vmem:[%s1 + $0x310] sm:$0xff]
  %v122 = vld [vmem:[%s1 + $0x318] sm:$0xff]
  %v123 = vld [vmem:[%s1 + $0x320] sm:$0xff]
  %v124 = vld [vmem:[%s1 + $0x328] sm:$0xff]
  %v125 = vld [vmem:[%s1 + $0x330] sm:$0xff]
  %v126 = vld [vmem:[%s1 + $0x338] sm:$0xff]
  %v127 = vld [vmem:[%s1 + $0x340] sm:$0xff]
  %v128 = vld [vmem:[%s1 + $0x348] sm:$0xff]
  %v129 = vld [vmem:[%s1 + $0x350] sm:$0xff]
  %v130 = vld [vmem:[%s1 + $0x358] sm:$0xff]
  %v131 = vld [vmem:[%s1 + $0x360] sm:$0xff]
  %v132 = vld [vmem:[%s1 + $0x368] sm:$0xff]
  %v133 = vld [vmem:[%s1 + $0x370] sm:$0xff]
  %v134 = vld [vmem:[%s1 + $0x378] sm:$0xff]
  %v135 = vld [vmem:[%s1 + $0x380] sm:$0xff]
  %v136 = vld [vmem:[%s1 + $0x388] sm:$0xff]
  %v137 = vld [vmem:[%s1 + $0x390] sm:$0xff]
  %v138 = vld [vmem:[%s1 + $0x398] sm:$0xff]
  %v139 = vld [vmem:[%s1 + $0x3a0] sm:$0xff]
  %v140 = vld [vmem:[%s1 + $0x3a8] sm:$0xff]
  %v141 = vld [vmem:[%s1 + $0x3b0] sm:$0xff]
  %v142 = vld [vmem:[%s1 + $0x3b8] sm:$0xff]
  %v143 = vld [vmem:[%s1 + $0x3c0] sm:$0xff]
  %v144 = vld [vmem:[%s1 + $0x3c8] sm:$0xff]
  %v145 = vld [vmem:[%s1 + $0x3d0] sm:$0xff]
  %v146 = vld [vmem:[%s1 + $0x3d8] sm:$0xff]
  %v147 = vld [vmem:[%s1 + $0x3e0] sm:$0xff]
  %v148 = vld [vmem:[%s1 + $0x3e8] sm:$0xff]
  %v149 = vld [vmem:[%s1 + $0x3f0] sm:$0xff]
  %v150 = vld [vmem:[%s1 + $0x3f8] sm:$0xff]
  %v151 = vld [vmem:[%s1 + $0x400] sm:$0xff]
  %v152 = vld [vmem:[%s1 + $0x408] sm:$0xff]
  %v153 = vld [vmem:[%s1 + $0x410] sm:$0xff]
  %v154 = vld [vmem:[%s1 + $0x418] sm:$0xff]
  %v155 = vld [vmem:[%s1 + $0x420] sm:$0xff]
  %v156 = vld [vmem:[%s1 + $0x428] sm:$0xff]
  %v157 = vld [vmem:[%s1 + $0x430] sm:$0xff]
  %v158 = vld [vmem:[%s1 + $0x438] sm:$0xff]
  %v159 = vld [vmem:[%s1 + $0x440] sm:$0xff]
  %v160 = vld [vmem:[%s1 + $0x448] sm:$0xff]
  %v161 = vld [vmem:[%s1 + $0x450] sm:$0xff]
  %v162 = vld [vmem:[%s1 + $0x458] sm:$0xff]
  %v163 = vld [vmem:[%s1 + $0x460] sm:$0xff]
  %v164 = vld [vmem:[%s1 + $0x468] sm:$0xff]
  %v165 = vld [vmem:[%s1 + $0x470] sm:$0xff]
  %v166 = vld [vmem:[%s1 + $0x478] sm:$0xff]
  %v167 = vld [vmem:[%s1 + $0x480] sm:$0xff]
  %v168 = vld [vmem:[%s1 + $0x488] sm:$0xff]
  %v169 = vld [vmem:[%s1 + $0x490] sm:$0xff]
  %v170 = vld [vmem:[%s1 + $0x498] sm:$0xff]
  %v171 = vld [vmem:[%s1 + $0x4a0] sm:$0xff]
  %v172 = vld [vmem:[%s1 + $0x4a8] sm:$0xff]
  %v173 = vld [vmem:[%s1 + $0x4b0] sm:$0xff]
  %v174 = vld [vmem:[%s1 + $0x4b8] sm:$0xff]
  %v175 = vld [vmem:[%s1 + $0x4c0] sm:$0xff]
  %v176 = vld [vmem:[%s1 + $0x4c8] sm:$0xff]
  %v177 = vld [vmem:[%s1 + $0x4d0] sm:$0xff]
  %v178 = vld [vmem:[%s1 + $0x4d8] sm:$0xff]
  %v179 = vld [vmem:[%s1 + $0x4e0] sm:$0xff]
  %v180 = vld [vmem:[%s1 + $0x4e8] sm:$0xff]
  %v181 = vld [vmem:[%s1 + $0x4f0] sm:$0xff]
  %v182 = vld [vmem:[%s1 + $0x4f8] sm:$0xff]
  %v183 = vld [vmem:[%s1 + $0x500] sm:$0xff]
  %v184 = vld [vmem:[%s1 + $0x508] sm:$0xff]
  %v185 = vld [vmem:[%s1 + $0x510] sm:$0xff]
  %v186 = vld [vmem:[%s1 + $0x518] sm:$0xff]
  %v187 = vld [vmem:[%s1 + $0x520] sm:$0xff]
  %v188 = vld [vmem:[%s1 + $0x528] sm:$0xff]
  %v189 = vld [vmem:[%s1 + $0x530] sm:$0xff]
  %v190 = vld [vmem:[%s1 + $0x538] sm:$0xff]
  %v191 = vld [vmem:[%s1 + $0x540] sm:$0xff]
  %v192 = vld [vmem:[%s1 + $0x548] sm:$0xff]
  %v193 = vld [vmem:[%s1 + $0x550] sm:$0xff]
  %v194 = vld [vmem:[%s1 + $0x558] sm:$0xff]
  %v195 = vld [vmem:[%s1 + $0x560] sm:$0xff]
  %v196 = vld [vmem:[%s1 + $0x568] sm:$0xff]
  %v197 = vld [vmem:[%s1 + $0x570] sm:$0xff]
  %v198 = vld [vmem:[%s1 + $0x578] sm:$0xff]
  %v199 = vld [vmem:[%s1 + $0x580] sm:$0xff]
  %v200 = vld [vmem:[%s1 + $0x588] sm:$0xff]
  %v201 = vld [vmem:[%s1 + $0x590] sm:$0xff]
  %v202 = vld [vmem:[%s1 + $0x598] sm:$0xff]
  %v203 = vld [vmem:[%s1 + $0x5a0] sm:$0xff]
  %v204 = vld [vmem:[%s1 + $0x5a8] sm:$0xff]
  %v205 = vld [vmem:[%s1 + $0x5b0] sm:$0xff]
  %v206 = vld [vmem:[%s1 + $0x5b8] sm:$0xff]
  %v207 = vld [vmem:[%s1 + $0x5c0] sm:$0xff]
  %v208 = vld [vmem:[%s1 + $0x5c8] sm:$0xff]
  %v209 = vld [vmem:[%s1 + $0x5d0] sm:$0xff]
  %v210 = vld [vmem:[%s1 + $0x5d8] sm:$0xff]
  %v211 = vld [vmem:[%s1 + $0x5e0] sm:$0xff]
  %v212 = vld [vmem:[%s1 + $0x5e8] sm:$0xff]
  %v213 = vld [vmem:[%s1 + $0x5f0] sm:$0xff]
  %v214 = vld [vmem:[%s1 + $0x5f8] sm:$0xff]
  %v215 = vld [vmem:[%s1 + $0x600] sm:$0xff]
  %v216 = vld [vmem:[%s1 + $0x608] sm:$0xff]
  %v217 = vld [vmem:[%s1 + $0x610] sm:$0xff]
  %v218 = vld [vmem:[%s1 + $0x618] sm:$0xff]
  %v219 = vld [vmem:[%s1 + $0x620] sm:$0xff]
  %v220 = vld [vmem:[%s1 + $0x628] sm:$0xff]
  %v221 = vld [vmem:[%s1 + $0x630] sm:$0xff]
  %v222 = vld [vmem:[%s1 + $0x638] sm:$0xff]
  %v223 = vld [vmem:[%s1 + $0x640] sm:$0xff]
  %v224 = vld [vmem:[%s1 + $0x648] sm:$0xff]
  %v225 = vld [vmem:[%s1 + $0x650] sm:$0xff]
  %v226 = vld [vmem:[%s1 + $0x658] sm:$0xff]
  %v227 = vld [vmem:[%s1 + $0x660] sm:$0xff]
  %v228 = vld [vmem:[%s1 + $0x668] sm:$0xff]
  %v229 = vld [vmem:[%s1 + $0x670] sm:$0xff]
  %v230 = vld [vmem:[%s1 + $0x678] sm:$0xff]
  %v231 = vld [vmem:[%s1 + $0x680] sm:$0xff]
  %v232 = vld [vmem:[%s1 + $0x688] sm:$0xff]
  %v233 = vld [vmem:[%s1 + $0x690] sm:$0xff]
  %v234 = vld [vmem:[%s1 + $0x698] sm:$0xff]
  %v235 = vld [vmem:[%s1 + $0x6a0] sm:$0xff]
  %v236 = vld [vmem:[%s1 + $0x6a8] sm:$0xff]
  %v237 = vld [vmem:[%s1 + $0x6b0] sm:$0xff]
  %v238 = vld [vmem:[%s1 + $0x6b8] sm:$0xff]
  %v239 = vld [vmem:[%s1 + $0x6c0] sm:$0xff]
  %v240 = vld [vmem:[%s1 + $0x6c8] sm:$0xff]
  %v241 = vld [vmem:[%s1 + $0x6d0] sm:$0xff]
  %v242 = vld [vmem:[%s1 + $0x6d8] sm:$0xff]
  %v243 = vld [vmem:[%s1 + $0x6e0] sm:$0xff]
  %v244 = vld [vmem:[%s1 + $0x6e8] sm:$0xff]
  %v245 = vld [vmem:[%s1 + $0x6f0] sm:$0xff]
  %v246 = vld [vmem:[%s1 + $0x6f8] sm:$0xff]
  %v247 = vld [vmem:[%s1 + $0x700] sm:$0xff]
  %v248 = vld [vmem:[%s1 + $0x708] sm:$0xff]
  %v249 = vld [vmem:[%s1 + $0x710] sm:$0xff]
  %v250 = vld [vmem:[%s1 + $0x718] sm:$0xff]
  %v251 = vld [vmem:[%s1 + $0x720] sm:$0xff]
  %v252 = vld [vmem:[%s1 + $0x728] sm:$0xff]
  %v253 = vld [vmem:[%s1 + $0x730] sm:$0xff]
  %v254 = vld [vmem:[%s1 + $0x738] sm:$0xff]
  %v255 = vld [vmem:[%s1 + $0x740] sm:$0xff]
  %v256 = vld [vmem:[%s1 + $0x748] sm:$0xff]
  %v257 = vld [vmem:[%s1 + $0x750] sm:$0xff]
  %v258 = vld [vmem:[%s1 + $0x758] sm:$0xff]
  %v259 = vld [vmem:[%s1 + $0x760] sm:$0xff]
  %v260 = vld [vmem:[%s1 + $0x768] sm:$0xff]
  %v261 = vld [vmem:[%s1 + $0x770] sm:$0xff]
  %v262 = vld [vmem:[%s1 + $0x778] sm:$0xff]
  %v263 = vld [vmem:[%s1 + $0x780] sm:$0xff]
  %v264 = vld [vmem:[%s1 + $0x788] sm:$0xff]
  %v265 = vld [vmem:[%s1 + $0x790] sm:$0xff]
  %v266 = vld [vmem:[%s1 + $0x798] sm:$0xff]
  %v267 = vld [vmem:[%s1 + $0x7a0] sm:$0xff]
  %v268 = vld [vmem:[%s1 + $0x7a8] sm:$0xff]
  %v269 = vld [vmem:[%s1 + $0x7b0] sm:$0xff]
  %v270 = vld [vmem:[%s1 + $0x7b8] sm:$0xff]
  %v271 = vld [vmem:[%s1 + $0x7c0] sm:$0xff]
  %v272 = vld [vmem:[%s1 + $0x7c8] sm:$0xff]
  %v273 = vld [vmem:[%s1 + $0x7d0] sm:$0xff]
  %v274 = vld [vmem:[%s1 + $0x7d8] sm:$0xff]
  %v275 = vld [vmem:[%s1 + $0x7e0] sm:$0xff]
  %v276 = vld [vmem:[%s1 + $0x7e8] sm:$0xff]
  %v277 = vld [vmem:[%s1 + $0x7f0] sm:$0xff]
  %v278 = vld [vmem:[%s1 + $0x7f8] sm:$0xff]
  %v279 = vld [vmem:[%s1 + $0x800] sm:$0xff]
  %v280 = vld [vmem:[%s1 + $0x808] sm:$0xff]
  %v281 = vld [vmem:[%s1 + $0x810] sm:$0xff]
  %v282 = vld [vmem:[%s1 + $0x818] sm:$0xff]
  %v283 = vld [vmem:[%s1 + $0x820] sm:$0xff]
  %v284 = vld [vmem:[%s1 + $0x828] sm:$0xff]
  %v285 = vld [vmem:[%s1 + $0x830] sm:$0xff]
  %v286 = vld [vmem:[%s1 + $0x838] sm:$0xff]
  %v287 = vld [vmem:[%s1 + $0x840] sm:$0xff]
  %v288 = vld [vmem:[%s1 + $0x848] sm:$0xff]
  %v289 = vld [vmem:[%s1 + $0x850] sm:$0xff]
  %v290 = vld [vmem:[%s1 + $0x858] sm:$0xff]
  %v291 = vld [vmem:[%s1 + $0x860] sm:$0xff]
  %v292 = vld [vmem:[%s1 + $0x868] sm:$0xff]
  %v293 = vld [vmem:[%s1 + $0x870] sm:$0xff]
  %v294 = vld [vmem:[%s1 + $0x878] sm:$0xff]
  %v295 = vld [vmem:[%s1 + $0x880] sm:$0xff]
  %v296 = vld [vmem:[%s1 + $0x888] sm:$0xff]
  %v297 = vld [vmem:[%s1 + $0x890] sm:$0xff]
  %v298 = vld [vmem:[%s1 + $0x898] sm:$0xff]
  %v299 = vld [vmem:[%s1 + $0x8a0] sm:$0xff]
  %v300 = vld [vmem:[%s1 + $0x8a8] sm:$0xff]
  %v301 = vld [vmem:[%s1 + $0x8b0] sm:$0xff]
  %v302 = vld [vmem:[%s1 + $0x8b8] sm:$0xff]
  %v303 = vld [vmem:[%s1 + $0x8c0] sm:$0xff]
  %v304 = vld [vmem:[%s1 + $0x8c8] sm:$0xff]
  %v305 = vld [vmem:[%s1 + $0x8d0] sm:$0xff]
  %v306 = vld [vmem:[%s1 + $0x8d8] sm:$0xff]
  %v307 = vld [vmem:[%s1 + $0x8e0] sm:$0xff]
  %v308 = vld [vmem:[%s1 + $0x8e8] sm:$0xff]
  %v309 = vld [vmem:[%s1 + $0x8f0] sm:$0xff]
  %v310 = vld [vmem:[%s1 + $0x8f8] sm:$0xff]
  %v311 = vld [vmem:[%s1 + $0x900] sm:$0xff]
  %v312 = vld [vmem:[%s1 + $0x908] sm:$0xff]
  %v313 = vld [vmem:[%s1 + $0x910] sm:$0xff]
  %v314 = vld [vmem:[%s1 + $0x918] sm:$0xff]
  %v315 = vld [vmem:[%s1 + $0x920] sm:$0xff]
  %v316 = vld [vmem:[%s1 + $0x928] sm:$0xff]
  %v317 = vld [vmem:[%s1 + $0x930] sm:$0xff]
  %v318 = vld [vmem:[%s1 + $0x938] sm:$0xff]
  %v319 = vld [vmem:[%s1 + $0x940] sm:$0xff]
  %v320 = vld [vmem:[%s1 + $0x948] sm:$0xff]
  %v321 = vld [vmem:[%s1 + $0x950] sm:$0xff]
  %v322 = vld [vmem:[%s1 + $0x958] sm:$0xff]
  %v323 = vld [vmem:[%s1 + $0x960] sm:$0xff]
  %v324 = vld [vmem:[%s1 + $0x968] sm:$0xff]
  %v325 = vld [vmem:[%s1 + $0x970] sm:$0xff]
  %v326 = vld [vmem:[%s1 + $0x978] sm:$0xff]
  %v327 = vld [vmem:[%s1 + $0x980] sm:$0xff]
  %v328 = vld [vmem:[%s1 + $0x988] sm:$0xff]
  %v329 = vld [vmem:[%s1 + $0x990] sm:$0xff]
  %v330 = vld [vmem:[%s1 + $0x998] sm:$0xff]
  %v331 = vld [vmem:[%s1 + $0x9a0] sm:$0xff]
  %v332 = vld [vmem:[%s1 + $0x9a8] sm:$0xff]
  %v333 = vld [vmem:[%s1 + $0x9b0] sm:$0xff]
  %v334 = vld [vmem:[%s1 + $0x9b8] sm:$0xff]
  %v335 = vld [vmem:[%s1 + $0x9c0] sm:$0xff]
  %v336 = vld [vmem:[%s1 + $0x9c8] sm:$0xff]
  %v337 = vld [vmem:[%s1 + $0x9d0] sm:$0xff]
  %v338 = vld [vmem:[%s1 + $0x9d8] sm:$0xff]
  %v339 = vld [vmem:[%s1 + $0x9e0] sm:$0xff]
  %v340 = vld [vmem:[%s1 + $0x9e8] sm:$0xff]
  %v341 = vld [vmem:[%s1 + $0x9f0] sm:$0xff]
  %v342 = vld [vmem:[%s1 + $0x9f8] sm:$0xff]
  %v343 = vld [vmem:[%s1 + $0xa00] sm:$0xff]
  %v344 = vld [vmem:[%s1 + $0xa08] sm:$0xff]
  %v345 = vld [vmem:[%s1 + $0xa10] sm:$0xff]
  %v346 = vld [vmem:[%s1 + $0xa18] sm:$0xff]
  %v347 = vld [vmem:[%s1 + $0xa20] sm:$0xff]
  %v348 = vld [vmem:[%s1 + $0xa28] sm:$0xff]
  %v349 = vld [vmem:[%s1 + $0xa30] sm:$0xff]
  %v350 = vld [vmem:[%s1 + $0xa38] sm:$0xff]
  %v351 = vld [vmem:[%s1 + $0xa40] sm:$0xff]
  %v352 = vld [vmem:[%s1 + $0xa48] sm:$0xff]
  %v353 = vld [vmem:[%s1 + $0xa50] sm:$0xff]
  %v354 = vld [vmem:[%s1 + $0xa58] sm:$0xff]
  %v355 = vld [vmem:[%s1 + $0xa60] sm:$0xff]
  %v356 = vld [vmem:[%s1 + $0xa68] sm:$0xff]
  %v357 = vld [vmem:[%s1 + $0xa70] sm:$0xff]
  %v358 = vld [vmem:[%s1 + $0xa78] sm:$0xff]
  %v359 = vld [vmem:[%s1 + $0xa80] sm:$0xff]
  %v360 = vld [vmem:[%s1 + $0xa88] sm:$0xff]
  %v361 = vld [vmem:[%s1 + $0xa90] sm:$0xff]
  %v362 = vld [vmem:[%s1 + $0xa98] sm:$0xff]
  %v363 = vld [vmem:[%s1 + $0xaa0] sm:$0xff]
  %v364 = vld [vmem:[%s1 + $0xaa8] sm:$0xff]
  %v365 = vld [vmem:[%s1 + $0xab0] sm:$0xff]
  %v366 = vld [vmem:[%s1 + $0xab8] sm:$0xff]
  %v367 = vld [vmem:[%s1 + $0xac0] sm:$0xff]
  %v368 = vld [vmem:[%s1 + $0xac8] sm:$0xff]
  %v369 = vld [vmem:[%s1 + $0xad0] sm:$0xff]
  %v370 = vld [vmem:[%s1 + $0xad8] sm:$0xff]
  %v371 = vld [vmem:[%s1 + $0xae0] sm:$0xff]
  %v372 = vld [vmem:[%s1 + $0xae8] sm:$0xff]
  %v373 = vld [vmem:[%s1 + $0xaf0] sm:$0xff]
  %v374 = vld [vmem:[%s1 + $0xaf8] sm:$0xff]
  %v375 = vld [vmem:[%s1 + $0xb00] sm:$0xff]
  %v376 = vld [vmem:[%s1 + $0xb08] sm:$0xff]
  %v377 = vld [vmem:[%s1 + $0xb10] sm:$0xff]
  %v378 = vld [vmem:[%s1 + $0xb18] sm:$0xff]
  %v379 = vld [vmem:[%s1 + $0xb20] sm:$0xff]
  %v380 = vld [vmem:[%s1 + $0xb28] sm:$0xff]
  %v381 = vld [vmem:[%s1 + $0xb30] sm:$0xff]
  %v382 = vld [vmem:[%s1 + $0xb38] sm:$0xff]
  %v383 = vld [vmem:[%s1 + $0xb40] sm:$0xff]
  %v384 = vld [vmem:[%s1 + $0xb48] sm:$0xff]
  %v385 = vld [vmem:[%s1 + $0xb50] sm:$0xff]
  %v386 = vld [vmem:[%s1 + $0xb58] sm:$0xff]
  %v387 = vld [vmem:[%s1 + $0xb60] sm:$0xff]
  %v388 = vld [vmem:[%s1 + $0xb68] sm:$0xff]
  %v389 = vld [vmem:[%s1 + $0xb70] sm:$0xff]
  %v390 = vld [vmem:[%s1 + $0xb78] sm:$0xff]
  %v391 = vld [vmem:[%s1 + $0xb80] sm:$0xff]
  %v392 = vld [vmem:[%s1 + $0xb88] sm:$0xff]
  %v393 = vld [vmem:[%s1 + $0xb90] sm:$0xff]
  %v394 = vld [vmem:[%s1 + $0xb98] sm:$0xff]
  %v395 = vld [vmem:[%s1 + $0xba0] sm:$0xff]
  %v396 = vld [vmem:[%s1 + $0xba8] sm:$0xff]
  %v397 = vld [vmem:[%s1 + $0xbb0] sm:$0xff]
  %v398 = vld [vmem:[%s1 + $0xbb8] sm:$0xff]
  %v399 = vld [vmem:[%s1 + $0xbc0] sm:$0xff]
  %v400 = vld [vmem:[%s1 + $0xbc8] sm:$0xff]
  %v401 = vld [vmem:[%s1 + $0xbd0] sm:$0xff]
  %v402 = vld [vmem:[%s1 + $0xbd8] sm:$0xff]
  %v403 = vld [vmem:[%s1 + $0xbe0] sm:$0xff]
  %v404 = vld [vmem:[%s1 + $0xbe8] sm:$0xff]
  %v405 = vld [vmem:[%s1 + $0xbf0] sm:$0xff]
  %v406 = vld [vmem:[%s1 + $0xbf8] sm:$0xff]
  %v407 = vld [vmem:[%s1 + $0xc00] sm:$0xff]
  %v408 = vld [vmem:[%s1 + $0xc08] sm:$0xff]
  %v409 = vld [vmem:[%s1 + $0xc10] sm:$0xff]
  %v410 = vld [vmem:[%s1 + $0xc18] sm:$0xff]
  %v411 = vld [vmem:[%s1 + $0xc20] sm:$0xff]
  %v412 = vld [vmem:[%s1 + $0xc28] sm:$0xff]
  %v413 = vld [vmem:[%s1 + $0xc30] sm:$0xff]
  %v414 = vld [vmem:[%s1 + $0xc38] sm:$0xff]
  %v415 = vld [vmem:[%s1 + $0xc40] sm:$0xff]
  %v416 = vld [vmem:[%s1 + $0xc48] sm:$0xff]
  %v417 = vld [vmem:[%s1 + $0xc50] sm:$0xff]
  %v418 = vld [vmem:[%s1 + $0xc58] sm:$0xff]
  %v419 = vld [vmem:[%s1 + $0xc60] sm:$0xff]
  %v420 = vld [vmem:[%s1 + $0xc68] sm:$0xff]
  %v421 = vld [vmem:[%s1 + $0xc70] sm:$0xff]
  %v422 = vld [vmem:[%s1 + $0xc78] sm:$0xff]
  %v423 = vld [vmem:[%s1 + $0xc80] sm:$0xff]
  %v424 = vld [vmem:[%s1 + $0xc88] sm:$0xff]
  %v425 = vld [vmem:[%s1 + $0xc90] sm:$0xff]
  %v426 = vld [vmem:[%s1 + $0xc98] sm:$0xff]
  %v427 = vld [vmem:[%s1 + $0xca0] sm:$0xff]
  %v428 = vld [vmem:[%s1 + $0xca8] sm:$0xff]
  %v429 = vld [vmem:[%s1 + $0xcb0] sm:$0xff]
  %v430 = vld [vmem:[%s1 + $0xcb8] sm:$0xff]
  %v431 = vld [vmem:[%s1 + $0xcc0] sm:$0xff]
  %v432 = vld [vmem:[%s1 + $0xcc8] sm:$0xff]
  %v433 = vld [vmem:[%s1 + $0xcd0] sm:$0xff]
  %v434 = vld [vmem:[%s1 + $0xcd8] sm:$0xff]
  %v435 = vld [vmem:[%s1 + $0xce0] sm:$0xff]
  %v436 = vld [vmem:[%s1 + $0xce8] sm:$0xff]
  %v437 = vld [vmem:[%s1 + $0xcf0] sm:$0xff]
  %v438 = vld [vmem:[%s1 + $0xcf8] sm:$0xff]
  %v439 = vld [vmem:[%s1 + $0xd00] sm:$0xff]
  %v440 = vld [vmem:[%s1 + $0xd08] sm:$0xff]
  %v441 = vld [vmem:[%s1 + $0xd10] sm:$0xff]
  %v442 = vld [vmem:[%s1 + $0xd18] sm:$0xff]
  %v443 = vld [vmem:[%s1 + $0xd20] sm:$0xff]
  %v444 = vld [vmem:[%s1 + $0xd28] sm:$0xff]
  %v445 = vld [vmem:[%s1 + $0xd30] sm:$0xff]
  %v446 = vld [vmem:[%s1 + $0xd38] sm:$0xff]
  %v447 = vld [vmem:[%s1 + $0xd40] sm:$0xff]
  %v448 = vld [vmem:[%s1 + $0xd48] sm:$0xff]
  %v449 = vld [vmem:[%s1 + $0xd50] sm:$0xff]
  %v450 = vld [vmem:[%s1 + $0xd58] sm:$0xff]
  %v451 = vld [vmem:[%s1 + $0xd60] sm:$0xff]
  %v452 = vld [vmem:[%s1 + $0xd68] sm:$0xff]
  %v453 = vld [vmem:[%s1 + $0xd70] sm:$0xff]
  %v454 = vld [vmem:[%s1 + $0xd78] sm:$0xff]
  %v455 = vld [vmem:[%s1 + $0xd80] sm:$0xff]
  %v456 = vld [vmem:[%s1 + $0xd88] sm:$0xff]
  %v457 = vld [vmem:[%s1 + $0xd90] sm:$0xff]
  %v458 = vld [vmem:[%s1 + $0xd98] sm:$0xff]
  %v459 = vld [vmem:[%s1 + $0xda0] sm:$0xff]
  %v460 = vld [vmem:[%s1 + $0xda8] sm:$0xff]
  %v461 = vld [vmem:[%s1 + $0xdb0] sm:$0xff]
  %v462 = vld [vmem:[%s1 + $0xdb8] sm:$0xff]
  %v463 = vld [vmem:[%s1 + $0xdc0] sm:$0xff]
  %v464 = vld [vmem:[%s1 + $0xdc8] sm:$0xff]
  %v465 = vld [vmem:[%s1 + $0xdd0] sm:$0xff]
  %v466 = vld [vmem:[%s1 + $0xdd8] sm:$0xff]
  %v467 = vld [vmem:[%s1 + $0xde0] sm:$0xff]
  %v468 = vld [vmem:[%s1 + $0xde8] sm:$0xff]
  %v469 = vld [vmem:[%s1 + $0xdf0] sm:$0xff]
  %v470 = vld [vmem:[%s1 + $0xdf8] sm:$0xff]
  %v471 = vld [vmem:[%s1 + $0xe00] sm:$0xff]
  %v472 = vld [vmem:[%s1 + $0xe08] sm:$0xff]
  %v473 = vld [vmem:[%s1 + $0xe10] sm:$0xff]
  %v474 = vld [vmem:[%s1 + $0xe18] sm:$0xff]
  %v475 = vld [vmem:[%s1 + $0xe20] sm:$0xff]
  %v476 = vld [vmem:[%s1 + $0xe28] sm:$0xff]
  %v477 = vld [vmem:[%s1 + $0xe30] sm:$0xff]
  %v478 = vld [vmem:[%s1 + $0xe38] sm:$0xff]
  %v479 = vld [vmem:[%s1 + $0xe40] sm:$0xff]
  %v480 = vld [vmem:[%s1 + $0xe48] sm:$0xff]
  %v481 = vld [vmem:[%s1 + $0xe50] sm:$0xff]
  %v482 = vld [vmem:[%s1 + $0xe58] sm:$0xff]
  %v483 = vld [vmem:[%s1 + $0xe60] sm:$0xff]
  %v484 = vld [vmem:[%s1 + $0xe68] sm:$0xff]
  %v485 = vld [vmem:[%s1 + $0xe70] sm:$0xff]
  %v486 = vld [vmem:[%s1 + $0xe78] sm:$0xff]
  %v487 = vld [vmem:[%s1 + $0xe80] sm:$0xff]
  %v488 = vld [vmem:[%s1 + $0xe88] sm:$0xff]
  %v489 = vld [vmem:[%s1 + $0xe90] sm:$0xff]
  %v490 = vld [vmem:[%s1 + $0xe98] sm:$0xff]
  %v491 = vld [vmem:[%s1 + $0xea0] sm:$0xff]
  %v492 = vld [vmem:[%s1 + $0xea8] sm:$0xff]
  %v493 = vld [vmem:[%s1 + $0xeb0] sm:$0xff]
  %v494 = vld [vmem:[%s1 + $0xeb8] sm:$0xff]
  %v495 = vld [vmem:[%s1 + $0xec0] sm:$0xff]
  %v496 = vld [vmem:[%s1 + $0xec8] sm:$0xff]
  %v497 = vld [vmem:[%s1 + $0xed0] sm:$0xff]
  %v498 = vld [vmem:[%s1 + $0xed8] sm:$0xff]
  %v499 = vld [vmem:[%s1 + $0xee0] sm:$0xff]
  %v500 = vld [vmem:[%s1 + $0xee8] sm:$0xff]
  %v501 = vld [vmem:[%s1 + $0xef0] sm:$0xff]
  %v502 = vld [vmem:[%s1 + $0xef8] sm:$0xff]
  %v503 = vld [vmem:[%s1 + $0xf00] sm:$0xff]
  %v504 = vld [vmem:[%s1 + $0xf08] sm:$0xff]
  %v505 = vld [vmem:[%s1 + $0xf10] sm:$0xff]
  %v506 = vld [vmem:[%s1 + $0xf18] sm:$0xff]
  %v507 = vld [vmem:[%s1 + $0xf20] sm:$0xff]
  %v508 = vld [vmem:[%s1 + $0xf28] sm:$0xff]
  %v509 = vld [vmem:[%s1 + $0xf30] sm:$0xff]
  %v510 = vld [vmem:[%s1 + $0xf38] sm:$0xff]
  %v511 = vld [vmem:[%s1 + $0xf40] sm:$0xff]
  %v512 = vld [vmem:[%s1 + $0xf48] sm:$0xff]
  %v513 = vld [vmem:[%s1 + $0xf50] sm:$0xff]
  %v514 = vld [vmem:[%s1 + $0xf58] sm:$0xff]
  %v515 = vld [vmem:[%s1 + $0xf60] sm:$0xff]
  %v516 = vld [vmem:[%s1 + $0xf68] sm:$0xff]
  %v517 = vld [vmem:[%s1 + $0xf70] sm:$0xff]
  %v518 = vld [vmem:[%s1 + $0xf78] sm:$0xff]
  %v519 = vld [vmem:[%s1 + $0xf80] sm:$0xff]
  %v520 = vld [vmem:[%s1 + $0xf88] sm:$0xff]
  %v521 = vld [vmem:[%s1 + $0xf90] sm:$0xff]
  %v522 = vld [vmem:[%s1 + $0xf98] sm:$0xff]
  %v523 = vld [vmem:[%s1 + $0xfa0] sm:$0xff]
  %v524 = vld [vmem:[%s1 + $0xfa8] sm:$0xff]
  %v525 = vld [vmem:[%s1 + $0xfb0] sm:$0xff]
  %v526 = vld [vmem:[%s1 + $0xfb8] sm:$0xff]
  %v527 = vld [vmem:[%s1 + $0xfc0] sm:$0xff]
  %v528 = vld [vmem:[%s1 + $0xfc8] sm:$0xff]
  %v529 = vld [vmem:[%s1 + $0xfd0] sm:$0xff]
  %v530 = vld [vmem:[%s1 + $0xfd8] sm:$0xff]
  %v531 = vld [vmem:[%s1 + $0xfe0] sm:$0xff]
  %v532 = vld [vmem:[%s1 + $0xfe8] sm:$0xff]
  %v533 = vld [vmem:[%s1 + $0xff0] sm:$0xff]
  %v534 = vld [vmem:[%s1 + $0xff8] sm:$0xff]
  %v535 = vld [vmem:[%s1 + $0x1000] sm:$0xff]
  %v536 = vld [vmem:[%s1 + $0x1008] sm:$0xff]
  %v537 = vld [vmem:[%s1 + $0x1010] sm:$0xff]
  %v538 = vld [vmem:[%s1 + $0x1018] sm:$0xff]
  %v539 = vld [vmem:[%s1 + $0x1020] sm:$0xff]
  %v540 = vld [vmem:[%s1 + $0x1028] sm:$0xff]
  %v541 = vld [vmem:[%s1 + $0x1030] sm:$0xff]
  %v542 = vld [vmem:[%s1 + $0x1038] sm:$0xff]
  %v543 = vld [vmem:[%s1 + $0x1040] sm:$0xff]
  %v544 = vld [vmem:[%s1 + $0x1048] sm:$0xff]
  %v545 = vld [vmem:[%s1 + $0x1050] sm:$0xff]
  %v546 = vld [vmem:[%s1 + $0x1058] sm:$0xff]
  %v547 = vld [vmem:[%s1 + $0x1060] sm:$0xff]
  %v548 = vld [vmem:[%s1 + $0x1068] sm:$0xff]
  %v549 = vld [vmem:[%s1 + $0x1070] sm:$0xff]
  %v550 = vld [vmem:[%s1 + $0x1078] sm:$0xff]
  %v551 = vld [vmem:[%s1 + $0x1080] sm:$0xff]
  %v552 = vld [vmem:[%s1 + $0x1088] sm:$0xff]
  %v553 = vld [vmem:[%s1 + $0x1090] sm:$0xff]
  %v554 = vld [vmem:[%s1 + $0x1098] sm:$0xff]
  %v555 = vld [vmem:[%s1 + $0x10a0] sm:$0xff]
  %v556 = vld [vmem:[%s1 + $0x10a8] sm:$0xff]
  %v557 = vld [vmem:[%s1 + $0x10b0] sm:$0xff]
  %v558 = vld [vmem:[%s1 + $0x10b8] sm:$0xff]
  %v559 = vld [vmem:[%s1 + $0x10c0] sm:$0xff]
  %v560 = vld [vmem:[%s1 + $0x10c8] sm:$0xff]
  %v561 = vld [vmem:[%s1 + $0x10d0] sm:$0xff]
  %v562 = vld [vmem:[%s1 + $0x10d8] sm:$0xff]
  %v563 = vld [vmem:[%s1 + $0x10e0] sm:$0xff]
  %v564 = vld [vmem:[%s1 + $0x10e8] sm:$0xff]
  %v565 = vld [vmem:[%s1 + $0x10f0] sm:$0xff]
  %v566 = vld [vmem:[%s1 + $0x10f8] sm:$0xff]
  %v567 = vld [vmem:[%s1 + $0x1100] sm:$0xff]
  %v568 = vld [vmem:[%s1 + $0x1108] sm:$0xff]
  %v569 = vld [vmem:[%s1 + $0x1110] sm:$0xff]
  %v570 = vld [vmem:[%s1 + $0x1118] sm:$0xff]
  %v571 = vld [vmem:[%s1 + $0x1120] sm:$0xff]
  %v572 = vld [vmem:[%s1 + $0x1128] sm:$0xff]
  %v573 = vld [vmem:[%s1 + $0x1130] sm:$0xff]
  %v574 = vld [vmem:[%s1 + $0x1138] sm:$0xff]
  %v575 = vld [vmem:[%s1 + $0x1140] sm:$0xff]
  %v576 = vld [vmem:[%s1 + $0x1148] sm:$0xff]
  %v577 = vld [vmem:[%s1 + $0x1150] sm:$0xff]
  %v578 = vld [vmem:[%s1 + $0x1158] sm:$0xff]
  %v579 = vld [vmem:[%s1 + $0x1160] sm:$0xff]
  %v580 = vld [vmem:[%s1 + $0x1168] sm:$0xff]
  %v581 = vld [vmem:[%s1 + $0x1170] sm:$0xff]
  %v582 = vld [vmem:[%s1 + $0x1178] sm:$0xff]
  %v583 = vld [vmem:[%s1 + $0x1180] sm:$0xff]
  %v584 = vld [vmem:[%s1 + $0x1188] sm:$0xff]
  %v585 = vld [vmem:[%s1 + $0x1190] sm:$0xff]
  %v586 = vld [vmem:[%s1 + $0x1198] sm:$0xff]
  %v587 = vld [vmem:[%s1 + $0x11a0] sm:$0xff]
  %v588 = vld [vmem:[%s1 + $0x11a8] sm:$0xff]
  %v589 = vld [vmem:[%s1 + $0x11b0] sm:$0xff]
  %v590 = vld [vmem:[%s1 + $0x11b8] sm:$0xff]
  %v591 = vld [vmem:[%s1 + $0x11c0] sm:$0xff]
  %v592 = vld [vmem:[%s1 + $0x11c8] sm:$0xff]
  %v593 = vld [vmem:[%s1 + $0x11d0] sm:$0xff]
  %v594 = vld [vmem:[%s1 + $0x11d8] sm:$0xff]
  %v595 = vld [vmem:[%s1 + $0x11e0] sm:$0xff]
  %v596 = vld [vmem:[%s1 + $0x11e8] sm:$0xff]
  %v597 = vld [vmem:[%s1 + $0x11f0] sm:$0xff]
  %v598 = vld [vmem:[%s1 + $0x11f8] sm:$0xff]
  %v599 = vld [vmem:[%s2] sm:$0xf]
  %v601 = vlaneseq
  %v602 = vshrl.u32 %v601, 7
  %v603 = vsub.s32 0, %v602
  %v604 = vrot.slane %v599, %v603
  %v605 = vlaneseq
  %v606 = vshrl.u32 %v605, 7
  %v607 = vsub.s32 1, %v606
  %v608 = vrot.slane %v599, %v607
  %v609 = vlaneseq
  %v610 = vshrl.u32 %v609, 7
  %v611 = vsub.s32 2, %v610
  %v612 = vrot.slane %v599, %v611
  %v613 = vlaneseq
  %v614 = vshrl.u32 %v613, 7
  %v615 = vsub.s32 3, %v614
  %v616 = vrot.slane %v599, %v615
  %v630 = vunpack.c.l.b16 %v14
  %v631 = vunpack.c.h.b16 %v14
  %v632 = vunpack.c.l.b16 %v15
  %v633 = vunpack.c.h.b16 %v15
  %v634 = vunpack.c.l.b16 %v16
  %v635 = vunpack.c.h.b16 %v16
  %v636 = vunpack.c.l.b16 %v17
  %v637 = vunpack.c.h.b16 %v17
  %v638 = vunpack.c.l.b16 %v18
  %v639 = vunpack.c.h.b16 %v18
  %v640 = vunpack.c.l.b16 %v19
  %v641 = vunpack.c.h.b16 %v19
  %v642 = vunpack.c.l.b16 %v20
  %v643 = vunpack.c.h.b16 %v20
  %v644 = vunpack.c.l.b16 %v21
  %v645 = vunpack.c.h.b16 %v21
  %v646 = vunpack.c.l.b16 %v22
  %v647 = vunpack.c.h.b16 %v22
  %v648 = vpack.c.b16 %v630, %v630
  %v649 = vpack.c.b16 %v631, %v631
  %v650 = vpack.c.b16 %v632, %v632
  %v651 = vpack.c.b16 %v633, %v633
  %v652 = vpack.c.b16 %v634, %v634
  %v653 = vpack.c.b16 %v635, %v635
  %v654 = vpack.c.b16 %v636, %v636
  %v655 = vpack.c.b16 %v637, %v637
  %v656 = vpack.c.b16 %v638, %v638
  %v657 = vpack.c.b16 %v639, %v639
  %v658 = vpack.c.b16 %v640, %v640
  %v659 = vpack.c.b16 %v641, %v641
  %v660 = vpack.c.b16 %v642, %v642
  %v661 = vpack.c.b16 %v643, %v643
  %v662 = vpack.c.b16 %v644, %v644
  %v663 = vpack.c.b16 %v645, %v645
  %v664 = vpack.c.b16 %v646, %v646
  %v665 = vpack.c.b16 %v647, %v647
  %v1260 = vunpack.c.l.b16 %v23
  %v1261 = vunpack.c.h.b16 %v23
  %v1262 = vunpack.c.l.b16 %v24
  %v1263 = vunpack.c.h.b16 %v24
  %v1264 = vunpack.c.l.b16 %v25
  %v1265 = vunpack.c.h.b16 %v25
  %v1266 = vunpack.c.l.b16 %v26
  %v1267 = vunpack.c.h.b16 %v26
  %v1268 = vunpack.c.l.b16 %v27
  %v1269 = vunpack.c.h.b16 %v27
  %v1270 = vunpack.c.l.b16 %v28
  %v1271 = vunpack.c.h.b16 %v28
  %v1272 = vunpack.c.l.b16 %v29
  %v1273 = vunpack.c.h.b16 %v29
  %v1274 = vunpack.c.l.b16 %v30
  %v1275 = vunpack.c.h.b16 %v30
  %v1276 = vunpack.c.l.b16 %v31
  %v1277 = vunpack.c.h.b16 %v31
  %v1278 = vunpack.c.l.b16 %v32
  %v1279 = vunpack.c.h.b16 %v32
  %v1280 = vunpack.c.l.b16 %v33
  %v1281 = vunpack.c.h.b16 %v33
  %v1282 = vunpack.c.l.b16 %v34
  %v1283 = vunpack.c.h.b16 %v34
  %v1284 = vunpack.c.l.b16 %v35
  %v1285 = vunpack.c.h.b16 %v35
  %v1286 = vunpack.c.l.b16 %v36
  %v1287 = vunpack.c.h.b16 %v36
  %v1288 = vunpack.c.l.b16 %v37
  %v1289 = vunpack.c.h.b16 %v37
  %v1290 = vunpack.c.l.b16 %v38
  %v1291 = vunpack.c.h.b16 %v38
  %v1292 = vunpack.c.l.b16 %v39
  %v1293 = vunpack.c.h.b16 %v39
  %v1294 = vunpack.c.l.b16 %v40
  %v1295 = vunpack.c.h.b16 %v40
  %v1296 = vunpack.c.l.b16 %v41
  %v1297 = vunpack.c.h.b16 %v41
  %v1298 = vunpack.c.l.b16 %v42
  %v1299 = vunpack.c.h.b16 %v42
  %v1300 = vunpack.c.l.b16 %v43
  %v1301 = vunpack.c.h.b16 %v43
  %v1302 = vunpack.c.l.b16 %v44
  %v1303 = vunpack.c.h.b16 %v44
  %v1304 = vunpack.c.l.b16 %v45
  %v1305 = vunpack.c.h.b16 %v45
  %v1306 = vunpack.c.l.b16 %v46
  %v1307 = vunpack.c.h.b16 %v46
  %v1308 = vunpack.c.l.b16 %v47
  %v1309 = vunpack.c.h.b16 %v47
  %v1310 = vunpack.c.l.b16 %v48
  %v1311 = vunpack.c.h.b16 %v48
  %v1312 = vunpack.c.l.b16 %v49
  %v1313 = vunpack.c.h.b16 %v49
  %v1314 = vunpack.c.l.b16 %v50
  %v1315 = vunpack.c.h.b16 %v50
  %v1316 = vunpack.c.l.b16 %v51
  %v1317 = vunpack.c.h.b16 %v51
  %v1318 = vunpack.c.l.b16 %v52
  %v1319 = vunpack.c.h.b16 %v52
  %v1320 = vunpack.c.l.b16 %v53
  %v1321 = vunpack.c.h.b16 %v53
  %v1322 = vunpack.c.l.b16 %v54
  %v1323 = vunpack.c.h.b16 %v54
  %v1324 = vunpack.c.l.b16 %v55
  %v1325 = vunpack.c.h.b16 %v55
  %v1326 = vunpack.c.l.b16 %v56
  %v1327 = vunpack.c.h.b16 %v56
  %v1328 = vunpack.c.l.b16 %v57
  %v1329 = vunpack.c.h.b16 %v57
  %v1330 = vunpack.c.l.b16 %v58
  %v1331 = vunpack.c.h.b16 %v58
  %v1332 = vunpack.c.l.b16 %v59
  %v1333 = vunpack.c.h.b16 %v59
  %v1334 = vunpack.c.l.b16 %v60
  %v1335 = vunpack.c.h.b16 %v60
  %v1336 = vunpack.c.l.b16 %v61
  %v1337 = vunpack.c.h.b16 %v61
  %v1338 = vunpack.c.l.b16 %v62
  %v1339 = vunpack.c.h.b16 %v62
  %v1340 = vunpack.c.l.b16 %v63
  %v1341 = vunpack.c.h.b16 %v63
  %v1342 = vunpack.c.l.b16 %v64
  %v1343 = vunpack.c.h.b16 %v64
  %v1344 = vunpack.c.l.b16 %v65
  %v1345 = vunpack.c.h.b16 %v65
  %v1346 = vunpack.c.l.b16 %v66
  %v1347 = vunpack.c.h.b16 %v66
  %v1348 = vunpack.c.l.b16 %v67
  %v1349 = vunpack.c.h.b16 %v67
  %v1350 = vunpack.c.l.b16 %v68
  %v1351 = vunpack.c.h.b16 %v68
  %v1352 = vunpack.c.l.b16 %v69
  %v1353 = vunpack.c.h.b16 %v69
  %v1354 = vunpack.c.l.b16 %v70
  %v1355 = vunpack.c.h.b16 %v70
  %v1356 = vunpack.c.l.b16 %v71
  %v1357 = vunpack.c.h.b16 %v71
  %v1358 = vunpack.c.l.b16 %v72
  %v1359 = vunpack.c.h.b16 %v72
  %v1360 = vunpack.c.l.b16 %v73
  %v1361 = vunpack.c.h.b16 %v73
  %v1362 = vunpack.c.l.b16 %v74
  %v1363 = vunpack.c.h.b16 %v74
  %v1364 = vunpack.c.l.b16 %v75
  %v1365 = vunpack.c.h.b16 %v75
  %v1366 = vunpack.c.l.b16 %v76
  %v1367 = vunpack.c.h.b16 %v76
  %v1368 = vunpack.c.l.b16 %v77
  %v1369 = vunpack.c.h.b16 %v77
  %v1370 = vunpack.c.l.b16 %v78
  %v1371 = vunpack.c.h.b16 %v78
  %v1372 = vunpack.c.l.b16 %v79
  %v1373 = vunpack.c.h.b16 %v79
  %v1374 = vunpack.c.l.b16 %v80
  %v1375 = vunpack.c.h.b16 %v80
  %v1376 = vunpack.c.l.b16 %v81
  %v1377 = vunpack.c.h.b16 %v81
  %v1378 = vunpack.c.l.b16 %v82
  %v1379 = vunpack.c.h.b16 %v82
  %v1380 = vunpack.c.l.b16 %v83
  %v1381 = vunpack.c.h.b16 %v83
  %v1382 = vunpack.c.l.b16 %v84
  %v1383 = vunpack.c.h.b16 %v84
  %v1384 = vunpack.c.l.b16 %v85
  %v1385 = vunpack.c.h.b16 %v85
  %v1386 = vunpack.c.l.b16 %v86
  %v1387 = vunpack.c.h.b16 %v86
  %v1388 = vunpack.c.l.b16 %v87
  %v1389 = vunpack.c.h.b16 %v87
  %v1390 = vunpack.c.l.b16 %v88
  %v1391 = vunpack.c.h.b16 %v88
  %v1392 = vunpack.c.l.b16 %v89
  %v1393 = vunpack.c.h.b16 %v89
  %v1394 = vunpack.c.l.b16 %v90
  %v1395 = vunpack.c.h.b16 %v90
  %v1396 = vunpack.c.l.b16 %v91
  %v1397 = vunpack.c.h.b16 %v91
  %v1398 = vunpack.c.l.b16 %v92
  %v1399 = vunpack.c.h.b16 %v92
  %v1400 = vunpack.c.l.b16 %v93
  %v1401 = vunpack.c.h.b16 %v93
  %v1402 = vunpack.c.l.b16 %v94
  %v1403 = vunpack.c.h.b16 %v94
  %v1404 = vunpack.c.l.b16 %v95
  %v1405 = vunpack.c.h.b16 %v95
  %v1406 = vunpack.c.l.b16 %v96
  %v1407 = vunpack.c.h.b16 %v96
  %v1408 = vunpack.c.l.b16 %v97
  %v1409 = vunpack.c.h.b16 %v97
  %v1410 = vunpack.c.l.b16 %v98
  %v1411 = vunpack.c.h.b16 %v98
  %v1412 = vunpack.c.l.b16 %v99
  %v1413 = vunpack.c.h.b16 %v99
  %v1414 = vunpack.c.l.b16 %v100
  %v1415 = vunpack.c.h.b16 %v100
  %v1416 = vunpack.c.l.b16 %v101
  %v1417 = vunpack.c.h.b16 %v101
  %v1418 = vunpack.c.l.b16 %v102
  %v1419 = vunpack.c.h.b16 %v102
  %v1420 = vunpack.c.l.b16 %v103
  %v1421 = vunpack.c.h.b16 %v103
  %v1422 = vunpack.c.l.b16 %v104
  %v1423 = vunpack.c.h.b16 %v104
  %v1424 = vunpack.c.l.b16 %v105
  %v1425 = vunpack.c.h.b16 %v105
  %v1426 = vunpack.c.l.b16 %v106
  %v1427 = vunpack.c.h.b16 %v106
  %v1428 = vunpack.c.l.b16 %v107
  %v1429 = vunpack.c.h.b16 %v107
  %v1430 = vunpack.c.l.b16 %v108
  %v1431 = vunpack.c.h.b16 %v108
  %v1432 = vunpack.c.l.b16 %v109
  %v1433 = vunpack.c.h.b16 %v109
  %v1434 = vunpack.c.l.b16 %v110
  %v1435 = vunpack.c.h.b16 %v110
  %v1436 = vunpack.c.l.b16 %v111
  %v1437 = vunpack.c.h.b16 %v111
  %v1438 = vunpack.c.l.b16 %v112
  %v1439 = vunpack.c.h.b16 %v112
  %v1440 = vunpack.c.l.b16 %v113
  %v1441 = vunpack.c.h.b16 %v113
  %v1442 = vunpack.c.l.b16 %v114
  %v1443 = vunpack.c.h.b16 %v114
  %v1444 = vunpack.c.l.b16 %v115
  %v1445 = vunpack.c.h.b16 %v115
  %v1446 = vunpack.c.l.b16 %v116
  %v1447 = vunpack.c.h.b16 %v116
  %v1448 = vunpack.c.l.b16 %v117
  %v1449 = vunpack.c.h.b16 %v117
  %v1450 = vunpack.c.l.b16 %v118
  %v1451 = vunpack.c.h.b16 %v118
  %v1452 = vunpack.c.l.b16 %v119
  %v1453 = vunpack.c.h.b16 %v119
  %v1454 = vunpack.c.l.b16 %v120
  %v1455 = vunpack.c.h.b16 %v120
  %v1456 = vunpack.c.l.b16 %v121
  %v1457 = vunpack.c.h.b16 %v121
  %v1458 = vunpack.c.l.b16 %v122
  %v1459 = vunpack.c.h.b16 %v122
  %v1460 = vunpack.c.l.b16 %v123
  %v1461 = vunpack.c.h.b16 %v123
  %v1462 = vunpack.c.l.b16 %v124
  %v1463 = vunpack.c.h.b16 %v124
  %v1464 = vunpack.c.l.b16 %v125
  %v1465 = vunpack.c.h.b16 %v125
  %v1466 = vunpack.c.l.b16 %v126
  %v1467 = vunpack.c.h.b16 %v126
  %v1468 = vunpack.c.l.b16 %v127
  %v1469 = vunpack.c.h.b16 %v127
  %v1470 = vunpack.c.l.b16 %v128
  %v1471 = vunpack.c.h.b16 %v128
  %v1472 = vunpack.c.l.b16 %v129
  %v1473 = vunpack.c.h.b16 %v129
  %v1474 = vunpack.c.l.b16 %v130
  %v1475 = vunpack.c.h.b16 %v130
  %v1476 = vunpack.c.l.b16 %v131
  %v1477 = vunpack.c.h.b16 %v131
  %v1478 = vunpack.c.l.b16 %v132
  %v1479 = vunpack.c.h.b16 %v132
  %v1480 = vunpack.c.l.b16 %v133
  %v1481 = vunpack.c.h.b16 %v133
  %v1482 = vunpack.c.l.b16 %v134
  %v1483 = vunpack.c.h.b16 %v134
  %v1484 = vunpack.c.l.b16 %v135
  %v1485 = vunpack.c.h.b16 %v135
  %v1486 = vunpack.c.l.b16 %v136
  %v1487 = vunpack.c.h.b16 %v136
  %v1488 = vunpack.c.l.b16 %v137
  %v1489 = vunpack.c.h.b16 %v137
  %v1490 = vunpack.c.l.b16 %v138
  %v1491 = vunpack.c.h.b16 %v138
  %v1492 = vunpack.c.l.b16 %v139
  %v1493 = vunpack.c.h.b16 %v139
  %v1494 = vunpack.c.l.b16 %v140
  %v1495 = vunpack.c.h.b16 %v140
  %v1496 = vunpack.c.l.b16 %v141
  %v1497 = vunpack.c.h.b16 %v141
  %v1498 = vunpack.c.l.b16 %v142
  %v1499 = vunpack.c.h.b16 %v142
  %v1500 = vunpack.c.l.b16 %v143
  %v1501 = vunpack.c.h.b16 %v143
  %v1502 = vunpack.c.l.b16 %v144
  %v1503 = vunpack.c.h.b16 %v144
  %v1504 = vunpack.c.l.b16 %v145
  %v1505 = vunpack.c.h.b16 %v145
  %v1506 = vunpack.c.l.b16 %v146
  %v1507 = vunpack.c.h.b16 %v146
  %v1508 = vunpack.c.l.b16 %v147
  %v1509 = vunpack.c.h.b16 %v147
  %v1510 = vunpack.c.l.b16 %v148
  %v1511 = vunpack.c.h.b16 %v148
  %v1512 = vunpack.c.l.b16 %v149
  %v1513 = vunpack.c.h.b16 %v149
  %v1514 = vunpack.c.l.b16 %v150
  %v1515 = vunpack.c.h.b16 %v150
  %v1516 = vunpack.c.l.b16 %v151
  %v1517 = vunpack.c.h.b16 %v151
  %v1518 = vunpack.c.l.b16 %v152
  %v1519 = vunpack.c.h.b16 %v152
  %v1520 = vunpack.c.l.b16 %v153
  %v1521 = vunpack.c.h.b16 %v153
  %v1522 = vunpack.c.l.b16 %v154
  %v1523 = vunpack.c.h.b16 %v154
  %v1524 = vunpack.c.l.b16 %v155
  %v1525 = vunpack.c.h.b16 %v155
  %v1526 = vunpack.c.l.b16 %v156
  %v1527 = vunpack.c.h.b16 %v156
  %v1528 = vunpack.c.l.b16 %v157
  %v1529 = vunpack.c.h.b16 %v157
  %v1530 = vunpack.c.l.b16 %v158
  %v1531 = vunpack.c.h.b16 %v158
  %v1532 = vunpack.c.l.b16 %v159
  %v1533 = vunpack.c.h.b16 %v159
  %v1534 = vunpack.c.l.b16 %v160
  %v1535 = vunpack.c.h.b16 %v160
  %v1536 = vunpack.c.l.b16 %v161
  %v1537 = vunpack.c.h.b16 %v161
  %v1538 = vunpack.c.l.b16 %v162
  %v1539 = vunpack.c.h.b16 %v162
  %v1540 = vunpack.c.l.b16 %v163
  %v1541 = vunpack.c.h.b16 %v163
  %v1542 = vunpack.c.l.b16 %v164
  %v1543 = vunpack.c.h.b16 %v164
  %v1544 = vunpack.c.l.b16 %v165
  %v1545 = vunpack.c.h.b16 %v165
  %v1546 = vunpack.c.l.b16 %v166
  %v1547 = vunpack.c.h.b16 %v166
  %v1548 = vunpack.c.l.b16 %v167
  %v1549 = vunpack.c.h.b16 %v167
  %v1550 = vunpack.c.l.b16 %v168
  %v1551 = vunpack.c.h.b16 %v168
  %v1552 = vunpack.c.l.b16 %v169
  %v1553 = vunpack.c.h.b16 %v169
  %v1554 = vunpack.c.l.b16 %v170
  %v1555 = vunpack.c.h.b16 %v170
  %v1556 = vunpack.c.l.b16 %v171
  %v1557 = vunpack.c.h.b16 %v171
  %v1558 = vunpack.c.l.b16 %v172
  %v1559 = vunpack.c.h.b16 %v172
  %v1560 = vunpack.c.l.b16 %v173
  %v1561 = vunpack.c.h.b16 %v173
  %v1562 = vunpack.c.l.b16 %v174
  %v1563 = vunpack.c.h.b16 %v174
  %v1564 = vunpack.c.l.b16 %v175
  %v1565 = vunpack.c.h.b16 %v175
  %v1566 = vunpack.c.l.b16 %v176
  %v1567 = vunpack.c.h.b16 %v176
  %v1568 = vunpack.c.l.b16 %v177
  %v1569 = vunpack.c.h.b16 %v177
  %v1570 = vunpack.c.l.b16 %v178
  %v1571 = vunpack.c.h.b16 %v178
  %v1572 = vunpack.c.l.b16 %v179
  %v1573 = vunpack.c.h.b16 %v179
  %v1574 = vunpack.c.l.b16 %v180
  %v1575 = vunpack.c.h.b16 %v180
  %v1576 = vunpack.c.l.b16 %v181
  %v1577 = vunpack.c.h.b16 %v181
  %v1578 = vunpack.c.l.b16 %v182
  %v1579 = vunpack.c.h.b16 %v182
  %v1580 = vunpack.c.l.b16 %v183
  %v1581 = vunpack.c.h.b16 %v183
  %v1582 = vunpack.c.l.b16 %v184
  %v1583 = vunpack.c.h.b16 %v184
  %v1584 = vunpack.c.l.b16 %v185
  %v1585 = vunpack.c.h.b16 %v185
  %v1586 = vunpack.c.l.b16 %v186
  %v1587 = vunpack.c.h.b16 %v186
  %v1588 = vunpack.c.l.b16 %v187
  %v1589 = vunpack.c.h.b16 %v187
  %v1590 = vunpack.c.l.b16 %v188
  %v1591 = vunpack.c.h.b16 %v188
  %v1592 = vunpack.c.l.b16 %v189
  %v1593 = vunpack.c.h.b16 %v189
  %v1594 = vunpack.c.l.b16 %v190
  %v1595 = vunpack.c.h.b16 %v190
  %v1596 = vunpack.c.l.b16 %v191
  %v1597 = vunpack.c.h.b16 %v191
  %v1598 = vunpack.c.l.b16 %v192
  %v1599 = vunpack.c.h.b16 %v192
  %v1600 = vunpack.c.l.b16 %v193
  %v1601 = vunpack.c.h.b16 %v193
  %v1602 = vunpack.c.l.b16 %v194
  %v1603 = vunpack.c.h.b16 %v194
  %v1604 = vunpack.c.l.b16 %v195
  %v1605 = vunpack.c.h.b16 %v195
  %v1606 = vunpack.c.l.b16 %v196
  %v1607 = vunpack.c.h.b16 %v196
  %v1608 = vunpack.c.l.b16 %v197
  %v1609 = vunpack.c.h.b16 %v197
  %v1610 = vunpack.c.l.b16 %v198
  %v1611 = vunpack.c.h.b16 %v198
  %v1612 = vunpack.c.l.b16 %v199
  %v1613 = vunpack.c.h.b16 %v199
  %v1614 = vunpack.c.l.b16 %v200
  %v1615 = vunpack.c.h.b16 %v200
  %v1616 = vunpack.c.l.b16 %v201
  %v1617 = vunpack.c.h.b16 %v201
  %v1618 = vunpack.c.l.b16 %v202
  %v1619 = vunpack.c.h.b16 %v202
  %v1620 = vunpack.c.l.b16 %v203
  %v1621 = vunpack.c.h.b16 %v203
  %v1622 = vunpack.c.l.b16 %v204
  %v1623 = vunpack.c.h.b16 %v204
  %v1624 = vunpack.c.l.b16 %v205
  %v1625 = vunpack.c.h.b16 %v205
  %v1626 = vunpack.c.l.b16 %v206
  %v1627 = vunpack.c.h.b16 %v206
  %v1628 = vunpack.c.l.b16 %v207
  %v1629 = vunpack.c.h.b16 %v207
  %v1630 = vunpack.c.l.b16 %v208
  %v1631 = vunpack.c.h.b16 %v208
  %v1632 = vunpack.c.l.b16 %v209
  %v1633 = vunpack.c.h.b16 %v209
  %v1634 = vunpack.c.l.b16 %v210
  %v1635 = vunpack.c.h.b16 %v210
  %v1636 = vunpack.c.l.b16 %v211
  %v1637 = vunpack.c.h.b16 %v211
  %v1638 = vunpack.c.l.b16 %v212
  %v1639 = vunpack.c.h.b16 %v212
  %v1640 = vunpack.c.l.b16 %v213
  %v1641 = vunpack.c.h.b16 %v213
  %v1642 = vunpack.c.l.b16 %v214
  %v1643 = vunpack.c.h.b16 %v214
  %v1644 = vunpack.c.l.b16 %v215
  %v1645 = vunpack.c.h.b16 %v215
  %v1646 = vunpack.c.l.b16 %v216
  %v1647 = vunpack.c.h.b16 %v216
  %v1648 = vunpack.c.l.b16 %v217
  %v1649 = vunpack.c.h.b16 %v217
  %v1650 = vunpack.c.l.b16 %v218
  %v1651 = vunpack.c.h.b16 %v218
  %v1652 = vunpack.c.l.b16 %v219
  %v1653 = vunpack.c.h.b16 %v219
  %v1654 = vunpack.c.l.b16 %v220
  %v1655 = vunpack.c.h.b16 %v220
  %v1656 = vunpack.c.l.b16 %v221
  %v1657 = vunpack.c.h.b16 %v221
  %v1658 = vunpack.c.l.b16 %v222
  %v1659 = vunpack.c.h.b16 %v222
  %v1660 = vunpack.c.l.b16 %v223
  %v1661 = vunpack.c.h.b16 %v223
  %v1662 = vunpack.c.l.b16 %v224
  %v1663 = vunpack.c.h.b16 %v224
  %v1664 = vunpack.c.l.b16 %v225
  %v1665 = vunpack.c.h.b16 %v225
  %v1666 = vunpack.c.l.b16 %v226
  %v1667 = vunpack.c.h.b16 %v226
  %v1668 = vunpack.c.l.b16 %v227
  %v1669 = vunpack.c.h.b16 %v227
  %v1670 = vunpack.c.l.b16 %v228
  %v1671 = vunpack.c.h.b16 %v228
  %v1672 = vunpack.c.l.b16 %v229
  %v1673 = vunpack.c.h.b16 %v229
  %v1674 = vunpack.c.l.b16 %v230
  %v1675 = vunpack.c.h.b16 %v230
  %v1676 = vunpack.c.l.b16 %v231
  %v1677 = vunpack.c.h.b16 %v231
  %v1678 = vunpack.c.l.b16 %v232
  %v1679 = vunpack.c.h.b16 %v232
  %v1680 = vunpack.c.l.b16 %v233
  %v1681 = vunpack.c.h.b16 %v233
  %v1682 = vunpack.c.l.b16 %v234
  %v1683 = vunpack.c.h.b16 %v234
  %v1684 = vunpack.c.l.b16 %v235
  %v1685 = vunpack.c.h.b16 %v235
  %v1686 = vunpack.c.l.b16 %v236
  %v1687 = vunpack.c.h.b16 %v236
  %v1688 = vunpack.c.l.b16 %v237
  %v1689 = vunpack.c.h.b16 %v237
  %v1690 = vunpack.c.l.b16 %v238
  %v1691 = vunpack.c.h.b16 %v238
  %v1692 = vunpack.c.l.b16 %v239
  %v1693 = vunpack.c.h.b16 %v239
  %v1694 = vunpack.c.l.b16 %v240
  %v1695 = vunpack.c.h.b16 %v240
  %v1696 = vunpack.c.l.b16 %v241
  %v1697 = vunpack.c.h.b16 %v241
  %v1698 = vunpack.c.l.b16 %v242
  %v1699 = vunpack.c.h.b16 %v242
  %v1700 = vunpack.c.l.b16 %v243
  %v1701 = vunpack.c.h.b16 %v243
  %v1702 = vunpack.c.l.b16 %v244
  %v1703 = vunpack.c.h.b16 %v244
  %v1704 = vunpack.c.l.b16 %v245
  %v1705 = vunpack.c.h.b16 %v245
  %v1706 = vunpack.c.l.b16 %v246
  %v1707 = vunpack.c.h.b16 %v246
  %v1708 = vunpack.c.l.b16 %v247
  %v1709 = vunpack.c.h.b16 %v247
  %v1710 = vunpack.c.l.b16 %v248
  %v1711 = vunpack.c.h.b16 %v248
  %v1712 = vunpack.c.l.b16 %v249
  %v1713 = vunpack.c.h.b16 %v249
  %v1714 = vunpack.c.l.b16 %v250
  %v1715 = vunpack.c.h.b16 %v250
  %v1716 = vunpack.c.l.b16 %v251
  %v1717 = vunpack.c.h.b16 %v251
  %v1718 = vunpack.c.l.b16 %v252
  %v1719 = vunpack.c.h.b16 %v252
  %v1720 = vunpack.c.l.b16 %v253
  %v1721 = vunpack.c.h.b16 %v253
  %v1722 = vunpack.c.l.b16 %v254
  %v1723 = vunpack.c.h.b16 %v254
  %v1724 = vunpack.c.l.b16 %v255
  %v1725 = vunpack.c.h.b16 %v255
  %v1726 = vunpack.c.l.b16 %v256
  %v1727 = vunpack.c.h.b16 %v256
  %v1728 = vunpack.c.l.b16 %v257
  %v1729 = vunpack.c.h.b16 %v257
  %v1730 = vunpack.c.l.b16 %v258
  %v1731 = vunpack.c.h.b16 %v258
  %v1732 = vunpack.c.l.b16 %v259
  %v1733 = vunpack.c.h.b16 %v259
  %v1734 = vunpack.c.l.b16 %v260
  %v1735 = vunpack.c.h.b16 %v260
  %v1736 = vunpack.c.l.b16 %v261
  %v1737 = vunpack.c.h.b16 %v261
  %v1738 = vunpack.c.l.b16 %v262
  %v1739 = vunpack.c.h.b16 %v262
  %v1740 = vunpack.c.l.b16 %v263
  %v1741 = vunpack.c.h.b16 %v263
  %v1742 = vunpack.c.l.b16 %v264
  %v1743 = vunpack.c.h.b16 %v264
  %v1744 = vunpack.c.l.b16 %v265
  %v1745 = vunpack.c.h.b16 %v265
  %v1746 = vunpack.c.l.b16 %v266
  %v1747 = vunpack.c.h.b16 %v266
  %v1748 = vunpack.c.l.b16 %v267
  %v1749 = vunpack.c.h.b16 %v267
  %v1750 = vunpack.c.l.b16 %v268
  %v1751 = vunpack.c.h.b16 %v268
  %v1752 = vunpack.c.l.b16 %v269
  %v1753 = vunpack.c.h.b16 %v269
  %v1754 = vunpack.c.l.b16 %v270
  %v1755 = vunpack.c.h.b16 %v270
  %v1756 = vunpack.c.l.b16 %v271
  %v1757 = vunpack.c.h.b16 %v271
  %v1758 = vunpack.c.l.b16 %v272
  %v1759 = vunpack.c.h.b16 %v272
  %v1760 = vunpack.c.l.b16 %v273
  %v1761 = vunpack.c.h.b16 %v273
  %v1762 = vunpack.c.l.b16 %v274
  %v1763 = vunpack.c.h.b16 %v274
  %v1764 = vunpack.c.l.b16 %v275
  %v1765 = vunpack.c.h.b16 %v275
  %v1766 = vunpack.c.l.b16 %v276
  %v1767 = vunpack.c.h.b16 %v276
  %v1768 = vunpack.c.l.b16 %v277
  %v1769 = vunpack.c.h.b16 %v277
  %v1770 = vunpack.c.l.b16 %v278
  %v1771 = vunpack.c.h.b16 %v278
  %v1772 = vunpack.c.l.b16 %v279
  %v1773 = vunpack.c.h.b16 %v279
  %v1774 = vunpack.c.l.b16 %v280
  %v1775 = vunpack.c.h.b16 %v280
  %v1776 = vunpack.c.l.b16 %v281
  %v1777 = vunpack.c.h.b16 %v281
  %v1778 = vunpack.c.l.b16 %v282
  %v1779 = vunpack.c.h.b16 %v282
  %v1780 = vunpack.c.l.b16 %v283
  %v1781 = vunpack.c.h.b16 %v283
  %v1782 = vunpack.c.l.b16 %v284
  %v1783 = vunpack.c.h.b16 %v284
  %v1784 = vunpack.c.l.b16 %v285
  %v1785 = vunpack.c.h.b16 %v285
  %v1786 = vunpack.c.l.b16 %v286
  %v1787 = vunpack.c.h.b16 %v286
  %v1788 = vunpack.c.l.b16 %v287
  %v1789 = vunpack.c.h.b16 %v287
  %v1790 = vunpack.c.l.b16 %v288
  %v1791 = vunpack.c.h.b16 %v288
  %v1792 = vunpack.c.l.b16 %v289
  %v1793 = vunpack.c.h.b16 %v289
  %v1794 = vunpack.c.l.b16 %v290
  %v1795 = vunpack.c.h.b16 %v290
  %v1796 = vunpack.c.l.b16 %v291
  %v1797 = vunpack.c.h.b16 %v291
  %v1798 = vunpack.c.l.b16 %v292
  %v1799 = vunpack.c.h.b16 %v292
  %v1800 = vunpack.c.l.b16 %v293
  %v1801 = vunpack.c.h.b16 %v293
  %v1802 = vunpack.c.l.b16 %v294
  %v1803 = vunpack.c.h.b16 %v294
  %v1804 = vunpack.c.l.b16 %v295
  %v1805 = vunpack.c.h.b16 %v295
  %v1806 = vunpack.c.l.b16 %v296
  %v1807 = vunpack.c.h.b16 %v296
  %v1808 = vunpack.c.l.b16 %v297
  %v1809 = vunpack.c.h.b16 %v297
  %v1810 = vunpack.c.l.b16 %v298
  %v1811 = vunpack.c.h.b16 %v298
  %v1812 = vunpack.c.l.b16 %v299
  %v1813 = vunpack.c.h.b16 %v299
  %v1814 = vunpack.c.l.b16 %v300
  %v1815 = vunpack.c.h.b16 %v300
  %v1816 = vunpack.c.l.b16 %v301
  %v1817 = vunpack.c.h.b16 %v301
  %v1818 = vunpack.c.l.b16 %v302
  %v1819 = vunpack.c.h.b16 %v302
  %v1820 = vunpack.c.l.b16 %v303
  %v1821 = vunpack.c.h.b16 %v303
  %v1822 = vunpack.c.l.b16 %v304
  %v1823 = vunpack.c.h.b16 %v304
  %v1824 = vunpack.c.l.b16 %v305
  %v1825 = vunpack.c.h.b16 %v305
  %v1826 = vunpack.c.l.b16 %v306
  %v1827 = vunpack.c.h.b16 %v306
  %v1828 = vunpack.c.l.b16 %v307
  %v1829 = vunpack.c.h.b16 %v307
  %v1830 = vunpack.c.l.b16 %v308
  %v1831 = vunpack.c.h.b16 %v308
  %v1832 = vunpack.c.l.b16 %v309
  %v1833 = vunpack.c.h.b16 %v309
  %v1834 = vunpack.c.l.b16 %v310
  %v1835 = vunpack.c.h.b16 %v310
  %v1836 = vunpack.c.l.b16 %v311
  %v1837 = vunpack.c.h.b16 %v311
  %v1838 = vunpack.c.l.b16 %v312
  %v1839 = vunpack.c.h.b16 %v312
  %v1840 = vunpack.c.l.b16 %v313
  %v1841 = vunpack.c.h.b16 %v313
  %v1842 = vunpack.c.l.b16 %v314
  %v1843 = vunpack.c.h.b16 %v314
  %v1844 = vunpack.c.l.b16 %v315
  %v1845 = vunpack.c.h.b16 %v315
  %v1846 = vunpack.c.l.b16 %v316
  %v1847 = vunpack.c.h.b16 %v316
  %v1848 = vunpack.c.l.b16 %v317
  %v1849 = vunpack.c.h.b16 %v317
  %v1850 = vunpack.c.l.b16 %v318
  %v1851 = vunpack.c.h.b16 %v318
  %v1852 = vunpack.c.l.b16 %v319
  %v1853 = vunpack.c.h.b16 %v319
  %v1854 = vunpack.c.l.b16 %v320
  %v1855 = vunpack.c.h.b16 %v320
  %v1856 = vunpack.c.l.b16 %v321
  %v1857 = vunpack.c.h.b16 %v321
  %v1858 = vunpack.c.l.b16 %v322
  %v1859 = vunpack.c.h.b16 %v322
  %v1860 = vunpack.c.l.b16 %v323
  %v1861 = vunpack.c.h.b16 %v323
  %v1862 = vunpack.c.l.b16 %v324
  %v1863 = vunpack.c.h.b16 %v324
  %v1864 = vunpack.c.l.b16 %v325
  %v1865 = vunpack.c.h.b16 %v325
  %v1866 = vunpack.c.l.b16 %v326
  %v1867 = vunpack.c.h.b16 %v326
  %v1868 = vunpack.c.l.b16 %v327
  %v1869 = vunpack.c.h.b16 %v327
  %v1870 = vunpack.c.l.b16 %v328
  %v1871 = vunpack.c.h.b16 %v328
  %v1872 = vunpack.c.l.b16 %v329
  %v1873 = vunpack.c.h.b16 %v329
  %v1874 = vunpack.c.l.b16 %v330
  %v1875 = vunpack.c.h.b16 %v330
  %v1876 = vunpack.c.l.b16 %v331
  %v1877 = vunpack.c.h.b16 %v331
  %v1878 = vunpack.c.l.b16 %v332
  %v1879 = vunpack.c.h.b16 %v332
  %v1880 = vunpack.c.l.b16 %v333
  %v1881 = vunpack.c.h.b16 %v333
  %v1882 = vunpack.c.l.b16 %v334
  %v1883 = vunpack.c.h.b16 %v334
  %v1884 = vunpack.c.l.b16 %v335
  %v1885 = vunpack.c.h.b16 %v335
  %v1886 = vunpack.c.l.b16 %v336
  %v1887 = vunpack.c.h.b16 %v336
  %v1888 = vunpack.c.l.b16 %v337
  %v1889 = vunpack.c.h.b16 %v337
  %v1890 = vunpack.c.l.b16 %v338
  %v1891 = vunpack.c.h.b16 %v338
  %v1892 = vunpack.c.l.b16 %v339
  %v1893 = vunpack.c.h.b16 %v339
  %v1894 = vunpack.c.l.b16 %v340
  %v1895 = vunpack.c.h.b16 %v340
  %v1896 = vunpack.c.l.b16 %v341
  %v1897 = vunpack.c.h.b16 %v341
  %v1898 = vunpack.c.l.b16 %v342
  %v1899 = vunpack.c.h.b16 %v342
  %v1900 = vunpack.c.l.b16 %v343
  %v1901 = vunpack.c.h.b16 %v343
  %v1902 = vunpack.c.l.b16 %v344
  %v1903 = vunpack.c.h.b16 %v344
  %v1904 = vunpack.c.l.b16 %v345
  %v1905 = vunpack.c.h.b16 %v345
  %v1906 = vunpack.c.l.b16 %v346
  %v1907 = vunpack.c.h.b16 %v346
  %v1908 = vunpack.c.l.b16 %v347
  %v1909 = vunpack.c.h.b16 %v347
  %v1910 = vunpack.c.l.b16 %v348
  %v1911 = vunpack.c.h.b16 %v348
  %v1912 = vunpack.c.l.b16 %v349
  %v1913 = vunpack.c.h.b16 %v349
  %v1914 = vunpack.c.l.b16 %v350
  %v1915 = vunpack.c.h.b16 %v350
  %v1916 = vunpack.c.l.b16 %v351
  %v1917 = vunpack.c.h.b16 %v351
  %v1918 = vunpack.c.l.b16 %v352
  %v1919 = vunpack.c.h.b16 %v352
  %v1920 = vunpack.c.l.b16 %v353
  %v1921 = vunpack.c.h.b16 %v353
  %v1922 = vunpack.c.l.b16 %v354
  %v1923 = vunpack.c.h.b16 %v354
  %v1924 = vunpack.c.l.b16 %v355
  %v1925 = vunpack.c.h.b16 %v355
  %v1926 = vunpack.c.l.b16 %v356
  %v1927 = vunpack.c.h.b16 %v356
  %v1928 = vunpack.c.l.b16 %v357
  %v1929 = vunpack.c.h.b16 %v357
  %v1930 = vunpack.c.l.b16 %v358
  %v1931 = vunpack.c.h.b16 %v358
  %v1932 = vunpack.c.l.b16 %v359
  %v1933 = vunpack.c.h.b16 %v359
  %v1934 = vunpack.c.l.b16 %v360
  %v1935 = vunpack.c.h.b16 %v360
  %v1936 = vunpack.c.l.b16 %v361
  %v1937 = vunpack.c.h.b16 %v361
  %v1938 = vunpack.c.l.b16 %v362
  %v1939 = vunpack.c.h.b16 %v362
  %v1940 = vunpack.c.l.b16 %v363
  %v1941 = vunpack.c.h.b16 %v363
  %v1942 = vunpack.c.l.b16 %v364
  %v1943 = vunpack.c.h.b16 %v364
  %v1944 = vunpack.c.l.b16 %v365
  %v1945 = vunpack.c.h.b16 %v365
  %v1946 = vunpack.c.l.b16 %v366
  %v1947 = vunpack.c.h.b16 %v366
  %v1948 = vunpack.c.l.b16 %v367
  %v1949 = vunpack.c.h.b16 %v367
  %v1950 = vunpack.c.l.b16 %v368
  %v1951 = vunpack.c.h.b16 %v368
  %v1952 = vunpack.c.l.b16 %v369
  %v1953 = vunpack.c.h.b16 %v369
  %v1954 = vunpack.c.l.b16 %v370
  %v1955 = vunpack.c.h.b16 %v370
  %v1956 = vunpack.c.l.b16 %v371
  %v1957 = vunpack.c.h.b16 %v371
  %v1958 = vunpack.c.l.b16 %v372
  %v1959 = vunpack.c.h.b16 %v372
  %v1960 = vunpack.c.l.b16 %v373
  %v1961 = vunpack.c.h.b16 %v373
  %v1962 = vunpack.c.l.b16 %v374
  %v1963 = vunpack.c.h.b16 %v374
  %v1964 = vunpack.c.l.b16 %v375
  %v1965 = vunpack.c.h.b16 %v375
  %v1966 = vunpack.c.l.b16 %v376
  %v1967 = vunpack.c.h.b16 %v376
  %v1968 = vunpack.c.l.b16 %v377
  %v1969 = vunpack.c.h.b16 %v377
  %v1970 = vunpack.c.l.b16 %v378
  %v1971 = vunpack.c.h.b16 %v378
  %v1972 = vunpack.c.l.b16 %v379
  %v1973 = vunpack.c.h.b16 %v379
  %v1974 = vunpack.c.l.b16 %v380
  %v1975 = vunpack.c.h.b16 %v380
  %v1976 = vunpack.c.l.b16 %v381
  %v1977 = vunpack.c.h.b16 %v381
  %v1978 = vunpack.c.l.b16 %v382
  %v1979 = vunpack.c.h.b16 %v382
  %v1980 = vunpack.c.l.b16 %v383
  %v1981 = vunpack.c.h.b16 %v383
  %v1982 = vunpack.c.l.b16 %v384
  %v1983 = vunpack.c.h.b16 %v384
  %v1984 = vunpack.c.l.b16 %v385
  %v1985 = vunpack.c.h.b16 %v385
  %v1986 = vunpack.c.l.b16 %v386
  %v1987 = vunpack.c.h.b16 %v386
  %v1988 = vunpack.c.l.b16 %v387
  %v1989 = vunpack.c.h.b16 %v387
  %v1990 = vunpack.c.l.b16 %v388
  %v1991 = vunpack.c.h.b16 %v388
  %v1992 = vunpack.c.l.b16 %v389
  %v1993 = vunpack.c.h.b16 %v389
  %v1994 = vunpack.c.l.b16 %v390
  %v1995 = vunpack.c.h.b16 %v390
  %v1996 = vunpack.c.l.b16 %v391
  %v1997 = vunpack.c.h.b16 %v391
  %v1998 = vunpack.c.l.b16 %v392
  %v1999 = vunpack.c.h.b16 %v392
  %v2000 = vunpack.c.l.b16 %v393
  %v2001 = vunpack.c.h.b16 %v393
  %v2002 = vunpack.c.l.b16 %v394
  %v2003 = vunpack.c.h.b16 %v394
  %v2004 = vunpack.c.l.b16 %v395
  %v2005 = vunpack.c.h.b16 %v395
  %v2006 = vunpack.c.l.b16 %v396
  %v2007 = vunpack.c.h.b16 %v396
  %v2008 = vunpack.c.l.b16 %v397
  %v2009 = vunpack.c.h.b16 %v397
  %v2010 = vunpack.c.l.b16 %v398
  %v2011 = vunpack.c.h.b16 %v398
  %v2012 = vunpack.c.l.b16 %v399
  %v2013 = vunpack.c.h.b16 %v399
  %v2014 = vunpack.c.l.b16 %v400
  %v2015 = vunpack.c.h.b16 %v400
  %v2016 = vunpack.c.l.b16 %v401
  %v2017 = vunpack.c.h.b16 %v401
  %v2018 = vunpack.c.l.b16 %v402
  %v2019 = vunpack.c.h.b16 %v402
  %v2020 = vunpack.c.l.b16 %v403
  %v2021 = vunpack.c.h.b16 %v403
  %v2022 = vunpack.c.l.b16 %v404
  %v2023 = vunpack.c.h.b16 %v404
  %v2024 = vunpack.c.l.b16 %v405
  %v2025 = vunpack.c.h.b16 %v405
  %v2026 = vunpack.c.l.b16 %v406
  %v2027 = vunpack.c.h.b16 %v406
  %v2028 = vunpack.c.l.b16 %v407
  %v2029 = vunpack.c.h.b16 %v407
  %v2030 = vunpack.c.l.b16 %v408
  %v2031 = vunpack.c.h.b16 %v408
  %v2032 = vunpack.c.l.b16 %v409
  %v2033 = vunpack.c.h.b16 %v409
  %v2034 = vunpack.c.l.b16 %v410
  %v2035 = vunpack.c.h.b16 %v410
  %v2036 = vunpack.c.l.b16 %v411
  %v2037 = vunpack.c.h.b16 %v411
  %v2038 = vunpack.c.l.b16 %v412
  %v2039 = vunpack.c.h.b16 %v412
  %v2040 = vunpack.c.l.b16 %v413
  %v2041 = vunpack.c.h.b16 %v413
  %v2042 = vunpack.c.l.b16 %v414
  %v2043 = vunpack.c.h.b16 %v414
  %v2044 = vunpack.c.l.b16 %v415
  %v2045 = vunpack.c.h.b16 %v415
  %v2046 = vunpack.c.l.b16 %v416
  %v2047 = vunpack.c.h.b16 %v416
  %v2048 = vunpack.c.l.b16 %v417
  %v2049 = vunpack.c.h.b16 %v417
  %v2050 = vunpack.c.l.b16 %v418
  %v2051 = vunpack.c.h.b16 %v418
  %v2052 = vunpack.c.l.b16 %v419
  %v2053 = vunpack.c.h.b16 %v419
  %v2054 = vunpack.c.l.b16 %v420
  %v2055 = vunpack.c.h.b16 %v420
  %v2056 = vunpack.c.l.b16 %v421
  %v2057 = vunpack.c.h.b16 %v421
  %v2058 = vunpack.c.l.b16 %v422
  %v2059 = vunpack.c.h.b16 %v422
  %v2060 = vunpack.c.l.b16 %v423
  %v2061 = vunpack.c.h.b16 %v423
  %v2062 = vunpack.c.l.b16 %v424
  %v2063 = vunpack.c.h.b16 %v424
  %v2064 = vunpack.c.l.b16 %v425
  %v2065 = vunpack.c.h.b16 %v425
  %v2066 = vunpack.c.l.b16 %v426
  %v2067 = vunpack.c.h.b16 %v426
  %v2068 = vunpack.c.l.b16 %v427
  %v2069 = vunpack.c.h.b16 %v427
  %v2070 = vunpack.c.l.b16 %v428
  %v2071 = vunpack.c.h.b16 %v428
  %v2072 = vunpack.c.l.b16 %v429
  %v2073 = vunpack.c.h.b16 %v429
  %v2074 = vunpack.c.l.b16 %v430
  %v2075 = vunpack.c.h.b16 %v430
  %v2076 = vunpack.c.l.b16 %v431
  %v2077 = vunpack.c.h.b16 %v431
  %v2078 = vunpack.c.l.b16 %v432
  %v2079 = vunpack.c.h.b16 %v432
  %v2080 = vunpack.c.l.b16 %v433
  %v2081 = vunpack.c.h.b16 %v433
  %v2082 = vunpack.c.l.b16 %v434
  %v2083 = vunpack.c.h.b16 %v434
  %v2084 = vunpack.c.l.b16 %v435
  %v2085 = vunpack.c.h.b16 %v435
  %v2086 = vunpack.c.l.b16 %v436
  %v2087 = vunpack.c.h.b16 %v436
  %v2088 = vunpack.c.l.b16 %v437
  %v2089 = vunpack.c.h.b16 %v437
  %v2090 = vunpack.c.l.b16 %v438
  %v2091 = vunpack.c.h.b16 %v438
  %v2092 = vunpack.c.l.b16 %v439
  %v2093 = vunpack.c.h.b16 %v439
  %v2094 = vunpack.c.l.b16 %v440
  %v2095 = vunpack.c.h.b16 %v440
  %v2096 = vunpack.c.l.b16 %v441
  %v2097 = vunpack.c.h.b16 %v441
  %v2098 = vunpack.c.l.b16 %v442
  %v2099 = vunpack.c.h.b16 %v442
  %v2100 = vunpack.c.l.b16 %v443
  %v2101 = vunpack.c.h.b16 %v443
  %v2102 = vunpack.c.l.b16 %v444
  %v2103 = vunpack.c.h.b16 %v444
  %v2104 = vunpack.c.l.b16 %v445
  %v2105 = vunpack.c.h.b16 %v445
  %v2106 = vunpack.c.l.b16 %v446
  %v2107 = vunpack.c.h.b16 %v446
  %v2108 = vunpack.c.l.b16 %v447
  %v2109 = vunpack.c.h.b16 %v447
  %v2110 = vunpack.c.l.b16 %v448
  %v2111 = vunpack.c.h.b16 %v448
  %v2112 = vunpack.c.l.b16 %v449
  %v2113 = vunpack.c.h.b16 %v449
  %v2114 = vunpack.c.l.b16 %v450
  %v2115 = vunpack.c.h.b16 %v450
  %v2116 = vunpack.c.l.b16 %v451
  %v2117 = vunpack.c.h.b16 %v451
  %v2118 = vunpack.c.l.b16 %v452
  %v2119 = vunpack.c.h.b16 %v452
  %v2120 = vunpack.c.l.b16 %v453
  %v2121 = vunpack.c.h.b16 %v453
  %v2122 = vunpack.c.l.b16 %v454
  %v2123 = vunpack.c.h.b16 %v454
  %v2124 = vunpack.c.l.b16 %v455
  %v2125 = vunpack.c.h.b16 %v455
  %v2126 = vunpack.c.l.b16 %v456
  %v2127 = vunpack.c.h.b16 %v456
  %v2128 = vunpack.c.l.b16 %v457
  %v2129 = vunpack.c.h.b16 %v457
  %v2130 = vunpack.c.l.b16 %v458
  %v2131 = vunpack.c.h.b16 %v458
  %v2132 = vunpack.c.l.b16 %v459
  %v2133 = vunpack.c.h.b16 %v459
  %v2134 = vunpack.c.l.b16 %v460
  %v2135 = vunpack.c.h.b16 %v460
  %v2136 = vunpack.c.l.b16 %v461
  %v2137 = vunpack.c.h.b16 %v461
  %v2138 = vunpack.c.l.b16 %v462
  %v2139 = vunpack.c.h.b16 %v462
  %v2140 = vunpack.c.l.b16 %v463
  %v2141 = vunpack.c.h.b16 %v463
  %v2142 = vunpack.c.l.b16 %v464
  %v2143 = vunpack.c.h.b16 %v464
  %v2144 = vunpack.c.l.b16 %v465
  %v2145 = vunpack.c.h.b16 %v465
  %v2146 = vunpack.c.l.b16 %v466
  %v2147 = vunpack.c.h.b16 %v466
  %v2148 = vunpack.c.l.b16 %v467
  %v2149 = vunpack.c.h.b16 %v467
  %v2150 = vunpack.c.l.b16 %v468
  %v2151 = vunpack.c.h.b16 %v468
  %v2152 = vunpack.c.l.b16 %v469
  %v2153 = vunpack.c.h.b16 %v469
  %v2154 = vunpack.c.l.b16 %v470
  %v2155 = vunpack.c.h.b16 %v470
  %v2156 = vunpack.c.l.b16 %v471
  %v2157 = vunpack.c.h.b16 %v471
  %v2158 = vunpack.c.l.b16 %v472
  %v2159 = vunpack.c.h.b16 %v472
  %v2160 = vunpack.c.l.b16 %v473
  %v2161 = vunpack.c.h.b16 %v473
  %v2162 = vunpack.c.l.b16 %v474
  %v2163 = vunpack.c.h.b16 %v474
  %v2164 = vunpack.c.l.b16 %v475
  %v2165 = vunpack.c.h.b16 %v475
  %v2166 = vunpack.c.l.b16 %v476
  %v2167 = vunpack.c.h.b16 %v476
  %v2168 = vunpack.c.l.b16 %v477
  %v2169 = vunpack.c.h.b16 %v477
  %v2170 = vunpack.c.l.b16 %v478
  %v2171 = vunpack.c.h.b16 %v478
  %v2172 = vunpack.c.l.b16 %v479
  %v2173 = vunpack.c.h.b16 %v479
  %v2174 = vunpack.c.l.b16 %v480
  %v2175 = vunpack.c.h.b16 %v480
  %v2176 = vunpack.c.l.b16 %v481
  %v2177 = vunpack.c.h.b16 %v481
  %v2178 = vunpack.c.l.b16 %v482
  %v2179 = vunpack.c.h.b16 %v482
  %v2180 = vunpack.c.l.b16 %v483
  %v2181 = vunpack.c.h.b16 %v483
  %v2182 = vunpack.c.l.b16 %v484
  %v2183 = vunpack.c.h.b16 %v484
  %v2184 = vunpack.c.l.b16 %v485
  %v2185 = vunpack.c.h.b16 %v485
  %v2186 = vunpack.c.l.b16 %v486
  %v2187 = vunpack.c.h.b16 %v486
  %v2188 = vunpack.c.l.b16 %v487
  %v2189 = vunpack.c.h.b16 %v487
  %v2190 = vunpack.c.l.b16 %v488
  %v2191 = vunpack.c.h.b16 %v488
  %v2192 = vunpack.c.l.b16 %v489
  %v2193 = vunpack.c.h.b16 %v489
  %v2194 = vunpack.c.l.b16 %v490
  %v2195 = vunpack.c.h.b16 %v490
  %v2196 = vunpack.c.l.b16 %v491
  %v2197 = vunpack.c.h.b16 %v491
  %v2198 = vunpack.c.l.b16 %v492
  %v2199 = vunpack.c.h.b16 %v492
  %v2200 = vunpack.c.l.b16 %v493
  %v2201 = vunpack.c.h.b16 %v493
  %v2202 = vunpack.c.l.b16 %v494
  %v2203 = vunpack.c.h.b16 %v494
  %v2204 = vunpack.c.l.b16 %v495
  %v2205 = vunpack.c.h.b16 %v495
  %v2206 = vunpack.c.l.b16 %v496
  %v2207 = vunpack.c.h.b16 %v496
  %v2208 = vunpack.c.l.b16 %v497
  %v2209 = vunpack.c.h.b16 %v497
  %v2210 = vunpack.c.l.b16 %v498
  %v2211 = vunpack.c.h.b16 %v498
  %v2212 = vunpack.c.l.b16 %v499
  %v2213 = vunpack.c.h.b16 %v499
  %v2214 = vunpack.c.l.b16 %v500
  %v2215 = vunpack.c.h.b16 %v500
  %v2216 = vunpack.c.l.b16 %v501
  %v2217 = vunpack.c.h.b16 %v501
  %v2218 = vunpack.c.l.b16 %v502
  %v2219 = vunpack.c.h.b16 %v502
  %v2220 = vunpack.c.l.b16 %v503
  %v2221 = vunpack.c.h.b16 %v503
  %v2222 = vunpack.c.l.b16 %v504
  %v2223 = vunpack.c.h.b16 %v504
  %v2224 = vunpack.c.l.b16 %v505
  %v2225 = vunpack.c.h.b16 %v505
  %v2226 = vunpack.c.l.b16 %v506
  %v2227 = vunpack.c.h.b16 %v506
  %v2228 = vunpack.c.l.b16 %v507
  %v2229 = vunpack.c.h.b16 %v507
  %v2230 = vunpack.c.l.b16 %v508
  %v2231 = vunpack.c.h.b16 %v508
  %v2232 = vunpack.c.l.b16 %v509
  %v2233 = vunpack.c.h.b16 %v509
  %v2234 = vunpack.c.l.b16 %v510
  %v2235 = vunpack.c.h.b16 %v510
  %v2236 = vunpack.c.l.b16 %v511
  %v2237 = vunpack.c.h.b16 %v511
  %v2238 = vunpack.c.l.b16 %v512
  %v2239 = vunpack.c.h.b16 %v512
  %v2240 = vunpack.c.l.b16 %v513
  %v2241 = vunpack.c.h.b16 %v513
  %v2242 = vunpack.c.l.b16 %v514
  %v2243 = vunpack.c.h.b16 %v514
  %v2244 = vunpack.c.l.b16 %v515
  %v2245 = vunpack.c.h.b16 %v515
  %v2246 = vunpack.c.l.b16 %v516
  %v2247 = vunpack.c.h.b16 %v516
  %v2248 = vunpack.c.l.b16 %v517
  %v2249 = vunpack.c.h.b16 %v517
  %v2250 = vunpack.c.l.b16 %v518
  %v2251 = vunpack.c.h.b16 %v518
  %v2252 = vunpack.c.l.b16 %v519
  %v2253 = vunpack.c.h.b16 %v519
  %v2254 = vunpack.c.l.b16 %v520
  %v2255 = vunpack.c.h.b16 %v520
  %v2256 = vunpack.c.l.b16 %v521
  %v2257 = vunpack.c.h.b16 %v521
  %v2258 = vunpack.c.l.b16 %v522
  %v2259 = vunpack.c.h.b16 %v522
  %v2260 = vunpack.c.l.b16 %v523
  %v2261 = vunpack.c.h.b16 %v523
  %v2262 = vunpack.c.l.b16 %v524
  %v2263 = vunpack.c.h.b16 %v524
  %v2264 = vunpack.c.l.b16 %v525
  %v2265 = vunpack.c.h.b16 %v525
  %v2266 = vunpack.c.l.b16 %v526
  %v2267 = vunpack.c.h.b16 %v526
  %v2268 = vunpack.c.l.b16 %v527
  %v2269 = vunpack.c.h.b16 %v527
  %v2270 = vunpack.c.l.b16 %v528
  %v2271 = vunpack.c.h.b16 %v528
  %v2272 = vunpack.c.l.b16 %v529
  %v2273 = vunpack.c.h.b16 %v529
  %v2274 = vunpack.c.l.b16 %v530
  %v2275 = vunpack.c.h.b16 %v530
  %v2276 = vunpack.c.l.b16 %v531
  %v2277 = vunpack.c.h.b16 %v531
  %v2278 = vunpack.c.l.b16 %v532
  %v2279 = vunpack.c.h.b16 %v532
  %v2280 = vunpack.c.l.b16 %v533
  %v2281 = vunpack.c.h.b16 %v533
  %v2282 = vunpack.c.l.b16 %v534
  %v2283 = vunpack.c.h.b16 %v534
  %v2284 = vunpack.c.l.b16 %v535
  %v2285 = vunpack.c.h.b16 %v535
  %v2286 = vunpack.c.l.b16 %v536
  %v2287 = vunpack.c.h.b16 %v536
  %v2288 = vunpack.c.l.b16 %v537
  %v2289 = vunpack.c.h.b16 %v537
  %v2290 = vunpack.c.l.b16 %v538
  %v2291 = vunpack.c.h.b16 %v538
  %v2292 = vunpack.c.l.b16 %v539
  %v2293 = vunpack.c.h.b16 %v539
  %v2294 = vunpack.c.l.b16 %v540
  %v2295 = vunpack.c.h.b16 %v540
  %v2296 = vunpack.c.l.b16 %v541
  %v2297 = vunpack.c.h.b16 %v541
  %v2298 = vunpack.c.l.b16 %v542
  %v2299 = vunpack.c.h.b16 %v542
  %v2300 = vunpack.c.l.b16 %v543
  %v2301 = vunpack.c.h.b16 %v543
  %v2302 = vunpack.c.l.b16 %v544
  %v2303 = vunpack.c.h.b16 %v544
  %v2304 = vunpack.c.l.b16 %v545
  %v2305 = vunpack.c.h.b16 %v545
  %v2306 = vunpack.c.l.b16 %v546
  %v2307 = vunpack.c.h.b16 %v546
  %v2308 = vunpack.c.l.b16 %v547
  %v2309 = vunpack.c.h.b16 %v547
  %v2310 = vunpack.c.l.b16 %v548
  %v2311 = vunpack.c.h.b16 %v548
  %v2312 = vunpack.c.l.b16 %v549
  %v2313 = vunpack.c.h.b16 %v549
  %v2314 = vunpack.c.l.b16 %v550
  %v2315 = vunpack.c.h.b16 %v550
  %v2316 = vunpack.c.l.b16 %v551
  %v2317 = vunpack.c.h.b16 %v551
  %v2318 = vunpack.c.l.b16 %v552
  %v2319 = vunpack.c.h.b16 %v552
  %v2320 = vunpack.c.l.b16 %v553
  %v2321 = vunpack.c.h.b16 %v553
  %v2322 = vunpack.c.l.b16 %v554
  %v2323 = vunpack.c.h.b16 %v554
  %v2324 = vunpack.c.l.b16 %v555
  %v2325 = vunpack.c.h.b16 %v555
  %v2326 = vunpack.c.l.b16 %v556
  %v2327 = vunpack.c.h.b16 %v556
  %v2328 = vunpack.c.l.b16 %v557
  %v2329 = vunpack.c.h.b16 %v557
  %v2330 = vunpack.c.l.b16 %v558
  %v2331 = vunpack.c.h.b16 %v558
  %v2332 = vunpack.c.l.b16 %v559
  %v2333 = vunpack.c.h.b16 %v559
  %v2334 = vunpack.c.l.b16 %v560
  %v2335 = vunpack.c.h.b16 %v560
  %v2336 = vunpack.c.l.b16 %v561
  %v2337 = vunpack.c.h.b16 %v561
  %v2338 = vunpack.c.l.b16 %v562
  %v2339 = vunpack.c.h.b16 %v562
  %v2340 = vunpack.c.l.b16 %v563
  %v2341 = vunpack.c.h.b16 %v563
  %v2342 = vunpack.c.l.b16 %v564
  %v2343 = vunpack.c.h.b16 %v564
  %v2344 = vunpack.c.l.b16 %v565
  %v2345 = vunpack.c.h.b16 %v565
  %v2346 = vunpack.c.l.b16 %v566
  %v2347 = vunpack.c.h.b16 %v566
  %v2348 = vunpack.c.l.b16 %v567
  %v2349 = vunpack.c.h.b16 %v567
  %v2350 = vunpack.c.l.b16 %v568
  %v2351 = vunpack.c.h.b16 %v568
  %v2352 = vunpack.c.l.b16 %v569
  %v2353 = vunpack.c.h.b16 %v569
  %v2354 = vunpack.c.l.b16 %v570
  %v2355 = vunpack.c.h.b16 %v570
  %v2356 = vunpack.c.l.b16 %v571
  %v2357 = vunpack.c.h.b16 %v571
  %v2358 = vunpack.c.l.b16 %v572
  %v2359 = vunpack.c.h.b16 %v572
  %v2360 = vunpack.c.l.b16 %v573
  %v2361 = vunpack.c.h.b16 %v573
  %v2362 = vunpack.c.l.b16 %v574
  %v2363 = vunpack.c.h.b16 %v574
  %v2364 = vunpack.c.l.b16 %v575
  %v2365 = vunpack.c.h.b16 %v575
  %v2366 = vunpack.c.l.b16 %v576
  %v2367 = vunpack.c.h.b16 %v576
  %v2368 = vunpack.c.l.b16 %v577
  %v2369 = vunpack.c.h.b16 %v577
  %v2370 = vunpack.c.l.b16 %v578
  %v2371 = vunpack.c.h.b16 %v578
  %v2372 = vunpack.c.l.b16 %v579
  %v2373 = vunpack.c.h.b16 %v579
  %v2374 = vunpack.c.l.b16 %v580
  %v2375 = vunpack.c.h.b16 %v580
  %v2376 = vunpack.c.l.b16 %v581
  %v2377 = vunpack.c.h.b16 %v581
  %v2378 = vunpack.c.l.b16 %v582
  %v2379 = vunpack.c.h.b16 %v582
  %v2380 = vunpack.c.l.b16 %v583
  %v2381 = vunpack.c.h.b16 %v583
  %v2382 = vunpack.c.l.b16 %v584
  %v2383 = vunpack.c.h.b16 %v584
  %v2384 = vunpack.c.l.b16 %v585
  %v2385 = vunpack.c.h.b16 %v585
  %v2386 = vunpack.c.l.b16 %v586
  %v2387 = vunpack.c.h.b16 %v586
  %v2388 = vunpack.c.l.b16 %v587
  %v2389 = vunpack.c.h.b16 %v587
  %v2390 = vunpack.c.l.b16 %v588
  %v2391 = vunpack.c.h.b16 %v588
  %v2392 = vunpack.c.l.b16 %v589
  %v2393 = vunpack.c.h.b16 %v589
  %v2394 = vunpack.c.l.b16 %v590
  %v2395 = vunpack.c.h.b16 %v590
  %v2396 = vunpack.c.l.b16 %v591
  %v2397 = vunpack.c.h.b16 %v591
  %v2398 = vunpack.c.l.b16 %v592
  %v2399 = vunpack.c.h.b16 %v592
  %v2400 = vunpack.c.l.b16 %v593
  %v2401 = vunpack.c.h.b16 %v593
  %v2402 = vunpack.c.l.b16 %v594
  %v2403 = vunpack.c.h.b16 %v594
  %v2404 = vunpack.c.l.b16 %v595
  %v2405 = vunpack.c.h.b16 %v595
  %v2406 = vunpack.c.l.b16 %v596
  %v2407 = vunpack.c.h.b16 %v596
  %v2408 = vunpack.c.l.b16 %v597
  %v2409 = vunpack.c.h.b16 %v597
  %v2410 = vunpack.c.l.b16 %v598
  %v2411 = vunpack.c.h.b16 %v598
  %v2412 = vpack.c.b16 %v1264, %v1260
  %v2413 = vpack.c.b16 %v1265, %v1261
  %v2414 = vpack.c.b16 %v1266, %v1262
  %v2415 = vpack.c.b16 %v1267, %v1263
  %v2416 = vpack.c.b16 %v1272, %v1268
  %v2417 = vpack.c.b16 %v1273, %v1269
  %v2418 = vpack.c.b16 %v1274, %v1270
  %v2419 = vpack.c.b16 %v1275, %v1271
  %v2420 = vpack.c.b16 %v1280, %v1276
  %v2421 = vpack.c.b16 %v1281, %v1277
  %v2422 = vpack.c.b16 %v1282, %v1278
  %v2423 = vpack.c.b16 %v1283, %v1279
  %v2424 = vpack.c.b16 %v1288, %v1284
  %v2425 = vpack.c.b16 %v1289, %v1285
  %v2426 = vpack.c.b16 %v1290, %v1286
  %v2427 = vpack.c.b16 %v1291, %v1287
  %v2428 = vpack.c.b16 %v1296, %v1292
  %v2429 = vpack.c.b16 %v1297, %v1293
  %v2430 = vpack.c.b16 %v1298, %v1294
  %v2431 = vpack.c.b16 %v1299, %v1295
  %v2432 = vpack.c.b16 %v1304, %v1300
  %v2433 = vpack.c.b16 %v1305, %v1301
  %v2434 = vpack.c.b16 %v1306, %v1302
  %v2435 = vpack.c.b16 %v1307, %v1303
  %v2436 = vpack.c.b16 %v1312, %v1308
  %v2437 = vpack.c.b16 %v1313, %v1309
  %v2438 = vpack.c.b16 %v1314, %v1310
  %v2439 = vpack.c.b16 %v1315, %v1311
  %v2440 = vpack.c.b16 %v1320, %v1316
  %v2441 = vpack.c.b16 %v1321, %v1317
  %v2442 = vpack.c.b16 %v1322, %v1318
  %v2443 = vpack.c.b16 %v1323, %v1319
  %v2444 = vpack.c.b16 %v1328, %v1324
  %v2445 = vpack.c.b16 %v1329, %v1325
  %v2446 = vpack.c.b16 %v1330, %v1326
  %v2447 = vpack.c.b16 %v1331, %v1327
  %v2448 = vpack.c.b16 %v1336, %v1332
  %v2449 = vpack.c.b16 %v1337, %v1333
  %v2450 = vpack.c.b16 %v1338, %v1334
  %v2451 = vpack.c.b16 %v1339, %v1335
  %v2452 = vpack.c.b16 %v1344, %v1340
  %v2453 = vpack.c.b16 %v1345, %v1341
  %v2454 = vpack.c.b16 %v1346, %v1342
  %v2455 = vpack.c.b16 %v1347, %v1343
  %v2456 = vpack.c.b16 %v1352, %v1348
  %v2457 = vpack.c.b16 %v1353, %v1349
  %v2458 = vpack.c.b16 %v1354, %v1350
  %v2459 = vpack.c.b16 %v1355, %v1351
  %v2460 = vpack.c.b16 %v1360, %v1356
  %v2461 = vpack.c.b16 %v1361, %v1357
  %v2462 = vpack.c.b16 %v1362, %v1358
  %v2463 = vpack.c.b16 %v1363, %v1359
  %v2464 = vpack.c.b16 %v1368, %v1364
  %v2465 = vpack.c.b16 %v1369, %v1365
  %v2466 = vpack.c.b16 %v1370, %v1366
  %v2467 = vpack.c.b16 %v1371, %v1367
  %v2468 = vpack.c.b16 %v1376, %v1372
  %v2469 = vpack.c.b16 %v1377, %v1373
  %v2470 = vpack.c.b16 %v1378, %v1374
  %v2471 = vpack.c.b16 %v1379, %v1375
  %v2472 = vpack.c.b16 %v1384, %v1380
  %v2473 = vpack.c.b16 %v1385, %v1381
  %v2474 = vpack.c.b16 %v1386, %v1382
  %v2475 = vpack.c.b16 %v1387, %v1383
  %v2476 = vpack.c.b16 %v1392, %v1388
  %v2477 = vpack.c.b16 %v1393, %v1389
  %v2478 = vpack.c.b16 %v1394, %v1390
  %v2479 = vpack.c.b16 %v1395, %v1391
  %v2480 = vpack.c.b16 %v1400, %v1396
  %v2481 = vpack.c.b16 %v1401, %v1397
  %v2482 = vpack.c.b16 %v1402, %v1398
  %v2483 = vpack.c.b16 %v1403, %v1399
  %v2484 = vpack.c.b16 %v1408, %v1404
  %v2485 = vpack.c.b16 %v1409, %v1405
  %v2486 = vpack.c.b16 %v1410, %v1406
  %v2487 = vpack.c.b16 %v1411, %v1407
  %v2488 = vpack.c.b16 %v1416, %v1412
  %v2489 = vpack.c.b16 %v1417, %v1413
  %v2490 = vpack.c.b16 %v1418, %v1414
  %v2491 = vpack.c.b16 %v1419, %v1415
  %v2492 = vpack.c.b16 %v1424, %v1420
  %v2493 = vpack.c.b16 %v1425, %v1421
  %v2494 = vpack.c.b16 %v1426, %v1422
  %v2495 = vpack.c.b16 %v1427, %v1423
  %v2496 = vpack.c.b16 %v1432, %v1428
  %v2497 = vpack.c.b16 %v1433, %v1429
  %v2498 = vpack.c.b16 %v1434, %v1430
  %v2499 = vpack.c.b16 %v1435, %v1431
  %v2500 = vpack.c.b16 %v1440, %v1436
  %v2501 = vpack.c.b16 %v1441, %v1437
  %v2502 = vpack.c.b16 %v1442, %v1438
  %v2503 = vpack.c.b16 %v1443, %v1439
  %v2504 = vpack.c.b16 %v1448, %v1444
  %v2505 = vpack.c.b16 %v1449, %v1445
  %v2506 = vpack.c.b16 %v1450, %v1446
  %v2507 = vpack.c.b16 %v1451, %v1447
  %v2508 = vpack.c.b16 %v1456, %v1452
  %v2509 = vpack.c.b16 %v1457, %v1453
  %v2510 = vpack.c.b16 %v1458, %v1454
  %v2511 = vpack.c.b16 %v1459, %v1455
  %v2512 = vpack.c.b16 %v1464, %v1460
  %v2513 = vpack.c.b16 %v1465, %v1461
  %v2514 = vpack.c.b16 %v1466, %v1462
  %v2515 = vpack.c.b16 %v1467, %v1463
  %v2516 = vpack.c.b16 %v1472, %v1468
  %v2517 = vpack.c.b16 %v1473, %v1469
  %v2518 = vpack.c.b16 %v1474, %v1470
  %v2519 = vpack.c.b16 %v1475, %v1471
  %v2520 = vpack.c.b16 %v1480, %v1476
  %v2521 = vpack.c.b16 %v1481, %v1477
  %v2522 = vpack.c.b16 %v1482, %v1478
  %v2523 = vpack.c.b16 %v1483, %v1479
  %v2524 = vpack.c.b16 %v1488, %v1484
  %v2525 = vpack.c.b16 %v1489, %v1485
  %v2526 = vpack.c.b16 %v1490, %v1486
  %v2527 = vpack.c.b16 %v1491, %v1487
  %v2528 = vpack.c.b16 %v1496, %v1492
  %v2529 = vpack.c.b16 %v1497, %v1493
  %v2530 = vpack.c.b16 %v1498, %v1494
  %v2531 = vpack.c.b16 %v1499, %v1495
  %v2532 = vpack.c.b16 %v1504, %v1500
  %v2533 = vpack.c.b16 %v1505, %v1501
  %v2534 = vpack.c.b16 %v1506, %v1502
  %v2535 = vpack.c.b16 %v1507, %v1503
  %v2536 = vpack.c.b16 %v1512, %v1508
  %v2537 = vpack.c.b16 %v1513, %v1509
  %v2538 = vpack.c.b16 %v1514, %v1510
  %v2539 = vpack.c.b16 %v1515, %v1511
  %v2540 = vpack.c.b16 %v1520, %v1516
  %v2541 = vpack.c.b16 %v1521, %v1517
  %v2542 = vpack.c.b16 %v1522, %v1518
  %v2543 = vpack.c.b16 %v1523, %v1519
  %v2544 = vpack.c.b16 %v1528, %v1524
  %v2545 = vpack.c.b16 %v1529, %v1525
  %v2546 = vpack.c.b16 %v1530, %v1526
  %v2547 = vpack.c.b16 %v1531, %v1527
  %v2548 = vpack.c.b16 %v1536, %v1532
  %v2549 = vpack.c.b16 %v1537, %v1533
  %v2550 = vpack.c.b16 %v1538, %v1534
  %v2551 = vpack.c.b16 %v1539, %v1535
  %v2552 = vpack.c.b16 %v1544, %v1540
  %v2553 = vpack.c.b16 %v1545, %v1541
  %v2554 = vpack.c.b16 %v1546, %v1542
  %v2555 = vpack.c.b16 %v1547, %v1543
  %v2556 = vpack.c.b16 %v1552, %v1548
  %v2557 = vpack.c.b16 %v1553, %v1549
  %v2558 = vpack.c.b16 %v1554, %v1550
  %v2559 = vpack.c.b16 %v1555, %v1551
  %v2560 = vpack.c.b16 %v1560, %v1556
  %v2561 = vpack.c.b16 %v1561, %v1557
  %v2562 = vpack.c.b16 %v1562, %v1558
  %v2563 = vpack.c.b16 %v1563, %v1559
  %v2564 = vpack.c.b16 %v1568, %v1564
  %v2565 = vpack.c.b16 %v1569, %v1565
  %v2566 = vpack.c.b16 %v1570, %v1566
  %v2567 = vpack.c.b16 %v1571, %v1567
  %v2568 = vpack.c.b16 %v1576, %v1572
  %v2569 = vpack.c.b16 %v1577, %v1573
  %v2570 = vpack.c.b16 %v1578, %v1574
  %v2571 = vpack.c.b16 %v1579, %v1575
  %v2572 = vpack.c.b16 %v1584, %v1580
  %v2573 = vpack.c.b16 %v1585, %v1581
  %v2574 = vpack.c.b16 %v1586, %v1582
  %v2575 = vpack.c.b16 %v1587, %v1583
  %v2576 = vpack.c.b16 %v1592, %v1588
  %v2577 = vpack.c.b16 %v1593, %v1589
  %v2578 = vpack.c.b16 %v1594, %v1590
  %v2579 = vpack.c.b16 %v1595, %v1591
  %v2580 = vpack.c.b16 %v1600, %v1596
  %v2581 = vpack.c.b16 %v1601, %v1597
  %v2582 = vpack.c.b16 %v1602, %v1598
  %v2583 = vpack.c.b16 %v1603, %v1599
  %v2584 = vpack.c.b16 %v1608, %v1604
  %v2585 = vpack.c.b16 %v1609, %v1605
  %v2586 = vpack.c.b16 %v1610, %v1606
  %v2587 = vpack.c.b16 %v1611, %v1607
  %v2588 = vpack.c.b16 %v1616, %v1612
  %v2589 = vpack.c.b16 %v1617, %v1613
  %v2590 = vpack.c.b16 %v1618, %v1614
  %v2591 = vpack.c.b16 %v1619, %v1615
  %v2592 = vpack.c.b16 %v1624, %v1620
  %v2593 = vpack.c.b16 %v1625, %v1621
  %v2594 = vpack.c.b16 %v1626, %v1622
  %v2595 = vpack.c.b16 %v1627, %v1623
  %v2596 = vpack.c.b16 %v1632, %v1628
  %v2597 = vpack.c.b16 %v1633, %v1629
  %v2598 = vpack.c.b16 %v1634, %v1630
  %v2599 = vpack.c.b16 %v1635, %v1631
  %v2600 = vpack.c.b16 %v1640, %v1636
  %v2601 = vpack.c.b16 %v1641, %v1637
  %v2602 = vpack.c.b16 %v1642, %v1638
  %v2603 = vpack.c.b16 %v1643, %v1639
  %v2604 = vpack.c.b16 %v1648, %v1644
  %v2605 = vpack.c.b16 %v1649, %v1645
  %v2606 = vpack.c.b16 %v1650, %v1646
  %v2607 = vpack.c.b16 %v1651, %v1647
  %v2608 = vpack.c.b16 %v1656, %v1652
  %v2609 = vpack.c.b16 %v1657, %v1653
  %v2610 = vpack.c.b16 %v1658, %v1654
  %v2611 = vpack.c.b16 %v1659, %v1655
  %v2612 = vpack.c.b16 %v1664, %v1660
  %v2613 = vpack.c.b16 %v1665, %v1661
  %v2614 = vpack.c.b16 %v1666, %v1662
  %v2615 = vpack.c.b16 %v1667, %v1663
  %v2616 = vpack.c.b16 %v1672, %v1668
  %v2617 = vpack.c.b16 %v1673, %v1669
  %v2618 = vpack.c.b16 %v1674, %v1670
  %v2619 = vpack.c.b16 %v1675, %v1671
  %v2620 = vpack.c.b16 %v1680, %v1676
  %v2621 = vpack.c.b16 %v1681, %v1677
  %v2622 = vpack.c.b16 %v1682, %v1678
  %v2623 = vpack.c.b16 %v1683, %v1679
  %v2624 = vpack.c.b16 %v1688, %v1684
  %v2625 = vpack.c.b16 %v1689, %v1685
  %v2626 = vpack.c.b16 %v1690, %v1686
  %v2627 = vpack.c.b16 %v1691, %v1687
  %v2628 = vpack.c.b16 %v1696, %v1692
  %v2629 = vpack.c.b16 %v1697, %v1693
  %v2630 = vpack.c.b16 %v1698, %v1694
  %v2631 = vpack.c.b16 %v1699, %v1695
  %v2632 = vpack.c.b16 %v1704, %v1700
  %v2633 = vpack.c.b16 %v1705, %v1701
  %v2634 = vpack.c.b16 %v1706, %v1702
  %v2635 = vpack.c.b16 %v1707, %v1703
  %v2636 = vpack.c.b16 %v1712, %v1708
  %v2637 = vpack.c.b16 %v1713, %v1709
  %v2638 = vpack.c.b16 %v1714, %v1710
  %v2639 = vpack.c.b16 %v1715, %v1711
  %v2640 = vpack.c.b16 %v1720, %v1716
  %v2641 = vpack.c.b16 %v1721, %v1717
  %v2642 = vpack.c.b16 %v1722, %v1718
  %v2643 = vpack.c.b16 %v1723, %v1719
  %v2644 = vpack.c.b16 %v1728, %v1724
  %v2645 = vpack.c.b16 %v1729, %v1725
  %v2646 = vpack.c.b16 %v1730, %v1726
  %v2647 = vpack.c.b16 %v1731, %v1727
  %v2648 = vpack.c.b16 %v1736, %v1732
  %v2649 = vpack.c.b16 %v1737, %v1733
  %v2650 = vpack.c.b16 %v1738, %v1734
  %v2651 = vpack.c.b16 %v1739, %v1735
  %v2652 = vpack.c.b16 %v1744, %v1740
  %v2653 = vpack.c.b16 %v1745, %v1741
  %v2654 = vpack.c.b16 %v1746, %v1742
  %v2655 = vpack.c.b16 %v1747, %v1743
  %v2656 = vpack.c.b16 %v1752, %v1748
  %v2657 = vpack.c.b16 %v1753, %v1749
  %v2658 = vpack.c.b16 %v1754, %v1750
  %v2659 = vpack.c.b16 %v1755, %v1751
  %v2660 = vpack.c.b16 %v1760, %v1756
  %v2661 = vpack.c.b16 %v1761, %v1757
  %v2662 = vpack.c.b16 %v1762, %v1758
  %v2663 = vpack.c.b16 %v1763, %v1759
  %v2664 = vpack.c.b16 %v1768, %v1764
  %v2665 = vpack.c.b16 %v1769, %v1765
  %v2666 = vpack.c.b16 %v1770, %v1766
  %v2667 = vpack.c.b16 %v1771, %v1767
  %v2668 = vpack.c.b16 %v1776, %v1772
  %v2669 = vpack.c.b16 %v1777, %v1773
  %v2670 = vpack.c.b16 %v1778, %v1774
  %v2671 = vpack.c.b16 %v1779, %v1775
  %v2672 = vpack.c.b16 %v1784, %v1780
  %v2673 = vpack.c.b16 %v1785, %v1781
  %v2674 = vpack.c.b16 %v1786, %v1782
  %v2675 = vpack.c.b16 %v1787, %v1783
  %v2676 = vpack.c.b16 %v1792, %v1788
  %v2677 = vpack.c.b16 %v1793, %v1789
  %v2678 = vpack.c.b16 %v1794, %v1790
  %v2679 = vpack.c.b16 %v1795, %v1791
  %v2680 = vpack.c.b16 %v1800, %v1796
  %v2681 = vpack.c.b16 %v1801, %v1797
  %v2682 = vpack.c.b16 %v1802, %v1798
  %v2683 = vpack.c.b16 %v1803, %v1799
  %v2684 = vpack.c.b16 %v1808, %v1804
  %v2685 = vpack.c.b16 %v1809, %v1805
  %v2686 = vpack.c.b16 %v1810, %v1806
  %v2687 = vpack.c.b16 %v1811, %v1807
  %v2688 = vpack.c.b16 %v1816, %v1812
  %v2689 = vpack.c.b16 %v1817, %v1813
  %v2690 = vpack.c.b16 %v1818, %v1814
  %v2691 = vpack.c.b16 %v1819, %v1815
  %v2692 = vpack.c.b16 %v1824, %v1820
  %v2693 = vpack.c.b16 %v1825, %v1821
  %v2694 = vpack.c.b16 %v1826, %v1822
  %v2695 = vpack.c.b16 %v1827, %v1823
  %v2696 = vpack.c.b16 %v1832, %v1828
  %v2697 = vpack.c.b16 %v1833, %v1829
  %v2698 = vpack.c.b16 %v1834, %v1830
  %v2699 = vpack.c.b16 %v1835, %v1831
  %v2700 = vpack.c.b16 %v1840, %v1836
  %v2701 = vpack.c.b16 %v1841, %v1837
  %v2702 = vpack.c.b16 %v1842, %v1838
  %v2703 = vpack.c.b16 %v1843, %v1839
  %v2704 = vpack.c.b16 %v1848, %v1844
  %v2705 = vpack.c.b16 %v1849, %v1845
  %v2706 = vpack.c.b16 %v1850, %v1846
  %v2707 = vpack.c.b16 %v1851, %v1847
  %v2708 = vpack.c.b16 %v1856, %v1852
  %v2709 = vpack.c.b16 %v1857, %v1853
  %v2710 = vpack.c.b16 %v1858, %v1854
  %v2711 = vpack.c.b16 %v1859, %v1855
  %v2712 = vpack.c.b16 %v1864, %v1860
  %v2713 = vpack.c.b16 %v1865, %v1861
  %v2714 = vpack.c.b16 %v1866, %v1862
  %v2715 = vpack.c.b16 %v1867, %v1863
  %v2716 = vpack.c.b16 %v1872, %v1868
  %v2717 = vpack.c.b16 %v1873, %v1869
  %v2718 = vpack.c.b16 %v1874, %v1870
  %v2719 = vpack.c.b16 %v1875, %v1871
  %v2720 = vpack.c.b16 %v1880, %v1876
  %v2721 = vpack.c.b16 %v1881, %v1877
  %v2722 = vpack.c.b16 %v1882, %v1878
  %v2723 = vpack.c.b16 %v1883, %v1879
  %v2724 = vpack.c.b16 %v1888, %v1884
  %v2725 = vpack.c.b16 %v1889, %v1885
  %v2726 = vpack.c.b16 %v1890, %v1886
  %v2727 = vpack.c.b16 %v1891, %v1887
  %v2728 = vpack.c.b16 %v1896, %v1892
  %v2729 = vpack.c.b16 %v1897, %v1893
  %v2730 = vpack.c.b16 %v1898, %v1894
  %v2731 = vpack.c.b16 %v1899, %v1895
  %v2732 = vpack.c.b16 %v1904, %v1900
  %v2733 = vpack.c.b16 %v1905, %v1901
  %v2734 = vpack.c.b16 %v1906, %v1902
  %v2735 = vpack.c.b16 %v1907, %v1903
  %v2736 = vpack.c.b16 %v1912, %v1908
  %v2737 = vpack.c.b16 %v1913, %v1909
  %v2738 = vpack.c.b16 %v1914, %v1910
  %v2739 = vpack.c.b16 %v1915, %v1911
  %v2740 = vpack.c.b16 %v1920, %v1916
  %v2741 = vpack.c.b16 %v1921, %v1917
  %v2742 = vpack.c.b16 %v1922, %v1918
  %v2743 = vpack.c.b16 %v1923, %v1919
  %v2744 = vpack.c.b16 %v1928, %v1924
  %v2745 = vpack.c.b16 %v1929, %v1925
  %v2746 = vpack.c.b16 %v1930, %v1926
  %v2747 = vpack.c.b16 %v1931, %v1927
  %v2748 = vpack.c.b16 %v1936, %v1932
  %v2749 = vpack.c.b16 %v1937, %v1933
  %v2750 = vpack.c.b16 %v1938, %v1934
  %v2751 = vpack.c.b16 %v1939, %v1935
  %v2752 = vpack.c.b16 %v1944, %v1940
  %v2753 = vpack.c.b16 %v1945, %v1941
  %v2754 = vpack.c.b16 %v1946, %v1942
  %v2755 = vpack.c.b16 %v1947, %v1943
  %v2756 = vpack.c.b16 %v1952, %v1948
  %v2757 = vpack.c.b16 %v1953, %v1949
  %v2758 = vpack.c.b16 %v1954, %v1950
  %v2759 = vpack.c.b16 %v1955, %v1951
  %v2760 = vpack.c.b16 %v1960, %v1956
  %v2761 = vpack.c.b16 %v1961, %v1957
  %v2762 = vpack.c.b16 %v1962, %v1958
  %v2763 = vpack.c.b16 %v1963, %v1959
  %v2764 = vpack.c.b16 %v1968, %v1964
  %v2765 = vpack.c.b16 %v1969, %v1965
  %v2766 = vpack.c.b16 %v1970, %v1966
  %v2767 = vpack.c.b16 %v1971, %v1967
  %v2768 = vpack.c.b16 %v1976, %v1972
  %v2769 = vpack.c.b16 %v1977, %v1973
  %v2770 = vpack.c.b16 %v1978, %v1974
  %v2771 = vpack.c.b16 %v1979, %v1975
  %v2772 = vpack.c.b16 %v1984, %v1980
  %v2773 = vpack.c.b16 %v1985, %v1981
  %v2774 = vpack.c.b16 %v1986, %v1982
  %v2775 = vpack.c.b16 %v1987, %v1983
  %v2776 = vpack.c.b16 %v1992, %v1988
  %v2777 = vpack.c.b16 %v1993, %v1989
  %v2778 = vpack.c.b16 %v1994, %v1990
  %v2779 = vpack.c.b16 %v1995, %v1991
  %v2780 = vpack.c.b16 %v2000, %v1996
  %v2781 = vpack.c.b16 %v2001, %v1997
  %v2782 = vpack.c.b16 %v2002, %v1998
  %v2783 = vpack.c.b16 %v2003, %v1999
  %v2784 = vpack.c.b16 %v2008, %v2004
  %v2785 = vpack.c.b16 %v2009, %v2005
  %v2786 = vpack.c.b16 %v2010, %v2006
  %v2787 = vpack.c.b16 %v2011, %v2007
  %v2788 = vpack.c.b16 %v2016, %v2012
  %v2789 = vpack.c.b16 %v2017, %v2013
  %v2790 = vpack.c.b16 %v2018, %v2014
  %v2791 = vpack.c.b16 %v2019, %v2015
  %v2792 = vpack.c.b16 %v2024, %v2020
  %v2793 = vpack.c.b16 %v2025, %v2021
  %v2794 = vpack.c.b16 %v2026, %v2022
  %v2795 = vpack.c.b16 %v2027, %v2023
  %v2796 = vpack.c.b16 %v2032, %v2028
  %v2797 = vpack.c.b16 %v2033, %v2029
  %v2798 = vpack.c.b16 %v2034, %v2030
  %v2799 = vpack.c.b16 %v2035, %v2031
  %v2800 = vpack.c.b16 %v2040, %v2036
  %v2801 = vpack.c.b16 %v2041, %v2037
  %v2802 = vpack.c.b16 %v2042, %v2038
  %v2803 = vpack.c.b16 %v2043, %v2039
  %v2804 = vpack.c.b16 %v2048, %v2044
  %v2805 = vpack.c.b16 %v2049, %v2045
  %v2806 = vpack.c.b16 %v2050, %v2046
  %v2807 = vpack.c.b16 %v2051, %v2047
  %v2808 = vpack.c.b16 %v2056, %v2052
  %v2809 = vpack.c.b16 %v2057, %v2053
  %v2810 = vpack.c.b16 %v2058, %v2054
  %v2811 = vpack.c.b16 %v2059, %v2055
  %v2812 = vpack.c.b16 %v2064, %v2060
  %v2813 = vpack.c.b16 %v2065, %v2061
  %v2814 = vpack.c.b16 %v2066, %v2062
  %v2815 = vpack.c.b16 %v2067, %v2063
  %v2816 = vpack.c.b16 %v2072, %v2068
  %v2817 = vpack.c.b16 %v2073, %v2069
  %v2818 = vpack.c.b16 %v2074, %v2070
  %v2819 = vpack.c.b16 %v2075, %v2071
  %v2820 = vpack.c.b16 %v2080, %v2076
  %v2821 = vpack.c.b16 %v2081, %v2077
  %v2822 = vpack.c.b16 %v2082, %v2078
  %v2823 = vpack.c.b16 %v2083, %v2079
  %v2824 = vpack.c.b16 %v2088, %v2084
  %v2825 = vpack.c.b16 %v2089, %v2085
  %v2826 = vpack.c.b16 %v2090, %v2086
  %v2827 = vpack.c.b16 %v2091, %v2087
  %v2828 = vpack.c.b16 %v2096, %v2092
  %v2829 = vpack.c.b16 %v2097, %v2093
  %v2830 = vpack.c.b16 %v2098, %v2094
  %v2831 = vpack.c.b16 %v2099, %v2095
  %v2832 = vpack.c.b16 %v2104, %v2100
  %v2833 = vpack.c.b16 %v2105, %v2101
  %v2834 = vpack.c.b16 %v2106, %v2102
  %v2835 = vpack.c.b16 %v2107, %v2103
  %v2836 = vpack.c.b16 %v2112, %v2108
  %v2837 = vpack.c.b16 %v2113, %v2109
  %v2838 = vpack.c.b16 %v2114, %v2110
  %v2839 = vpack.c.b16 %v2115, %v2111
  %v2840 = vpack.c.b16 %v2120, %v2116
  %v2841 = vpack.c.b16 %v2121, %v2117
  %v2842 = vpack.c.b16 %v2122, %v2118
  %v2843 = vpack.c.b16 %v2123, %v2119
  %v2844 = vpack.c.b16 %v2128, %v2124
  %v2845 = vpack.c.b16 %v2129, %v2125
  %v2846 = vpack.c.b16 %v2130, %v2126
  %v2847 = vpack.c.b16 %v2131, %v2127
  %v2848 = vpack.c.b16 %v2136, %v2132
  %v2849 = vpack.c.b16 %v2137, %v2133
  %v2850 = vpack.c.b16 %v2138, %v2134
  %v2851 = vpack.c.b16 %v2139, %v2135
  %v2852 = vpack.c.b16 %v2144, %v2140
  %v2853 = vpack.c.b16 %v2145, %v2141
  %v2854 = vpack.c.b16 %v2146, %v2142
  %v2855 = vpack.c.b16 %v2147, %v2143
  %v2856 = vpack.c.b16 %v2152, %v2148
  %v2857 = vpack.c.b16 %v2153, %v2149
  %v2858 = vpack.c.b16 %v2154, %v2150
  %v2859 = vpack.c.b16 %v2155, %v2151
  %v2860 = vpack.c.b16 %v2160, %v2156
  %v2861 = vpack.c.b16 %v2161, %v2157
  %v2862 = vpack.c.b16 %v2162, %v2158
  %v2863 = vpack.c.b16 %v2163, %v2159
  %v2864 = vpack.c.b16 %v2168, %v2164
  %v2865 = vpack.c.b16 %v2169, %v2165
  %v2866 = vpack.c.b16 %v2170, %v2166
  %v2867 = vpack.c.b16 %v2171, %v2167
  %v2868 = vpack.c.b16 %v2176, %v2172
  %v2869 = vpack.c.b16 %v2177, %v2173
  %v2870 = vpack.c.b16 %v2178, %v2174
  %v2871 = vpack.c.b16 %v2179, %v2175
  %v2872 = vpack.c.b16 %v2184, %v2180
  %v2873 = vpack.c.b16 %v2185, %v2181
  %v2874 = vpack.c.b16 %v2186, %v2182
  %v2875 = vpack.c.b16 %v2187, %v2183
  %v2876 = vpack.c.b16 %v2192, %v2188
  %v2877 = vpack.c.b16 %v2193, %v2189
  %v2878 = vpack.c.b16 %v2194, %v2190
  %v2879 = vpack.c.b16 %v2195, %v2191
  %v2880 = vpack.c.b16 %v2200, %v2196
  %v2881 = vpack.c.b16 %v2201, %v2197
  %v2882 = vpack.c.b16 %v2202, %v2198
  %v2883 = vpack.c.b16 %v2203, %v2199
  %v2884 = vpack.c.b16 %v2208, %v2204
  %v2885 = vpack.c.b16 %v2209, %v2205
  %v2886 = vpack.c.b16 %v2210, %v2206
  %v2887 = vpack.c.b16 %v2211, %v2207
  %v2888 = vpack.c.b16 %v2216, %v2212
  %v2889 = vpack.c.b16 %v2217, %v2213
  %v2890 = vpack.c.b16 %v2218, %v2214
  %v2891 = vpack.c.b16 %v2219, %v2215
  %v2892 = vpack.c.b16 %v2224, %v2220
  %v2893 = vpack.c.b16 %v2225, %v2221
  %v2894 = vpack.c.b16 %v2226, %v2222
  %v2895 = vpack.c.b16 %v2227, %v2223
  %v2896 = vpack.c.b16 %v2232, %v2228
  %v2897 = vpack.c.b16 %v2233, %v2229
  %v2898 = vpack.c.b16 %v2234, %v2230
  %v2899 = vpack.c.b16 %v2235, %v2231
  %v2900 = vpack.c.b16 %v2240, %v2236
  %v2901 = vpack.c.b16 %v2241, %v2237
  %v2902 = vpack.c.b16 %v2242, %v2238
  %v2903 = vpack.c.b16 %v2243, %v2239
  %v2904 = vpack.c.b16 %v2248, %v2244
  %v2905 = vpack.c.b16 %v2249, %v2245
  %v2906 = vpack.c.b16 %v2250, %v2246
  %v2907 = vpack.c.b16 %v2251, %v2247
  %v2908 = vpack.c.b16 %v2256, %v2252
  %v2909 = vpack.c.b16 %v2257, %v2253
  %v2910 = vpack.c.b16 %v2258, %v2254
  %v2911 = vpack.c.b16 %v2259, %v2255
  %v2912 = vpack.c.b16 %v2264, %v2260
  %v2913 = vpack.c.b16 %v2265, %v2261
  %v2914 = vpack.c.b16 %v2266, %v2262
  %v2915 = vpack.c.b16 %v2267, %v2263
  %v2916 = vpack.c.b16 %v2272, %v2268
  %v2917 = vpack.c.b16 %v2273, %v2269
  %v2918 = vpack.c.b16 %v2274, %v2270
  %v2919 = vpack.c.b16 %v2275, %v2271
  %v2920 = vpack.c.b16 %v2280, %v2276
  %v2921 = vpack.c.b16 %v2281, %v2277
  %v2922 = vpack.c.b16 %v2282, %v2278
  %v2923 = vpack.c.b16 %v2283, %v2279
  %v2924 = vpack.c.b16 %v2288, %v2284
  %v2925 = vpack.c.b16 %v2289, %v2285
  %v2926 = vpack.c.b16 %v2290, %v2286
  %v2927 = vpack.c.b16 %v2291, %v2287
  %v2928 = vpack.c.b16 %v2296, %v2292
  %v2929 = vpack.c.b16 %v2297, %v2293
  %v2930 = vpack.c.b16 %v2298, %v2294
  %v2931 = vpack.c.b16 %v2299, %v2295
  %v2932 = vpack.c.b16 %v2304, %v2300
  %v2933 = vpack.c.b16 %v2305, %v2301
  %v2934 = vpack.c.b16 %v2306, %v2302
  %v2935 = vpack.c.b16 %v2307, %v2303
  %v2936 = vpack.c.b16 %v2312, %v2308
  %v2937 = vpack.c.b16 %v2313, %v2309
  %v2938 = vpack.c.b16 %v2314, %v2310
  %v2939 = vpack.c.b16 %v2315, %v2311
  %v2940 = vpack.c.b16 %v2320, %v2316
  %v2941 = vpack.c.b16 %v2321, %v2317
  %v2942 = vpack.c.b16 %v2322, %v2318
  %v2943 = vpack.c.b16 %v2323, %v2319
  %v2944 = vpack.c.b16 %v2328, %v2324
  %v2945 = vpack.c.b16 %v2329, %v2325
  %v2946 = vpack.c.b16 %v2330, %v2326
  %v2947 = vpack.c.b16 %v2331, %v2327
  %v2948 = vpack.c.b16 %v2336, %v2332
  %v2949 = vpack.c.b16 %v2337, %v2333
  %v2950 = vpack.c.b16 %v2338, %v2334
  %v2951 = vpack.c.b16 %v2339, %v2335
  %v2952 = vpack.c.b16 %v2344, %v2340
  %v2953 = vpack.c.b16 %v2345, %v2341
  %v2954 = vpack.c.b16 %v2346, %v2342
  %v2955 = vpack.c.b16 %v2347, %v2343
  %v2956 = vpack.c.b16 %v2352, %v2348
  %v2957 = vpack.c.b16 %v2353, %v2349
  %v2958 = vpack.c.b16 %v2354, %v2350
  %v2959 = vpack.c.b16 %v2355, %v2351
  %v2960 = vpack.c.b16 %v2360, %v2356
  %v2961 = vpack.c.b16 %v2361, %v2357
  %v2962 = vpack.c.b16 %v2362, %v2358
  %v2963 = vpack.c.b16 %v2363, %v2359
  %v2964 = vpack.c.b16 %v2368, %v2364
  %v2965 = vpack.c.b16 %v2369, %v2365
  %v2966 = vpack.c.b16 %v2370, %v2366
  %v2967 = vpack.c.b16 %v2371, %v2367
  %v2968 = vpack.c.b16 %v2376, %v2372
  %v2969 = vpack.c.b16 %v2377, %v2373
  %v2970 = vpack.c.b16 %v2378, %v2374
  %v2971 = vpack.c.b16 %v2379, %v2375
  %v2972 = vpack.c.b16 %v2384, %v2380
  %v2973 = vpack.c.b16 %v2385, %v2381
  %v2974 = vpack.c.b16 %v2386, %v2382
  %v2975 = vpack.c.b16 %v2387, %v2383
  %v2976 = vpack.c.b16 %v2392, %v2388
  %v2977 = vpack.c.b16 %v2393, %v2389
  %v2978 = vpack.c.b16 %v2394, %v2390
  %v2979 = vpack.c.b16 %v2395, %v2391
  %v2980 = vpack.c.b16 %v2400, %v2396
  %v2981 = vpack.c.b16 %v2401, %v2397
  %v2982 = vpack.c.b16 %v2402, %v2398
  %v2983 = vpack.c.b16 %v2403, %v2399
  %v2984 = vpack.c.b16 %v2408, %v2404
  %v2985 = vpack.c.b16 %v2409, %v2405
  %v2986 = vpack.c.b16 %v2410, %v2406
  %v2987 = vpack.c.b16 %v2411, %v2407
  %3564 = vmatprep.subr.bf16.mxu0 %v2413
  %3565 = vmatpush1.bf16.msra.mxu0 %v2412
  %3566 = vmatprep.subr.bf16.mxu0 %v2417
  %3567 = vmatpush1.bf16.msra.mxu0 %v2416
  %3568 = vmatprep.subr.bf16.mxu0 %v2421
  %3569 = vmatpush1.bf16.msra.mxu0 %v2420
  %3570 = vmatprep.subr.bf16.mxu0 %v2425
  %3571 = vmatpush1.bf16.msra.mxu0 %v2424
  %3572 = vmatprep.subr.bf16.mxu0 %v2429
  %3573 = vmatpush1.bf16.msra.mxu0 %v2428
  %3574 = vmatprep.subr.bf16.mxu0 %v2433
  %3575 = vmatpush1.bf16.msra.mxu0 %v2432
  %3576 = vmatprep.subr.bf16.mxu0 %v2437
  %3577 = vmatpush1.bf16.msra.mxu0 %v2436
  %3578 = vmatprep.subr.bf16.mxu0 %v2441
  %3579 = vmatpush1.bf16.msra.mxu0 %v2440
  %3580 = vmatprep.subr.bf16.mxu0 %v2445
  %3581 = vmatpush1.bf16.msra.mxu0 %v2444
  %3582 = vmatprep.subr.bf16.mxu0 %v2449
  %3583 = vmatpush1.bf16.msra.mxu0 %v2448
  %3584 = vmatprep.subr.bf16.mxu0 %v2453
  %3585 = vmatpush1.bf16.msra.mxu0 %v2452
  %3586 = vmatprep.subr.bf16.mxu0 %v2457
  %3587 = vmatpush1.bf16.msra.mxu0 %v2456
  %3588 = vmatprep.subr.bf16.mxu0 %v2461
  %3589 = vmatpush1.bf16.msra.mxu0 %v2460
  %3590 = vmatprep.subr.bf16.mxu0 %v2465
  %3591 = vmatpush1.bf16.msra.mxu0 %v2464
  %3592 = vmatprep.subr.bf16.mxu0 %v2469
  %3593 = vmatpush1.bf16.msra.mxu0 %v2468
  %3594 = vmatprep.subr.bf16.mxu0 %v2473
  %3595 = vmatpush1.bf16.msra.mxu0 %v2472
  %3596 = vmatprep.mubr.bf16.mxu0 %v649
  %3597 = vmatmul.mubr.bf16.gmra.mrb[0].mxu0 %v648
  %v3598 = vpop.f32.mrb[0].mxu0
  %v3599 = vadd.f32 %v604, %v3598
  %v3600 = vpop.f32.mrb[0].mxu0
  %v3601 = vadd.f32 %v608, %v3600
  %v3602 = vpop.f32.mrb[0].mxu0
  %v3603 = vpop.f32.mrb[0].mxu0
  %3604 = vdwg.mxu0
  %3605 = vmatprep.subr.bf16.mxu0 %v2477
  %3606 = vmatpush1.bf16.msra.mxu0 %v2476
  %3607 = vmatprep.subr.bf16.mxu0 %v2481
  %3608 = vmatpush1.bf16.msra.mxu0 %v2480
  %3609 = vmatprep.subr.bf16.mxu0 %v2485
  %3610 = vmatpush1.bf16.msra.mxu0 %v2484
  %3611 = vmatprep.subr.bf16.mxu0 %v2489
  %3612 = vmatpush1.bf16.msra.mxu0 %v2488
  %3613 = vmatprep.subr.bf16.mxu0 %v2493
  %3614 = vmatpush1.bf16.msra.mxu0 %v2492
  %3615 = vmatprep.subr.bf16.mxu0 %v2497
  %3616 = vmatpush1.bf16.msra.mxu0 %v2496
  %3617 = vmatprep.subr.bf16.mxu0 %v2501
  %3618 = vmatpush1.bf16.msra.mxu0 %v2500
  %3619 = vmatprep.subr.bf16.mxu0 %v2505
  %3620 = vmatpush1.bf16.msra.mxu0 %v2504
  %3621 = vmatprep.subr.bf16.mxu0 %v2509
  %3622 = vmatpush1.bf16.msra.mxu0 %v2508
  %3623 = vmatprep.subr.bf16.mxu0 %v2513
  %3624 = vmatpush1.bf16.msra.mxu0 %v2512
  %3625 = vmatprep.subr.bf16.mxu0 %v2517
  %3626 = vmatpush1.bf16.msra.mxu0 %v2516
  %3627 = vmatprep.subr.bf16.mxu0 %v2521
  %3628 = vmatpush1.bf16.msra.mxu0 %v2520
  %3629 = vmatprep.subr.bf16.mxu0 %v2525
  %3630 = vmatpush1.bf16.msra.mxu0 %v2524
  %3631 = vmatprep.subr.bf16.mxu0 %v2529
  %3632 = vmatpush1.bf16.msra.mxu0 %v2528
  %3633 = vmatprep.subr.bf16.mxu0 %v2533
  %3634 = vmatpush1.bf16.msra.mxu0 %v2532
  %3635 = vmatprep.subr.bf16.mxu0 %v2537
  %3636 = vmatpush1.bf16.msra.mxu0 %v2536
  %3637 = vmatprep.mubr.bf16.mxu0 %v651
  %3638 = vmatmul.mubr.bf16.gmra.mrb[0].mxu0 %v650
  %v3639 = vpop.f32.mrb[0].mxu0
  %v3640 = vadd.f32 %v3599, %v3639
  %v3641 = vpop.f32.mrb[0].mxu0
  %v3642 = vadd.f32 %v3601, %v3641
  %v3643 = vpop.f32.mrb[0].mxu0
  %v3644 = vpop.f32.mrb[0].mxu0
  %3645 = vdwg.mxu0
  %3646 = vmatprep.subr.bf16.mxu0 %v2541
  %3647 = vmatpush1.bf16.msra.mxu0 %v2540
  %3648 = vmatprep.subr.bf16.mxu0 %v2545
  %3649 = vmatpush1.bf16.msra.mxu0 %v2544
  %3650 = vmatprep.subr.bf16.mxu0 %v2549
  %3651 = vmatpush1.bf16.msra.mxu0 %v2548
  %3652 = vmatprep.subr.bf16.mxu0 %v2553
  %3653 = vmatpush1.bf16.msra.mxu0 %v2552
  %3654 = vmatprep.subr.bf16.mxu0 %v2557
  %3655 = vmatpush1.bf16.msra.mxu0 %v2556
  %3656 = vmatprep.subr.bf16.mxu0 %v2561
  %3657 = vmatpush1.bf16.msra.mxu0 %v2560
  %3658 = vmatprep.subr.bf16.mxu0 %v2565
  %3659 = vmatpush1.bf16.msra.mxu0 %v2564
  %3660 = vmatprep.subr.bf16.mxu0 %v2569
  %3661 = vmatpush1.bf16.msra.mxu0 %v2568
  %3662 = vmatprep.subr.bf16.mxu0 %v2573
  %3663 = vmatpush1.bf16.msra.mxu0 %v2572
  %3664 = vmatprep.subr.bf16.mxu0 %v2577
  %3665 = vmatpush1.bf16.msra.mxu0 %v2576
  %3666 = vmatprep.subr.bf16.mxu0 %v2581
  %3667 = vmatpush1.bf16.msra.mxu0 %v2580
  %3668 = vmatprep.subr.bf16.mxu0 %v2585
  %3669 = vmatpush1.bf16.msra.mxu0 %v2584
  %3670 = vmatprep.subr.bf16.mxu0 %v2589
  %3671 = vmatpush1.bf16.msra.mxu0 %v2588
  %3672 = vmatprep.subr.bf16.mxu0 %v2593
  %3673 = vmatpush1.bf16.msra.mxu0 %v2592
  %3674 = vmatprep.subr.bf16.mxu0 %v2597
  %3675 = vmatpush1.bf16.msra.mxu0 %v2596
  %3676 = vmatprep.subr.bf16.mxu0 %v2601
  %3677 = vmatpush1.bf16.msra.mxu0 %v2600
  %3678 = vmatprep.mubr.bf16.mxu0 %v653
  %3679 = vmatmul.mubr.bf16.gmra.mrb[0].mxu0 %v652
  %v3680 = vpop.f32.mrb[0].mxu0
  %v3681 = vadd.f32 %v3640, %v3680
  %v3682 = vpop.f32.mrb[0].mxu0
  %v3683 = vadd.f32 %v3642, %v3682
  %v3684 = vpop.f32.mrb[0].mxu0
  %v3685 = vpop.f32.mrb[0].mxu0
  %3686 = vdwg.mxu0
  %3687 = vmatprep.subr.bf16.mxu0 %v2605
  %3688 = vmatpush1.bf16.msra.mxu0 %v2604
  %3689 = vmatprep.subr.bf16.mxu0 %v2609
  %3690 = vmatpush1.bf16.msra.mxu0 %v2608
  %3691 = vmatprep.subr.bf16.mxu0 %v2613
  %3692 = vmatpush1.bf16.msra.mxu0 %v2612
  %3693 = vmatprep.subr.bf16.mxu0 %v2617
  %3694 = vmatpush1.bf16.msra.mxu0 %v2616
  %3695 = vmatprep.subr.bf16.mxu0 %v2621
  %3696 = vmatpush1.bf16.msra.mxu0 %v2620
  %3697 = vmatprep.subr.bf16.mxu0 %v2625
  %3698 = vmatpush1.bf16.msra.mxu0 %v2624
  %3699 = vmatprep.subr.bf16.mxu0 %v2629
  %3700 = vmatpush1.bf16.msra.mxu0 %v2628
  %3701 = vmatprep.subr.bf16.mxu0 %v2633
  %3702 = vmatpush1.bf16.msra.mxu0 %v2632
  %3703 = vmatprep.subr.bf16.mxu0 %v2637
  %3704 = vmatpush1.bf16.msra.mxu0 %v2636
  %3705 = vmatprep.subr.bf16.mxu0 %v2641
  %3706 = vmatpush1.bf16.msra.mxu0 %v2640
  %3707 = vmatprep.subr.bf16.mxu0 %v2645
  %3708 = vmatpush1.bf16.msra.mxu0 %v2644
  %3709 = vmatprep.subr.bf16.mxu0 %v2649
  %3710 = vmatpush1.bf16.msra.mxu0 %v2648
  %3711 = vmatprep.subr.bf16.mxu0 %v2653
  %3712 = vmatpush1.bf16.msra.mxu0 %v2652
  %3713 = vmatprep.subr.bf16.mxu0 %v2657
  %3714 = vmatpush1.bf16.msra.mxu0 %v2656
  %3715 = vmatprep.subr.bf16.mxu0 %v2661
  %3716 = vmatpush1.bf16.msra.mxu0 %v2660
  %3717 = vmatprep.subr.bf16.mxu0 %v2665
  %3718 = vmatpush1.bf16.msra.mxu0 %v2664
  %3719 = vmatprep.mubr.bf16.mxu0 %v655
  %3720 = vmatmul.mubr.bf16.gmra.mrb[0].mxu0 %v654
  %v3721 = vpop.f32.mrb[0].mxu0
  %v3722 = vadd.f32 %v3681, %v3721
  %v3723 = vpop.f32.mrb[0].mxu0
  %v3724 = vadd.f32 %v3683, %v3723
  %v3725 = vpop.f32.mrb[0].mxu0
  %v3726 = vpop.f32.mrb[0].mxu0
  %3727 = vdwg.mxu0
  %3728 = vmatprep.subr.bf16.mxu0 %v2669
  %3729 = vmatpush1.bf16.msra.mxu0 %v2668
  %3730 = vmatprep.subr.bf16.mxu0 %v2673
  %3731 = vmatpush1.bf16.msra.mxu0 %v2672
  %3732 = vmatprep.subr.bf16.mxu0 %v2677
  %3733 = vmatpush1.bf16.msra.mxu0 %v2676
  %3734 = vmatprep.subr.bf16.mxu0 %v2681
  %3735 = vmatpush1.bf16.msra.mxu0 %v2680
  %3736 = vmatprep.subr.bf16.mxu0 %v2685
  %3737 = vmatpush1.bf16.msra.mxu0 %v2684
  %3738 = vmatprep.subr.bf16.mxu0 %v2689
  %3739 = vmatpush1.bf16.msra.mxu0 %v2688
  %3740 = vmatprep.subr.bf16.mxu0 %v2693
  %3741 = vmatpush1.bf16.msra.mxu0 %v2692
  %3742 = vmatprep.subr.bf16.mxu0 %v2697
  %3743 = vmatpush1.bf16.msra.mxu0 %v2696
  %3744 = vmatprep.subr.bf16.mxu0 %v2701
  %3745 = vmatpush1.bf16.msra.mxu0 %v2700
  %3746 = vmatprep.subr.bf16.mxu0 %v2705
  %3747 = vmatpush1.bf16.msra.mxu0 %v2704
  %3748 = vmatprep.subr.bf16.mxu0 %v2709
  %3749 = vmatpush1.bf16.msra.mxu0 %v2708
  %3750 = vmatprep.subr.bf16.mxu0 %v2713
  %3751 = vmatpush1.bf16.msra.mxu0 %v2712
  %3752 = vmatprep.subr.bf16.mxu0 %v2717
  %3753 = vmatpush1.bf16.msra.mxu0 %v2716
  %3754 = vmatprep.subr.bf16.mxu0 %v2721
  %3755 = vmatpush1.bf16.msra.mxu0 %v2720
  %3756 = vmatprep.subr.bf16.mxu0 %v2725
  %3757 = vmatpush1.bf16.msra.mxu0 %v2724
  %3758 = vmatprep.subr.bf16.mxu0 %v2729
  %3759 = vmatpush1.bf16.msra.mxu0 %v2728
  %3760 = vmatprep.mubr.bf16.mxu0 %v657
  %3761 = vmatmul.mubr.bf16.gmra.mrb[0].mxu0 %v656
  %v3762 = vpop.f32.mrb[0].mxu0
  %v3763 = vadd.f32 %v3722, %v3762
  %v3764 = vpop.f32.mrb[0].mxu0
  %v3765 = vadd.f32 %v3724, %v3764
  %v3766 = vpop.f32.mrb[0].mxu0
  %v3767 = vpop.f32.mrb[0].mxu0
  %3768 = vdwg.mxu0
  %3769 = vmatprep.subr.bf16.mxu0 %v2733
  %3770 = vmatpush1.bf16.msra.mxu0 %v2732
  %3771 = vmatprep.subr.bf16.mxu0 %v2737
  %3772 = vmatpush1.bf16.msra.mxu0 %v2736
  %3773 = vmatprep.subr.bf16.mxu0 %v2741
  %3774 = vmatpush1.bf16.msra.mxu0 %v2740
  %3775 = vmatprep.subr.bf16.mxu0 %v2745
  %3776 = vmatpush1.bf16.msra.mxu0 %v2744
  %3777 = vmatprep.subr.bf16.mxu0 %v2749
  %3778 = vmatpush1.bf16.msra.mxu0 %v2748
  %3779 = vmatprep.subr.bf16.mxu0 %v2753
  %3780 = vmatpush1.bf16.msra.mxu0 %v2752
  %3781 = vmatprep.subr.bf16.mxu0 %v2757
  %3782 = vmatpush1.bf16.msra.mxu0 %v2756
  %3783 = vmatprep.subr.bf16.mxu0 %v2761
  %3784 = vmatpush1.bf16.msra.mxu0 %v2760
  %3785 = vmatprep.subr.bf16.mxu0 %v2765
  %3786 = vmatpush1.bf16.msra.mxu0 %v2764
  %3787 = vmatprep.subr.bf16.mxu0 %v2769
  %3788 = vmatpush1.bf16.msra.mxu0 %v2768
  %3789 = vmatprep.subr.bf16.mxu0 %v2773
  %3790 = vmatpush1.bf16.msra.mxu0 %v2772
  %3791 = vmatprep.subr.bf16.mxu0 %v2777
  %3792 = vmatpush1.bf16.msra.mxu0 %v2776
  %3793 = vmatprep.subr.bf16.mxu0 %v2781
  %3794 = vmatpush1.bf16.msra.mxu0 %v2780
  %3795 = vmatprep.subr.bf16.mxu0 %v2785
  %3796 = vmatpush1.bf16.msra.mxu0 %v2784
  %3797 = vmatprep.subr.bf16.mxu0 %v2789
  %3798 = vmatpush1.bf16.msra.mxu0 %v2788
  %3799 = vmatprep.subr.bf16.mxu0 %v2793
  %3800 = vmatpush1.bf16.msra.mxu0 %v2792
  %3801 = vmatprep.mubr.bf16.mxu0 %v659
  %3802 = vmatmul.mubr.bf16.gmra.mrb[0].mxu0 %v658
  %v3803 = vpop.f32.mrb[0].mxu0
  %v3804 = vadd.f32 %v3763, %v3803
  %v3805 = vpop.f32.mrb[0].mxu0
  %v3806 = vadd.f32 %v3765, %v3805
  %v3807 = vpop.f32.mrb[0].mxu0
  %v3808 = vpop.f32.mrb[0].mxu0
  %3809 = vdwg.mxu0
  %3810 = vmatprep.subr.bf16.mxu0 %v2797
  %3811 = vmatpush1.bf16.msra.mxu0 %v2796
  %3812 = vmatprep.subr.bf16.mxu0 %v2801
  %3813 = vmatpush1.bf16.msra.mxu0 %v2800
  %3814 = vmatprep.subr.bf16.mxu0 %v2805
  %3815 = vmatpush1.bf16.msra.mxu0 %v2804
  %3816 = vmatprep.subr.bf16.mxu0 %v2809
  %3817 = vmatpush1.bf16.msra.mxu0 %v2808
  %3818 = vmatprep.subr.bf16.mxu0 %v2813
  %3819 = vmatpush1.bf16.msra.mxu0 %v2812
  %3820 = vmatprep.subr.bf16.mxu0 %v2817
  %3821 = vmatpush1.bf16.msra.mxu0 %v2816
  %3822 = vmatprep.subr.bf16.mxu0 %v2821
  %3823 = vmatpush1.bf16.msra.mxu0 %v2820
  %3824 = vmatprep.subr.bf16.mxu0 %v2825
  %3825 = vmatpush1.bf16.msra.mxu0 %v2824
  %3826 = vmatprep.subr.bf16.mxu0 %v2829
  %3827 = vmatpush1.bf16.msra.mxu0 %v2828
  %3828 = vmatprep.subr.bf16.mxu0 %v2833
  %3829 = vmatpush1.bf16.msra.mxu0 %v2832
  %3830 = vmatprep.subr.bf16.mxu0 %v2837
  %3831 = vmatpush1.bf16.msra.mxu0 %v2836
  %3832 = vmatprep.subr.bf16.mxu0 %v2841
  %3833 = vmatpush1.bf16.msra.mxu0 %v2840
  %3834 = vmatprep.subr.bf16.mxu0 %v2845
  %3835 = vmatpush1.bf16.msra.mxu0 %v2844
  %3836 = vmatprep.subr.bf16.mxu0 %v2849
  %3837 = vmatpush1.bf16.msra.mxu0 %v2848
  %3838 = vmatprep.subr.bf16.mxu0 %v2853
  %3839 = vmatpush1.bf16.msra.mxu0 %v2852
  %3840 = vmatprep.subr.bf16.mxu0 %v2857
  %3841 = vmatpush1.bf16.msra.mxu0 %v2856
  %3842 = vmatprep.mubr.bf16.mxu0 %v661
  %3843 = vmatmul.mubr.bf16.gmra.mrb[0].mxu0 %v660
  %v3844 = vpop.f32.mrb[0].mxu0
  %v3845 = vadd.f32 %v3804, %v3844
  %v3846 = vpop.f32.mrb[0].mxu0
  %v3847 = vadd.f32 %v3806, %v3846
  %v3848 = vpop.f32.mrb[0].mxu0
  %v3849 = vpop.f32.mrb[0].mxu0
  %3850 = vdwg.mxu0
  %3851 = vmatprep.subr.bf16.mxu0 %v2861
  %3852 = vmatpush1.bf16.msra.mxu0 %v2860
  %3853 = vmatprep.subr.bf16.mxu0 %v2865
  %3854 = vmatpush1.bf16.msra.mxu0 %v2864
  %3855 = vmatprep.subr.bf16.mxu0 %v2869
  %3856 = vmatpush1.bf16.msra.mxu0 %v2868
  %3857 = vmatprep.subr.bf16.mxu0 %v2873
  %3858 = vmatpush1.bf16.msra.mxu0 %v2872
  %3859 = vmatprep.subr.bf16.mxu0 %v2877
  %3860 = vmatpush1.bf16.msra.mxu0 %v2876
  %3861 = vmatprep.subr.bf16.mxu0 %v2881
  %3862 = vmatpush1.bf16.msra.mxu0 %v2880
  %3863 = vmatprep.subr.bf16.mxu0 %v2885
  %3864 = vmatpush1.bf16.msra.mxu0 %v2884
  %3865 = vmatprep.subr.bf16.mxu0 %v2889
  %3866 = vmatpush1.bf16.msra.mxu0 %v2888
  %3867 = vmatprep.subr.bf16.mxu0 %v2893
  %3868 = vmatpush1.bf16.msra.mxu0 %v2892
  %3869 = vmatprep.subr.bf16.mxu0 %v2897
  %3870 = vmatpush1.bf16.msra.mxu0 %v2896
  %3871 = vmatprep.subr.bf16.mxu0 %v2901
  %3872 = vmatpush1.bf16.msra.mxu0 %v2900
  %3873 = vmatprep.subr.bf16.mxu0 %v2905
  %3874 = vmatpush1.bf16.msra.mxu0 %v2904
  %3875 = vmatprep.subr.bf16.mxu0 %v2909
  %3876 = vmatpush1.bf16.msra.mxu0 %v2908
  %3877 = vmatprep.subr.bf16.mxu0 %v2913
  %3878 = vmatpush1.bf16.msra.mxu0 %v2912
  %3879 = vmatprep.subr.bf16.mxu0 %v2917
  %3880 = vmatpush1.bf16.msra.mxu0 %v2916
  %3881 = vmatprep.subr.bf16.mxu0 %v2921
  %3882 = vmatpush1.bf16.msra.mxu0 %v2920
  %3883 = vmatprep.mubr.bf16.mxu0 %v663
  %3884 = vmatmul.mubr.bf16.gmra.mrb[0].mxu0 %v662
  %v3885 = vpop.f32.mrb[0].mxu0
  %v3886 = vadd.f32 %v3845, %v3885
  %v3887 = vpop.f32.mrb[0].mxu0
  %v3888 = vadd.f32 %v3847, %v3887
  %v3889 = vpop.f32.mrb[0].mxu0
  %v3890 = vpop.f32.mrb[0].mxu0
  %3891 = vdwg.mxu0
  %3892 = vmatprep.subr.bf16.mxu0 %v2925
  %3893 = vmatpush1.bf16.msra.mxu0 %v2924
  %3894 = vmatprep.subr.bf16.mxu0 %v2929
  %3895 = vmatpush1.bf16.msra.mxu0 %v2928
  %3896 = vmatprep.subr.bf16.mxu0 %v2933
  %3897 = vmatpush1.bf16.msra.mxu0 %v2932
  %3898 = vmatprep.subr.bf16.mxu0 %v2937
  %3899 = vmatpush1.bf16.msra.mxu0 %v2936
  %3900 = vmatprep.subr.bf16.mxu0 %v2941
  %3901 = vmatpush1.bf16.msra.mxu0 %v2940
  %3902 = vmatprep.subr.bf16.mxu0 %v2945
  %3903 = vmatpush1.bf16.msra.mxu0 %v2944
  %3904 = vmatprep.subr.bf16.mxu0 %v2949
  %3905 = vmatpush1.bf16.msra.mxu0 %v2948
  %3906 = vmatprep.subr.bf16.mxu0 %v2953
  %3907 = vmatpush1.bf16.msra.mxu0 %v2952
  %3908 = vmatprep.subr.bf16.mxu0 %v2957
  %3909 = vmatpush1.bf16.msra.mxu0 %v2956
  %3910 = vmatprep.subr.bf16.mxu0 %v2961
  %3911 = vmatpush1.bf16.msra.mxu0 %v2960
  %3912 = vmatprep.subr.bf16.mxu0 %v2965
  %3913 = vmatpush1.bf16.msra.mxu0 %v2964
  %3914 = vmatprep.subr.bf16.mxu0 %v2969
  %3915 = vmatpush1.bf16.msra.mxu0 %v2968
  %3916 = vmatprep.subr.bf16.mxu0 %v2973
  %3917 = vmatpush1.bf16.msra.mxu0 %v2972
  %3918 = vmatprep.subr.bf16.mxu0 %v2977
  %3919 = vmatpush1.bf16.msra.mxu0 %v2976
  %3920 = vmatprep.subr.bf16.mxu0 %v2981
  %3921 = vmatpush1.bf16.msra.mxu0 %v2980
  %3922 = vmatprep.subr.bf16.mxu0 %v2985
  %3923 = vmatpush1.bf16.msra.mxu0 %v2984
  %3924 = vmatprep.mubr.bf16.mxu0 %v665
  %3925 = vmatmul.mubr.bf16.gmra.mrb[0].mxu0 %v664
  %v3926 = vpop.f32.mrb[0].mxu0
  %v3927 = vadd.f32 %v3886, %v3926
  %v3928 = vpop.f32.mrb[0].mxu0
  %v3929 = vadd.f32 %v3888, %v3928
  %v3930 = vpop.f32.mrb[0].mxu0
  %v3931 = vpop.f32.mrb[0].mxu0
  %3932 = vdwg.mxu0
  %3933 = vmatprep.subr.bf16.mxu0 %v2415
  %3934 = vmatpush1.bf16.msra.mxu0 %v2414
  %3935 = vmatprep.subr.bf16.mxu0 %v2419
  %3936 = vmatpush1.bf16.msra.mxu0 %v2418
  %3937 = vmatprep.subr.bf16.mxu0 %v2423
  %3938 = vmatpush1.bf16.msra.mxu0 %v2422
  %3939 = vmatprep.subr.bf16.mxu0 %v2427
  %3940 = vmatpush1.bf16.msra.mxu0 %v2426
  %3941 = vmatprep.subr.bf16.mxu0 %v2431
  %3942 = vmatpush1.bf16.msra.mxu0 %v2430
  %3943 = vmatprep.subr.bf16.mxu0 %v2435
  %3944 = vmatpush1.bf16.msra.mxu0 %v2434
  %3945 = vmatprep.subr.bf16.mxu0 %v2439
  %3946 = vmatpush1.bf16.msra.mxu0 %v2438
  %3947 = vmatprep.subr.bf16.mxu0 %v2443
  %3948 = vmatpush1.bf16.msra.mxu0 %v2442
  %3949 = vmatprep.subr.bf16.mxu0 %v2447
  %3950 = vmatpush1.bf16.msra.mxu0 %v2446
  %3951 = vmatprep.subr.bf16.mxu0 %v2451
  %3952 = vmatpush1.bf16.msra.mxu0 %v2450
  %3953 = vmatprep.subr.bf16.mxu0 %v2455
  %3954 = vmatpush1.bf16.msra.mxu0 %v2454
  %3955 = vmatprep.subr.bf16.mxu0 %v2459
  %3956 = vmatpush1.bf16.msra.mxu0 %v2458
  %3957 = vmatprep.subr.bf16.mxu0 %v2463
  %3958 = vmatpush1.bf16.msra.mxu0 %v2462
  %3959 = vmatprep.subr.bf16.mxu0 %v2467
  %3960 = vmatpush1.bf16.msra.mxu0 %v2466
  %3961 = vmatprep.subr.bf16.mxu0 %v2471
  %3962 = vmatpush1.bf16.msra.mxu0 %v2470
  %3963 = vmatprep.subr.bf16.mxu0 %v2475
  %3964 = vmatpush1.bf16.msra.mxu0 %v2474
  %3965 = vmatprep.mubr.bf16.mxu0 %v649
  %3966 = vmatmul.mubr.bf16.gmra.mrb[0].mxu0 %v648
  %v3967 = vpop.f32.mrb[0].mxu0
  %v3968 = vadd.f32 %v612, %v3967
  %v3969 = vpop.f32.mrb[0].mxu0
  %v3970 = vadd.f32 %v616, %v3969
  %v3971 = vpop.f32.mrb[0].mxu0
  %v3972 = vpop.f32.mrb[0].mxu0
  %3973 = vdwg.mxu0
  %3974 = vmatprep.subr.bf16.mxu0 %v2479
  %3975 = vmatpush1.bf16.msra.mxu0 %v2478
  %3976 = vmatprep.subr.bf16.mxu0 %v2483
  %3977 = vmatpush1.bf16.msra.mxu0 %v2482
  %3978 = vmatprep.subr.bf16.mxu0 %v2487
  %3979 = vmatpush1.bf16.msra.mxu0 %v2486
  %3980 = vmatprep.subr.bf16.mxu0 %v2491
  %3981 = vmatpush1.bf16.msra.mxu0 %v2490
  %3982 = vmatprep.subr.bf16.mxu0 %v2495
  %3983 = vmatpush1.bf16.msra.mxu0 %v2494
  %3984 = vmatprep.subr.bf16.mxu0 %v2499
  %3985 = vmatpush1.bf16.msra.mxu0 %v2498
  %3986 = vmatprep.subr.bf16.mxu0 %v2503
  %3987 = vmatpush1.bf16.msra.mxu0 %v2502
  %3988 = vmatprep.subr.bf16.mxu0 %v2507
  %3989 = vmatpush1.bf16.msra.mxu0 %v2506
  %3990 = vmatprep.subr.bf16.mxu0 %v2511
  %3991 = vmatpush1.bf16.msra.mxu0 %v2510
  %3992 = vmatprep.subr.bf16.mxu0 %v2515
  %3993 = vmatpush1.bf16.msra.mxu0 %v2514
  %3994 = vmatprep.subr.bf16.mxu0 %v2519
  %3995 = vmatpush1.bf16.msra.mxu0 %v2518
  %3996 = vmatprep.subr.bf16.mxu0 %v2523
  %3997 = vmatpush1.bf16.msra.mxu0 %v2522
  %3998 = vmatprep.subr.bf16.mxu0 %v2527
  %3999 = vmatpush1.bf16.msra.mxu0 %v2526
  %4000 = vmatprep.subr.bf16.mxu0 %v2531
  %4001 = vmatpush1.bf16.msra.mxu0 %v2530
  %4002 = vmatprep.subr.bf16.mxu0 %v2535
  %4003 = vmatpush1.bf16.msra.mxu0 %v2534
  %4004 = vmatprep.subr.bf16.mxu0 %v2539
  %4005 = vmatpush1.bf16.msra.mxu0 %v2538
  %4006 = vmatprep.mubr.bf16.mxu0 %v651
  %4007 = vmatmul.mubr.bf16.gmra.mrb[0].mxu0 %v650
  %v4008 = vpop.f32.mrb[0].mxu0
  %v4009 = vadd.f32 %v3968, %v4008
  %v4010 = vpop.f32.mrb[0].mxu0
  %v4011 = vadd.f32 %v3970, %v4010
  %v4012 = vpop.f32.mrb[0].mxu0
  %v4013 = vpop.f32.mrb[0].mxu0
  %4014 = vdwg.mxu0
  %4015 = vmatprep.subr.bf16.mxu0 %v2543
  %4016 = vmatpush1.bf16.msra.mxu0 %v2542
  %4017 = vmatprep.subr.bf16.mxu0 %v2547
  %4018 = vmatpush1.bf16.msra.mxu0 %v2546
  %4019 = vmatprep.subr.bf16.mxu0 %v2551
  %4020 = vmatpush1.bf16.msra.mxu0 %v2550
  %4021 = vmatprep.subr.bf16.mxu0 %v2555
  %4022 = vmatpush1.bf16.msra.mxu0 %v2554
  %4023 = vmatprep.subr.bf16.mxu0 %v2559
  %4024 = vmatpush1.bf16.msra.mxu0 %v2558
  %4025 = vmatprep.subr.bf16.mxu0 %v2563
  %4026 = vmatpush1.bf16.msra.mxu0 %v2562
  %4027 = vmatprep.subr.bf16.mxu0 %v2567
  %4028 = vmatpush1.bf16.msra.mxu0 %v2566
  %4029 = vmatprep.subr.bf16.mxu0 %v2571
  %4030 = vmatpush1.bf16.msra.mxu0 %v2570
  %4031 = vmatprep.subr.bf16.mxu0 %v2575
  %4032 = vmatpush1.bf16.msra.mxu0 %v2574
  %4033 = vmatprep.subr.bf16.mxu0 %v2579
  %4034 = vmatpush1.bf16.msra.mxu0 %v2578
  %4035 = vmatprep.subr.bf16.mxu0 %v2583
  %4036 = vmatpush1.bf16.msra.mxu0 %v2582
  %4037 = vmatprep.subr.bf16.mxu0 %v2587
  %4038 = vmatpush1.bf16.msra.mxu0 %v2586
  %4039 = vmatprep.subr.bf16.mxu0 %v2591
  %4040 = vmatpush1.bf16.msra.mxu0 %v2590
  %4041 = vmatprep.subr.bf16.mxu0 %v2595
  %4042 = vmatpush1.bf16.msra.mxu0 %v2594
  %4043 = vmatprep.subr.bf16.mxu0 %v2599
  %4044 = vmatpush1.bf16.msra.mxu0 %v2598
  %4045 = vmatprep.subr.bf16.mxu0 %v2603
  %4046 = vmatpush1.bf16.msra.mxu0 %v2602
  %4047 = vmatprep.mubr.bf16.mxu0 %v653
  %4048 = vmatmul.mubr.bf16.gmra.mrb[0].mxu0 %v652
  %v4049 = vpop.f32.mrb[0].mxu0
  %v4050 = vadd.f32 %v4009, %v4049
  %v4051 = vpop.f32.mrb[0].mxu0
  %v4052 = vadd.f32 %v4011, %v4051
  %v4053 = vpop.f32.mrb[0].mxu0
  %v4054 = vpop.f32.mrb[0].mxu0
  %4055 = vdwg.mxu0
  %4056 = vmatprep.subr.bf16.mxu0 %v2607
  %4057 = vmatpush1.bf16.msra.mxu0 %v2606
  %4058 = vmatprep.subr.bf16.mxu0 %v2611
  %4059 = vmatpush1.bf16.msra.mxu0 %v2610
  %4060 = vmatprep.subr.bf16.mxu0 %v2615
  %4061 = vmatpush1.bf16.msra.mxu0 %v2614
  %4062 = vmatprep.subr.bf16.mxu0 %v2619
  %4063 = vmatpush1.bf16.msra.mxu0 %v2618
  %4064 = vmatprep.subr.bf16.mxu0 %v2623
  %4065 = vmatpush1.bf16.msra.mxu0 %v2622
  %4066 = vmatprep.subr.bf16.mxu0 %v2627
  %4067 = vmatpush1.bf16.msra.mxu0 %v2626
  %4068 = vmatprep.subr.bf16.mxu0 %v2631
  %4069 = vmatpush1.bf16.msra.mxu0 %v2630
  %4070 = vmatprep.subr.bf16.mxu0 %v2635
  %4071 = vmatpush1.bf16.msra.mxu0 %v2634
  %4072 = vmatprep.subr.bf16.mxu0 %v2639
  %4073 = vmatpush1.bf16.msra.mxu0 %v2638
  %4074 = vmatprep.subr.bf16.mxu0 %v2643
  %4075 = vmatpush1.bf16.msra.mxu0 %v2642
  %4076 = vmatprep.subr.bf16.mxu0 %v2647
  %4077 = vmatpush1.bf16.msra.mxu0 %v2646
  %4078 = vmatprep.subr.bf16.mxu0 %v2651
  %4079 = vmatpush1.bf16.msra.mxu0 %v2650
  %4080 = vmatprep.subr.bf16.mxu0 %v2655
  %4081 = vmatpush1.bf16.msra.mxu0 %v2654
  %4082 = vmatprep.subr.bf16.mxu0 %v2659
  %4083 = vmatpush1.bf16.msra.mxu0 %v2658
  %4084 = vmatprep.subr.bf16.mxu0 %v2663
  %4085 = vmatpush1.bf16.msra.mxu0 %v2662
  %4086 = vmatprep.subr.bf16.mxu0 %v2667
  %4087 = vmatpush1.bf16.msra.mxu0 %v2666
  %4088 = vmatprep.mubr.bf16.mxu0 %v655
  %4089 = vmatmul.mubr.bf16.gmra.mrb[0].mxu0 %v654
  %v4090 = vpop.f32.mrb[0].mxu0
  %v4091 = vadd.f32 %v4050, %v4090
  %v4092 = vpop.f32.mrb[0].mxu0
  %v4093 = vadd.f32 %v4052, %v4092
  %v4094 = vpop.f32.mrb[0].mxu0
  %v4095 = vpop.f32.mrb[0].mxu0
  %4096 = vdwg.mxu0
  %4097 = vmatprep.subr.bf16.mxu0 %v2671
  %4098 = vmatpush1.bf16.msra.mxu0 %v2670
  %4099 = vmatprep.subr.bf16.mxu0 %v2675
  %4100 = vmatpush1.bf16.msra.mxu0 %v2674
  %4101 = vmatprep.subr.bf16.mxu0 %v2679
  %4102 = vmatpush1.bf16.msra.mxu0 %v2678
  %4103 = vmatprep.subr.bf16.mxu0 %v2683
  %4104 = vmatpush1.bf16.msra.mxu0 %v2682
  %4105 = vmatprep.subr.bf16.mxu0 %v2687
  %4106 = vmatpush1.bf16.msra.mxu0 %v2686
  %4107 = vmatprep.subr.bf16.mxu0 %v2691
  %4108 = vmatpush1.bf16.msra.mxu0 %v2690
  %4109 = vmatprep.subr.bf16.mxu0 %v2695
  %4110 = vmatpush1.bf16.msra.mxu0 %v2694
  %4111 = vmatprep.subr.bf16.mxu0 %v2699
  %4112 = vmatpush1.bf16.msra.mxu0 %v2698
  %4113 = vmatprep.subr.bf16.mxu0 %v2703
  %4114 = vmatpush1.bf16.msra.mxu0 %v2702
  %4115 = vmatprep.subr.bf16.mxu0 %v2707
  %4116 = vmatpush1.bf16.msra.mxu0 %v2706
  %4117 = vmatprep.subr.bf16.mxu0 %v2711
  %4118 = vmatpush1.bf16.msra.mxu0 %v2710
  %4119 = vmatprep.subr.bf16.mxu0 %v2715
  %4120 = vmatpush1.bf16.msra.mxu0 %v2714
  %4121 = vmatprep.subr.bf16.mxu0 %v2719
  %4122 = vmatpush1.bf16.msra.mxu0 %v2718
  %4123 = vmatprep.subr.bf16.mxu0 %v2723
  %4124 = vmatpush1.bf16.msra.mxu0 %v2722
  %4125 = vmatprep.subr.bf16.mxu0 %v2727
  %4126 = vmatpush1.bf16.msra.mxu0 %v2726
  %4127 = vmatprep.subr.bf16.mxu0 %v2731
  %4128 = vmatpush1.bf16.msra.mxu0 %v2730
  %4129 = vmatprep.mubr.bf16.mxu0 %v657
  %4130 = vmatmul.mubr.bf16.gmra.mrb[0].mxu0 %v656
  %v4131 = vpop.f32.mrb[0].mxu0
  %v4132 = vadd.f32 %v4091, %v4131
  %v4133 = vpop.f32.mrb[0].mxu0
  %v4134 = vadd.f32 %v4093, %v4133
  %v4135 = vpop.f32.mrb[0].mxu0
  %v4136 = vpop.f32.mrb[0].mxu0
  %4137 = vdwg.mxu0
  %4138 = vmatprep.subr.bf16.mxu0 %v2735
  %4139 = vmatpush1.bf16.msra.mxu0 %v2734
  %4140 = vmatprep.subr.bf16.mxu0 %v2739
  %4141 = vmatpush1.bf16.msra.mxu0 %v2738
  %4142 = vmatprep.subr.bf16.mxu0 %v2743
  %4143 = vmatpush1.bf16.msra.mxu0 %v2742
  %4144 = vmatprep.subr.bf16.mxu0 %v2747
  %4145 = vmatpush1.bf16.msra.mxu0 %v2746
  %4146 = vmatprep.subr.bf16.mxu0 %v2751
  %4147 = vmatpush1.bf16.msra.mxu0 %v2750
  %4148 = vmatprep.subr.bf16.mxu0 %v2755
  %4149 = vmatpush1.bf16.msra.mxu0 %v2754
  %4150 = vmatprep.subr.bf16.mxu0 %v2759
  %4151 = vmatpush1.bf16.msra.mxu0 %v2758
  %4152 = vmatprep.subr.bf16.mxu0 %v2763
  %4153 = vmatpush1.bf16.msra.mxu0 %v2762
  %4154 = vmatprep.subr.bf16.mxu0 %v2767
  %4155 = vmatpush1.bf16.msra.mxu0 %v2766
  %4156 = vmatprep.subr.bf16.mxu0 %v2771
  %4157 = vmatpush1.bf16.msra.mxu0 %v2770
  %4158 = vmatprep.subr.bf16.mxu0 %v2775
  %4159 = vmatpush1.bf16.msra.mxu0 %v2774
  %4160 = vmatprep.subr.bf16.mxu0 %v2779
  %4161 = vmatpush1.bf16.msra.mxu0 %v2778
  %4162 = vmatprep.subr.bf16.mxu0 %v2783
  %4163 = vmatpush1.bf16.msra.mxu0 %v2782
  %4164 = vmatprep.subr.bf16.mxu0 %v2787
  %4165 = vmatpush1.bf16.msra.mxu0 %v2786
  %4166 = vmatprep.subr.bf16.mxu0 %v2791
  %4167 = vmatpush1.bf16.msra.mxu0 %v2790
  %4168 = vmatprep.subr.bf16.mxu0 %v2795
  %4169 = vmatpush1.bf16.msra.mxu0 %v2794
  %4170 = vmatprep.mubr.bf16.mxu0 %v659
  %4171 = vmatmul.mubr.bf16.gmra.mrb[0].mxu0 %v658
  %v4172 = vpop.f32.mrb[0].mxu0
  %v4173 = vadd.f32 %v4132, %v4172
  %v4174 = vpop.f32.mrb[0].mxu0
  %v4175 = vadd.f32 %v4134, %v4174
  %v4176 = vpop.f32.mrb[0].mxu0
  %v4177 = vpop.f32.mrb[0].mxu0
  %4178 = vdwg.mxu0
  %4179 = vmatprep.subr.bf16.mxu0 %v2799
  %4180 = vmatpush1.bf16.msra.mxu0 %v2798
  %4181 = vmatprep.subr.bf16.mxu0 %v2803
  %4182 = vmatpush1.bf16.msra.mxu0 %v2802
  %4183 = vmatprep.subr.bf16.mxu0 %v2807
  %4184 = vmatpush1.bf16.msra.mxu0 %v2806
  %4185 = vmatprep.subr.bf16.mxu0 %v2811
  %4186 = vmatpush1.bf16.msra.mxu0 %v2810
  %4187 = vmatprep.subr.bf16.mxu0 %v2815
  %4188 = vmatpush1.bf16.msra.mxu0 %v2814
  %4189 = vmatprep.subr.bf16.mxu0 %v2819
  %4190 = vmatpush1.bf16.msra.mxu0 %v2818
  %4191 = vmatprep.subr.bf16.mxu0 %v2823
  %4192 = vmatpush1.bf16.msra.mxu0 %v2822
  %4193 = vmatprep.subr.bf16.mxu0 %v2827
  %4194 = vmatpush1.bf16.msra.mxu0 %v2826
  %4195 = vmatprep.subr.bf16.mxu0 %v2831
  %4196 = vmatpush1.bf16.msra.mxu0 %v2830
  %4197 = vmatprep.subr.bf16.mxu0 %v2835
  %4198 = vmatpush1.bf16.msra.mxu0 %v2834
  %4199 = vmatprep.subr.bf16.mxu0 %v2839
  %4200 = vmatpush1.bf16.msra.mxu0 %v2838
  %4201 = vmatprep.subr.bf16.mxu0 %v2843
  %4202 = vmatpush1.bf16.msra.mxu0 %v2842
  %4203 = vmatprep.subr.bf16.mxu0 %v2847
  %4204 = vmatpush1.bf16.msra.mxu0 %v2846
  %4205 = vmatprep.subr.bf16.mxu0 %v2851
  %4206 = vmatpush1.bf16.msra.mxu0 %v2850
  %4207 = vmatprep.subr.bf16.mxu0 %v2855
  %4208 = vmatpush1.bf16.msra.mxu0 %v2854
  %4209 = vmatprep.subr.bf16.mxu0 %v2859
  %4210 = vmatpush1.bf16.msra.mxu0 %v2858
  %4211 = vmatprep.mubr.bf16.mxu0 %v661
  %4212 = vmatmul.mubr.bf16.gmra.mrb[0].mxu0 %v660
  %v4213 = vpop.f32.mrb[0].mxu0
  %v4214 = vadd.f32 %v4173, %v4213
  %v4215 = vpop.f32.mrb[0].mxu0
  %v4216 = vadd.f32 %v4175, %v4215
  %v4217 = vpop.f32.mrb[0].mxu0
  %v4218 = vpop.f32.mrb[0].mxu0
  %4219 = vdwg.mxu0
  %4220 = vmatprep.subr.bf16.mxu0 %v2863
  %4221 = vmatpush1.bf16.msra.mxu0 %v2862
  %4222 = vmatprep.subr.bf16.mxu0 %v2867
  %4223 = vmatpush1.bf16.msra.mxu0 %v2866
  %4224 = vmatprep.subr.bf16.mxu0 %v2871
  %4225 = vmatpush1.bf16.msra.mxu0 %v2870
  %4226 = vmatprep.subr.bf16.mxu0 %v2875
  %4227 = vmatpush1.bf16.msra.mxu0 %v2874
  %4228 = vmatprep.subr.bf16.mxu0 %v2879
  %4229 = vmatpush1.bf16.msra.mxu0 %v2878
  %4230 = vmatprep.subr.bf16.mxu0 %v2883
  %4231 = vmatpush1.bf16.msra.mxu0 %v2882
  %4232 = vmatprep.subr.bf16.mxu0 %v2887
  %4233 = vmatpush1.bf16.msra.mxu0 %v2886
  %4234 = vmatprep.subr.bf16.mxu0 %v2891
  %4235 = vmatpush1.bf16.msra.mxu0 %v2890
  %4236 = vmatprep.subr.bf16.mxu0 %v2895
  %4237 = vmatpush1.bf16.msra.mxu0 %v2894
  %4238 = vmatprep.subr.bf16.mxu0 %v2899
  %4239 = vmatpush1.bf16.msra.mxu0 %v2898
  %4240 = vmatprep.subr.bf16.mxu0 %v2903
  %4241 = vmatpush1.bf16.msra.mxu0 %v2902
  %4242 = vmatprep.subr.bf16.mxu0 %v2907
  %4243 = vmatpush1.bf16.msra.mxu0 %v2906
  %4244 = vmatprep.subr.bf16.mxu0 %v2911
  %4245 = vmatpush1.bf16.msra.mxu0 %v2910
  %4246 = vmatprep.subr.bf16.mxu0 %v2915
  %4247 = vmatpush1.bf16.msra.mxu0 %v2914
  %4248 = vmatprep.subr.bf16.mxu0 %v2919
  %4249 = vmatpush1.bf16.msra.mxu0 %v2918
  %4250 = vmatprep.subr.bf16.mxu0 %v2923
  %4251 = vmatpush1.bf16.msra.mxu0 %v2922
  %4252 = vmatprep.mubr.bf16.mxu0 %v663
  %4253 = vmatmul.mubr.bf16.gmra.mrb[0].mxu0 %v662
  %v4254 = vpop.f32.mrb[0].mxu0
  %v4255 = vadd.f32 %v4214, %v4254
  %v4256 = vpop.f32.mrb[0].mxu0
  %v4257 = vadd.f32 %v4216, %v4256
  %v4258 = vpop.f32.mrb[0].mxu0
  %v4259 = vpop.f32.mrb[0].mxu0
  %4260 = vdwg.mxu0
  %4261 = vmatprep.subr.bf16.mxu0 %v2927
  %4262 = vmatpush1.bf16.msra.mxu0 %v2926
  %4263 = vmatprep.subr.bf16.mxu0 %v2931
  %4264 = vmatpush1.bf16.msra.mxu0 %v2930
  %4265 = vmatprep.subr.bf16.mxu0 %v2935
  %4266 = vmatpush1.bf16.msra.mxu0 %v2934
  %4267 = vmatprep.subr.bf16.mxu0 %v2939
  %4268 = vmatpush1.bf16.msra.mxu0 %v2938
  %4269 = vmatprep.subr.bf16.mxu0 %v2943
  %4270 = vmatpush1.bf16.msra.mxu0 %v2942
  %4271 = vmatprep.subr.bf16.mxu0 %v2947
  %4272 = vmatpush1.bf16.msra.mxu0 %v2946
  %4273 = vmatprep.subr.bf16.mxu0 %v2951
  %4274 = vmatpush1.bf16.msra.mxu0 %v2950
  %4275 = vmatprep.subr.bf16.mxu0 %v2955
  %4276 = vmatpush1.bf16.msra.mxu0 %v2954
  %4277 = vmatprep.subr.bf16.mxu0 %v2959
  %4278 = vmatpush1.bf16.msra.mxu0 %v2958
  %4279 = vmatprep.subr.bf16.mxu0 %v2963
  %4280 = vmatpush1.bf16.msra.mxu0 %v2962
  %4281 = vmatprep.subr.bf16.mxu0 %v2967
  %4282 = vmatpush1.bf16.msra.mxu0 %v2966
  %4283 = vmatprep.subr.bf16.mxu0 %v2971
  %4284 = vmatpush1.bf16.msra.mxu0 %v2970
  %4285 = vmatprep.subr.bf16.mxu0 %v2975
  %4286 = vmatpush1.bf16.msra.mxu0 %v2974
  %4287 = vmatprep.subr.bf16.mxu0 %v2979
  %4288 = vmatpush1.bf16.msra.mxu0 %v2978
  %4289 = vmatprep.subr.bf16.mxu0 %v2983
  %4290 = vmatpush1.bf16.msra.mxu0 %v2982
  %4291 = vmatprep.subr.bf16.mxu0 %v2987
  %4292 = vmatpush1.bf16.msra.mxu0 %v2986
  %4293 = vmatprep.mubr.bf16.mxu0 %v665
  %4294 = vmatmul.mubr.bf16.gmra.mrb[0].mxu0 %v664
  %v4295 = vpop.f32.mrb[0].mxu0
  %v4296 = vadd.f32 %v4255, %v4295
  %v4297 = vpop.f32.mrb[0].mxu0
  %v4298 = vadd.f32 %v4257, %v4297
  %v4299 = vpop.f32.mrb[0].mxu0
  %v4300 = vpop.f32.mrb[0].mxu0
  %4301 = vdwg.mxu0
  %v4302 = vmax.f32 %v3927, 0.0
  %v4303 = vmax.f32 %v3929, 0.0
  %v4304 = vmax.f32 %v4296, 0.0
  %v4305 = vmax.f32 %v4298, 0.0
  %v4306 = vpack.c.bf16 %v4302, %v4302
  %v4307 = vpack.c.bf16 %v4303, %v4303
  %v4308 = vpack.c.bf16 %v4304, %v4304
  %v4309 = vpack.c.bf16 %v4305, %v4305
  %v4314 = vunpack.c.l.b16 %v4306
  %v4315 = vunpack.c.l.b16 %v4307
  %v4316 = vunpack.c.l.b16 %v4308
  %v4317 = vunpack.c.l.b16 %v4309
  %v4318 = vpack.c.b16 %v4315, %v4314
  %v4319 = vpack.c.b16 %v4317, %v4316
  %4322 = vst [vmem:[%s3] sm:$0xff] %v4318
  %4323 = vst [vmem:[%s3 + $0x8] sm:$0xff] %v4319
  // Predicated region
  $region14: #{conv_deconv_vqvae_forward.14} parent=0 // pred_check
    _
  $region15: #{conv_deconv_vqvae_forward.14} parent=0 // pred_check_branch
    %4325 = sbr.rel (0) target = $region17
  $region16: #{conv_deconv_vqvae_forward.14} parent=0 // pred_region
    _
  $region17: #{conv_deconv_vqvae_forward.14} parent=0 // pred_fallthru
    _
  // Predicated region
  $region18: #{conv_deconv_vqvae_forward.14} parent=0 // pred_check
    _
  $region19: #{conv_deconv_vqvae_forward.14} parent=0 // pred_check_branch
    %4327 = sbr.rel (0) target = $region21
  $region20: #{conv_deconv_vqvae_forward.14} parent=0 // pred_region
    _
  $region21: #{conv_deconv_vqvae_forward.14} parent=0 // pred_fallthru
    _

// kernel: conv_deconv_vqvae_forward.17
$region0: #{conv_deconv_vqvae_forward.17}
  #allocation0 [shape = 'u32[]', space=smem, size = 0x4, offset = 0x4, fixed_abs, tag = 'smem constant byte address 0x4 - core index']
  #allocation1 [shape = 'u32[144,128]{1,0:T(1,128)}', space=vmem, size = 0x12000, scoped, tag = 'internal scratch']
  %s0 = inlined_call_operand.vmem [shape: bf16[512,288], index: 0, kind: input, shape index: {}]
  %s1 = inlined_call_operand.vmem [shape: bf16[288,12], index: 1, kind: input, shape index: {}]
  %s2 = inlined_call_operand.vmem [shape: f32[1,12], index: 2, kind: input, shape index: {}]
  %s3 = inlined_call_operand.vmem [shape: f32[512,12], index: 3, kind: output, shape index: {}]
  %s4 = sld [smem:[#allocation0]]
  $region45: #{conv_deconv_vqvae_forward.17} parent=0
    _
  %s6 = ssub.s32 1, %s4
  %s7 = scalar_select 0, %s6, %s4
  loop: start=0, step=1, limit=4
  $region2: #{conv_deconv_vqvae_forward.17} parent=0 // loop_pre_header
    _
  $region3: #{conv_deconv_vqvae_forward.17} parent=0 // loop_header
    %s9 = sphi 0, %s13
    %p10 = scmp.ge.s32.totalorder %s9, 4
    %s19 = sphi 0, %s21
    %s22 = sphi 0, %s19
    %s23 = sphi 0, %s22
    %s39 = sphi 0, %s23
    %s43 = sphi 0, %s43
    %s45 = sphi 0, %s43
    %s46 = sphi 0, %s45
    %s60 = sphi 0, %s46
    %s64 = sphi 0, %s64
    %s66 = sphi 0, %s64
    %s67 = sphi 0, %s66
    %s81 = sphi 0, %s67
    %s87 = sphi 0, %s89
    %s90 = sphi 0, %s87
    %s91 = sphi 0, %s90
    %s107 = sphi 0, %s91
  $region4: #{conv_deconv_vqvae_forward.17} parent=0 // loop_header_branch
    %12 = sbr.rel (%p10) target = $region8
  $region5: #{conv_deconv_vqvae_forward.17} parent=0 // loop_body
    %s14 = ssub.s32 %s9, 1
    %s15 = ssub.s32 %s9, 2
    %s16 = sadd.s32 %s9, 1
    %s17 = ssub.s32 %s9, %s16
    %p18 = scmp.eq.s32.totalorder %s17, 0
    %s20 = sadd.s32 %s19, 1
    %s21 = scalar_select %p18, %s19, %s20
    %p24 = pneg %p18
    %p25 = scmp.eq.s32.totalorder %s9, 1
    %p26 = por %p24, %p25
    %p27 = scmp.ne.s32.totalorder %s19, %s22
    %p28 = scmp.eq.s32.totalorder %s9, 0
    %p29 = por %p27, %p28
    %p30 = scmp.ne.s32.totalorder %s19, %s22
    %p31 = scmp.eq.s32.totalorder %s14, 1
    %p32 = por %p30, %p31
    %p33 = scmp.ne.s32.totalorder %s22, %s23
    %p34 = scmp.eq.s32.totalorder %s14, 0
    %p35 = por %p33, %p34
    %p36 = scmp.ne.s32.totalorder %s22, %s23
    %p37 = scmp.eq.s32.totalorder %s15, 1
    %p38 = por %p36, %p37
    %p40 = scmp.ne.s32.totalorder %s23, %s39
    %p41 = scmp.eq.s32.totalorder %s15, 0
    %p42 = por %p40, %p41
    %s44 = sadd.s32 %s43, 1
    %p47 = scmp.eq.s32.totalorder %s9, 1
    %p48 = scmp.ne.s32.totalorder %s43, %s45
    %p49 = scmp.eq.s32.totalorder %s9, 0
    %p50 = por %p48, %p49
    %p51 = scmp.ne.s32.totalorder %s43, %s45
    %p52 = scmp.eq.s32.totalorder %s14, 1
    %p53 = por %p51, %p52
    %p54 = scmp.ne.s32.totalorder %s45, %s46
    %p55 = scmp.eq.s32.totalorder %s14, 0
    %p56 = por %p54, %p55
    %p57 = scmp.ne.s32.totalorder %s45, %s46
    %p58 = scmp.eq.s32.totalorder %s15, 1
    %p59 = por %p57, %p58
    %p61 = scmp.ne.s32.totalorder %s46, %s60
    %p62 = scmp.eq.s32.totalorder %s15, 0
    %p63 = por %p61, %p62
    %s65 = sadd.s32 %s64, 1
    %p68 = scmp.eq.s32.totalorder %s9, 1
    %p69 = scmp.ne.s32.totalorder %s64, %s66
    %p70 = scmp.eq.s32.totalorder %s9, 0
    %p71 = por %p69, %p70
    %p72 = scmp.ne.s32.totalorder %s64, %s66
    %p73 = scmp.eq.s32.totalorder %s14, 1
    %p74 = por %p72, %p73
    %p75 = scmp.ne.s32.totalorder %s66, %s67
    %p76 = scmp.eq.s32.totalorder %s14, 0
    %p77 = por %p75, %p76
    %p78 = scmp.ne.s32.totalorder %s66, %s67
    %p79 = scmp.eq.s32.totalorder %s15, 1
    %p80 = por %p78, %p79
    %p82 = scmp.ne.s32.totalorder %s67, %s81
    %p83 = scmp.eq.s32.totalorder %s15, 0
    %p84 = por %p82, %p83
    %s85 = ssub.s32 %s9, %s16
    %p86 = scmp.eq.s32.totalorder %s85, 0
    %s88 = sadd.s32 %s87, 1
    %s89 = scalar_select %p86, %s87, %s88
    %p92 = pneg %p86
    %p93 = scmp.eq.s32.totalorder %s9, 1
    %p94 = por %p92, %p93
    %p95 = scmp.ne.s32.totalorder %s87, %s90
    %p96 = scmp.eq.s32.totalorder %s9, 0
    %p97 = por %p95, %p96
    %p98 = scmp.ne.s32.totalorder %s87, %s90
    %p99 = scmp.eq.s32.totalorder %s14, 1
    %p100 = por %p98, %p99
    %p101 = scmp.ne.s32.totalorder %s90, %s91
    %p102 = scmp.eq.s32.totalorder %s14, 0
    %p103 = por %p101, %p102
    %p104 = scmp.ne.s32.totalorder %s90, %s91
    %p105 = scmp.eq.s32.totalorder %s15, 1
    %p106 = por %p104, %p105
    %p108 = scmp.ne.s32.totalorder %s91, %s107
    %p109 = scmp.eq.s32.totalorder %s15, 0
    %p110 = por %p108, %p109
    %p111 = scmp.le.s32.totalorder 1, %s9
    %p112 = scmp.lt.s32.totalorder %s9, 3
    %p113 = pnand %p111, %p112
    %p114 = pneg %p113
    // Predicated region
    $region9: #{conv_deconv_vqvae_forward.17} parent=5 // pred_check
      _
    $region10: #{conv_deconv_vqvae_forward.17} parent=5 // pred_check_branch
      %116 = sbr.rel (%p113) target = $region12
    $region11: #{conv_deconv_vqvae_forward.17} parent=5 // pred_region
      %s117 = ssub.s32 %s9, 1
      // Predicated region
      $region13: #{conv_deconv_vqvae_forward.17} parent=11 // pred_check
        %p118 = pneg %p56
      $region14: #{conv_deconv_vqvae_forward.17} parent=11 // pred_check_branch
        %120 = sbr.rel (%p118) target = $region16
      $region15: #{conv_deconv_vqvae_forward.17} parent=11 // pred_region
        _
      $region16: #{conv_deconv_vqvae_forward.17} parent=11 // pred_fallthru
        _
      // Predicated region
      $region17: #{conv_deconv_vqvae_forward.17} parent=11 // pred_check
        %p121 = pneg %p77
      $region18: #{conv_deconv_vqvae_forward.17} parent=11 // pred_check_branch
        %123 = sbr.rel (%p121) target = $region20
      $region19: #{conv_deconv_vqvae_forward.17} parent=11 // pred_region
        _
      $region20: #{conv_deconv_vqvae_forward.17} parent=11 // pred_fallthru
        _
    $region12: #{conv_deconv_vqvae_forward.17} parent=5 // pred_fallthru
      _
    %p124 = scmp.lt.s32.totalorder %s9, 2
    // Predicated region
    $region21: #{conv_deconv_vqvae_forward.17} parent=5 // pred_check
      %p125 = pneg %p124
    $region22: #{conv_deconv_vqvae_forward.17} parent=5 // pred_check_branch
      %127 = sbr.rel (%p125) target = $region24
    $region23: #{conv_deconv_vqvae_forward.17} parent=5 // pred_region
      // Predicated region
      $region25: #{conv_deconv_vqvae_forward.17} parent=23 // pred_check
        %p128 = pneg %p29
      $region26: #{conv_deconv_vqvae_forward.17} parent=23 // pred_check_branch
        %130 = sbr.rel (%p128) target = $region28
      $region27: #{conv_deconv_vqvae_forward.17} parent=23 // pred_region
        %s131 = smul.u32 32, %s9
        %p132 = scmp.lt.s32.totalorder %s131, 63
        %s133 = scalar_select %p132, %s131, 63
        %s134 = smul.addr %s133, 3
        %s135 = smul.addr %s134, 4
        %s136 = scalar_lea.vmem %s0, %s135
        %s137 = smul.u32 32, %s9
      $region28: #{conv_deconv_vqvae_forward.17} parent=23 // pred_fallthru
        _
    $region24: #{conv_deconv_vqvae_forward.17} parent=5 // pred_fallthru
      _
    %p138 = scmp.le.s32.totalorder 1, %s9
    %p139 = scmp.lt.s32.totalorder %s9, 3
    %p140 = pnand %p138, %p139
    %p141 = pneg %p140
    // Predicated region
    $region29: #{conv_deconv_vqvae_forward.17} parent=5 // pred_check
      _
    $region30: #{conv_deconv_vqvae_forward.17} parent=5 // pred_check_branch
      %143 = sbr.rel (%p140) target = $region32
    $region31: #{conv_deconv_vqvae_forward.17} parent=5 // pred_region
      %s144 = ssub.s32 %s9, 1
      %s145 = smul.u32 32, %s14
      %p146 = scmp.lt.s32.totalorder %s145, 63
      %s147 = scalar_select %p146, %s145, 63
      %s148 = smul.addr %s147, 3
      %s149 = smul.addr %s148, 4
      %s150 = scalar_lea.vmem %s0, %s149
      %p151 = pneg %p35
      %p152 = pneg %p32
      %p153 = pneg %p56
      %p154 = pneg %p53
      %p155 = pneg %p77
      %p156 = pneg %p74
      %p157 = pneg %p103
      %p158 = pneg %p100
      %s159 = smul.u32 32, %s14
      %p160 = scmp.lt.s32.totalorder %s159, 63
      %s161 = scalar_select %p160, %s159, 63
      %s162 = smul.addr %s161, 8
      %s163 = scalar_lea.vmem %s3, %s162
      %s164 = smul.u32 32, %s14
      %p165 = scmp.lt.s32.totalorder %s164, 63
      %s166 = scalar_select %p165, %s164, 63
      %s167 = smul.addr %s166, 3
      %s168 = smul.addr %s167, 4
      %s169 = scalar_lea.vmem %s0, %s168
      %s170 = smul.u32 32, %s14
      %s171 = smul.u32 32, %s14
      %p172 = scmp.lt.s32.totalorder %s171, 63
      %s173 = scalar_select %p172, %s171, 63
      %s174 = smul.addr %s173, 8
      %s175 = scalar_lea.vmem %s3, %s174
      %s176 = smul.u32 32, %s14
      %v178 = vld [vmem:[%s169] sm:$0xff]
      %v179 = vld [vmem:[%s169 + $0x8] sm:$0xf]
      %v180 = vld [vmem:[%s169 + $0xc] sm:$0xff]
      %v181 = vld [vmem:[%s169 + $0x14] sm:$0xf]
      %v182 = vld [vmem:[%s169 + $0x18] sm:$0xff]
      %v183 = vld [vmem:[%s169 + $0x20] sm:$0xf]
      %v184 = vld [vmem:[%s169 + $0x24] sm:$0xff]
      %v185 = vld [vmem:[%s169 + $0x2c] sm:$0xf]
      %v186 = vld [vmem:[%s169 + $0x30] sm:$0xff]
      %v187 = vld [vmem:[%s169 + $0x38] sm:$0xf]
      %v188 = vld [vmem:[%s169 + $0x3c] sm:$0xff]
      %v189 = vld [vmem:[%s169 + $0x44] sm:$0xf]
      %v190 = vld [vmem:[%s169 + $0x48] sm:$0xff]
      %v191 = vld [vmem:[%s169 + $0x50] sm:$0xf]
      %v192 = vld [vmem:[%s169 + $0x54] sm:$0xff]
      %v193 = vld [vmem:[%s169 + $0x5c] sm:$0xf]
      %v194 = vld [vmem:[%s169 + $0x60] sm:$0xff]
      %v195 = vld [vmem:[%s169 + $0x68] sm:$0xf]
      %v196 = vld [vmem:[%s169 + $0x6c] sm:$0xff]
      %v197 = vld [vmem:[%s169 + $0x74] sm:$0xf]
      %v198 = vld [vmem:[%s169 + $0x78] sm:$0xff]
      %v199 = vld [vmem:[%s169 + $0x80] sm:$0xf]
      %v200 = vld [vmem:[%s169 + $0x84] sm:$0xff]
      %v201 = vld [vmem:[%s169 + $0x8c] sm:$0xf]
      %v202 = vld [vmem:[%s169 + $0x90] sm:$0xff]
      %v203 = vld [vmem:[%s169 + $0x98] sm:$0xf]
      %v204 = vld [vmem:[%s169 + $0x9c] sm:$0xff]
      %v205 = vld [vmem:[%s169 + $0xa4] sm:$0xf]
      %v206 = vld [vmem:[%s169 + $0xa8] sm:$0xff]
      %v207 = vld [vmem:[%s169 + $0xb0] sm:$0xf]
      %v208 = vld [vmem:[%s169 + $0xb4] sm:$0xff]
      %v209 = vld [vmem:[%s169 + $0xbc] sm:$0xf]
      %v210 = vld [vmem:[%s169 + $0xc0] sm:$0xff]
      %v211 = vld [vmem:[%s169 + $0xc8] sm:$0xf]
      %v212 = vld [vmem:[%s169 + $0xcc] sm:$0xff]
      %v213 = vld [vmem:[%s169 + $0xd4] sm:$0xf]
      %v214 = vld [vmem:[%s169 + $0xd8] sm:$0xff]
      %v215 = vld [vmem:[%s169 + $0xe0] sm:$0xf]
      %v216 = vld [vmem:[%s169 + $0xe4] sm:$0xff]
      %v217 = vld [vmem:[%s169 + $0xec] sm:$0xf]
      %v218 = vld [vmem:[%s169 + $0xf0] sm:$0xff]
      %v219 = vld [vmem:[%s169 + $0xf8] sm:$0xf]
      %v220 = vld [vmem:[%s169 + $0xfc] sm:$0xff]
      %v221 = vld [vmem:[%s169 + $0x104] sm:$0xf]
      %v222 = vld [vmem:[%s169 + $0x108] sm:$0xff]
      %v223 = vld [vmem:[%s169 + $0x110] sm:$0xf]
      %v224 = vld [vmem:[%s169 + $0x114] sm:$0xff]
      %v225 = vld [vmem:[%s169 + $0x11c] sm:$0xf]
      %v226 = vld [vmem:[%s169 + $0x120] sm:$0xff]
      %v227 = vld [vmem:[%s169 + $0x128] sm:$0xf]
      %v228 = vld [vmem:[%s169 + $0x12c] sm:$0xff]
      %v229 = vld [vmem:[%s169 + $0x134] sm:$0xf]
      %v230 = vld [vmem:[%s169 + $0x138] sm:$0xff]
      %v231 = vld [vmem:[%s169 + $0x140] sm:$0xf]
      %v232 = vld [vmem:[%s169 + $0x144] sm:$0xff]
      %v233 = vld [vmem:[%s169 + $0x14c] sm:$0xf]
      %v234 = vld [vmem:[%s169 + $0x150] sm:$0xff]
      %v235 = vld [vmem:[%s169 + $0x158] sm:$0xf]
      %v236 = vld [vmem:[%s169 + $0x15c] sm:$0xff]
      %v237 = vld [vmem:[%s169 + $0x164] sm:$0xf]
      %v238 = vld [vmem:[%s169 + $0x168] sm:$0xff]
      %v239 = vld [vmem:[%s169 + $0x170] sm:$0xf]
      %v240 = vld [vmem:[%s169 + $0x174] sm:$0xff]
      %v241 = vld [vmem:[%s169 + $0x17c] sm:$0xf]
      %v242 = vld [vmem:[%s1] sm:$0xf]
      %v243 = vld [vmem:[%s1 + $0x4] sm:$0xf]
      %v244 = vld [vmem:[%s1 + $0x8] sm:$0xf]
      %v245 = vld [vmem:[%s1 + $0xc] sm:$0xf]
      %v246 = vld [vmem:[%s1 + $0x10] sm:$0xf]
      %v247 = vld [vmem:[%s1 + $0x14] sm:$0xf]
      %v248 = vld [vmem:[%s1 + $0x18] sm:$0xf]
      %v249 = vld [vmem:[%s1 + $0x1c] sm:$0xf]
      %v250 = vld [vmem:[%s1 + $0x20] sm:$0xf]
      %v251 = vld [vmem:[%s1 + $0x24] sm:$0xf]
      %v252 = vld [vmem:[%s1 + $0x28] sm:$0xf]
      %v253 = vld [vmem:[%s1 + $0x2c] sm:$0xf]
      %v254 = vld [vmem:[%s1 + $0x30] sm:$0xf]
      %v255 = vld [vmem:[%s1 + $0x34] sm:$0xf]
      %v256 = vld [vmem:[%s1 + $0x38] sm:$0xf]
      %v257 = vld [vmem:[%s1 + $0x3c] sm:$0xf]
      %v258 = vld [vmem:[%s1 + $0x40] sm:$0xf]
      %v259 = vld [vmem:[%s1 + $0x44] sm:$0xf]
      %v260 = vld [vmem:[%s1 + $0x48] sm:$0xf]
      %v261 = vld [vmem:[%s1 + $0x4c] sm:$0xf]
      %v262 = vld [vmem:[%s1 + $0x50] sm:$0xf]
      %v263 = vld [vmem:[%s1 + $0x54] sm:$0xf]
      %v264 = vld [vmem:[%s1 + $0x58] sm:$0xf]
      %v265 = vld [vmem:[%s1 + $0x5c] sm:$0xf]
      %v266 = vld [vmem:[%s1 + $0x60] sm:$0xf]
      %v267 = vld [vmem:[%s1 + $0x64] sm:$0xf]
      %v268 = vld [vmem:[%s1 + $0x68] sm:$0xf]
      %v269 = vld [vmem:[%s1 + $0x6c] sm:$0xf]
      %v270 = vld [vmem:[%s1 + $0x70] sm:$0xf]
      %v271 = vld [vmem:[%s1 + $0x74] sm:$0xf]
      %v272 = vld [vmem:[%s1 + $0x78] sm:$0xf]
      %v273 = vld [vmem:[%s1 + $0x7c] sm:$0xf]
      %v274 = vld [vmem:[%s1 + $0x80] sm:$0xf]
      %v275 = vld [vmem:[%s1 + $0x84] sm:$0xf]
      %v276 = vld [vmem:[%s1 + $0x88] sm:$0xf]
      %v277 = vld [vmem:[%s1 + $0x8c] sm:$0xf]
      %v278 = vld [vmem:[%s2] sm:$0x1]
      %v280 = vlaneseq
      %v281 = vshrl.u32 %v280, 7
      %v282 = vsub.s32 0, %v281
      %v283 = vrot.slane %v278, %v282
      %v349 = vunpack.c.l.b16 %v178
      %v350 = vunpack.c.h.b16 %v178
      %v351 = vunpack.c.l.b16 %v179
      %v352 = vunpack.c.l.b16 %v180
      %v353 = vunpack.c.h.b16 %v180
      %v354 = vunpack.c.l.b16 %v181
      %v355 = vunpack.c.l.b16 %v182
      %v356 = vunpack.c.h.b16 %v182
      %v357 = vunpack.c.l.b16 %v183
      %v358 = vunpack.c.l.b16 %v184
      %v359 = vunpack.c.h.b16 %v184
      %v360 = vunpack.c.l.b16 %v185
      %v361 = vunpack.c.l.b16 %v186
      %v362 = vunpack.c.h.b16 %v186
      %v363 = vunpack.c.l.b16 %v187
      %v364 = vunpack.c.l.b16 %v188
      %v365 = vunpack.c.h.b16 %v188
      %v366 = vunpack.c.l.b16 %v189
      %v367 = vunpack.c.l.b16 %v190
      %v368 = vunpack.c.h.b16 %v190
      %v369 = vunpack.c.l.b16 %v191
      %v370 = vunpack.c.l.b16 %v192
      %v371 = vunpack.c.h.b16 %v192
      %v372 = vunpack.c.l.b16 %v193
      %v373 = vunpack.c.l.b16 %v194
      %v374 = vunpack.c.h.b16 %v194
      %v375 = vunpack.c.l.b16 %v195
      %v376 = vunpack.c.l.b16 %v196
      %v377 = vunpack.c.h.b16 %v196
      %v378 = vunpack.c.l.b16 %v197
      %v379 = vunpack.c.l.b16 %v198
      %v380 = vunpack.c.h.b16 %v198
      %v381 = vunpack.c.l.b16 %v199
      %v382 = vunpack.c.l.b16 %v200
      %v383 = vunpack.c.h.b16 %v200
      %v384 = vunpack.c.l.b16 %v201
      %v385 = vunpack.c.l.b16 %v202
      %v386 = vunpack.c.h.b16 %v202
      %v387 = vunpack.c.l.b16 %v203
      %v388 = vunpack.c.l.b16 %v204
      %v389 = vunpack.c.h.b16 %v204
      %v390 = vunpack.c.l.b16 %v205
      %v391 = vunpack.c.l.b16 %v206
      %v392 = vunpack.c.h.b16 %v206
      %v393 = vunpack.c.l.b16 %v207
      %v394 = vunpack.c.l.b16 %v208
      %v395 = vunpack.c.h.b16 %v208
      %v396 = vunpack.c.l.b16 %v209
      %v397 = vunpack.c.l.b16 %v210
      %v398 = vunpack.c.h.b16 %v210
      %v399 = vunpack.c.l.b16 %v211
      %v400 = vunpack.c.l.b16 %v212
      %v401 = vunpack.c.h.b16 %v212
      %v402 = vunpack.c.l.b16 %v213
      %v403 = vunpack.c.l.b16 %v214
      %v404 = vunpack.c.h.b16 %v214
      %v405 = vunpack.c.l.b16 %v215
      %v406 = vunpack.c.l.b16 %v216
      %v407 = vunpack.c.h.b16 %v216
      %v408 = vunpack.c.l.b16 %v217
      %v409 = vunpack.c.l.b16 %v218
      %v410 = vunpack.c.h.b16 %v218
      %v411 = vunpack.c.l.b16 %v219
      %v412 = vunpack.c.l.b16 %v220
      %v413 = vunpack.c.h.b16 %v220
      %v414 = vunpack.c.l.b16 %v221
      %v415 = vunpack.c.l.b16 %v222
      %v416 = vunpack.c.h.b16 %v222
      %v417 = vunpack.c.l.b16 %v223
      %v418 = vunpack.c.l.b16 %v224
      %v419 = vunpack.c.h.b16 %v224
      %v420 = vunpack.c.l.b16 %v225
      %v421 = vunpack.c.l.b16 %v226
      %v422 = vunpack.c.h.b16 %v226
      %v423 = vunpack.c.l.b16 %v227
      %v424 = vunpack.c.l.b16 %v228
      %v425 = vunpack.c.h.b16 %v228
      %v426 = vunpack.c.l.b16 %v229
      %v427 = vunpack.c.l.b16 %v230
      %v428 = vunpack.c.h.b16 %v230
      %v429 = vunpack.c.l.b16 %v231
      %v430 = vunpack.c.l.b16 %v232
      %v431 = vunpack.c.h.b16 %v232
      %v432 = vunpack.c.l.b16 %v233
      %v433 = vunpack.c.l.b16 %v234
      %v434 = vunpack.c.h.b16 %v234
      %v435 = vunpack.c.l.b16 %v235
      %v436 = vunpack.c.l.b16 %v236
      %v437 = vunpack.c.h.b16 %v236
      %v438 = vunpack.c.l.b16 %v237
      %v439 = vunpack.c.l.b16 %v238
      %v440 = vunpack.c.h.b16 %v238
      %v441 = vunpack.c.l.b16 %v239
      %v442 = vunpack.c.l.b16 %v240
      %v443 = vunpack.c.h.b16 %v240
      %v444 = vunpack.c.l.b16 %v241
      %v445 = vpack.c.b16 %v352, %v349
      %v446 = vpack.c.b16 %v353, %v350
      %v447 = vpack.c.b16 %v354, %v351
      %v448 = vpack.c.b16 %v358, %v355
      %v449 = vpack.c.b16 %v359, %v356
      %v450 = vpack.c.b16 %v360, %v357
      %v451 = vpack.c.b16 %v364, %v361
      %v452 = vpack.c.b16 %v365, %v362
      %v453 = vpack.c.b16 %v366, %v363
      %v454 = vpack.c.b16 %v370, %v367
      %v455 = vpack.c.b16 %v371, %v368
      %v456 = vpack.c.b16 %v372, %v369
      %v457 = vpack.c.b16 %v376, %v373
      %v458 = vpack.c.b16 %v377, %v374
      %v459 = vpack.c.b16 %v378, %v375
      %v460 = vpack.c.b16 %v382, %v379
      %v461 = vpack.c.b16 %v383, %v380
      %v462 = vpack.c.b16 %v384, %v381
      %v463 = vpack.c.b16 %v388, %v385
      %v464 = vpack.c.b16 %v389, %v386
      %v465 = vpack.c.b16 %v390, %v387
      %v466 = vpack.c.b16 %v394, %v391
      %v467 = vpack.c.b16 %v395, %v392
      %v468 = vpack.c.b16 %v396, %v393
      %v469 = vpack.c.b16 %v400, %v397
      %v470 = vpack.c.b16 %v401, %v398
      %v471 = vpack.c.b16 %v402, %v399
      %v472 = vpack.c.b16 %v406, %v403
      %v473 = vpack.c.b16 %v407, %v404
      %v474 = vpack.c.b16 %v408, %v405
      %v475 = vpack.c.b16 %v412, %v409
      %v476 = vpack.c.b16 %v413, %v410
      %v477 = vpack.c.b16 %v414, %v411
      %v478 = vpack.c.b16 %v418, %v415
      %v479 = vpack.c.b16 %v419, %v416
      %v480 = vpack.c.b16 %v420, %v417
      %v481 = vpack.c.b16 %v424, %v421
      %v482 = vpack.c.b16 %v425, %v422
      %v483 = vpack.c.b16 %v426, %v423
      %v484 = vpack.c.b16 %v430, %v427
      %v485 = vpack.c.b16 %v431, %v428
      %v486 = vpack.c.b16 %v432, %v429
      %v487 = vpack.c.b16 %v436, %v433
      %v488 = vpack.c.b16 %v437, %v434
      %v489 = vpack.c.b16 %v438, %v435
      %v490 = vpack.c.b16 %v442, %v439
      %v491 = vpack.c.b16 %v443, %v440
      %v492 = vpack.c.b16 %v444, %v441
      %v561 = vunpack.c.l.b16 %v242
      %v562 = vunpack.c.l.b16 %v243
      %v563 = vunpack.c.l.b16 %v244
      %v564 = vunpack.c.l.b16 %v245
      %v565 = vunpack.c.l.b16 %v246
      %v566 = vunpack.c.l.b16 %v247
      %v567 = vunpack.c.l.b16 %v248
      %v568 = vunpack.c.l.b16 %v249
      %v569 = vunpack.c.l.b16 %v250
      %v570 = vunpack.c.l.b16 %v251
      %v571 = vunpack.c.l.b16 %v252
      %v572 = vunpack.c.l.b16 %v253
      %v573 = vunpack.c.l.b16 %v254
      %v574 = vunpack.c.l.b16 %v255
      %v575 = vunpack.c.l.b16 %v256
      %v576 = vunpack.c.l.b16 %v257
      %v577 = vunpack.c.l.b16 %v258
      %v578 = vunpack.c.l.b16 %v259
      %v579 = vunpack.c.l.b16 %v260
      %v580 = vunpack.c.l.b16 %v261
      %v581 = vunpack.c.l.b16 %v262
      %v582 = vunpack.c.l.b16 %v263
      %v583 = vunpack.c.l.b16 %v264
      %v584 = vunpack.c.l.b16 %v265
      %v585 = vunpack.c.l.b16 %v266
      %v586 = vunpack.c.l.b16 %v267
      %v587 = vunpack.c.l.b16 %v268
      %v588 = vunpack.c.l.b16 %v269
      %v589 = vunpack.c.l.b16 %v270
      %v590 = vunpack.c.l.b16 %v271
      %v591 = vunpack.c.l.b16 %v272
      %v592 = vunpack.c.l.b16 %v273
      %v593 = vunpack.c.l.b16 %v274
      %v594 = vunpack.c.l.b16 %v275
      %v595 = vunpack.c.l.b16 %v276
      %v596 = vunpack.c.l.b16 %v277
      %v597 = vpack.c.b16 %v562, %v561
      %v598 = vpack.c.b16 %v564, %v563
      %v599 = vpack.c.b16 %v566, %v565
      %v600 = vpack.c.b16 %v568, %v567
      %v601 = vpack.c.b16 %v570, %v569
      %v602 = vpack.c.b16 %v572, %v571
      %v603 = vpack.c.b16 %v574, %v573
      %v604 = vpack.c.b16 %v576, %v575
      %v605 = vpack.c.b16 %v578, %v577
      %v606 = vpack.c.b16 %v580, %v579
      %v607 = vpack.c.b16 %v582, %v581
      %v608 = vpack.c.b16 %v584, %v583
      %v609 = vpack.c.b16 %v586, %v585
      %v610 = vpack.c.b16 %v588, %v587
      %v611 = vpack.c.b16 %v590, %v589
      %v612 = vpack.c.b16 %v592, %v591
      %v613 = vpack.c.b16 %v594, %v593
      %v614 = vpack.c.b16 %v596, %v595
      %vm633 = vcmask 261120
      %v635 = vsel %vm633, %v447, 0
      %v638 = vsel %vm633, %v450, 0
      %v641 = vsel %vm633, %v453, 0
      %v644 = vsel %vm633, %v456, 0
      %v647 = vsel %vm633, %v459, 0
      %v650 = vsel %vm633, %v462, 0
      %v653 = vsel %vm633, %v465, 0
      %v656 = vsel %vm633, %v468, 0
      %v659 = vsel %vm633, %v471, 0
      %v662 = vsel %vm633, %v474, 0
      %v665 = vsel %vm633, %v477, 0
      %v668 = vsel %vm633, %v480, 0
      %v671 = vsel %vm633, %v483, 0
      %v674 = vsel %vm633, %v486, 0
      %v677 = vsel %vm633, %v489, 0
      %v680 = vsel %vm633, %v492, 0
      %682 = vmatprep.subr.bf16.mxu0 0
      %683 = vmatpush1.bf16.msra.mxu0 %v597
      %684 = vmatprep.subr.bf16.mxu0 0
      %685 = vmatpush1.bf16.msra.mxu0 %v598
      %686 = vmatprep.subr.bf16.mxu0 0
      %687 = vmatpush1.bf16.msra.mxu0 %v599
      %688 = vmatprep.subr.bf16.mxu0 0
      %689 = vmatpush1.bf16.msra.mxu0 %v600
      %690 = vmatprep.subr.bf16.mxu0 0
      %691 = vmatpush1.bf16.msra.mxu0 %v601
      %692 = vmatprep.subr.bf16.mxu0 0
      %693 = vmatpush1.bf16.msra.mxu0 %v602
      %694 = vmatprep.subr.bf16.mxu0 0
      %695 = vmatpush1.bf16.msra.mxu0 %v603
      %696 = vmatprep.subr.bf16.mxu0 0
      %697 = vmatpush1.bf16.msra.mxu0 %v604
      %698 = vmatprep.subr.bf16.mxu0 0
      %699 = vmatpush1.bf16.msra.mxu0 %v605
      %700 = vmatprep.subr.bf16.mxu0 0
      %701 = vmatpush1.bf16.msra.mxu0 %v606
      %702 = vmatprep.subr.bf16.mxu0 0
      %703 = vmatpush1.bf16.msra.mxu0 %v607
      %704 = vmatprep.subr.bf16.mxu0 0
      %705 = vmatpush1.bf16.msra.mxu0 %v608
      %706 = vmatprep.subr.bf16.mxu0 0
      %707 = vmatpush1.bf16.msra.mxu0 %v609
      %708 = vmatprep.subr.bf16.mxu0 0
      %709 = vmatpush1.bf16.msra.mxu0 %v610
      %710 = vmatprep.subr.bf16.mxu0 0
      %711 = vmatpush1.bf16.msra.mxu0 %v611
      %712 = vmatprep.subr.bf16.mxu0 0
      %713 = vmatpush1.bf16.msra.mxu0 %v612
      %714 = vmatprep.mubr.bf16.mxu0 %v446
      %715 = vmatmul.mubr.bf16.gmra.mrb[0].mxu0 %v445
      %v716 = vpop.f32.mrb[0].mxu0
      %v717 = vadd.f32 %v283, %v716
      %v718 = vpop.f32.mrb[0].mxu0
      %v719 = vpop.f32.mrb[0].mxu0
      %v720 = vadd.f32 %v283, %v719
      %v721 = vpop.f32.mrb[0].mxu0
      %722 = vmatprep.mubr.bf16.mxu0 %v449
      %723 = vmatmul.mubr.bf16.gmra.mrb[0].mxu0 %v448
      %v724 = vpop.f32.mrb[0].mxu0
      %v725 = vadd.f32 %v283, %v724
      %v726 = vpop.f32.mrb[0].mxu0
      %v727 = vpop.f32.mrb[0].mxu0
      %v728 = vadd.f32 %v283, %v727
      %v729 = vpop.f32.mrb[0].mxu0
      %730 = vmatprep.mubr.bf16.mxu0 %v452
      %731 = vmatmul.mubr.bf16.gmra.mrb[0].mxu0 %v451
      %v732 = vpop.f32.mrb[0].mxu0
      %v733 = vadd.f32 %v283, %v732
      %v734 = vpop.f32.mrb[0].mxu0
      %v735 = vpop.f32.mrb[0].mxu0
      %v736 = vadd.f32 %v283, %v735
      %v737 = vpop.f32.mrb[0].mxu0
      %738 = vmatprep.mubr.bf16.mxu0 %v455
      %739 = vmatmul.mubr.bf16.gmra.mrb[0].mxu0 %v454
      %v740 = vpop.f32.mrb[0].mxu0
      %v741 = vadd.f32 %v283, %v740
      %v742 = vpop.f32.mrb[0].mxu0
      %v743 = vpop.f32.mrb[0].mxu0
      %v744 = vadd.f32 %v283, %v743
      %v745 = vpop.f32.mrb[0].mxu0
      %746 = vmatprep.mubr.bf16.mxu0 %v458
      %747 = vmatmul.mubr.bf16.gmra.mrb[0].mxu0 %v457
      %v748 = vpop.f32.mrb[0].mxu0
      %v749 = vadd.f32 %v283, %v748
      %v750 = vpop.f32.mrb[0].mxu0
      %v751 = vpop.f32.mrb[0].mxu0
      %v752 = vadd.f32 %v283, %v751
      %v753 = vpop.f32.mrb[0].mxu0
      %754 = vmatprep.mubr.bf16.mxu0 %v461
      %755 = vmatmul.mubr.bf16.gmra.mrb[0].mxu0 %v460
      %v756 = vpop.f32.mrb[0].mxu0
      %v757 = vadd.f32 %v283, %v756
      %v758 = vpop.f32.mrb[0].mxu0
      %v759 = vpop.f32.mrb[0].mxu0
      %v760 = vadd.f32 %v283, %v759
      %v761 = vpop.f32.mrb[0].mxu0
      %762 = vmatprep.mubr.bf16.mxu0 %v464
      %763 = vmatmul.mubr.bf16.gmra.mrb[0].mxu0 %v463
      %v764 = vpop.f32.mrb[0].mxu0
      %v765 = vadd.f32 %v283, %v764
      %v766 = vpop.f32.mrb[0].mxu0
      %v767 = vpop.f32.mrb[0].mxu0
      %v768 = vadd.f32 %v283, %v767
      %v769 = vpop.f32.mrb[0].mxu0
      %770 = vmatprep.mubr.bf16.mxu0 %v467
      %771 = vmatmul.mubr.bf16.gmra.mrb[0].mxu0 %v466
      %v772 = vpop.f32.mrb[0].mxu0
      %v773 = vadd.f32 %v283, %v772
      %v774 = vpop.f32.mrb[0].mxu0
      %v775 = vpop.f32.mrb[0].mxu0
      %v776 = vadd.f32 %v283, %v775
      %v777 = vpop.f32.mrb[0].mxu0
      %778 = vmatprep.mubr.bf16.mxu0 %v470
      %779 = vmatmul.mubr.bf16.gmra.mrb[0].mxu0 %v469
      %v780 = vpop.f32.mrb[0].mxu0
      %v781 = vadd.f32 %v283, %v780
      %v782 = vpop.f32.mrb[0].mxu0
      %v783 = vpop.f32.mrb[0].mxu0
      %v784 = vadd.f32 %v283, %v783
      %v785 = vpop.f32.mrb[0].mxu0
      %786 = vmatprep.mubr.bf16.mxu0 %v473
      %787 = vmatmul.mubr.bf16.gmra.mrb[0].mxu0 %v472
      %v788 = vpop.f32.mrb[0].mxu0
      %v789 = vadd.f32 %v283, %v788
      %v790 = vpop.f32.mrb[0].mxu0
      %v791 = vpop.f32.mrb[0].mxu0
      %v792 = vadd.f32 %v283, %v791
      %v793 = vpop.f32.mrb[0].mxu0
      %794 = vmatprep.mubr.bf16.mxu0 %v476
      %795 = vmatmul.mubr.bf16.gmra.mrb[0].mxu0 %v475
      %v796 = vpop.f32.mrb[0].mxu0
      %v797 = vadd.f32 %v283, %v796
      %v798 = vpop.f32.mrb[0].mxu0
      %v799 = vpop.f32.mrb[0].mxu0
      %v800 = vadd.f32 %v283, %v799
      %v801 = vpop.f32.mrb[0].mxu0
      %802 = vmatprep.mubr.bf16.mxu0 %v479
      %803 = vmatmul.mubr.bf16.gmra.mrb[0].mxu0 %v478
      %v804 = vpop.f32.mrb[0].mxu0
      %v805 = vadd.f32 %v283, %v804
      %v806 = vpop.f32.mrb[0].mxu0
      %v807 = vpop.f32.mrb[0].mxu0
      %v808 = vadd.f32 %v283, %v807
      %v809 = vpop.f32.mrb[0].mxu0
      %810 = vmatprep.mubr.bf16.mxu0 %v482
      %811 = vmatmul.mubr.bf16.gmra.mrb[0].mxu0 %v481
      %v812 = vpop.f32.mrb[0].mxu0
      %v813 = vadd.f32 %v283, %v812
      %v814 = vpop.f32.mrb[0].mxu0
      %v815 = vpop.f32.mrb[0].mxu0
      %v816 = vadd.f32 %v283, %v815
      %v817 = vpop.f32.mrb[0].mxu0
      %818 = vmatprep.mubr.bf16.mxu0 %v485
      %819 = vmatmul.mubr.bf16.gmra.mrb[0].mxu0 %v484
      %v820 = vpop.f32.mrb[0].mxu0
      %v821 = vadd.f32 %v283, %v820
      %v822 = vpop.f32.mrb[0].mxu0
      %v823 = vpop.f32.mrb[0].mxu0
      %v824 = vadd.f32 %v283, %v823
      %v825 = vpop.f32.mrb[0].mxu0
      %826 = vmatprep.mubr.bf16.mxu0 %v488
      %827 = vmatmul.mubr.bf16.gmra.mrb[0].mxu0 %v487
      %v828 = vpop.f32.mrb[0].mxu0
      %v829 = vadd.f32 %v283, %v828
      %v830 = vpop.f32.mrb[0].mxu0
      %v831 = vpop.f32.mrb[0].mxu0
      %v832 = vadd.f32 %v283, %v831
      %v833 = vpop.f32.mrb[0].mxu0
      %834 = vmatprep.mubr.bf16.mxu0 %v491
      %835 = vmatmul.mubr.bf16.gmra.mrb[0].mxu0 %v490
      %v836 = vpop.f32.mrb[0].mxu0
      %v837 = vadd.f32 %v283, %v836
      %v838 = vpop.f32.mrb[0].mxu0
      %v839 = vpop.f32.mrb[0].mxu0
      %v840 = vadd.f32 %v283, %v839
      %v841 = vpop.f32.mrb[0].mxu0
      %842 = vdwg.mxu0
      %843 = vmatprep.subr.bf16.mxu0 0
      %844 = vmatpush1.bf16.msra.mxu0 %v613
      %845 = vmatprep.subr.bf16.mxu0 0
      %846 = vmatpush1.bf16.msra.mxu0 %v614
      %847 = vmatprep.subr.bf16.mxu0 0
      %848 = vmatpush1.bf16.msra.mxu0 0
      %849 = vmatprep.subr.bf16.mxu0 0
      %850 = vmatpush1.bf16.msra.mxu0 0
      %851 = vmatprep.subr.bf16.mxu0 0
      %852 = vmatpush1.bf16.msra.mxu0 0
      %853 = vmatprep.subr.bf16.mxu0 0
      %854 = vmatpush1.bf16.msra.mxu0 0
      %855 = vmatprep.subr.bf16.mxu0 0
      %856 = vmatpush1.bf16.msra.mxu0 0
      %857 = vmatprep.subr.bf16.mxu0 0
      %858 = vmatpush1.bf16.msra.mxu0 0
      %859 = vmatprep.subr.bf16.mxu0 0
      %860 = vmatpush1.bf16.msra.mxu0 0
      %861 = vmatprep.subr.bf16.mxu0 0
      %862 = vmatpush1.bf16.msra.mxu0 0
      %863 = vmatprep.subr.bf16.mxu0 0
      %864 = vmatpush1.bf16.msra.mxu0 0
      %865 = vmatprep.subr.bf16.mxu0 0
      %866 = vmatpush1.bf16.msra.mxu0 0
      %867 = vmatprep.subr.bf16.mxu0 0
      %868 = vmatpush1.bf16.msra.mxu0 0
      %869 = vmatprep.subr.bf16.mxu0 0
      %870 = vmatpush1.bf16.msra.mxu0 0
      %871 = vmatprep.subr.bf16.mxu0 0
      %872 = vmatpush1.bf16.msra.mxu0 0
      %873 = vmatprep.subr.bf16.mxu0 0
      %874 = vmatpush1.bf16.msra.mxu0 0
      %875 = vmatprep.mubr.bf16.mxu0 0
      %876 = vmatmul.mubr.bf16.gmra.mrb[0].mxu0 %v635
      %v877 = vpop.f32.mrb[0].mxu0
      %v878 = vadd.f32 %v717, %v877
      %v879 = vpop.f32.mrb[0].mxu0
      %v880 = vpop.f32.mrb[0].mxu0
      %v881 = vadd.f32 %v720, %v880
      %v882 = vpop.f32.mrb[0].mxu0
      %883 = vmatprep.mubr.bf16.mxu0 0
      %884 = vmatmul.mubr.bf16.gmra.mrb[0].mxu0 %v638
      %v885 = vpop.f32.mrb[0].mxu0
      %v886 = vadd.f32 %v725, %v885
      %v887 = vpop.f32.mrb[0].mxu0
      %v888 = vpop.f32.mrb[0].mxu0
      %v889 = vadd.f32 %v728, %v888
      %v890 = vpop.f32.mrb[0].mxu0
      %891 = vmatprep.mubr.bf16.mxu0 0
      %892 = vmatmul.mubr.bf16.gmra.mrb[0].mxu0 %v641
      %v893 = vpop.f32.mrb[0].mxu0
      %v894 = vadd.f32 %v733, %v893
      %v895 = vpop.f32.mrb[0].mxu0
      %v896 = vpop.f32.mrb[0].mxu0
      %v897 = vadd.f32 %v736, %v896
      %v898 = vpop.f32.mrb[0].mxu0
      %899 = vmatprep.mubr.bf16.mxu0 0
      %900 = vmatmul.mubr.bf16.gmra.mrb[0].mxu0 %v644
      %v901 = vpop.f32.mrb[0].mxu0
      %v902 = vadd.f32 %v741, %v901
      %v903 = vpop.f32.mrb[0].mxu0
      %v904 = vpop.f32.mrb[0].mxu0
      %v905 = vadd.f32 %v744, %v904
      %v906 = vpop.f32.mrb[0].mxu0
      %907 = vmatprep.mubr.bf16.mxu0 0
      %908 = vmatmul.mubr.bf16.gmra.mrb[0].mxu0 %v647
      %v909 = vpop.f32.mrb[0].mxu0
      %v910 = vadd.f32 %v749, %v909
      %v911 = vpop.f32.mrb[0].mxu0
      %v912 = vpop.f32.mrb[0].mxu0
      %v913 = vadd.f32 %v752, %v912
      %v914 = vpop.f32.mrb[0].mxu0
      %915 = vmatprep.mubr.bf16.mxu0 0
      %916 = vmatmul.mubr.bf16.gmra.mrb[0].mxu0 %v650
      %v917 = vpop.f32.mrb[0].mxu0
      %v918 = vadd.f32 %v757, %v917
      %v919 = vpop.f32.mrb[0].mxu0
      %v920 = vpop.f32.mrb[0].mxu0
      %v921 = vadd.f32 %v760, %v920
      %v922 = vpop.f32.mrb[0].mxu0
      %923 = vmatprep.mubr.bf16.mxu0 0
      %924 = vmatmul.mubr.bf16.gmra.mrb[0].mxu0 %v653
      %v925 = vpop.f32.mrb[0].mxu0
      %v926 = vadd.f32 %v765, %v925
      %v927 = vpop.f32.mrb[0].mxu0
      %v928 = vpop.f32.mrb[0].mxu0
      %v929 = vadd.f32 %v768, %v928
      %v930 = vpop.f32.mrb[0].mxu0
      %931 = vmatprep.mubr.bf16.mxu0 0
      %932 = vmatmul.mubr.bf16.gmra.mrb[0].mxu0 %v656
      %v933 = vpop.f32.mrb[0].mxu0
      %v934 = vadd.f32 %v773, %v933
      %v935 = vpop.f32.mrb[0].mxu0
      %v936 = vpop.f32.mrb[0].mxu0
      %v937 = vadd.f32 %v776, %v936
      %v938 = vpop.f32.mrb[0].mxu0
      %939 = vmatprep.mubr.bf16.mxu0 0
      %940 = vmatmul.mubr.bf16.gmra.mrb[0].mxu0 %v659
      %v941 = vpop.f32.mrb[0].mxu0
      %v942 = vadd.f32 %v781, %v941
      %v943 = vpop.f32.mrb[0].mxu0
      %v944 = vpop.f32.mrb[0].mxu0
      %v945 = vadd.f32 %v784, %v944
      %v946 = vpop.f32.mrb[0].mxu0
      %947 = vmatprep.mubr.bf16.mxu0 0
      %948 = vmatmul.mubr.bf16.gmra.mrb[0].mxu0 %v662
      %v949 = vpop.f32.mrb[0].mxu0
      %v950 = vadd.f32 %v789, %v949
      %v951 = vpop.f32.mrb[0].mxu0
      %v952 = vpop.f32.mrb[0].mxu0
      %v953 = vadd.f32 %v792, %v952
      %v954 = vpop.f32.mrb[0].mxu0
      %955 = vmatprep.mubr.bf16.mxu0 0
      %956 = vmatmul.mubr.bf16.gmra.mrb[0].mxu0 %v665
      %v957 = vpop.f32.mrb[0].mxu0
      %v958 = vadd.f32 %v797, %v957
      %v959 = vpop.f32.mrb[0].mxu0
      %v960 = vpop.f32.mrb[0].mxu0
      %v961 = vadd.f32 %v800, %v960
      %v962 = vpop.f32.mrb[0].mxu0
      %963 = vmatprep.mubr.bf16.mxu0 0
      %964 = vmatmul.mubr.bf16.gmra.mrb[0].mxu0 %v668
      %v965 = vpop.f32.mrb[0].mxu0
      %v966 = vadd.f32 %v805, %v965
      %v967 = vpop.f32.mrb[0].mxu0
      %v968 = vpop.f32.mrb[0].mxu0
      %v969 = vadd.f32 %v808, %v968
      %v970 = vpop.f32.mrb[0].mxu0
      %971 = vmatprep.mubr.bf16.mxu0 0
      %972 = vmatmul.mubr.bf16.gmra.mrb[0].mxu0 %v671
      %v973 = vpop.f32.mrb[0].mxu0
      %v974 = vadd.f32 %v813, %v973
      %v975 = vpop.f32.mrb[0].mxu0
      %v976 = vpop.f32.mrb[0].mxu0
      %v977 = vadd.f32 %v816, %v976
      %v978 = vpop.f32.mrb[0].mxu0
      %979 = vmatprep.mubr.bf16.mxu0 0
      %980 = vmatmul.mubr.bf16.gmra.mrb[0].mxu0 %v674
      %v981 = vpop.f32.mrb[0].mxu0
      %v982 = vadd.f32 %v821, %v981
      %v983 = vpop.f32.mrb[0].mxu0
      %v984 = vpop.f32.mrb[0].mxu0
      %v985 = vadd.f32 %v824, %v984
      %v986 = vpop.f32.mrb[0].mxu0
      %987 = vmatprep.mubr.bf16.mxu0 0
      %988 = vmatmul.mubr.bf16.gmra.mrb[0].mxu0 %v677
      %v989 = vpop.f32.mrb[0].mxu0
      %v990 = vadd.f32 %v829, %v989
      %v991 = vpop.f32.mrb[0].mxu0
      %v992 = vpop.f32.mrb[0].mxu0
      %v993 = vadd.f32 %v832, %v992
      %v994 = vpop.f32.mrb[0].mxu0
      %995 = vmatprep.mubr.bf16.mxu0 0
      %996 = vmatmul.mubr.bf16.gmra.mrb[0].mxu0 %v680
      %v997 = vpop.f32.mrb[0].mxu0
      %v998 = vadd.f32 %v837, %v997
      %v999 = vpop.f32.mrb[0].mxu0
      %v1000 = vpop.f32.mrb[0].mxu0
      %v1001 = vadd.f32 %v840, %v1000
      %v1002 = vpop.f32.mrb[0].mxu0
      %1003 = vdwg.mxu0
      %v1004 = vxor.u32 %v878, 2147483648
      %v1005 = vxor.u32 %v881, 2147483648
      %v1006 = vxor.u32 %v886, 2147483648
      %v1007 = vxor.u32 %v889, 2147483648
      %v1008 = vxor.u32 %v894, 2147483648
      %v1009 = vxor.u32 %v897, 2147483648
      %v1010 = vxor.u32 %v902, 2147483648
      %v1011 = vxor.u32 %v905, 2147483648
      %v1012 = vxor.u32 %v910, 2147483648
      %v1013 = vxor.u32 %v913, 2147483648
      %v1014 = vxor.u32 %v918, 2147483648
      %v1015 = vxor.u32 %v921, 2147483648
      %v1016 = vxor.u32 %v926, 2147483648
      %v1017 = vxor.u32 %v929, 2147483648
      %v1018 = vxor.u32 %v934, 2147483648
      %v1019 = vxor.u32 %v937, 2147483648
      %v1020 = vxor.u32 %v942, 2147483648
      %v1021 = vxor.u32 %v945, 2147483648
      %v1022 = vxor.u32 %v950, 2147483648
      %v1023 = vxor.u32 %v953, 2147483648
      %v1024 = vxor.u32 %v958, 2147483648
      %v1025 = vxor.u32 %v961, 2147483648
      %v1026 = vxor.u32 %v966, 2147483648
      %v1027 = vxor.u32 %v969, 2147483648
      %v1028 = vxor.u32 %v974, 2147483648
      %v1029 = vxor.u32 %v977, 2147483648
      %v1030 = vxor.u32 %v982, 2147483648
      %v1031 = vxor.u32 %v985, 2147483648
      %v1032 = vxor.u32 %v990, 2147483648
      %v1033 = vxor.u32 %v993, 2147483648
      %v1034 = vxor.u32 %v998, 2147483648
      %v1035 = vxor.u32 %v1001, 2147483648
      %v1036 = vmul.f32 %v1004, 1.442695
      %v1037 = vpow.pop %v1036
      %v1038 = vmul.f32 %v1005, 1.442695
      %v1039 = vpow.pop %v1038
      %v1040 = vmul.f32 %v1006, 1.442695
      %v1041 = vpow.pop %v1040
      %v1042 = vmul.f32 %v1007, 1.442695
      %v1043 = vpow.pop %v1042
      %v1044 = vmul.f32 %v1008, 1.442695
      %v1045 = vpow.pop %v1044
      %v1046 = vmul.f32 %v1009, 1.442695
      %v1047 = vpow.pop %v1046
      %v1048 = vmul.f32 %v1010, 1.442695
      %v1049 = vpow.pop %v1048
      %v1050 = vmul.f32 %v1011, 1.442695
      %v1051 = vpow.pop %v1050
      %v1052 = vmul.f32 %v1012, 1.442695
      %v1053 = vpow.pop %v1052
      %v1054 = vmul.f32 %v1013, 1.442695
      %v1055 = vpow.pop %v1054
      %v1056 = vmul.f32 %v1014, 1.442695
      %v1057 = vpow.pop %v1056
      %v1058 = vmul.f32 %v1015, 1.442695
      %v1059 = vpow.pop %v1058
      %v1060 = vmul.f32 %v1016, 1.442695
      %v1061 = vpow.pop %v1060
      %v1062 = vmul.f32 %v1017, 1.442695
      %v1063 = vpow.pop %v1062
      %v1064 = vmul.f32 %v1018, 1.442695
      %v1065 = vpow.pop %v1064
      %v1066 = vmul.f32 %v1019, 1.442695
      %v1067 = vpow.pop %v1066
      %v1068 = vmul.f32 %v1020, 1.442695
      %v1069 = vpow.pop %v1068
      %v1070 = vmul.f32 %v1021, 1.442695
      %v1071 = vpow.pop %v1070
      %v1072 = vmul.f32 %v1022, 1.442695
      %v1073 = vpow.pop %v1072
      %v1074 = vmul.f32 %v1023, 1.442695
      %v1075 = vpow.pop %v1074
      %v1076 = vmul.f32 %v1024, 1.442695
      %v1077 = vpow.pop %v1076
      %v1078 = vmul.f32 %v1025, 1.442695
      %v1079 = vpow.pop %v1078
      %v1080 = vmul.f32 %v1026, 1.442695
      %v1081 = vpow.pop %v1080
      %v1082 = vmul.f32 %v1027, 1.442695
      %v1083 = vpow.pop %v1082
      %v1084 = vmul.f32 %v1028, 1.442695
      %v1085 = vpow.pop %v1084
      %v1086 = vmul.f32 %v1029, 1.442695
      %v1087 = vpow.pop %v1086
      %v1088 = vmul.f32 %v1030, 1.442695
      %v1089 = vpow.pop %v1088
      %v1090 = vmul.f32 %v1031, 1.442695
      %v1091 = vpow.pop %v1090
      %v1092 = vmul.f32 %v1032, 1.442695
      %v1093 = vpow.pop %v1092
      %v1094 = vmul.f32 %v1033, 1.442695
      %v1095 = vpow.pop %v1094
      %v1096 = vmul.f32 %v1034, 1.442695
      %v1097 = vpow.pop %v1096
      %v1098 = vmul.f32 %v1035, 1.442695
      %v1099 = vpow.pop %v1098
      %v1100 = vadd.f32 %v1037, 1.0
      %v1101 = vadd.f32 %v1039, 1.0
      %v1102 = vadd.f32 %v1041, 1.0
      %v1103 = vadd.f32 %v1043, 1.0
      %v1104 = vadd.f32 %v1045, 1.0
      %v1105 = vadd.f32 %v1047, 1.0
      %v1106 = vadd.f32 %v1049, 1.0
      %v1107 = vadd.f32 %v1051, 1.0
      %v1108 = vadd.f32 %v1053, 1.0
      %v1109 = vadd.f32 %v1055, 1.0
      %v1110 = vadd.f32 %v1057, 1.0
      %v1111 = vadd.f32 %v1059, 1.0
      %v1112 = vadd.f32 %v1061, 1.0
      %v1113 = vadd.f32 %v1063, 1.0
      %v1114 = vadd.f32 %v1065, 1.0
      %v1115 = vadd.f32 %v1067, 1.0
      %v1116 = vadd.f32 %v1069, 1.0
      %v1117 = vadd.f32 %v1071, 1.0
      %v1118 = vadd.f32 %v1073, 1.0
      %v1119 = vadd.f32 %v1075, 1.0
      %v1120 = vadd.f32 %v1077, 1.0
      %v1121 = vadd.f32 %v1079, 1.0
      %v1122 = vadd.f32 %v1081, 1.0
      %v1123 = vadd.f32 %v1083, 1.0
      %v1124 = vadd.f32 %v1085, 1.0
      %v1125 = vadd.f32 %v1087, 1.0
      %v1126 = vadd.f32 %v1089, 1.0
      %v1127 = vadd.f32 %v1091, 1.0
      %v1128 = vadd.f32 %v1093, 1.0
      %v1129 = vadd.f32 %v1095, 1.0
      %v1130 = vadd.f32 %v1097, 1.0
      %v1131 = vadd.f32 %v1099, 1.0
      %v1132 = vrcp.pop %v1100
      %v1133 = vmul.f32 1.0, %v1132
      %v1134 = vrcp.pop %v1101
      %v1135 = vmul.f32 1.0, %v1134
      %v1136 = vrcp.pop %v1102
      %v1137 = vmul.f32 1.0, %v1136
      %v1138 = vrcp.pop %v1103
      %v1139 = vmul.f32 1.0, %v1138
      %v1140 = vrcp.pop %v1104
      %v1141 = vmul.f32 1.0, %v1140
      %v1142 = vrcp.pop %v1105
      %v1143 = vmul.f32 1.0, %v1142
      %v1144 = vrcp.pop %v1106
      %v1145 = vmul.f32 1.0, %v1144
      %v1146 = vrcp.pop %v1107
      %v1147 = vmul.f32 1.0, %v1146
      %v1148 = vrcp.pop %v1108
      %v1149 = vmul.f32 1.0, %v1148
      %v1150 = vrcp.pop %v1109
      %v1151 = vmul.f32 1.0, %v1150
      %v1152 = vrcp.pop %v1110
      %v1153 = vmul.f32 1.0, %v1152
      %v1154 = vrcp.pop %v1111
      %v1155 = vmul.f32 1.0, %v1154
      %v1156 = vrcp.pop %v1112
      %v1157 = vmul.f32 1.0, %v1156
      %v1158 = vrcp.pop %v1113
      %v1159 = vmul.f32 1.0, %v1158
      %v1160 = vrcp.pop %v1114
      %v1161 = vmul.f32 1.0, %v1160
      %v1162 = vrcp.pop %v1115
      %v1163 = vmul.f32 1.0, %v1162
      %v1164 = vrcp.pop %v1116
      %v1165 = vmul.f32 1.0, %v1164
      %v1166 = vrcp.pop %v1117
      %v1167 = vmul.f32 1.0, %v1166
      %v1168 = vrcp.pop %v1118
      %v1169 = vmul.f32 1.0, %v1168
      %v1170 = vrcp.pop %v1119
      %v1171 = vmul.f32 1.0, %v1170
      %v1172 = vrcp.pop %v1120
      %v1173 = vmul.f32 1.0, %v1172
      %v1174 = vrcp.pop %v1121
      %v1175 = vmul.f32 1.0, %v1174
      %v1176 = vrcp.pop %v1122
      %v1177 = vmul.f32 1.0, %v1176
      %v1178 = vrcp.pop %v1123
      %v1179 = vmul.f32 1.0, %v1178
      %v1180 = vrcp.pop %v1124
      %v1181 = vmul.f32 1.0, %v1180
      %v1182 = vrcp.pop %v1125
      %v1183 = vmul.f32 1.0, %v1182
      %v1184 = vrcp.pop %v1126
      %v1185 = vmul.f32 1.0, %v1184
      %v1186 = vrcp.pop %v1127
      %v1187 = vmul.f32 1.0, %v1186
      %v1188 = vrcp.pop %v1128
      %v1189 = vmul.f32 1.0, %v1188
      %v1190 = vrcp.pop %v1129
      %v1191 = vmul.f32 1.0, %v1190
      %v1192 = vrcp.pop %v1130
      %v1193 = vmul.f32 1.0, %v1192
      %v1194 = vrcp.pop %v1131
      %v1195 = vmul.f32 1.0, %v1194
      %vm1196 = vcmask 97280
      %1197 = vst.msk [vmem:[%s175] sm:$0xff] %vm1196, %v1133
      %1198 = vst.msk [vmem:[%s175 + $0x8] sm:$0xff] %vm1196, %v1135
      %1199 = vst.msk [vmem:[%s175 + $0x10] sm:$0xff] %vm1196, %v1137
      %1200 = vst.msk [vmem:[%s175 + $0x18] sm:$0xff] %vm1196, %v1139
      %1201 = vst.msk [vmem:[%s175 + $0x20] sm:$0xff] %vm1196, %v1141
      %1202 = vst.msk [vmem:[%s175 + $0x28] sm:$0xff] %vm1196, %v1143
      %1203 = vst.msk [vmem:[%s175 + $0x30] sm:$0xff] %vm1196, %v1145
      %1204 = vst.msk [vmem:[%s175 + $0x38] sm:$0xff] %vm1196, %v1147
      %1205 = vst.msk [vmem:[%s175 + $0x40] sm:$0xff] %vm1196, %v1149
      %1206 = vst.msk [vmem:[%s175 + $0x48] sm:$0xff] %vm1196, %v1151
      %1207 = vst.msk [vmem:[%s175 + $0x50] sm:$0xff] %vm1196, %v1153
      %1208 = vst.msk [vmem:[%s175 + $0x58] sm:$0xff] %vm1196, %v1155
      %1209 = vst.msk [vmem:[%s175 + $0x60] sm:$0xff] %vm1196, %v1157
      %1210 = vst.msk [vmem:[%s175 + $0x68] sm:$0xff] %vm1196, %v1159
      %1211 = vst.msk [vmem:[%s175 + $0x70] sm:$0xff] %vm1196, %v1161
      %1212 = vst.msk [vmem:[%s175 + $0x78] sm:$0xff] %vm1196, %v1163
      %1213 = vst.msk [vmem:[%s175 + $0x80] sm:$0xff] %vm1196, %v1165
      %1214 = vst.msk [vmem:[%s175 + $0x88] sm:$0xff] %vm1196, %v1167
      %1215 = vst.msk [vmem:[%s175 + $0x90] sm:$0xff] %vm1196, %v1169
      %1216 = vst.msk [vmem:[%s175 + $0x98] sm:$0xff] %vm1196, %v1171
      %1217 = vst.msk [vmem:[%s175 + $0xa0] sm:$0xff] %vm1196, %v1173
      %1218 = vst.msk [vmem:[%s175 + $0xa8] sm:$0xff] %vm1196, %v1175
      %1219 = vst.msk [vmem:[%s175 + $0xb0] sm:$0xff] %vm1196, %v1177
      %1220 = vst.msk [vmem:[%s175 + $0xb8] sm:$0xff] %vm1196, %v1179
      %1221 = vst.msk [vmem:[%s175 + $0xc0] sm:$0xff] %vm1196, %v1181
      %1222 = vst.msk [vmem:[%s175 + $0xc8] sm:$0xff] %vm1196, %v1183
      %1223 = vst.msk [vmem:[%s175 + $0xd0] sm:$0xff] %vm1196, %v1185
      %1224 = vst.msk [vmem:[%s175 + $0xd8] sm:$0xff] %vm1196, %v1187
      %1225 = vst.msk [vmem:[%s175 + $0xe0] sm:$0xff] %vm1196, %v1189
      %1226 = vst.msk [vmem:[%s175 + $0xe8] sm:$0xff] %vm1196, %v1191
      %1227 = vst.msk [vmem:[%s175 + $0xf0] sm:$0xff] %vm1196, %v1193
      %1228 = vst.msk [vmem:[%s175 + $0xf8] sm:$0xff] %vm1196, %v1195
      %s1229 = smul.u32 32, %s14
      %p1230 = scmp.lt.s32.totalorder %s1229, 63
      %s1231 = scalar_select %p1230, %s1229, 63
      %s1232 = smul.addr %s1231, 8
      %s1233 = scalar_lea.vmem %s3, %s1232
      // Predicated region
      $region33: #{conv_deconv_vqvae_forward.17} parent=31 // pred_check
        %p1234 = pneg %p100
      $region34: #{conv_deconv_vqvae_forward.17} parent=31 // pred_check_branch
        %1236 = sbr.rel (%p1234) target = $region36
      $region35: #{conv_deconv_vqvae_forward.17} parent=31 // pred_region
        %s1237 = smul.u32 32, %s14
      $region36: #{conv_deconv_vqvae_forward.17} parent=31 // pred_fallthru
        _
    $region32: #{conv_deconv_vqvae_forward.17} parent=5 // pred_fallthru
      _
    %p1238 = scmp.le.s32.totalorder 2, %s9
    // Predicated region
    $region37: #{conv_deconv_vqvae_forward.17} parent=5 // pred_check
      %p1239 = pneg %p1238
    $region38: #{conv_deconv_vqvae_forward.17} parent=5 // pred_check_branch
      %1241 = sbr.rel (%p1239) target = $region40
    $region39: #{conv_deconv_vqvae_forward.17} parent=5 // pred_region
      %s1242 = ssub.s32 %s9, 2
      // Predicated region
      $region41: #{conv_deconv_vqvae_forward.17} parent=39 // pred_check
        %p1243 = pneg %p106
      $region42: #{conv_deconv_vqvae_forward.17} parent=39 // pred_check_branch
        %1245 = sbr.rel (%p1243) target = $region44
      $region43: #{conv_deconv_vqvae_forward.17} parent=39 // pred_region
        %s1246 = smul.u32 32, %s15
        %p1247 = scmp.lt.s32.totalorder %s1246, 63
        %s1248 = scalar_select %p1247, %s1246, 63
        %s1249 = smul.addr %s1248, 8
        %s1250 = scalar_lea.vmem %s3, %s1249
      $region44: #{conv_deconv_vqvae_forward.17} parent=39 // pred_fallthru
        _
    $region40: #{conv_deconv_vqvae_forward.17} parent=5 // pred_fallthru
      _
  $region6: #{conv_deconv_vqvae_forward.17} parent=0 // loop_footer
    %s13 = sadd.s32 1, %s9
  $region7: #{conv_deconv_vqvae_forward.17} parent=0 // loop_footer_branch
    %8 = sbr.rel target = $region3
  $region8: #{conv_deconv_vqvae_forward.17} parent=0 // loop_exit
    _

</llo_original>
